<compile_context>
chip_gen: v7x
topology: tpu7x:2x2x1
jax: 0.10.0
libtpu: 0.0.40
codegen_flags: <defaults>
</compile_context>

<pallas_src>
import math

import jax
import jax.numpy as jnp
from jax.experimental import pallas as pl
from jax.experimental.pallas import tpu as pltpu

HIDDEN = 512
NEG_SLOPE = 0.01   # PyTorch LeakyReLU default negative_slope
BN_EPS = 1e-5      # PyTorch BatchNorm1d default eps


def _round_up(x, m):
    return (x + m - 1) // m * m


def _cdiv(a, b):
    return -(-a // b)


def _mlp_kernel(x_ref,
                w1_ref, b1_ref, w2_ref, b2_ref, w3_ref, b3_ref,
                w4_ref, b4_ref, w5_ref, b5_ref,
                o_ref):
    """One (TM, F) batch tile through the whole fused MLP.

    BatchNorm1d (eval) affines were pre-folded into the following Linear's
    weights/bias in the wrapper, so each hidden layer is dot + bias + LeakyReLU.
    Dropout(0.5) is identity at inference.
    """

    def hidden(h, w_ref, b_ref):
        z = jnp.dot(h, w_ref[...], preferred_element_type=jnp.float32) + b_ref[...]
        z = jnp.where(z >= 0, z, NEG_SLOPE * z)        # LeakyReLU in f32 (hides under MXU)
        return z.astype(w_ref.dtype)                   # back to bf16 for the next MXU matmul

    h = x_ref[...]                                     # bf16 activation tile
    h = hidden(h, w1_ref, b1_ref)
    h = hidden(h, w2_ref, b2_ref)
    h = hidden(h, w3_ref, b3_ref)
    h = hidden(h, w4_ref, b4_ref)
    out = jnp.dot(h, w5_ref[...], preferred_element_type=jnp.float32) + b5_ref[...]
    o_ref[...] = out.astype(o_ref.dtype)               # bf16 store (lane-dense, unmasked)


def _fold_bn_into_next(params):
    """params: [w1,b1,s1,t1, w2,b2,s2,t2, w3,b3,s3,t3, w4,b4,s4,t4, w5,b5] (all f32).

    For Linear_i -> LeakyReLU -> Dropout -> BN_i -> Linear_{i+1}:
      BN_i(a) @ W_{i+1} + b_{i+1} = a @ (diag(s_i) W_{i+1}) + (t_i @ W_{i+1} + b_{i+1})
    so each BN eval affine folds into the next Linear's weights/bias at trace time.
    Returns ([w1..w5_folded], [b1..b5_folded]).
    """
    ws = [params[0]]
    bs = [params[1]]
    for i in range(4):
        s, t = params[4 * i + 2], params[4 * i + 3]
        if i < 3:
            w_next, b_next = params[4 * (i + 1)], params[4 * (i + 1) + 1]
        else:
            w_next, b_next = params[16], params[17]
        ws.append(w_next * s.reshape(-1, 1))           # scale rows by BN scale
        bs.append(t @ w_next + b_next)                 # fold BN shift into bias
    return ws, bs


def mlp_forward(x_nchw, params, *, tm=512):
    """params: flat list [w1,b1,s1,t1, ..., w4,b4,s4,t4, w5,b5] (all 2-D f32)."""
    B = x_nchw.shape[0]
    F = int(math.prod(x_nchw.shape[1:]))

    ws, bs = _fold_bn_into_next(params)
    out_size = ws[-1].shape[1]
    out_pad = _round_up(out_size, 128)

    # Lane-dense (multiple-of-128) output block: pad the last layer with zero columns.
    if out_pad != out_size:
        ws[-1] = jnp.pad(ws[-1], ((0, 0), (0, out_pad - out_size)))
        bs[-1] = jnp.pad(bs[-1], ((0, 0), (0, out_pad - out_size)))

    # bf16 weights / streamed activations, f32 biases + accumulation.
    ws_bf = [w.astype(jnp.bfloat16) for w in ws]
    bs_f32 = [b.astype(jnp.float32) for b in bs]
    weight_bytes = sum(w.size * w.dtype.itemsize for w in ws_bf)
    bias_bytes = sum(b.size * b.dtype.itemsize for b in bs_f32)

    # Generation-aware VMEM budget (~96 MiB on v5e/v6e, ~48 MiB on v7x).
    try:
        info = pltpu.get_tpu_info()
        vmem_cap = int(getattr(info, "vmem_capacity_bytes", 64 << 20))
    except Exception:
        vmem_cap = 64 << 20                             # conservative (v7x per-TC size)
    vmem_budget = int(0.75 * vmem_cap)

    def vmem_needed(tm_):
        # 1x resident weights/biases (Buffered(1)), double-buffered bf16 in/out tiles,
        # plus f32 intermediate headroom inside the body.
        stream = 2 * tm_ * F * 2 + 2 * tm_ * out_pad * 2
        scratch = 6 * tm_ * HIDDEN * 4
        return int(1.4 * (weight_bytes + bias_bytes + stream + scratch))

    # Batch tile: >= 2 grid steps so both v7x TensorCores get work; padded to a
    # bf16-sublane-friendly multiple of 16; shrunk if the VMEM estimate is too big.
    TM = min(tm, _round_up(max(1, _cdiv(B, 2)), 16))
    while TM > 16 and vmem_needed(TM) > vmem_budget:
        TM = max(16, _round_up(TM // 2, 16))
    num_tiles = max(2, _cdiv(B, TM))
    B_pad = num_tiles * TM

    # Single pass: reshape -> bf16 cast -> pad (no intermediate f32 materialization).
    x_bf = x_nchw.reshape(B, F).astype(jnp.bfloat16)
    if B_pad != B:
        x_bf = jnp.pad(x_bf, ((0, B_pad - B), (0, 0)))

    vmem_limit = min(vmem_budget, max(16 << 20, vmem_needed(TM)))

    flops = 2 * B_pad * (F * HIDDEN + 3 * HIDDEN * HIDDEN + HIDDEN * out_pad)
    bytes_accessed = weight_bytes + bias_bytes + B_pad * F * 2 + B_pad * out_pad * 2

    def build_call(single_buffer_weights):
        mode = pl.Buffered(1) if single_buffer_weights else None

        def const_spec(shape):
            if mode is None:
                return pl.BlockSpec(shape, lambda i: (0, 0))
            return pl.BlockSpec(shape, lambda i: (0, 0), pipeline_mode=mode)

        in_specs = [pl.BlockSpec((TM, F), lambda i: (i, 0))]
        for w, b in zip(ws_bf, bs_f32):
            in_specs.append(const_spec(w.shape))        # weights: VMEM-resident, 1 buffer
            in_specs.append(const_spec(b.shape))
        out_spec = pl.BlockSpec((TM, out_pad), lambda i: (i, 0))

        return pl.pallas_call(
            _mlp_kernel,
            out_shape=jax.ShapeDtypeStruct((B_pad, out_pad), jnp.bfloat16),
            grid_spec=pltpu.PrefetchScalarGridSpec(
                num_scalar_prefetch=0,
                grid=(num_tiles,),
                in_specs=in_specs,
                out_specs=out_spec,
            ),
            compiler_params=pltpu.CompilerParams(
                dimension_semantics=("parallel",),      # batch tiles independent (v7x 2-TC)
                vmem_limit_bytes=vmem_limit,
            ),
            cost_estimate=pl.CostEstimate(
                flops=flops, transcendentals=0, bytes_accessed=bytes_accessed),
        )

    inputs = [x_bf]
    for w, b in zip(ws_bf, bs_f32):
        inputs += [w, b]

    try:
        out = build_call(True)(*inputs)
    except Exception:
        # Fallback: default (double-buffered) weight blocks if Buffered(1) is rejected
        # by the running jax build. Same numerics, slightly larger VMEM footprint.
        out = build_call(False)(*inputs)

    return out[:B, :out_size].astype(jnp.float32)


def init_params(key, input_size, output_size):
    """Deterministic synthetic parameters matching the PyTorch module's shapes.

    Each hidden layer contributes (W, b) for the Linear plus a folded BatchNorm1d
    affine (scale, shift) computed from synthetic gamma/beta/running_mean/running_var.
    """
    dims = [(input_size, HIDDEN), (HIDDEN, HIDDEN), (HIDDEN, HIDDEN), (HIDDEN, HIDDEN)]
    params = []
    for (fan_in, fan_out) in dims:
        key, kw, kb, kg, kbe, km, kv = jax.random.split(key, 7)
        bound = 1.0 / math.sqrt(fan_in)
        w = jax.random.uniform(kw, (fan_in, fan_out), jnp.float32, -bound, bound)
        b = jax.random.uniform(kb, (1, fan_out), jnp.float32, -bound, bound)
        gamma = 1.0 + 0.1 * jax.random.normal(kg, (1, fan_out), jnp.float32)
        beta = 0.1 * jax.random.normal(kbe, (1, fan_out), jnp.float32)
        running_mean = 0.1 * jax.random.normal(km, (1, fan_out), jnp.float32)
        running_var = jnp.abs(1.0 + 0.1 * jax.random.normal(kv, (1, fan_out), jnp.float32))
        scale = gamma / jnp.sqrt(running_var + BN_EPS)     # BN eval folded to affine
        shift = beta - running_mean * scale
        params += [w, b, scale, shift]

    key, kw, kb = jax.random.split(key, 3)
    bound = 1.0 / math.sqrt(HIDDEN)
    w5 = jax.random.uniform(kw, (HIDDEN, output_size), jnp.float32, -bound, bound)
    b5 = jax.random.uniform(kb, (1, output_size), jnp.float32, -bound, bound)
    params += [w5, b5]
    return params


def reference_forward(x_nchw, params):
    """Pure-JAX f32 reference of the same (eval-mode) forward, unfolded BN."""
    B = x_nchw.shape[0]
    h = x_nchw.reshape(B, -1).astype(jnp.float32)
    for i in range(4):
        w, b, s, t = params[4 * i:4 * i + 4]
        z = h @ w + b
        z = jnp.where(z >= 0, z, NEG_SLOPE * z)
        h = z * s + t
    w5, b5 = params[-2:]
    return h @ w5 + b5


if __name__ == "__main__":
    B, C, H, W = 2, 4, 16, 16
    input_size = C * H * W      # 1024 -> matches nn.Flatten() + nn.Linear(input_size, 512)
    output_size = 10

    root = jax.random.PRNGKey(0)
    kx, kp = jax.random.split(root)
    x = jax.random.normal(kx, (B, C, H, W), jnp.float32)
    params = init_params(kp, input_size, output_size)

    out = mlp_forward(x, params)
    out = jax.block_until_ready(out)

    ref = reference_forward(x, params)
    assert out.shape == (B, output_size)
    # bf16 weights/activations/output with f32 accumulation: loosened tolerance vs f32 ref.
    assert jnp.allclose(out, ref, atol=5e-2, rtol=5e-2), float(jnp.max(jnp.abs(out - ref)))

    print("KERNEL_OK")
</pallas_src>

<mosaic_0001>
module attributes {stable_mosaic.version = 11 : i64} {
  func.func @_mlp_kernel(%arg0: i32, %arg1: memref<16x1024xbf16, #tpu.memory_space<vmem>>, %arg2: memref<1024x512xbf16, #tpu.memory_space<vmem>>, %arg3: memref<1x512xf32, #tpu.memory_space<vmem>>, %arg4: memref<512x512xbf16, #tpu.memory_space<vmem>>, %arg5: memref<1x512xf32, #tpu.memory_space<vmem>>, %arg6: memref<512x512xbf16, #tpu.memory_space<vmem>>, %arg7: memref<1x512xf32, #tpu.memory_space<vmem>>, %arg8: memref<512x512xbf16, #tpu.memory_space<vmem>>, %arg9: memref<1x512xf32, #tpu.memory_space<vmem>>, %arg10: memref<512x128xbf16, #tpu.memory_space<vmem>>, %arg11: memref<1x128xf32, #tpu.memory_space<vmem>>, %arg12: memref<16x128xbf16, #tpu.memory_space<vmem>>) attributes {dimension_semantics = [#tpu.dimension_semantics<parallel>], iteration_bounds = array<i64: 2>, scalar_prefetch = 0 : i64, scratch_operands = 0 : i64, tpu.core_type = #tpu.core_type<tc>, window_params = [{transform_indices = @transform_0, window_bounds = array<i64: 16, 1024>}, {pipeline_mode = #tpu.pipeline_mode<synchronous>, transform_indices = @transform_1, window_bounds = array<i64: 1024, 512>}, {pipeline_mode = #tpu.pipeline_mode<synchronous>, transform_indices = @transform_2, window_bounds = array<i64: 1, 512>}, {pipeline_mode = #tpu.pipeline_mode<synchronous>, transform_indices = @transform_3, window_bounds = array<i64: 512, 512>}, {pipeline_mode = #tpu.pipeline_mode<synchronous>, transform_indices = @transform_4, window_bounds = array<i64: 1, 512>}, {pipeline_mode = #tpu.pipeline_mode<synchronous>, transform_indices = @transform_5, window_bounds = array<i64: 512, 512>}, {pipeline_mode = #tpu.pipeline_mode<synchronous>, transform_indices = @transform_6, window_bounds = array<i64: 1, 512>}, {pipeline_mode = #tpu.pipeline_mode<synchronous>, transform_indices = @transform_7, window_bounds = array<i64: 512, 512>}, {pipeline_mode = #tpu.pipeline_mode<synchronous>, transform_indices = @transform_8, window_bounds = array<i64: 1, 512>}, {pipeline_mode = #tpu.pipeline_mode<synchronous>, transform_indices = @transform_9, window_bounds = array<i64: 512, 128>}, {pipeline_mode = #tpu.pipeline_mode<synchronous>, transform_indices = @transform_10, window_bounds = array<i64: 1, 128>}, {transform_indices = @transform_11, window_bounds = array<i64: 16, 128>}]} {
    %c0 = arith.constant 0 : index
    %c0_0 = arith.constant 0 : index
    %0 = vector.load %arg1[%c0, %c0_0] : memref<16x1024xbf16, #tpu.memory_space<vmem>>, vector<16x1024xbf16>
    %c0_1 = arith.constant 0 : index
    %c0_2 = arith.constant 0 : index
    %1 = vector.load %arg2[%c0_1, %c0_2] : memref<1024x512xbf16, #tpu.memory_space<vmem>>, vector<1024x512xbf16>
    %cst = arith.constant dense<0.000000e+00> : vector<16x512xf32>
    %2 = tpu.matmul %0, %1, %cst {dimension_numbers = #tpu.dot_dimension_numbers<[1], [0], [0], [1], [0, 0, 1, 1], [], []>} : vector<16x1024xbf16>, vector<1024x512xbf16>, vector<16x512xf32> -> vector<16x512xf32>
    %c0_3 = arith.constant 0 : index
    %c0_4 = arith.constant 0 : index
    %3 = vector.load %arg3[%c0_3, %c0_4] : memref<1x512xf32, #tpu.memory_space<vmem>>, vector<1x512xf32>
    %4 = vector.broadcast %3 : vector<1x512xf32> to vector<16x512xf32>
    %5 = arith.addf %2, %4 : vector<16x512xf32>
    %cst_5 = arith.constant 0.000000e+00 : f32
    %6 = vector.broadcast %cst_5 : f32 to vector<16x512xf32>
    %7 = arith.cmpf oge, %5, %6 : vector<16x512xf32>
    %cst_6 = arith.constant 0.00999999977 : f32
    %8 = vector.broadcast %cst_6 : f32 to vector<16x512xf32>
    %9 = arith.mulf %8, %5 : vector<16x512xf32>
    %10 = arith.select %7, %5, %9 : vector<16x512xi1>, vector<16x512xf32>
    %11 = arith.truncf %10 : vector<16x512xf32> to vector<16x512xbf16>
    %c0_7 = arith.constant 0 : index
    %c0_8 = arith.constant 0 : index
    %12 = vector.load %arg4[%c0_7, %c0_8] : memref<512x512xbf16, #tpu.memory_space<vmem>>, vector<512x512xbf16>
    %cst_9 = arith.constant dense<0.000000e+00> : vector<16x512xf32>
    %13 = tpu.matmul %11, %12, %cst_9 {dimension_numbers = #tpu.dot_dimension_numbers<[1], [0], [0], [1], [0, 0, 1, 1], [], []>} : vector<16x512xbf16>, vector<512x512xbf16>, vector<16x512xf32> -> vector<16x512xf32>
    %c0_10 = arith.constant 0 : index
    %c0_11 = arith.constant 0 : index
    %14 = vector.load %arg5[%c0_10, %c0_11] : memref<1x512xf32, #tpu.memory_space<vmem>>, vector<1x512xf32>
    %15 = vector.broadcast %14 : vector<1x512xf32> to vector<16x512xf32>
    %16 = arith.addf %13, %15 : vector<16x512xf32>
    %cst_12 = arith.constant 0.000000e+00 : f32
    %17 = vector.broadcast %cst_12 : f32 to vector<16x512xf32>
    %18 = arith.cmpf oge, %16, %17 : vector<16x512xf32>
    %cst_13 = arith.constant 0.00999999977 : f32
    %19 = vector.broadcast %cst_13 : f32 to vector<16x512xf32>
    %20 = arith.mulf %19, %16 : vector<16x512xf32>
    %21 = arith.select %18, %16, %20 : vector<16x512xi1>, vector<16x512xf32>
    %22 = arith.truncf %21 : vector<16x512xf32> to vector<16x512xbf16>
    %c0_14 = arith.constant 0 : index
    %c0_15 = arith.constant 0 : index
    %23 = vector.load %arg6[%c0_14, %c0_15] : memref<512x512xbf16, #tpu.memory_space<vmem>>, vector<512x512xbf16>
    %cst_16 = arith.constant dense<0.000000e+00> : vector<16x512xf32>
    %24 = tpu.matmul %22, %23, %cst_16 {dimension_numbers = #tpu.dot_dimension_numbers<[1], [0], [0], [1], [0, 0, 1, 1], [], []>} : vector<16x512xbf16>, vector<512x512xbf16>, vector<16x512xf32> -> vector<16x512xf32>
    %c0_17 = arith.constant 0 : index
    %c0_18 = arith.constant 0 : index
    %25 = vector.load %arg7[%c0_17, %c0_18] : memref<1x512xf32, #tpu.memory_space<vmem>>, vector<1x512xf32>
    %26 = vector.broadcast %25 : vector<1x512xf32> to vector<16x512xf32>
    %27 = arith.addf %24, %26 : vector<16x512xf32>
    %cst_19 = arith.constant 0.000000e+00 : f32
    %28 = vector.broadcast %cst_19 : f32 to vector<16x512xf32>
    %29 = arith.cmpf oge, %27, %28 : vector<16x512xf32>
    %cst_20 = arith.constant 0.00999999977 : f32
    %30 = vector.broadcast %cst_20 : f32 to vector<16x512xf32>
    %31 = arith.mulf %30, %27 : vector<16x512xf32>
    %32 = arith.select %29, %27, %31 : vector<16x512xi1>, vector<16x512xf32>
    %33 = arith.truncf %32 : vector<16x512xf32> to vector<16x512xbf16>
    %c0_21 = arith.constant 0 : index
    %c0_22 = arith.constant 0 : index
    %34 = vector.load %arg8[%c0_21, %c0_22] : memref<512x512xbf16, #tpu.memory_space<vmem>>, vector<512x512xbf16>
    %cst_23 = arith.constant dense<0.000000e+00> : vector<16x512xf32>
    %35 = tpu.matmul %33, %34, %cst_23 {dimension_numbers = #tpu.dot_dimension_numbers<[1], [0], [0], [1], [0, 0, 1, 1], [], []>} : vector<16x512xbf16>, vector<512x512xbf16>, vector<16x512xf32> -> vector<16x512xf32>
    %c0_24 = arith.constant 0 : index
    %c0_25 = arith.constant 0 : index
    %36 = vector.load %arg9[%c0_24, %c0_25] : memref<1x512xf32, #tpu.memory_space<vmem>>, vector<1x512xf32>
    %37 = vector.broadcast %36 : vector<1x512xf32> to vector<16x512xf32>
    %38 = arith.addf %35, %37 : vector<16x512xf32>
    %cst_26 = arith.constant 0.000000e+00 : f32
    %39 = vector.broadcast %cst_26 : f32 to vector<16x512xf32>
    %40 = arith.cmpf oge, %38, %39 : vector<16x512xf32>
    %cst_27 = arith.constant 0.00999999977 : f32
    %41 = vector.broadcast %cst_27 : f32 to vector<16x512xf32>
    %42 = arith.mulf %41, %38 : vector<16x512xf32>
    %43 = arith.select %40, %38, %42 : vector<16x512xi1>, vector<16x512xf32>
    %44 = arith.truncf %43 : vector<16x512xf32> to vector<16x512xbf16>
    %c0_28 = arith.constant 0 : index
    %c0_29 = arith.constant 0 : index
    %45 = vector.load %arg10[%c0_28, %c0_29] : memref<512x128xbf16, #tpu.memory_space<vmem>>, vector<512x128xbf16>
    %cst_30 = arith.constant dense<0.000000e+00> : vector<16x128xf32>
    %46 = tpu.matmul %44, %45, %cst_30 {dimension_numbers = #tpu.dot_dimension_numbers<[1], [0], [0], [1], [0, 0, 1, 1], [], []>} : vector<16x512xbf16>, vector<512x128xbf16>, vector<16x128xf32> -> vector<16x128xf32>
    %c0_31 = arith.constant 0 : index
    %c0_32 = arith.constant 0 : index
    %47 = vector.load %arg11[%c0_31, %c0_32] : memref<1x128xf32, #tpu.memory_space<vmem>>, vector<1x128xf32>
    %48 = vector.broadcast %47 : vector<1x128xf32> to vector<16x128xf32>
    %49 = arith.addf %46, %48 : vector<16x128xf32>
    %50 = arith.truncf %49 : vector<16x128xf32> to vector<16x128xbf16>
    %c0_33 = arith.constant 0 : index
    %c0_34 = arith.constant 0 : index
    %51 = vector.load %arg12[%c0_33, %c0_34] : memref<16x128xbf16, #tpu.memory_space<vmem>>, vector<16x128xbf16>
    tpu.vector_store %arg12[%c0_33, %c0_34], %50 {strides = array<i32>} : memref<16x128xbf16, #tpu.memory_space<vmem>>, vector<16x128xbf16>,
    return
  }
  func.func @transform_0(%arg0: i32) -> (i32, i32) {
    %c0_i32 = arith.constant 0 : i32
    %c0_i32_0 = arith.constant 0 : i32
    return %arg0, %c0_i32 : i32, i32
  }
  func.func @transform_1(%arg0: i32) -> (i32, i32) {
    %c0_i32 = arith.constant 0 : i32
    %c0_i32_0 = arith.constant 0 : i32
    %c0_i32_1 = arith.constant 0 : i32
    return %c0_i32, %c0_i32_0 : i32, i32
  }
  func.func @transform_2(%arg0: i32) -> (i32, i32) {
    %c0_i32 = arith.constant 0 : i32
    %c0_i32_0 = arith.constant 0 : i32
    %c0_i32_1 = arith.constant 0 : i32
    return %c0_i32, %c0_i32_0 : i32, i32
  }
  func.func @transform_3(%arg0: i32) -> (i32, i32) {
    %c0_i32 = arith.constant 0 : i32
    %c0_i32_0 = arith.constant 0 : i32
    %c0_i32_1 = arith.constant 0 : i32
    return %c0_i32, %c0_i32_0 : i32, i32
  }
  func.func @transform_4(%arg0: i32) -> (i32, i32) {
    %c0_i32 = arith.constant 0 : i32
    %c0_i32_0 = arith.constant 0 : i32
    %c0_i32_1 = arith.constant 0 : i32
    return %c0_i32, %c0_i32_0 : i32, i32
  }
  func.func @transform_5(%arg0: i32) -> (i32, i32) {
    %c0_i32 = arith.constant 0 : i32
    %c0_i32_0 = arith.constant 0 : i32
    %c0_i32_1 = arith.constant 0 : i32
    return %c0_i32, %c0_i32_0 : i32, i32
  }
  func.func @transform_6(%arg0: i32) -> (i32, i32) {
    %c0_i32 = arith.constant 0 : i32
    %c0_i32_0 = arith.constant 0 : i32
    %c0_i32_1 = arith.constant 0 : i32
    return %c0_i32, %c0_i32_0 : i32, i32
  }
  func.func @transform_7(%arg0: i32) -> (i32, i32) {
    %c0_i32 = arith.constant 0 : i32
    %c0_i32_0 = arith.constant 0 : i32
    %c0_i32_1 = arith.constant 0 : i32
    return %c0_i32, %c0_i32_0 : i32, i32
  }
  func.func @transform_8(%arg0: i32) -> (i32, i32) {
    %c0_i32 = arith.constant 0 : i32
    %c0_i32_0 = arith.constant 0 : i32
    %c0_i32_1 = arith.constant 0 : i32
    return %c0_i32, %c0_i32_0 : i32, i32
  }
  func.func @transform_9(%arg0: i32) -> (i32, i32) {
    %c0_i32 = arith.constant 0 : i32
    %c0_i32_0 = arith.constant 0 : i32
    %c0_i32_1 = arith.constant 0 : i32
    return %c0_i32, %c0_i32_0 : i32, i32
  }
  func.func @transform_10(%arg0: i32) -> (i32, i32) {
    %c0_i32 = arith.constant 0 : i32
    %c0_i32_0 = arith.constant 0 : i32
    %c0_i32_1 = arith.constant 0 : i32
    return %c0_i32, %c0_i32_0 : i32, i32
  }
  func.func @transform_11(%arg0: i32) -> (i32, i32) {
    %c0_i32 = arith.constant 0 : i32
    %c0_i32_0 = arith.constant 0 : i32
    return %arg0, %c0_i32 : i32, i32
  }
}

module attributes {stable_mosaic.version = 11 : i64} {
  func.func @_mlp_kernel(%arg0: i32, %arg1: memref<16x1024xbf16, #tpu.memory_space<vmem>>, %arg2: memref<1024x512xbf16, #tpu.memory_space<vmem>>, %arg3: memref<1x512xf32, #tpu.memory_space<vmem>>, %arg4: memref<512x512xbf16, #tpu.memory_space<vmem>>, %arg5: memref<1x512xf32, #tpu.memory_space<vmem>>, %arg6: memref<512x512xbf16, #tpu.memory_space<vmem>>, %arg7: memref<1x512xf32, #tpu.memory_space<vmem>>, %arg8: memref<512x512xbf16, #tpu.memory_space<vmem>>, %arg9: memref<1x512xf32, #tpu.memory_space<vmem>>, %arg10: memref<512x128xbf16, #tpu.memory_space<vmem>>, %arg11: memref<1x128xf32, #tpu.memory_space<vmem>>, %arg12: memref<16x128xbf16, #tpu.memory_space<vmem>>) attributes {dimension_semantics = [#tpu.dimension_semantics<parallel>], iteration_bounds = array<i64: 2>, scalar_prefetch = 0 : i64, scratch_operands = 0 : i64, tpu.core_type = #tpu.core_type<tc>, window_params = [{transform_indices = @transform_0, window_bounds = array<i64: 16, 1024>}, {pipeline_mode = #tpu.pipeline_mode<synchronous>, transform_indices = @transform_1, window_bounds = array<i64: 1024, 512>}, {pipeline_mode = #tpu.pipeline_mode<synchronous>, transform_indices = @transform_2, window_bounds = array<i64: 1, 512>}, {pipeline_mode = #tpu.pipeline_mode<synchronous>, transform_indices = @transform_3, window_bounds = array<i64: 512, 512>}, {pipeline_mode = #tpu.pipeline_mode<synchronous>, transform_indices = @transform_4, window_bounds = array<i64: 1, 512>}, {pipeline_mode = #tpu.pipeline_mode<synchronous>, transform_indices = @transform_5, window_bounds = array<i64: 512, 512>}, {pipeline_mode = #tpu.pipeline_mode<synchronous>, transform_indices = @transform_6, window_bounds = array<i64: 1, 512>}, {pipeline_mode = #tpu.pipeline_mode<synchronous>, transform_indices = @transform_7, window_bounds = array<i64: 512, 512>}, {pipeline_mode = #tpu.pipeline_mode<synchronous>, transform_indices = @transform_8, window_bounds = array<i64: 1, 512>}, {pipeline_mode = #tpu.pipeline_mode<synchronous>, transform_indices = @transform_9, window_bounds = array<i64: 512, 128>}, {pipeline_mode = #tpu.pipeline_mode<synchronous>, transform_indices = @transform_10, window_bounds = array<i64: 1, 128>}, {transform_indices = @transform_11, window_bounds = array<i64: 16, 128>}]} {
    %c0 = arith.constant 0 : index
    %c0_0 = arith.constant 0 : index
    %0 = vector.load %arg1[%c0, %c0_0] : memref<16x1024xbf16, #tpu.memory_space<vmem>>, vector<16x1024xbf16>
    %c0_1 = arith.constant 0 : index
    %c0_2 = arith.constant 0 : index
    %1 = vector.load %arg2[%c0_1, %c0_2] : memref<1024x512xbf16, #tpu.memory_space<vmem>>, vector<1024x512xbf16>
    %cst = arith.constant dense<0.000000e+00> : vector<16x512xf32>
    %2 = tpu.matmul %0, %1, %cst {dimension_numbers = #tpu.dot_dimension_numbers<[1], [0], [0], [1], [0, 0, 1, 1], [], []>} : vector<16x1024xbf16>, vector<1024x512xbf16>, vector<16x512xf32> -> vector<16x512xf32>
    %c0_3 = arith.constant 0 : index
    %c0_4 = arith.constant 0 : index
    %3 = vector.load %arg3[%c0_3, %c0_4] : memref<1x512xf32, #tpu.memory_space<vmem>>, vector<1x512xf32>
    %4 = vector.broadcast %3 : vector<1x512xf32> to vector<16x512xf32>
    %5 = arith.addf %2, %4 : vector<16x512xf32>
    %cst_5 = arith.constant 0.000000e+00 : f32
    %6 = vector.broadcast %cst_5 : f32 to vector<16x512xf32>
    %7 = arith.cmpf oge, %5, %6 : vector<16x512xf32>
    %cst_6 = arith.constant 0.00999999977 : f32
    %8 = vector.broadcast %cst_6 : f32 to vector<16x512xf32>
    %9 = arith.mulf %8, %5 : vector<16x512xf32>
    %10 = arith.select %7, %5, %9 : vector<16x512xi1>, vector<16x512xf32>
    %11 = arith.truncf %10 : vector<16x512xf32> to vector<16x512xbf16>
    %c0_7 = arith.constant 0 : index
    %c0_8 = arith.constant 0 : index
    %12 = vector.load %arg4[%c0_7, %c0_8] : memref<512x512xbf16, #tpu.memory_space<vmem>>, vector<512x512xbf16>
    %cst_9 = arith.constant dense<0.000000e+00> : vector<16x512xf32>
    %13 = tpu.matmul %11, %12, %cst_9 {dimension_numbers = #tpu.dot_dimension_numbers<[1], [0], [0], [1], [0, 0, 1, 1], [], []>} : vector<16x512xbf16>, vector<512x512xbf16>, vector<16x512xf32> -> vector<16x512xf32>
    %c0_10 = arith.constant 0 : index
    %c0_11 = arith.constant 0 : index
    %14 = vector.load %arg5[%c0_10, %c0_11] : memref<1x512xf32, #tpu.memory_space<vmem>>, vector<1x512xf32>
    %15 = vector.broadcast %14 : vector<1x512xf32> to vector<16x512xf32>
    %16 = arith.addf %13, %15 : vector<16x512xf32>
    %cst_12 = arith.constant 0.000000e+00 : f32
    %17 = vector.broadcast %cst_12 : f32 to vector<16x512xf32>
    %18 = arith.cmpf oge, %16, %17 : vector<16x512xf32>
    %cst_13 = arith.constant 0.00999999977 : f32
    %19 = vector.broadcast %cst_13 : f32 to vector<16x512xf32>
    %20 = arith.mulf %19, %16 : vector<16x512xf32>
    %21 = arith.select %18, %16, %20 : vector<16x512xi1>, vector<16x512xf32>
    %22 = arith.truncf %21 : vector<16x512xf32> to vector<16x512xbf16>
    %c0_14 = arith.constant 0 : index
    %c0_15 = arith.constant 0 : index
    %23 = vector.load %arg6[%c0_14, %c0_15] : memref<512x512xbf16, #tpu.memory_space<vmem>>, vector<512x512xbf16>
    %cst_16 = arith.constant dense<0.000000e+00> : vector<16x512xf32>
    %24 = tpu.matmul %22, %23, %cst_16 {dimension_numbers = #tpu.dot_dimension_numbers<[1], [0], [0], [1], [0, 0, 1, 1], [], []>} : vector<16x512xbf16>, vector<512x512xbf16>, vector<16x512xf32> -> vector<16x512xf32>
    %c0_17 = arith.constant 0 : index
    %c0_18 = arith.constant 0 : index
    %25 = vector.load %arg7[%c0_17, %c0_18] : memref<1x512xf32, #tpu.memory_space<vmem>>, vector<1x512xf32>
    %26 = vector.broadcast %25 : vector<1x512xf32> to vector<16x512xf32>
    %27 = arith.addf %24, %26 : vector<16x512xf32>
    %cst_19 = arith.constant 0.000000e+00 : f32
    %28 = vector.broadcast %cst_19 : f32 to vector<16x512xf32>
    %29 = arith.cmpf oge, %27, %28 : vector<16x512xf32>
    %cst_20 = arith.constant 0.00999999977 : f32
    %30 = vector.broadcast %cst_20 : f32 to vector<16x512xf32>
    %31 = arith.mulf %30, %27 : vector<16x512xf32>
    %32 = arith.select %29, %27, %31 : vector<16x512xi1>, vector<16x512xf32>
    %33 = arith.truncf %32 : vector<16x512xf32> to vector<16x512xbf16>
    %c0_21 = arith.constant 0 : index
    %c0_22 = arith.constant 0 : index
    %34 = vector.load %arg8[%c0_21, %c0_22] : memref<512x512xbf16, #tpu.memory_space<vmem>>, vector<512x512xbf16>
    %cst_23 = arith.constant dense<0.000000e+00> : vector<16x512xf32>
    %35 = tpu.matmul %33, %34, %cst_23 {dimension_numbers = #tpu.dot_dimension_numbers<[1], [0], [0], [1], [0, 0, 1, 1], [], []>} : vector<16x512xbf16>, vector<512x512xbf16>, vector<16x512xf32> -> vector<16x512xf32>
    %c0_24 = arith.constant 0 : index
    %c0_25 = arith.constant 0 : index
    %36 = vector.load %arg9[%c0_24, %c0_25] : memref<1x512xf32, #tpu.memory_space<vmem>>, vector<1x512xf32>
    %37 = vector.broadcast %36 : vector<1x512xf32> to vector<16x512xf32>
    %38 = arith.addf %35, %37 : vector<16x512xf32>
    %cst_26 = arith.constant 0.000000e+00 : f32
    %39 = vector.broadcast %cst_26 : f32 to vector<16x512xf32>
    %40 = arith.cmpf oge, %38, %39 : vector<16x512xf32>
    %cst_27 = arith.constant 0.00999999977 : f32
    %41 = vector.broadcast %cst_27 : f32 to vector<16x512xf32>
    %42 = arith.mulf %41, %38 : vector<16x512xf32>
    %43 = arith.select %40, %38, %42 : vector<16x512xi1>, vector<16x512xf32>
    %44 = arith.truncf %43 : vector<16x512xf32> to vector<16x512xbf16>
    %c0_28 = arith.constant 0 : index
    %c0_29 = arith.constant 0 : index
    %45 = vector.load %arg10[%c0_28, %c0_29] : memref<512x128xbf16, #tpu.memory_space<vmem>>, vector<512x128xbf16>
    %cst_30 = arith.constant dense<0.000000e+00> : vector<16x128xf32>
    %46 = tpu.matmul %44, %45, %cst_30 {dimension_numbers = #tpu.dot_dimension_numbers<[1], [0], [0], [1], [0, 0, 1, 1], [], []>} : vector<16x512xbf16>, vector<512x128xbf16>, vector<16x128xf32> -> vector<16x128xf32>
    %c0_31 = arith.constant 0 : index
    %c0_32 = arith.constant 0 : index
    %47 = vector.load %arg11[%c0_31, %c0_32] : memref<1x128xf32, #tpu.memory_space<vmem>>, vector<1x128xf32>
    %48 = vector.broadcast %47 : vector<1x128xf32> to vector<16x128xf32>
    %49 = arith.addf %46, %48 : vector<16x128xf32>
    %50 = arith.truncf %49 : vector<16x128xf32> to vector<16x128xbf16>
    %c0_33 = arith.constant 0 : index
    %c0_34 = arith.constant 0 : index
    %51 = vector.load %arg12[%c0_33, %c0_34] : memref<16x128xbf16, #tpu.memory_space<vmem>>, vector<16x128xbf16>
    tpu.vector_store %arg12[%c0_33, %c0_34], %50 {strides = array<i32>} : memref<16x128xbf16, #tpu.memory_space<vmem>>, vector<16x128xbf16>,
    return
  }
  func.func @transform_0(%arg0: i32) -> (i32, i32) {
    %c0_i32 = arith.constant 0 : i32
    %c0_i32_0 = arith.constant 0 : i32
    return %arg0, %c0_i32 : i32, i32
  }
  func.func @transform_1(%arg0: i32) -> (i32, i32) {
    %c0_i32 = arith.constant 0 : i32
    %c0_i32_0 = arith.constant 0 : i32
    %c0_i32_1 = arith.constant 0 : i32
    return %c0_i32, %c0_i32_0 : i32, i32
  }
  func.func @transform_2(%arg0: i32) -> (i32, i32) {
    %c0_i32 = arith.constant 0 : i32
    %c0_i32_0 = arith.constant 0 : i32
    %c0_i32_1 = arith.constant 0 : i32
    return %c0_i32, %c0_i32_0 : i32, i32
  }
  func.func @transform_3(%arg0: i32) -> (i32, i32) {
    %c0_i32 = arith.constant 0 : i32
    %c0_i32_0 = arith.constant 0 : i32
    %c0_i32_1 = arith.constant 0 : i32
    return %c0_i32, %c0_i32_0 : i32, i32
  }
  func.func @transform_4(%arg0: i32) -> (i32, i32) {
    %c0_i32 = arith.constant 0 : i32
    %c0_i32_0 = arith.constant 0 : i32
    %c0_i32_1 = arith.constant 0 : i32
    return %c0_i32, %c0_i32_0 : i32, i32
  }
  func.func @transform_5(%arg0: i32) -> (i32, i32) {
    %c0_i32 = arith.constant 0 : i32
    %c0_i32_0 = arith.constant 0 : i32
    %c0_i32_1 = arith.constant 0 : i32
    return %c0_i32, %c0_i32_0 : i32, i32
  }
  func.func @transform_6(%arg0: i32) -> (i32, i32) {
    %c0_i32 = arith.constant 0 : i32
    %c0_i32_0 = arith.constant 0 : i32
    %c0_i32_1 = arith.constant 0 : i32
    return %c0_i32, %c0_i32_0 : i32, i32
  }
  func.func @transform_7(%arg0: i32) -> (i32, i32) {
    %c0_i32 = arith.constant 0 : i32
    %c0_i32_0 = arith.constant 0 : i32
    %c0_i32_1 = arith.constant 0 : i32
    return %c0_i32, %c0_i32_0 : i32, i32
  }
  func.func @transform_8(%arg0: i32) -> (i32, i32) {
    %c0_i32 = arith.constant 0 : i32
    %c0_i32_0 = arith.constant 0 : i32
    %c0_i32_1 = arith.constant 0 : i32
    return %c0_i32, %c0_i32_0 : i32, i32
  }
  func.func @transform_9(%arg0: i32) -> (i32, i32) {
    %c0_i32 = arith.constant 0 : i32
    %c0_i32_0 = arith.constant 0 : i32
    %c0_i32_1 = arith.constant 0 : i32
    return %c0_i32, %c0_i32_0 : i32, i32
  }
  func.func @transform_10(%arg0: i32) -> (i32, i32) {
    %c0_i32 = arith.constant 0 : i32
    %c0_i32_0 = arith.constant 0 : i32
    %c0_i32_1 = arith.constant 0 : i32
    return %c0_i32, %c0_i32_0 : i32, i32
  }
  func.func @transform_11(%arg0: i32) -> (i32, i32) {
    %c0_i32 = arith.constant 0 : i32
    %c0_i32_0 = arith.constant 0 : i32
    return %arg0, %c0_i32 : i32, i32
  }
}

</mosaic_0001>

<llo_original>
// kernel: tpu_custom_call.1
$region0: #{tpu_custom_call.1}
  #allocation0 [shape = 'u32[]', space=smem, size = 0x4, offset = 0x4, fixed_abs, tag = 'smem constant byte address 0x4 - core index']
  #allocation1 [shape = 'u32[144,128]{1,0:T(1,128)}', space=vmem, size = 0x12000, scoped, tag = 'internal scratch']
  %s0 = inlined_call_operand.hbm [shape: bf16[32,1024], index: 0, kind: input, shape index: {}]
  %s1 = inlined_call_operand.hbm [shape: bf16[1024,512], index: 1, kind: input, shape index: {}]
  %s2 = inlined_call_operand.vmem [shape: f32[1,512], index: 2, kind: input, shape index: {}]
  %s3 = inlined_call_operand.hbm [shape: bf16[512,512], index: 3, kind: input, shape index: {}]
  %s4 = inlined_call_operand.vmem [shape: f32[1,512], index: 4, kind: input, shape index: {}]
  %s5 = inlined_call_operand.hbm [shape: bf16[512,512], index: 5, kind: input, shape index: {}]
  %s6 = inlined_call_operand.vmem [shape: f32[1,512], index: 6, kind: input, shape index: {}]
  %s7 = inlined_call_operand.hbm [shape: bf16[512,512], index: 7, kind: input, shape index: {}]
  %s8 = inlined_call_operand.vmem [shape: f32[1,512], index: 8, kind: input, shape index: {}]
  %s9 = inlined_call_operand.hbm [shape: bf16[512,128], index: 9, kind: input, shape index: {}]
  %s10 = inlined_call_operand.vmem [shape: f32[1,128], index: 10, kind: input, shape index: {}]
  %s11 = inlined_call_operand.hbm [shape: bf16[32,128], index: 11, kind: output, shape index: {}]
  %s12 = sld [smem:[#allocation0]]
  $region101: #{tpu_custom_call.1} parent=0
    _
  %s14 = ssub.s32 1, %s12
  %s15 = scalar_select 0, %s14, %s12
  $region1: #{tpu_custom_call.1} parent=0
    #allocation2 [shape = 'u8[65536]{0}', space=vmem, size = 0x10000, scoped, tag = 'input window, operand 0']
    #allocation3 [shape = 's32[2]{0}', space=sflag, size = 0x8, scoped, tag = 'scoped memory for tpu_custom_call.1']
    #allocation4 [shape = 's32[2]{0}', space=sflag, size = 0x8, scoped, tag = 'scoped memory for tpu_custom_call.1']
    #allocation5 [shape = 'u8[1048576]{0}', space=vmem, size = 0x100000, scoped, tag = 'input window, operand 1, single buffered']
    #allocation6 [shape = 's32[1]{0}', space=sflag, size = 0x4, scoped, tag = 'scoped memory for tpu_custom_call.1']
    #allocation7 [shape = 'u8[524288]{0}', space=vmem, size = 0x80000, scoped, tag = 'input window, operand 3, single buffered']
    #allocation8 [shape = 'u8[524288]{0}', space=vmem, size = 0x80000, scoped, tag = 'input window, operand 5, single buffered']
    #allocation9 [shape = 's32[1]{0}', space=sflag, size = 0x4, scoped, tag = 'scoped memory for tpu_custom_call.1']
    #allocation10 [shape = 'u8[524288]{0}', space=vmem, size = 0x80000, scoped, tag = 'input window, operand 7, single buffered']
    #allocation11 [shape = 'u8[131072]{0}', space=vmem, size = 0x20000, scoped, tag = 'input window, operand 9, single buffered']
    #allocation12 [shape = 's32[1]{0}', space=sflag, size = 0x4, scoped, tag = 'scoped memory for tpu_custom_call.1']
    #allocation13 [shape = 'u8[8192]{0}', space=vmem, size = 0x2000, scoped, tag = 'output window, operand 0']
    %16 = vsyncpa [#allocation3], 0
    %s17 = scalar_lea.sflag [#allocation3], 1
    %18 = vsyncpa %s17, 0
    %19 = vsyncpa [#allocation6], 0
    %20 = vsyncpa [#allocation9], 0
    %21 = vsyncpa [#allocation12], 0
    %22 = vsyncpa [#allocation4], 0
    %s23 = scalar_lea.sflag [#allocation4], 1
    %24 = vsyncpa %s23, 0
    loop: start=0, step=1, limit=4
    $region2: #{tpu_custom_call.1} parent=1 // loop_pre_header
      _
    $region3: #{tpu_custom_call.1} parent=1 // loop_header
      %s26 = sphi 0, %s30
      %p27 = scmp.ge.s32.totalorder %s26, 4
      %s36 = sphi 0, %s38
      %s39 = sphi 0, %s36
      %s40 = sphi 0, %s39
      %s56 = sphi 0, %s40
      %s60 = sphi 0, %s60
      %s62 = sphi 0, %s60
      %s63 = sphi 0, %s62
      %s77 = sphi 0, %s63
      %s81 = sphi 0, %s81
      %s83 = sphi 0, %s81
      %s84 = sphi 0, %s83
      %s98 = sphi 0, %s84
      %s102 = sphi 0, %s102
      %s104 = sphi 0, %s102
      %s105 = sphi 0, %s104
      %s119 = sphi 0, %s105
      %s123 = sphi 0, %s123
      %s125 = sphi 0, %s123
      %s126 = sphi 0, %s125
      %s140 = sphi 0, %s126
      %s144 = sphi 0, %s144
      %s146 = sphi 0, %s144
      %s147 = sphi 0, %s146
      %s161 = sphi 0, %s147
      %s165 = sphi 0, %s165
      %s167 = sphi 0, %s165
      %s168 = sphi 0, %s167
      %s182 = sphi 0, %s168
      %s186 = sphi 0, %s186
      %s188 = sphi 0, %s186
      %s189 = sphi 0, %s188
      %s203 = sphi 0, %s189
      %s207 = sphi 0, %s207
      %s209 = sphi 0, %s207
      %s210 = sphi 0, %s209
      %s224 = sphi 0, %s210
      %s228 = sphi 0, %s228
      %s230 = sphi 0, %s228
      %s231 = sphi 0, %s230
      %s245 = sphi 0, %s231
      %s249 = sphi 0, %s249
      %s251 = sphi 0, %s249
      %s252 = sphi 0, %s251
      %s266 = sphi 0, %s252
      %s272 = sphi 0, %s274
      %s275 = sphi 0, %s272
      %s276 = sphi 0, %s275
      %s292 = sphi 0, %s276
    $region4: #{tpu_custom_call.1} parent=1 // loop_header_branch
      %29 = sbr.rel (%p27) target = $region8
    $region5: #{tpu_custom_call.1} parent=1 // loop_body
      %s31 = ssub.s32 %s26, 1
      %s32 = ssub.s32 %s26, 2
      %s33 = sadd.s32 %s26, 1
      %s34 = ssub.s32 %s26, %s33
      %p35 = scmp.eq.s32.totalorder %s34, 0
      %s37 = sadd.s32 %s36, 1
      %s38 = scalar_select %p35, %s36, %s37
      %p41 = pneg %p35
      %p42 = scmp.eq.s32.totalorder %s26, 1
      %p43 = por %p41, %p42
      %p44 = scmp.ne.s32.totalorder %s36, %s39
      %p45 = scmp.eq.s32.totalorder %s26, 0
      %p46 = por %p44, %p45
      %p47 = scmp.ne.s32.totalorder %s36, %s39
      %p48 = scmp.eq.s32.totalorder %s31, 1
      %p49 = por %p47, %p48
      %p50 = scmp.ne.s32.totalorder %s39, %s40
      %p51 = scmp.eq.s32.totalorder %s31, 0
      %p52 = por %p50, %p51
      %p53 = scmp.ne.s32.totalorder %s39, %s40
      %p54 = scmp.eq.s32.totalorder %s32, 1
      %p55 = por %p53, %p54
      %p57 = scmp.ne.s32.totalorder %s40, %s56
      %p58 = scmp.eq.s32.totalorder %s32, 0
      %p59 = por %p57, %p58
      %s61 = sadd.s32 %s60, 1
      %p64 = scmp.eq.s32.totalorder %s26, 1
      %p65 = scmp.ne.s32.totalorder %s60, %s62
      %p66 = scmp.eq.s32.totalorder %s26, 0
      %p67 = por %p65, %p66
      %p68 = scmp.ne.s32.totalorder %s60, %s62
      %p69 = scmp.eq.s32.totalorder %s31, 1
      %p70 = por %p68, %p69
      %p71 = scmp.ne.s32.totalorder %s62, %s63
      %p72 = scmp.eq.s32.totalorder %s31, 0
      %p73 = por %p71, %p72
      %p74 = scmp.ne.s32.totalorder %s62, %s63
      %p75 = scmp.eq.s32.totalorder %s32, 1
      %p76 = por %p74, %p75
      %p78 = scmp.ne.s32.totalorder %s63, %s77
      %p79 = scmp.eq.s32.totalorder %s32, 0
      %p80 = por %p78, %p79
      %s82 = sadd.s32 %s81, 1
      %p85 = scmp.eq.s32.totalorder %s26, 1
      %p86 = scmp.ne.s32.totalorder %s81, %s83
      %p87 = scmp.eq.s32.totalorder %s26, 0
      %p88 = por %p86, %p87
      %p89 = scmp.ne.s32.totalorder %s81, %s83
      %p90 = scmp.eq.s32.totalorder %s31, 1
      %p91 = por %p89, %p90
      %p92 = scmp.ne.s32.totalorder %s83, %s84
      %p93 = scmp.eq.s32.totalorder %s31, 0
      %p94 = por %p92, %p93
      %p95 = scmp.ne.s32.totalorder %s83, %s84
      %p96 = scmp.eq.s32.totalorder %s32, 1
      %p97 = por %p95, %p96
      %p99 = scmp.ne.s32.totalorder %s84, %s98
      %p100 = scmp.eq.s32.totalorder %s32, 0
      %p101 = por %p99, %p100
      %s103 = sadd.s32 %s102, 1
      %p106 = scmp.eq.s32.totalorder %s26, 1
      %p107 = scmp.ne.s32.totalorder %s102, %s104
      %p108 = scmp.eq.s32.totalorder %s26, 0
      %p109 = por %p107, %p108
      %p110 = scmp.ne.s32.totalorder %s102, %s104
      %p111 = scmp.eq.s32.totalorder %s31, 1
      %p112 = por %p110, %p111
      %p113 = scmp.ne.s32.totalorder %s104, %s105
      %p114 = scmp.eq.s32.totalorder %s31, 0
      %p115 = por %p113, %p114
      %p116 = scmp.ne.s32.totalorder %s104, %s105
      %p117 = scmp.eq.s32.totalorder %s32, 1
      %p118 = por %p116, %p117
      %p120 = scmp.ne.s32.totalorder %s105, %s119
      %p121 = scmp.eq.s32.totalorder %s32, 0
      %p122 = por %p120, %p121
      %s124 = sadd.s32 %s123, 1
      %p127 = scmp.eq.s32.totalorder %s26, 1
      %p128 = scmp.ne.s32.totalorder %s123, %s125
      %p129 = scmp.eq.s32.totalorder %s26, 0
      %p130 = por %p128, %p129
      %p131 = scmp.ne.s32.totalorder %s123, %s125
      %p132 = scmp.eq.s32.totalorder %s31, 1
      %p133 = por %p131, %p132
      %p134 = scmp.ne.s32.totalorder %s125, %s126
      %p135 = scmp.eq.s32.totalorder %s31, 0
      %p136 = por %p134, %p135
      %p137 = scmp.ne.s32.totalorder %s125, %s126
      %p138 = scmp.eq.s32.totalorder %s32, 1
      %p139 = por %p137, %p138
      %p141 = scmp.ne.s32.totalorder %s126, %s140
      %p142 = scmp.eq.s32.totalorder %s32, 0
      %p143 = por %p141, %p142
      %s145 = sadd.s32 %s144, 1
      %p148 = scmp.eq.s32.totalorder %s26, 1
      %p149 = scmp.ne.s32.totalorder %s144, %s146
      %p150 = scmp.eq.s32.totalorder %s26, 0
      %p151 = por %p149, %p150
      %p152 = scmp.ne.s32.totalorder %s144, %s146
      %p153 = scmp.eq.s32.totalorder %s31, 1
      %p154 = por %p152, %p153
      %p155 = scmp.ne.s32.totalorder %s146, %s147
      %p156 = scmp.eq.s32.totalorder %s31, 0
      %p157 = por %p155, %p156
      %p158 = scmp.ne.s32.totalorder %s146, %s147
      %p159 = scmp.eq.s32.totalorder %s32, 1
      %p160 = por %p158, %p159
      %p162 = scmp.ne.s32.totalorder %s147, %s161
      %p163 = scmp.eq.s32.totalorder %s32, 0
      %p164 = por %p162, %p163
      %s166 = sadd.s32 %s165, 1
      %p169 = scmp.eq.s32.totalorder %s26, 1
      %p170 = scmp.ne.s32.totalorder %s165, %s167
      %p171 = scmp.eq.s32.totalorder %s26, 0
      %p172 = por %p170, %p171
      %p173 = scmp.ne.s32.totalorder %s165, %s167
      %p174 = scmp.eq.s32.totalorder %s31, 1
      %p175 = por %p173, %p174
      %p176 = scmp.ne.s32.totalorder %s167, %s168
      %p177 = scmp.eq.s32.totalorder %s31, 0
      %p178 = por %p176, %p177
      %p179 = scmp.ne.s32.totalorder %s167, %s168
      %p180 = scmp.eq.s32.totalorder %s32, 1
      %p181 = por %p179, %p180
      %p183 = scmp.ne.s32.totalorder %s168, %s182
      %p184 = scmp.eq.s32.totalorder %s32, 0
      %p185 = por %p183, %p184
      %s187 = sadd.s32 %s186, 1
      %p190 = scmp.eq.s32.totalorder %s26, 1
      %p191 = scmp.ne.s32.totalorder %s186, %s188
      %p192 = scmp.eq.s32.totalorder %s26, 0
      %p193 = por %p191, %p192
      %p194 = scmp.ne.s32.totalorder %s186, %s188
      %p195 = scmp.eq.s32.totalorder %s31, 1
      %p196 = por %p194, %p195
      %p197 = scmp.ne.s32.totalorder %s188, %s189
      %p198 = scmp.eq.s32.totalorder %s31, 0
      %p199 = por %p197, %p198
      %p200 = scmp.ne.s32.totalorder %s188, %s189
      %p201 = scmp.eq.s32.totalorder %s32, 1
      %p202 = por %p200, %p201
      %p204 = scmp.ne.s32.totalorder %s189, %s203
      %p205 = scmp.eq.s32.totalorder %s32, 0
      %p206 = por %p204, %p205
      %s208 = sadd.s32 %s207, 1
      %p211 = scmp.eq.s32.totalorder %s26, 1
      %p212 = scmp.ne.s32.totalorder %s207, %s209
      %p213 = scmp.eq.s32.totalorder %s26, 0
      %p214 = por %p212, %p213
      %p215 = scmp.ne.s32.totalorder %s207, %s209
      %p216 = scmp.eq.s32.totalorder %s31, 1
      %p217 = por %p215, %p216
      %p218 = scmp.ne.s32.totalorder %s209, %s210
      %p219 = scmp.eq.s32.totalorder %s31, 0
      %p220 = por %p218, %p219
      %p221 = scmp.ne.s32.totalorder %s209, %s210
      %p222 = scmp.eq.s32.totalorder %s32, 1
      %p223 = por %p221, %p222
      %p225 = scmp.ne.s32.totalorder %s210, %s224
      %p226 = scmp.eq.s32.totalorder %s32, 0
      %p227 = por %p225, %p226
      %s229 = sadd.s32 %s228, 1
      %p232 = scmp.eq.s32.totalorder %s26, 1
      %p233 = scmp.ne.s32.totalorder %s228, %s230
      %p234 = scmp.eq.s32.totalorder %s26, 0
      %p235 = por %p233, %p234
      %p236 = scmp.ne.s32.totalorder %s228, %s230
      %p237 = scmp.eq.s32.totalorder %s31, 1
      %p238 = por %p236, %p237
      %p239 = scmp.ne.s32.totalorder %s230, %s231
      %p240 = scmp.eq.s32.totalorder %s31, 0
      %p241 = por %p239, %p240
      %p242 = scmp.ne.s32.totalorder %s230, %s231
      %p243 = scmp.eq.s32.totalorder %s32, 1
      %p244 = por %p242, %p243
      %p246 = scmp.ne.s32.totalorder %s231, %s245
      %p247 = scmp.eq.s32.totalorder %s32, 0
      %p248 = por %p246, %p247
      %s250 = sadd.s32 %s249, 1
      %p253 = scmp.eq.s32.totalorder %s26, 1
      %p254 = scmp.ne.s32.totalorder %s249, %s251
      %p255 = scmp.eq.s32.totalorder %s26, 0
      %p256 = por %p254, %p255
      %p257 = scmp.ne.s32.totalorder %s249, %s251
      %p258 = scmp.eq.s32.totalorder %s31, 1
      %p259 = por %p257, %p258
      %p260 = scmp.ne.s32.totalorder %s251, %s252
      %p261 = scmp.eq.s32.totalorder %s31, 0
      %p262 = por %p260, %p261
      %p263 = scmp.ne.s32.totalorder %s251, %s252
      %p264 = scmp.eq.s32.totalorder %s32, 1
      %p265 = por %p263, %p264
      %p267 = scmp.ne.s32.totalorder %s252, %s266
      %p268 = scmp.eq.s32.totalorder %s32, 0
      %p269 = por %p267, %p268
      %s270 = ssub.s32 %s26, %s33
      %p271 = scmp.eq.s32.totalorder %s270, 0
      %s273 = sadd.s32 %s272, 1
      %s274 = scalar_select %p271, %s272, %s273
      %p277 = pneg %p271
      %p278 = scmp.eq.s32.totalorder %s26, 1
      %p279 = por %p277, %p278
      %p280 = scmp.ne.s32.totalorder %s272, %s275
      %p281 = scmp.eq.s32.totalorder %s26, 0
      %p282 = por %p280, %p281
      %p283 = scmp.ne.s32.totalorder %s272, %s275
      %p284 = scmp.eq.s32.totalorder %s31, 1
      %p285 = por %p283, %p284
      %p286 = scmp.ne.s32.totalorder %s275, %s276
      %p287 = scmp.eq.s32.totalorder %s31, 0
      %p288 = por %p286, %p287
      %p289 = scmp.ne.s32.totalorder %s275, %s276
      %p290 = scmp.eq.s32.totalorder %s32, 1
      %p291 = por %p289, %p290
      %p293 = scmp.ne.s32.totalorder %s276, %s292
      %p294 = scmp.eq.s32.totalorder %s32, 0
      %p295 = por %p293, %p294
      %p296 = scmp.le.s32.totalorder 1, %s26
      %p297 = scmp.lt.s32.totalorder %s26, 3
      %p298 = pnand %p296, %p297
      %p299 = pneg %p298
      // Predicated region
      $region9: #{tpu_custom_call.1} parent=5 // pred_check
        _
      $region10: #{tpu_custom_call.1} parent=5 // pred_check_branch
        %301 = sbr.rel (%p298) target = $region12
      $region11: #{tpu_custom_call.1} parent=5 // pred_region
        %s302 = ssub.s32 %s26, 1
        // Predicated region
        $region13: #{tpu_custom_call.1} parent=11 // pred_check
          %p303 = pneg %p73
        $region14: #{tpu_custom_call.1} parent=11 // pred_check_branch
          %305 = sbr.rel (%p303) target = $region16
        $region15: #{tpu_custom_call.1} parent=11 // pred_region
          %s307 = ssub.s32 32768, 32768
          %308 = vsyncadd [#allocation6], %s307
          %s309 = sshll.u32 [#allocation5], 4
          %s310 = int_to_ptr.vmem [resolvable:$true] %s309
          %315 = dma.hbm_to_vmem [thread:$0]  %s1, 32768, %s310, [#allocation6], 256, 256, 16
        $region16: #{tpu_custom_call.1} parent=11 // pred_fallthru
          _
        // Predicated region
        $region17: #{tpu_custom_call.1} parent=11 // pred_check
          %p316 = pneg %p94
        $region18: #{tpu_custom_call.1} parent=11 // pred_check_branch
          %318 = sbr.rel (%p316) target = $region20
        $region19: #{tpu_custom_call.1} parent=11 // pred_region
          _
        $region20: #{tpu_custom_call.1} parent=11 // pred_fallthru
          _
        // Predicated region
        $region21: #{tpu_custom_call.1} parent=11 // pred_check
          %p319 = pneg %p115
        $region22: #{tpu_custom_call.1} parent=11 // pred_check_branch
          %321 = sbr.rel (%p319) target = $region24
        $region23: #{tpu_custom_call.1} parent=11 // pred_region
          %s323 = ssub.s32 16384, 16384
          %324 = vsyncadd [#allocation6], %s323
          %s325 = sshll.u32 [#allocation7], 4
          %s326 = int_to_ptr.vmem [resolvable:$true] %s325
          %331 = dma.hbm_to_vmem [thread:$0]  %s3, 16384, %s326, [#allocation6], 256, 256, 16
        $region24: #{tpu_custom_call.1} parent=11 // pred_fallthru
          _
        // Predicated region
        $region25: #{tpu_custom_call.1} parent=11 // pred_check
          %p332 = pneg %p136
        $region26: #{tpu_custom_call.1} parent=11 // pred_check_branch
          %334 = sbr.rel (%p332) target = $region28
        $region27: #{tpu_custom_call.1} parent=11 // pred_region
          _
        $region28: #{tpu_custom_call.1} parent=11 // pred_fallthru
          _
        // Predicated region
        $region29: #{tpu_custom_call.1} parent=11 // pred_check
          %p335 = pneg %p157
        $region30: #{tpu_custom_call.1} parent=11 // pred_check_branch
          %337 = sbr.rel (%p335) target = $region32
        $region31: #{tpu_custom_call.1} parent=11 // pred_region
          %s339 = ssub.s32 16384, 16384
          %340 = vsyncadd [#allocation9], %s339
          %s341 = sshll.u32 [#allocation8], 4
          %s342 = int_to_ptr.vmem [resolvable:$true] %s341
          %347 = dma.hbm_to_vmem [thread:$0]  %s5, 16384, %s342, [#allocation9], 256, 256, 16
        $region32: #{tpu_custom_call.1} parent=11 // pred_fallthru
          _
        // Predicated region
        $region33: #{tpu_custom_call.1} parent=11 // pred_check
          %p348 = pneg %p178
        $region34: #{tpu_custom_call.1} parent=11 // pred_check_branch
          %350 = sbr.rel (%p348) target = $region36
        $region35: #{tpu_custom_call.1} parent=11 // pred_region
          _
        $region36: #{tpu_custom_call.1} parent=11 // pred_fallthru
          _
        // Predicated region
        $region37: #{tpu_custom_call.1} parent=11 // pred_check
          %p351 = pneg %p199
        $region38: #{tpu_custom_call.1} parent=11 // pred_check_branch
          %353 = sbr.rel (%p351) target = $region40
        $region39: #{tpu_custom_call.1} parent=11 // pred_region
          %s355 = ssub.s32 16384, 16384
          %356 = vsyncadd [#allocation9], %s355
          %s357 = sshll.u32 [#allocation10], 4
          %s358 = int_to_ptr.vmem [resolvable:$true] %s357
          %363 = dma.hbm_to_vmem [thread:$0]  %s7, 16384, %s358, [#allocation9], 256, 256, 16
        $region40: #{tpu_custom_call.1} parent=11 // pred_fallthru
          _
        // Predicated region
        $region41: #{tpu_custom_call.1} parent=11 // pred_check
          %p364 = pneg %p220
        $region42: #{tpu_custom_call.1} parent=11 // pred_check_branch
          %366 = sbr.rel (%p364) target = $region44
        $region43: #{tpu_custom_call.1} parent=11 // pred_region
          _
        $region44: #{tpu_custom_call.1} parent=11 // pred_fallthru
          _
        // Predicated region
        $region45: #{tpu_custom_call.1} parent=11 // pred_check
          %p367 = pneg %p241
        $region46: #{tpu_custom_call.1} parent=11 // pred_check_branch
          %369 = sbr.rel (%p367) target = $region48
        $region47: #{tpu_custom_call.1} parent=11 // pred_region
          %s371 = ssub.s32 4096, 4096
          %372 = vsyncadd [#allocation12], %s371
          %s373 = sshll.u32 [#allocation11], 4
          %s374 = int_to_ptr.vmem [resolvable:$true] %s373
          %379 = dma.hbm_to_vmem [thread:$0]  %s9, 4096, %s374, [#allocation12], 64, 64, 4
        $region48: #{tpu_custom_call.1} parent=11 // pred_fallthru
          _
        // Predicated region
        $region49: #{tpu_custom_call.1} parent=11 // pred_check
          %p380 = pneg %p262
        $region50: #{tpu_custom_call.1} parent=11 // pred_check_branch
          %382 = sbr.rel (%p380) target = $region52
        $region51: #{tpu_custom_call.1} parent=11 // pred_region
          _
        $region52: #{tpu_custom_call.1} parent=11 // pred_fallthru
          _
      $region12: #{tpu_custom_call.1} parent=5 // pred_fallthru
        _
      %p383 = scmp.lt.s32.totalorder %s26, 2
      // Predicated region
      $region53: #{tpu_custom_call.1} parent=5 // pred_check
        %p384 = pneg %p383
      $region54: #{tpu_custom_call.1} parent=5 // pred_check_branch
        %386 = sbr.rel (%p384) target = $region56
      $region55: #{tpu_custom_call.1} parent=5 // pred_region
        // Predicated region
        $region57: #{tpu_custom_call.1} parent=55 // pred_check
          %p387 = pneg %p46
        $region58: #{tpu_custom_call.1} parent=55 // pred_check_branch
          %389 = sbr.rel (%p387) target = $region60
        $region59: #{tpu_custom_call.1} parent=55 // pred_region
          %s390 = sand.u32 %s36, 1
          %s391 = scalar_lea.sflag [#allocation3], %s390
          %s392 = sand.u32 %s36, 1
          %s393 = smul.addr %s392, 64
          %s394 = scalar_lea.vmem [#allocation2], %s393
          %s395 = smul.u32 2, %s26
          %s397 = ssub.s32 1024, 1024
          %398 = vsyncadd %s391, %s397
          %s399 = smul.addr %s395, 8
          %s400 = smul.addr %s399, 64
          %s401 = scalar_lea.hbm %s0, %s400
          %s402 = sshll.u32 %s394, 4
          %s403 = int_to_ptr.vmem [resolvable:$true] %s402
          %408 = dma.hbm_to_vmem [thread:$0]  %s401, 1024, %s403, %s391, 512, 512, 32
        $region60: #{tpu_custom_call.1} parent=55 // pred_fallthru
          _
      $region56: #{tpu_custom_call.1} parent=5 // pred_fallthru
        _
      %p409 = scmp.le.s32.totalorder 1, %s26
      %p410 = scmp.lt.s32.totalorder %s26, 3
      %p411 = pnand %p409, %p410
      %p412 = pneg %p411
      // Predicated region
      $region61: #{tpu_custom_call.1} parent=5 // pred_check
        _
      $region62: #{tpu_custom_call.1} parent=5 // pred_check_branch
        %414 = sbr.rel (%p411) target = $region64
      $region63: #{tpu_custom_call.1} parent=5 // pred_region
        %s415 = ssub.s32 %s26, 1
        %s416 = sand.u32 %s39, 1
        %s417 = scalar_lea.sflag [#allocation3], %s416
        %s418 = sand.u32 %s39, 1
        %s419 = smul.addr %s418, 64
        %s420 = scalar_lea.vmem [#allocation2], %s419
        // Predicated region
        $region65: #{tpu_custom_call.1} parent=63 // pred_check
          %p421 = pneg %p52
        $region66: #{tpu_custom_call.1} parent=63 // pred_check_branch
          %423 = sbr.rel (%p421) target = $region68
        $region67: #{tpu_custom_call.1} parent=63 // pred_region
          %424 = dma.done %s417, 1024
        $region68: #{tpu_custom_call.1} parent=63 // pred_fallthru
          _
        // Predicated region
        $region69: #{tpu_custom_call.1} parent=63 // pred_check
          %p425 = pneg %p73
        $region70: #{tpu_custom_call.1} parent=63 // pred_check_branch
          %427 = sbr.rel (%p425) target = $region72
        $region71: #{tpu_custom_call.1} parent=63 // pred_region
          %428 = dma.done [#allocation6], 32768
        $region72: #{tpu_custom_call.1} parent=63 // pred_fallthru
          _
        // Predicated region
        $region73: #{tpu_custom_call.1} parent=63 // pred_check
          %p429 = pneg %p115
        $region74: #{tpu_custom_call.1} parent=63 // pred_check_branch
          %431 = sbr.rel (%p429) target = $region76
        $region75: #{tpu_custom_call.1} parent=63 // pred_region
          %432 = dma.done [#allocation6], 16384
        $region76: #{tpu_custom_call.1} parent=63 // pred_fallthru
          _
        // Predicated region
        $region77: #{tpu_custom_call.1} parent=63 // pred_check
          %p433 = pneg %p157
        $region78: #{tpu_custom_call.1} parent=63 // pred_check_branch
          %435 = sbr.rel (%p433) target = $region80
        $region79: #{tpu_custom_call.1} parent=63 // pred_region
          %436 = dma.done [#allocation9], 16384
        $region80: #{tpu_custom_call.1} parent=63 // pred_fallthru
          _
        // Predicated region
        $region81: #{tpu_custom_call.1} parent=63 // pred_check
          %p437 = pneg %p199
        $region82: #{tpu_custom_call.1} parent=63 // pred_check_branch
          %439 = sbr.rel (%p437) target = $region84
        $region83: #{tpu_custom_call.1} parent=63 // pred_region
          %440 = dma.done [#allocation9], 16384
        $region84: #{tpu_custom_call.1} parent=63 // pred_fallthru
          _
        // Predicated region
        $region85: #{tpu_custom_call.1} parent=63 // pred_check
          %p441 = pneg %p241
        $region86: #{tpu_custom_call.1} parent=63 // pred_check_branch
          %443 = sbr.rel (%p441) target = $region88
        $region87: #{tpu_custom_call.1} parent=63 // pred_region
          %444 = dma.done [#allocation12], 4096
        $region88: #{tpu_custom_call.1} parent=63 // pred_fallthru
          _
        %s445 = sand.u32 %s39, 1
        %s446 = scalar_lea.sflag [#allocation3], %s445
        %s447 = sand.u32 %s39, 1
        %s448 = smul.addr %s447, 64
        %s449 = scalar_lea.vmem [#allocation2], %s448
        %p450 = pneg %p52
        %p451 = pneg %p49
        %p452 = pneg %p73
        %p453 = pneg %p70
        %p454 = pneg %p94
        %p455 = pneg %p91
        %p456 = pneg %p115
        %p457 = pneg %p112
        %p458 = pneg %p136
        %p459 = pneg %p133
        %p460 = pneg %p157
        %p461 = pneg %p154
        %p462 = pneg %p178
        %p463 = pneg %p175
        %p464 = pneg %p199
        %p465 = pneg %p196
        %p466 = pneg %p220
        %p467 = pneg %p217
        %p468 = pneg %p241
        %p469 = pneg %p238
        %p470 = pneg %p262
        %p471 = pneg %p259
        %p472 = pneg %p288
        %p473 = pneg %p285
        %s474 = sand.u32 %s275, 1
        %s475 = scalar_lea.sflag [#allocation4], %s474
        %s476 = sand.u32 %s275, 1
        %s477 = smul.addr %s476, 8
        %s478 = scalar_lea.vmem [#allocation13], %s477
        %s479 = smul.u32 2, %s31
        %s480 = smul.u32 2, %s31
        %v482 = vld [vmem:[%s420] sm:$0xff]
        %v483 = vld [vmem:[%s420 + $0x8] sm:$0xff]
        %v484 = vld [vmem:[%s420 + $0x10] sm:$0xff]
        %v485 = vld [vmem:[%s420 + $0x18] sm:$0xff]
        %v486 = vld [vmem:[%s420 + $0x20] sm:$0xff]
        %v487 = vld [vmem:[%s420 + $0x28] sm:$0xff]
        %v488 = vld [vmem:[%s420 + $0x30] sm:$0xff]
        %v489 = vld [vmem:[%s420 + $0x38] sm:$0xff]
        %v490 = vld [vmem:[#allocation5] sm:$0xff]
        %v491 = vld [vmem:[#allocation5 + $0x8] sm:$0xff]
        %v492 = vld [vmem:[#allocation5 + $0x10] sm:$0xff]
        %v493 = vld [vmem:[#allocation5 + $0x18] sm:$0xff]
        %v494 = vld [vmem:[#allocation5 + $0x20] sm:$0xff]
        %v495 = vld [vmem:[#allocation5 + $0x28] sm:$0xff]
        %v496 = vld [vmem:[#allocation5 + $0x30] sm:$0xff]
        %v497 = vld [vmem:[#allocation5 + $0x38] sm:$0xff]
        %v498 = vld [vmem:[#allocation5 + $0x40] sm:$0xff]
        %v499 = vld [vmem:[#allocation5 + $0x48] sm:$0xff]
        %v500 = vld [vmem:[#allocation5 + $0x50] sm:$0xff]
        %v501 = vld [vmem:[#allocation5 + $0x58] sm:$0xff]
        %v502 = vld [vmem:[#allocation5 + $0x60] sm:$0xff]
        %v503 = vld [vmem:[#allocation5 + $0x68] sm:$0xff]
        %v504 = vld [vmem:[#allocation5 + $0x70] sm:$0xff]
        %v505 = vld [vmem:[#allocation5 + $0x78] sm:$0xff]
        %v506 = vld [vmem:[#allocation5 + $0x80] sm:$0xff]
        %v507 = vld [vmem:[#allocation5 + $0x88] sm:$0xff]
        %v508 = vld [vmem:[#allocation5 + $0x90] sm:$0xff]
        %v509 = vld [vmem:[#allocation5 + $0x98] sm:$0xff]
        %v510 = vld [vmem:[#allocation5 + $0xa0] sm:$0xff]
        %v511 = vld [vmem:[#allocation5 + $0xa8] sm:$0xff]
        %v512 = vld [vmem:[#allocation5 + $0xb0] sm:$0xff]
        %v513 = vld [vmem:[#allocation5 + $0xb8] sm:$0xff]
        %v514 = vld [vmem:[#allocation5 + $0xc0] sm:$0xff]
        %v515 = vld [vmem:[#allocation5 + $0xc8] sm:$0xff]
        %v516 = vld [vmem:[#allocation5 + $0xd0] sm:$0xff]
        %v517 = vld [vmem:[#allocation5 + $0xd8] sm:$0xff]
        %v518 = vld [vmem:[#allocation5 + $0xe0] sm:$0xff]
        %v519 = vld [vmem:[#allocation5 + $0xe8] sm:$0xff]
        %v520 = vld [vmem:[#allocation5 + $0xf0] sm:$0xff]
        %v521 = vld [vmem:[#allocation5 + $0xf8] sm:$0xff]
        %v522 = vld [vmem:[#allocation5 + $0x100] sm:$0xff]
        %v523 = vld [vmem:[#allocation5 + $0x108] sm:$0xff]
        %v524 = vld [vmem:[#allocation5 + $0x110] sm:$0xff]
        %v525 = vld [vmem:[#allocation5 + $0x118] sm:$0xff]
        %v526 = vld [vmem:[#allocation5 + $0x120] sm:$0xff]
        %v527 = vld [vmem:[#allocation5 + $0x128] sm:$0xff]
        %v528 = vld [vmem:[#allocation5 + $0x130] sm:$0xff]
        %v529 = vld [vmem:[#allocation5 + $0x138] sm:$0xff]
        %v530 = vld [vmem:[#allocation5 + $0x140] sm:$0xff]
        %v531 = vld [vmem:[#allocation5 + $0x148] sm:$0xff]
        %v532 = vld [vmem:[#allocation5 + $0x150] sm:$0xff]
        %v533 = vld [vmem:[#allocation5 + $0x158] sm:$0xff]
        %v534 = vld [vmem:[#allocation5 + $0x160] sm:$0xff]
        %v535 = vld [vmem:[#allocation5 + $0x168] sm:$0xff]
        %v536 = vld [vmem:[#allocation5 + $0x170] sm:$0xff]
        %v537 = vld [vmem:[#allocation5 + $0x178] sm:$0xff]
        %v538 = vld [vmem:[#allocation5 + $0x180] sm:$0xff]
        %v539 = vld [vmem:[#allocation5 + $0x188] sm:$0xff]
        %v540 = vld [vmem:[#allocation5 + $0x190] sm:$0xff]
        %v541 = vld [vmem:[#allocation5 + $0x198] sm:$0xff]
        %v542 = vld [vmem:[#allocation5 + $0x1a0] sm:$0xff]
        %v543 = vld [vmem:[#allocation5 + $0x1a8] sm:$0xff]
        %v544 = vld [vmem:[#allocation5 + $0x1b0] sm:$0xff]
        %v545 = vld [vmem:[#allocation5 + $0x1b8] sm:$0xff]
        %v546 = vld [vmem:[#allocation5 + $0x1c0] sm:$0xff]
        %v547 = vld [vmem:[#allocation5 + $0x1c8] sm:$0xff]
        %v548 = vld [vmem:[#allocation5 + $0x1d0] sm:$0xff]
        %v549 = vld [vmem:[#allocation5 + $0x1d8] sm:$0xff]
        %v550 = vld [vmem:[#allocation5 + $0x1e0] sm:$0xff]
        %v551 = vld [vmem:[#allocation5 + $0x1e8] sm:$0xff]
        %v552 = vld [vmem:[#allocation5 + $0x1f0] sm:$0xff]
        %v553 = vld [vmem:[#allocation5 + $0x1f8] sm:$0xff]
        %v554 = vld [vmem:[#allocation5 + $0x200] sm:$0xff]
        %v555 = vld [vmem:[#allocation5 + $0x208] sm:$0xff]
        %v556 = vld [vmem:[#allocation5 + $0x210] sm:$0xff]
        %v557 = vld [vmem:[#allocation5 + $0x218] sm:$0xff]
        %v558 = vld [vmem:[#allocation5 + $0x220] sm:$0xff]
        %v559 = vld [vmem:[#allocation5 + $0x228] sm:$0xff]
        %v560 = vld [vmem:[#allocation5 + $0x230] sm:$0xff]
        %v561 = vld [vmem:[#allocation5 + $0x238] sm:$0xff]
        %v562 = vld [vmem:[#allocation5 + $0x240] sm:$0xff]
        %v563 = vld [vmem:[#allocation5 + $0x248] sm:$0xff]
        %v564 = vld [vmem:[#allocation5 + $0x250] sm:$0xff]
        %v565 = vld [vmem:[#allocation5 + $0x258] sm:$0xff]
        %v566 = vld [vmem:[#allocation5 + $0x260] sm:$0xff]
        %v567 = vld [vmem:[#allocation5 + $0x268] sm:$0xff]
        %v568 = vld [vmem:[#allocation5 + $0x270] sm:$0xff]
        %v569 = vld [vmem:[#allocation5 + $0x278] sm:$0xff]
        %v570 = vld [vmem:[#allocation5 + $0x280] sm:$0xff]
        %v571 = vld [vmem:[#allocation5 + $0x288] sm:$0xff]
        %v572 = vld [vmem:[#allocation5 + $0x290] sm:$0xff]
        %v573 = vld [vmem:[#allocation5 + $0x298] sm:$0xff]
        %v574 = vld [vmem:[#allocation5 + $0x2a0] sm:$0xff]
        %v575 = vld [vmem:[#allocation5 + $0x2a8] sm:$0xff]
        %v576 = vld [vmem:[#allocation5 + $0x2b0] sm:$0xff]
        %v577 = vld [vmem:[#allocation5 + $0x2b8] sm:$0xff]
        %v578 = vld [vmem:[#allocation5 + $0x2c0] sm:$0xff]
        %v579 = vld [vmem:[#allocation5 + $0x2c8] sm:$0xff]
        %v580 = vld [vmem:[#allocation5 + $0x2d0] sm:$0xff]
        %v581 = vld [vmem:[#allocation5 + $0x2d8] sm:$0xff]
        %v582 = vld [vmem:[#allocation5 + $0x2e0] sm:$0xff]
        %v583 = vld [vmem:[#allocation5 + $0x2e8] sm:$0xff]
        %v584 = vld [vmem:[#allocation5 + $0x2f0] sm:$0xff]
        %v585 = vld [vmem:[#allocation5 + $0x2f8] sm:$0xff]
        %v586 = vld [vmem:[#allocation5 + $0x300] sm:$0xff]
        %v587 = vld [vmem:[#allocation5 + $0x308] sm:$0xff]
        %v588 = vld [vmem:[#allocation5 + $0x310] sm:$0xff]
        %v589 = vld [vmem:[#allocation5 + $0x318] sm:$0xff]
        %v590 = vld [vmem:[#allocation5 + $0x320] sm:$0xff]
        %v591 = vld [vmem:[#allocation5 + $0x328] sm:$0xff]
        %v592 = vld [vmem:[#allocation5 + $0x330] sm:$0xff]
        %v593 = vld [vmem:[#allocation5 + $0x338] sm:$0xff]
        %v594 = vld [vmem:[#allocation5 + $0x340] sm:$0xff]
        %v595 = vld [vmem:[#allocation5 + $0x348] sm:$0xff]
        %v596 = vld [vmem:[#allocation5 + $0x350] sm:$0xff]
        %v597 = vld [vmem:[#allocation5 + $0x358] sm:$0xff]
        %v598 = vld [vmem:[#allocation5 + $0x360] sm:$0xff]
        %v599 = vld [vmem:[#allocation5 + $0x368] sm:$0xff]
        %v600 = vld [vmem:[#allocation5 + $0x370] sm:$0xff]
        %v601 = vld [vmem:[#allocation5 + $0x378] sm:$0xff]
        %v602 = vld [vmem:[#allocation5 + $0x380] sm:$0xff]
        %v603 = vld [vmem:[#allocation5 + $0x388] sm:$0xff]
        %v604 = vld [vmem:[#allocation5 + $0x390] sm:$0xff]
        %v605 = vld [vmem:[#allocation5 + $0x398] sm:$0xff]
        %v606 = vld [vmem:[#allocation5 + $0x3a0] sm:$0xff]
        %v607 = vld [vmem:[#allocation5 + $0x3a8] sm:$0xff]
        %v608 = vld [vmem:[#allocation5 + $0x3b0] sm:$0xff]
        %v609 = vld [vmem:[#allocation5 + $0x3b8] sm:$0xff]
        %v610 = vld [vmem:[#allocation5 + $0x3c0] sm:$0xff]
        %v611 = vld [vmem:[#allocation5 + $0x3c8] sm:$0xff]
        %v612 = vld [vmem:[#allocation5 + $0x3d0] sm:$0xff]
        %v613 = vld [vmem:[#allocation5 + $0x3d8] sm:$0xff]
        %v614 = vld [vmem:[#allocation5 + $0x3e0] sm:$0xff]
        %v615 = vld [vmem:[#allocation5 + $0x3e8] sm:$0xff]
        %v616 = vld [vmem:[#allocation5 + $0x3f0] sm:$0xff]
        %v617 = vld [vmem:[#allocation5 + $0x3f8] sm:$0xff]
        %v618 = vld [vmem:[#allocation5 + $0x400] sm:$0xff]
        %v619 = vld [vmem:[#allocation5 + $0x408] sm:$0xff]
        %v620 = vld [vmem:[#allocation5 + $0x410] sm:$0xff]
        %v621 = vld [vmem:[#allocation5 + $0x418] sm:$0xff]
        %v622 = vld [vmem:[#allocation5 + $0x420] sm:$0xff]
        %v623 = vld [vmem:[#allocation5 + $0x428] sm:$0xff]
        %v624 = vld [vmem:[#allocation5 + $0x430] sm:$0xff]
        %v625 = vld [vmem:[#allocation5 + $0x438] sm:$0xff]
        %v626 = vld [vmem:[#allocation5 + $0x440] sm:$0xff]
        %v627 = vld [vmem:[#allocation5 + $0x448] sm:$0xff]
        %v628 = vld [vmem:[#allocation5 + $0x450] sm:$0xff]
        %v629 = vld [vmem:[#allocation5 + $0x458] sm:$0xff]
        %v630 = vld [vmem:[#allocation5 + $0x460] sm:$0xff]
        %v631 = vld [vmem:[#allocation5 + $0x468] sm:$0xff]
        %v632 = vld [vmem:[#allocation5 + $0x470] sm:$0xff]
        %v633 = vld [vmem:[#allocation5 + $0x478] sm:$0xff]
        %v634 = vld [vmem:[#allocation5 + $0x480] sm:$0xff]
        %v635 = vld [vmem:[#allocation5 + $0x488] sm:$0xff]
        %v636 = vld [vmem:[#allocation5 + $0x490] sm:$0xff]
        %v637 = vld [vmem:[#allocation5 + $0x498] sm:$0xff]
        %v638 = vld [vmem:[#allocation5 + $0x4a0] sm:$0xff]
        %v639 = vld [vmem:[#allocation5 + $0x4a8] sm:$0xff]
        %v640 = vld [vmem:[#allocation5 + $0x4b0] sm:$0xff]
        %v641 = vld [vmem:[#allocation5 + $0x4b8] sm:$0xff]
        %v642 = vld [vmem:[#allocation5 + $0x4c0] sm:$0xff]
        %v643 = vld [vmem:[#allocation5 + $0x4c8] sm:$0xff]
        %v644 = vld [vmem:[#allocation5 + $0x4d0] sm:$0xff]
        %v645 = vld [vmem:[#allocation5 + $0x4d8] sm:$0xff]
        %v646 = vld [vmem:[#allocation5 + $0x4e0] sm:$0xff]
        %v647 = vld [vmem:[#allocation5 + $0x4e8] sm:$0xff]
        %v648 = vld [vmem:[#allocation5 + $0x4f0] sm:$0xff]
        %v649 = vld [vmem:[#allocation5 + $0x4f8] sm:$0xff]
        %v650 = vld [vmem:[#allocation5 + $0x500] sm:$0xff]
        %v651 = vld [vmem:[#allocation5 + $0x508] sm:$0xff]
        %v652 = vld [vmem:[#allocation5 + $0x510] sm:$0xff]
        %v653 = vld [vmem:[#allocation5 + $0x518] sm:$0xff]
        %v654 = vld [vmem:[#allocation5 + $0x520] sm:$0xff]
        %v655 = vld [vmem:[#allocation5 + $0x528] sm:$0xff]
        %v656 = vld [vmem:[#allocation5 + $0x530] sm:$0xff]
        %v657 = vld [vmem:[#allocation5 + $0x538] sm:$0xff]
        %v658 = vld [vmem:[#allocation5 + $0x540] sm:$0xff]
        %v659 = vld [vmem:[#allocation5 + $0x548] sm:$0xff]
        %v660 = vld [vmem:[#allocation5 + $0x550] sm:$0xff]
        %v661 = vld [vmem:[#allocation5 + $0x558] sm:$0xff]
        %v662 = vld [vmem:[#allocation5 + $0x560] sm:$0xff]
        %v663 = vld [vmem:[#allocation5 + $0x568] sm:$0xff]
        %v664 = vld [vmem:[#allocation5 + $0x570] sm:$0xff]
        %v665 = vld [vmem:[#allocation5 + $0x578] sm:$0xff]
        %v666 = vld [vmem:[#allocation5 + $0x580] sm:$0xff]
        %v667 = vld [vmem:[#allocation5 + $0x588] sm:$0xff]
        %v668 = vld [vmem:[#allocation5 + $0x590] sm:$0xff]
        %v669 = vld [vmem:[#allocation5 + $0x598] sm:$0xff]
        %v670 = vld [vmem:[#allocation5 + $0x5a0] sm:$0xff]
        %v671 = vld [vmem:[#allocation5 + $0x5a8] sm:$0xff]
        %v672 = vld [vmem:[#allocation5 + $0x5b0] sm:$0xff]
        %v673 = vld [vmem:[#allocation5 + $0x5b8] sm:$0xff]
        %v674 = vld [vmem:[#allocation5 + $0x5c0] sm:$0xff]
        %v675 = vld [vmem:[#allocation5 + $0x5c8] sm:$0xff]
        %v676 = vld [vmem:[#allocation5 + $0x5d0] sm:$0xff]
        %v677 = vld [vmem:[#allocation5 + $0x5d8] sm:$0xff]
        %v678 = vld [vmem:[#allocation5 + $0x5e0] sm:$0xff]
        %v679 = vld [vmem:[#allocation5 + $0x5e8] sm:$0xff]
        %v680 = vld [vmem:[#allocation5 + $0x5f0] sm:$0xff]
        %v681 = vld [vmem:[#allocation5 + $0x5f8] sm:$0xff]
        %v682 = vld [vmem:[#allocation5 + $0x600] sm:$0xff]
        %v683 = vld [vmem:[#allocation5 + $0x608] sm:$0xff]
        %v684 = vld [vmem:[#allocation5 + $0x610] sm:$0xff]
        %v685 = vld [vmem:[#allocation5 + $0x618] sm:$0xff]
        %v686 = vld [vmem:[#allocation5 + $0x620] sm:$0xff]
        %v687 = vld [vmem:[#allocation5 + $0x628] sm:$0xff]
        %v688 = vld [vmem:[#allocation5 + $0x630] sm:$0xff]
        %v689 = vld [vmem:[#allocation5 + $0x638] sm:$0xff]
        %v690 = vld [vmem:[#allocation5 + $0x640] sm:$0xff]
        %v691 = vld [vmem:[#allocation5 + $0x648] sm:$0xff]
        %v692 = vld [vmem:[#allocation5 + $0x650] sm:$0xff]
        %v693 = vld [vmem:[#allocation5 + $0x658] sm:$0xff]
        %v694 = vld [vmem:[#allocation5 + $0x660] sm:$0xff]
        %v695 = vld [vmem:[#allocation5 + $0x668] sm:$0xff]
        %v696 = vld [vmem:[#allocation5 + $0x670] sm:$0xff]
        %v697 = vld [vmem:[#allocation5 + $0x678] sm:$0xff]
        %v698 = vld [vmem:[#allocation5 + $0x680] sm:$0xff]
        %v699 = vld [vmem:[#allocation5 + $0x688] sm:$0xff]
        %v700 = vld [vmem:[#allocation5 + $0x690] sm:$0xff]
        %v701 = vld [vmem:[#allocation5 + $0x698] sm:$0xff]
        %v702 = vld [vmem:[#allocation5 + $0x6a0] sm:$0xff]
        %v703 = vld [vmem:[#allocation5 + $0x6a8] sm:$0xff]
        %v704 = vld [vmem:[#allocation5 + $0x6b0] sm:$0xff]
        %v705 = vld [vmem:[#allocation5 + $0x6b8] sm:$0xff]
        %v706 = vld [vmem:[#allocation5 + $0x6c0] sm:$0xff]
        %v707 = vld [vmem:[#allocation5 + $0x6c8] sm:$0xff]
        %v708 = vld [vmem:[#allocation5 + $0x6d0] sm:$0xff]
        %v709 = vld [vmem:[#allocation5 + $0x6d8] sm:$0xff]
        %v710 = vld [vmem:[#allocation5 + $0x6e0] sm:$0xff]
        %v711 = vld [vmem:[#allocation5 + $0x6e8] sm:$0xff]
        %v712 = vld [vmem:[#allocation5 + $0x6f0] sm:$0xff]
        %v713 = vld [vmem:[#allocation5 + $0x6f8] sm:$0xff]
        %v714 = vld [vmem:[#allocation5 + $0x700] sm:$0xff]
        %v715 = vld [vmem:[#allocation5 + $0x708] sm:$0xff]
        %v716 = vld [vmem:[#allocation5 + $0x710] sm:$0xff]
        %v717 = vld [vmem:[#allocation5 + $0x718] sm:$0xff]
        %v718 = vld [vmem:[#allocation5 + $0x720] sm:$0xff]
        %v719 = vld [vmem:[#allocation5 + $0x728] sm:$0xff]
        %v720 = vld [vmem:[#allocation5 + $0x730] sm:$0xff]
        %v721 = vld [vmem:[#allocation5 + $0x738] sm:$0xff]
        %v722 = vld [vmem:[#allocation5 + $0x740] sm:$0xff]
        %v723 = vld [vmem:[#allocation5 + $0x748] sm:$0xff]
        %v724 = vld [vmem:[#allocation5 + $0x750] sm:$0xff]
        %v725 = vld [vmem:[#allocation5 + $0x758] sm:$0xff]
        %v726 = vld [vmem:[#allocation5 + $0x760] sm:$0xff]
        %v727 = vld [vmem:[#allocation5 + $0x768] sm:$0xff]
        %v728 = vld [vmem:[#allocation5 + $0x770] sm:$0xff]
        %v729 = vld [vmem:[#allocation5 + $0x778] sm:$0xff]
        %v730 = vld [vmem:[#allocation5 + $0x780] sm:$0xff]
        %v731 = vld [vmem:[#allocation5 + $0x788] sm:$0xff]
        %v732 = vld [vmem:[#allocation5 + $0x790] sm:$0xff]
        %v733 = vld [vmem:[#allocation5 + $0x798] sm:$0xff]
        %v734 = vld [vmem:[#allocation5 + $0x7a0] sm:$0xff]
        %v735 = vld [vmem:[#allocation5 + $0x7a8] sm:$0xff]
        %v736 = vld [vmem:[#allocation5 + $0x7b0] sm:$0xff]
        %v737 = vld [vmem:[#allocation5 + $0x7b8] sm:$0xff]
        %v738 = vld [vmem:[#allocation5 + $0x7c0] sm:$0xff]
        %v739 = vld [vmem:[#allocation5 + $0x7c8] sm:$0xff]
        %v740 = vld [vmem:[#allocation5 + $0x7d0] sm:$0xff]
        %v741 = vld [vmem:[#allocation5 + $0x7d8] sm:$0xff]
        %v742 = vld [vmem:[#allocation5 + $0x7e0] sm:$0xff]
        %v743 = vld [vmem:[#allocation5 + $0x7e8] sm:$0xff]
        %v744 = vld [vmem:[#allocation5 + $0x7f0] sm:$0xff]
        %v745 = vld [vmem:[#allocation5 + $0x7f8] sm:$0xff]
        %v746 = vld [vmem:[%s2] sm:$0xf]
        %v748 = vlaneseq
        %v749 = vshrl.u32 %v748, 7
        %v750 = vsub.s32 0, %v749
        %v751 = vrot.slane %v746, %v750
        %v752 = vlaneseq
        %v753 = vshrl.u32 %v752, 7
        %v754 = vsub.s32 1, %v753
        %v755 = vrot.slane %v746, %v754
        %v756 = vlaneseq
        %v757 = vshrl.u32 %v756, 7
        %v758 = vsub.s32 2, %v757
        %v759 = vrot.slane %v746, %v758
        %v760 = vlaneseq
        %v761 = vshrl.u32 %v760, 7
        %v762 = vsub.s32 3, %v761
        %v763 = vrot.slane %v746, %v762
        %v776 = vunpack.c.l.b16 %v482
        %v777 = vunpack.c.h.b16 %v482
        %v778 = vunpack.c.l.b16 %v483
        %v779 = vunpack.c.h.b16 %v483
        %v780 = vunpack.c.l.b16 %v484
        %v781 = vunpack.c.h.b16 %v484
        %v782 = vunpack.c.l.b16 %v485
        %v783 = vunpack.c.h.b16 %v485
        %v784 = vunpack.c.l.b16 %v486
        %v785 = vunpack.c.h.b16 %v486
        %v786 = vunpack.c.l.b16 %v487
        %v787 = vunpack.c.h.b16 %v487
        %v788 = vunpack.c.l.b16 %v488
        %v789 = vunpack.c.h.b16 %v488
        %v790 = vunpack.c.l.b16 %v489
        %v791 = vunpack.c.h.b16 %v489
        %v792 = vpack.c.b16 %v784, %v776
        %v793 = vpack.c.b16 %v785, %v777
        %v794 = vpack.c.b16 %v786, %v778
        %v795 = vpack.c.b16 %v787, %v779
        %v796 = vpack.c.b16 %v788, %v780
        %v797 = vpack.c.b16 %v789, %v781
        %v798 = vpack.c.b16 %v790, %v782
        %v799 = vpack.c.b16 %v791, %v783
        %v1064 = vunpack.c.l.b16 %v490
        %v1065 = vunpack.c.h.b16 %v490
        %v1066 = vunpack.c.l.b16 %v491
        %v1067 = vunpack.c.h.b16 %v491
        %v1068 = vunpack.c.l.b16 %v492
        %v1069 = vunpack.c.h.b16 %v492
        %v1070 = vunpack.c.l.b16 %v493
        %v1071 = vunpack.c.h.b16 %v493
        %v1072 = vunpack.c.l.b16 %v494
        %v1073 = vunpack.c.h.b16 %v494
        %v1074 = vunpack.c.l.b16 %v495
        %v1075 = vunpack.c.h.b16 %v495
        %v1076 = vunpack.c.l.b16 %v496
        %v1077 = vunpack.c.h.b16 %v496
        %v1078 = vunpack.c.l.b16 %v497
        %v1079 = vunpack.c.h.b16 %v497
        %v1080 = vunpack.c.l.b16 %v498
        %v1081 = vunpack.c.h.b16 %v498
        %v1082 = vunpack.c.l.b16 %v499
        %v1083 = vunpack.c.h.b16 %v499
        %v1084 = vunpack.c.l.b16 %v500
        %v1085 = vunpack.c.h.b16 %v500
        %v1086 = vunpack.c.l.b16 %v501
        %v1087 = vunpack.c.h.b16 %v501
        %v1088 = vunpack.c.l.b16 %v502
        %v1089 = vunpack.c.h.b16 %v502
        %v1090 = vunpack.c.l.b16 %v503
        %v1091 = vunpack.c.h.b16 %v503
        %v1092 = vunpack.c.l.b16 %v504
        %v1093 = vunpack.c.h.b16 %v504
        %v1094 = vunpack.c.l.b16 %v505
        %v1095 = vunpack.c.h.b16 %v505
        %v1096 = vunpack.c.l.b16 %v506
        %v1097 = vunpack.c.h.b16 %v506
        %v1098 = vunpack.c.l.b16 %v507
        %v1099 = vunpack.c.h.b16 %v507
        %v1100 = vunpack.c.l.b16 %v508
        %v1101 = vunpack.c.h.b16 %v508
        %v1102 = vunpack.c.l.b16 %v509
        %v1103 = vunpack.c.h.b16 %v509
        %v1104 = vunpack.c.l.b16 %v510
        %v1105 = vunpack.c.h.b16 %v510
        %v1106 = vunpack.c.l.b16 %v511
        %v1107 = vunpack.c.h.b16 %v511
        %v1108 = vunpack.c.l.b16 %v512
        %v1109 = vunpack.c.h.b16 %v512
        %v1110 = vunpack.c.l.b16 %v513
        %v1111 = vunpack.c.h.b16 %v513
        %v1112 = vunpack.c.l.b16 %v514
        %v1113 = vunpack.c.h.b16 %v514
        %v1114 = vunpack.c.l.b16 %v515
        %v1115 = vunpack.c.h.b16 %v515
        %v1116 = vunpack.c.l.b16 %v516
        %v1117 = vunpack.c.h.b16 %v516
        %v1118 = vunpack.c.l.b16 %v517
        %v1119 = vunpack.c.h.b16 %v517
        %v1120 = vunpack.c.l.b16 %v518
        %v1121 = vunpack.c.h.b16 %v518
        %v1122 = vunpack.c.l.b16 %v519
        %v1123 = vunpack.c.h.b16 %v519
        %v1124 = vunpack.c.l.b16 %v520
        %v1125 = vunpack.c.h.b16 %v520
        %v1126 = vunpack.c.l.b16 %v521
        %v1127 = vunpack.c.h.b16 %v521
        %v1128 = vunpack.c.l.b16 %v522
        %v1129 = vunpack.c.h.b16 %v522
        %v1130 = vunpack.c.l.b16 %v523
        %v1131 = vunpack.c.h.b16 %v523
        %v1132 = vunpack.c.l.b16 %v524
        %v1133 = vunpack.c.h.b16 %v524
        %v1134 = vunpack.c.l.b16 %v525
        %v1135 = vunpack.c.h.b16 %v525
        %v1136 = vunpack.c.l.b16 %v526
        %v1137 = vunpack.c.h.b16 %v526
        %v1138 = vunpack.c.l.b16 %v527
        %v1139 = vunpack.c.h.b16 %v527
        %v1140 = vunpack.c.l.b16 %v528
        %v1141 = vunpack.c.h.b16 %v528
        %v1142 = vunpack.c.l.b16 %v529
        %v1143 = vunpack.c.h.b16 %v529
        %v1144 = vunpack.c.l.b16 %v530
        %v1145 = vunpack.c.h.b16 %v530
        %v1146 = vunpack.c.l.b16 %v531
        %v1147 = vunpack.c.h.b16 %v531
        %v1148 = vunpack.c.l.b16 %v532
        %v1149 = vunpack.c.h.b16 %v532
        %v1150 = vunpack.c.l.b16 %v533
        %v1151 = vunpack.c.h.b16 %v533
        %v1152 = vunpack.c.l.b16 %v534
        %v1153 = vunpack.c.h.b16 %v534
        %v1154 = vunpack.c.l.b16 %v535
        %v1155 = vunpack.c.h.b16 %v535
        %v1156 = vunpack.c.l.b16 %v536
        %v1157 = vunpack.c.h.b16 %v536
        %v1158 = vunpack.c.l.b16 %v537
        %v1159 = vunpack.c.h.b16 %v537
        %v1160 = vunpack.c.l.b16 %v538
        %v1161 = vunpack.c.h.b16 %v538
        %v1162 = vunpack.c.l.b16 %v539
        %v1163 = vunpack.c.h.b16 %v539
        %v1164 = vunpack.c.l.b16 %v540
        %v1165 = vunpack.c.h.b16 %v540
        %v1166 = vunpack.c.l.b16 %v541
        %v1167 = vunpack.c.h.b16 %v541
        %v1168 = vunpack.c.l.b16 %v542
        %v1169 = vunpack.c.h.b16 %v542
        %v1170 = vunpack.c.l.b16 %v543
        %v1171 = vunpack.c.h.b16 %v543
        %v1172 = vunpack.c.l.b16 %v544
        %v1173 = vunpack.c.h.b16 %v544
        %v1174 = vunpack.c.l.b16 %v545
        %v1175 = vunpack.c.h.b16 %v545
        %v1176 = vunpack.c.l.b16 %v546
        %v1177 = vunpack.c.h.b16 %v546
        %v1178 = vunpack.c.l.b16 %v547
        %v1179 = vunpack.c.h.b16 %v547
        %v1180 = vunpack.c.l.b16 %v548
        %v1181 = vunpack.c.h.b16 %v548
        %v1182 = vunpack.c.l.b16 %v549
        %v1183 = vunpack.c.h.b16 %v549
        %v1184 = vunpack.c.l.b16 %v550
        %v1185 = vunpack.c.h.b16 %v550
        %v1186 = vunpack.c.l.b16 %v551
        %v1187 = vunpack.c.h.b16 %v551
        %v1188 = vunpack.c.l.b16 %v552
        %v1189 = vunpack.c.h.b16 %v552
        %v1190 = vunpack.c.l.b16 %v553
        %v1191 = vunpack.c.h.b16 %v553
        %v1192 = vunpack.c.l.b16 %v554
        %v1193 = vunpack.c.h.b16 %v554
        %v1194 = vunpack.c.l.b16 %v555
        %v1195 = vunpack.c.h.b16 %v555
        %v1196 = vunpack.c.l.b16 %v556
        %v1197 = vunpack.c.h.b16 %v556
        %v1198 = vunpack.c.l.b16 %v557
        %v1199 = vunpack.c.h.b16 %v557
        %v1200 = vunpack.c.l.b16 %v558
        %v1201 = vunpack.c.h.b16 %v558
        %v1202 = vunpack.c.l.b16 %v559
        %v1203 = vunpack.c.h.b16 %v559
        %v1204 = vunpack.c.l.b16 %v560
        %v1205 = vunpack.c.h.b16 %v560
        %v1206 = vunpack.c.l.b16 %v561
        %v1207 = vunpack.c.h.b16 %v561
        %v1208 = vunpack.c.l.b16 %v562
        %v1209 = vunpack.c.h.b16 %v562
        %v1210 = vunpack.c.l.b16 %v563
        %v1211 = vunpack.c.h.b16 %v563
        %v1212 = vunpack.c.l.b16 %v564
        %v1213 = vunpack.c.h.b16 %v564
        %v1214 = vunpack.c.l.b16 %v565
        %v1215 = vunpack.c.h.b16 %v565
        %v1216 = vunpack.c.l.b16 %v566
        %v1217 = vunpack.c.h.b16 %v566
        %v1218 = vunpack.c.l.b16 %v567
        %v1219 = vunpack.c.h.b16 %v567
        %v1220 = vunpack.c.l.b16 %v568
        %v1221 = vunpack.c.h.b16 %v568
        %v1222 = vunpack.c.l.b16 %v569
        %v1223 = vunpack.c.h.b16 %v569
        %v1224 = vunpack.c.l.b16 %v570
        %v1225 = vunpack.c.h.b16 %v570
        %v1226 = vunpack.c.l.b16 %v571
        %v1227 = vunpack.c.h.b16 %v571
        %v1228 = vunpack.c.l.b16 %v572
        %v1229 = vunpack.c.h.b16 %v572
        %v1230 = vunpack.c.l.b16 %v573
        %v1231 = vunpack.c.h.b16 %v573
        %v1232 = vunpack.c.l.b16 %v574
        %v1233 = vunpack.c.h.b16 %v574
        %v1234 = vunpack.c.l.b16 %v575
        %v1235 = vunpack.c.h.b16 %v575
        %v1236 = vunpack.c.l.b16 %v576
        %v1237 = vunpack.c.h.b16 %v576
        %v1238 = vunpack.c.l.b16 %v577
        %v1239 = vunpack.c.h.b16 %v577
        %v1240 = vunpack.c.l.b16 %v578
        %v1241 = vunpack.c.h.b16 %v578
        %v1242 = vunpack.c.l.b16 %v579
        %v1243 = vunpack.c.h.b16 %v579
        %v1244 = vunpack.c.l.b16 %v580
        %v1245 = vunpack.c.h.b16 %v580
        %v1246 = vunpack.c.l.b16 %v581
        %v1247 = vunpack.c.h.b16 %v581
        %v1248 = vunpack.c.l.b16 %v582
        %v1249 = vunpack.c.h.b16 %v582
        %v1250 = vunpack.c.l.b16 %v583
        %v1251 = vunpack.c.h.b16 %v583
        %v1252 = vunpack.c.l.b16 %v584
        %v1253 = vunpack.c.h.b16 %v584
        %v1254 = vunpack.c.l.b16 %v585
        %v1255 = vunpack.c.h.b16 %v585
        %v1256 = vunpack.c.l.b16 %v586
        %v1257 = vunpack.c.h.b16 %v586
        %v1258 = vunpack.c.l.b16 %v587
        %v1259 = vunpack.c.h.b16 %v587
        %v1260 = vunpack.c.l.b16 %v588
        %v1261 = vunpack.c.h.b16 %v588
        %v1262 = vunpack.c.l.b16 %v589
        %v1263 = vunpack.c.h.b16 %v589
        %v1264 = vunpack.c.l.b16 %v590
        %v1265 = vunpack.c.h.b16 %v590
        %v1266 = vunpack.c.l.b16 %v591
        %v1267 = vunpack.c.h.b16 %v591
        %v1268 = vunpack.c.l.b16 %v592
        %v1269 = vunpack.c.h.b16 %v592
        %v1270 = vunpack.c.l.b16 %v593
        %v1271 = vunpack.c.h.b16 %v593
        %v1272 = vunpack.c.l.b16 %v594
        %v1273 = vunpack.c.h.b16 %v594
        %v1274 = vunpack.c.l.b16 %v595
        %v1275 = vunpack.c.h.b16 %v595
        %v1276 = vunpack.c.l.b16 %v596
        %v1277 = vunpack.c.h.b16 %v596
        %v1278 = vunpack.c.l.b16 %v597
        %v1279 = vunpack.c.h.b16 %v597
        %v1280 = vunpack.c.l.b16 %v598
        %v1281 = vunpack.c.h.b16 %v598
        %v1282 = vunpack.c.l.b16 %v599
        %v1283 = vunpack.c.h.b16 %v599
        %v1284 = vunpack.c.l.b16 %v600
        %v1285 = vunpack.c.h.b16 %v600
        %v1286 = vunpack.c.l.b16 %v601
        %v1287 = vunpack.c.h.b16 %v601
        %v1288 = vunpack.c.l.b16 %v602
        %v1289 = vunpack.c.h.b16 %v602
        %v1290 = vunpack.c.l.b16 %v603
        %v1291 = vunpack.c.h.b16 %v603
        %v1292 = vunpack.c.l.b16 %v604
        %v1293 = vunpack.c.h.b16 %v604
        %v1294 = vunpack.c.l.b16 %v605
        %v1295 = vunpack.c.h.b16 %v605
        %v1296 = vunpack.c.l.b16 %v606
        %v1297 = vunpack.c.h.b16 %v606
        %v1298 = vunpack.c.l.b16 %v607
        %v1299 = vunpack.c.h.b16 %v607
        %v1300 = vunpack.c.l.b16 %v608
        %v1301 = vunpack.c.h.b16 %v608
        %v1302 = vunpack.c.l.b16 %v609
        %v1303 = vunpack.c.h.b16 %v609
        %v1304 = vunpack.c.l.b16 %v610
        %v1305 = vunpack.c.h.b16 %v610
        %v1306 = vunpack.c.l.b16 %v611
        %v1307 = vunpack.c.h.b16 %v611
        %v1308 = vunpack.c.l.b16 %v612
        %v1309 = vunpack.c.h.b16 %v612
        %v1310 = vunpack.c.l.b16 %v613
        %v1311 = vunpack.c.h.b16 %v613
        %v1312 = vunpack.c.l.b16 %v614
        %v1313 = vunpack.c.h.b16 %v614
        %v1314 = vunpack.c.l.b16 %v615
        %v1315 = vunpack.c.h.b16 %v615
        %v1316 = vunpack.c.l.b16 %v616
        %v1317 = vunpack.c.h.b16 %v616
        %v1318 = vunpack.c.l.b16 %v617
        %v1319 = vunpack.c.h.b16 %v617
        %v1320 = vunpack.c.l.b16 %v618
        %v1321 = vunpack.c.h.b16 %v618
        %v1322 = vunpack.c.l.b16 %v619
        %v1323 = vunpack.c.h.b16 %v619
        %v1324 = vunpack.c.l.b16 %v620
        %v1325 = vunpack.c.h.b16 %v620
        %v1326 = vunpack.c.l.b16 %v621
        %v1327 = vunpack.c.h.b16 %v621
        %v1328 = vunpack.c.l.b16 %v622
        %v1329 = vunpack.c.h.b16 %v622
        %v1330 = vunpack.c.l.b16 %v623
        %v1331 = vunpack.c.h.b16 %v623
        %v1332 = vunpack.c.l.b16 %v624
        %v1333 = vunpack.c.h.b16 %v624
        %v1334 = vunpack.c.l.b16 %v625
        %v1335 = vunpack.c.h.b16 %v625
        %v1336 = vunpack.c.l.b16 %v626
        %v1337 = vunpack.c.h.b16 %v626
        %v1338 = vunpack.c.l.b16 %v627
        %v1339 = vunpack.c.h.b16 %v627
        %v1340 = vunpack.c.l.b16 %v628
        %v1341 = vunpack.c.h.b16 %v628
        %v1342 = vunpack.c.l.b16 %v629
        %v1343 = vunpack.c.h.b16 %v629
        %v1344 = vunpack.c.l.b16 %v630
        %v1345 = vunpack.c.h.b16 %v630
        %v1346 = vunpack.c.l.b16 %v631
        %v1347 = vunpack.c.h.b16 %v631
        %v1348 = vunpack.c.l.b16 %v632
        %v1349 = vunpack.c.h.b16 %v632
        %v1350 = vunpack.c.l.b16 %v633
        %v1351 = vunpack.c.h.b16 %v633
        %v1352 = vunpack.c.l.b16 %v634
        %v1353 = vunpack.c.h.b16 %v634
        %v1354 = vunpack.c.l.b16 %v635
        %v1355 = vunpack.c.h.b16 %v635
        %v1356 = vunpack.c.l.b16 %v636
        %v1357 = vunpack.c.h.b16 %v636
        %v1358 = vunpack.c.l.b16 %v637
        %v1359 = vunpack.c.h.b16 %v637
        %v1360 = vunpack.c.l.b16 %v638
        %v1361 = vunpack.c.h.b16 %v638
        %v1362 = vunpack.c.l.b16 %v639
        %v1363 = vunpack.c.h.b16 %v639
        %v1364 = vunpack.c.l.b16 %v640
        %v1365 = vunpack.c.h.b16 %v640
        %v1366 = vunpack.c.l.b16 %v641
        %v1367 = vunpack.c.h.b16 %v641
        %v1368 = vunpack.c.l.b16 %v642
        %v1369 = vunpack.c.h.b16 %v642
        %v1370 = vunpack.c.l.b16 %v643
        %v1371 = vunpack.c.h.b16 %v643
        %v1372 = vunpack.c.l.b16 %v644
        %v1373 = vunpack.c.h.b16 %v644
        %v1374 = vunpack.c.l.b16 %v645
        %v1375 = vunpack.c.h.b16 %v645
        %v1376 = vunpack.c.l.b16 %v646
        %v1377 = vunpack.c.h.b16 %v646
        %v1378 = vunpack.c.l.b16 %v647
        %v1379 = vunpack.c.h.b16 %v647
        %v1380 = vunpack.c.l.b16 %v648
        %v1381 = vunpack.c.h.b16 %v648
        %v1382 = vunpack.c.l.b16 %v649
        %v1383 = vunpack.c.h.b16 %v649
        %v1384 = vunpack.c.l.b16 %v650
        %v1385 = vunpack.c.h.b16 %v650
        %v1386 = vunpack.c.l.b16 %v651
        %v1387 = vunpack.c.h.b16 %v651
        %v1388 = vunpack.c.l.b16 %v652
        %v1389 = vunpack.c.h.b16 %v652
        %v1390 = vunpack.c.l.b16 %v653
        %v1391 = vunpack.c.h.b16 %v653
        %v1392 = vunpack.c.l.b16 %v654
        %v1393 = vunpack.c.h.b16 %v654
        %v1394 = vunpack.c.l.b16 %v655
        %v1395 = vunpack.c.h.b16 %v655
        %v1396 = vunpack.c.l.b16 %v656
        %v1397 = vunpack.c.h.b16 %v656
        %v1398 = vunpack.c.l.b16 %v657
        %v1399 = vunpack.c.h.b16 %v657
        %v1400 = vunpack.c.l.b16 %v658
        %v1401 = vunpack.c.h.b16 %v658
        %v1402 = vunpack.c.l.b16 %v659
        %v1403 = vunpack.c.h.b16 %v659
        %v1404 = vunpack.c.l.b16 %v660
        %v1405 = vunpack.c.h.b16 %v660
        %v1406 = vunpack.c.l.b16 %v661
        %v1407 = vunpack.c.h.b16 %v661
        %v1408 = vunpack.c.l.b16 %v662
        %v1409 = vunpack.c.h.b16 %v662
        %v1410 = vunpack.c.l.b16 %v663
        %v1411 = vunpack.c.h.b16 %v663
        %v1412 = vunpack.c.l.b16 %v664
        %v1413 = vunpack.c.h.b16 %v664
        %v1414 = vunpack.c.l.b16 %v665
        %v1415 = vunpack.c.h.b16 %v665
        %v1416 = vunpack.c.l.b16 %v666
        %v1417 = vunpack.c.h.b16 %v666
        %v1418 = vunpack.c.l.b16 %v667
        %v1419 = vunpack.c.h.b16 %v667
        %v1420 = vunpack.c.l.b16 %v668
        %v1421 = vunpack.c.h.b16 %v668
        %v1422 = vunpack.c.l.b16 %v669
        %v1423 = vunpack.c.h.b16 %v669
        %v1424 = vunpack.c.l.b16 %v670
        %v1425 = vunpack.c.h.b16 %v670
        %v1426 = vunpack.c.l.b16 %v671
        %v1427 = vunpack.c.h.b16 %v671
        %v1428 = vunpack.c.l.b16 %v672
        %v1429 = vunpack.c.h.b16 %v672
        %v1430 = vunpack.c.l.b16 %v673
        %v1431 = vunpack.c.h.b16 %v673
        %v1432 = vunpack.c.l.b16 %v674
        %v1433 = vunpack.c.h.b16 %v674
        %v1434 = vunpack.c.l.b16 %v675
        %v1435 = vunpack.c.h.b16 %v675
        %v1436 = vunpack.c.l.b16 %v676
        %v1437 = vunpack.c.h.b16 %v676
        %v1438 = vunpack.c.l.b16 %v677
        %v1439 = vunpack.c.h.b16 %v677
        %v1440 = vunpack.c.l.b16 %v678
        %v1441 = vunpack.c.h.b16 %v678
        %v1442 = vunpack.c.l.b16 %v679
        %v1443 = vunpack.c.h.b16 %v679
        %v1444 = vunpack.c.l.b16 %v680
        %v1445 = vunpack.c.h.b16 %v680
        %v1446 = vunpack.c.l.b16 %v681
        %v1447 = vunpack.c.h.b16 %v681
        %v1448 = vunpack.c.l.b16 %v682
        %v1449 = vunpack.c.h.b16 %v682
        %v1450 = vunpack.c.l.b16 %v683
        %v1451 = vunpack.c.h.b16 %v683
        %v1452 = vunpack.c.l.b16 %v684
        %v1453 = vunpack.c.h.b16 %v684
        %v1454 = vunpack.c.l.b16 %v685
        %v1455 = vunpack.c.h.b16 %v685
        %v1456 = vunpack.c.l.b16 %v686
        %v1457 = vunpack.c.h.b16 %v686
        %v1458 = vunpack.c.l.b16 %v687
        %v1459 = vunpack.c.h.b16 %v687
        %v1460 = vunpack.c.l.b16 %v688
        %v1461 = vunpack.c.h.b16 %v688
        %v1462 = vunpack.c.l.b16 %v689
        %v1463 = vunpack.c.h.b16 %v689
        %v1464 = vunpack.c.l.b16 %v690
        %v1465 = vunpack.c.h.b16 %v690
        %v1466 = vunpack.c.l.b16 %v691
        %v1467 = vunpack.c.h.b16 %v691
        %v1468 = vunpack.c.l.b16 %v692
        %v1469 = vunpack.c.h.b16 %v692
        %v1470 = vunpack.c.l.b16 %v693
        %v1471 = vunpack.c.h.b16 %v693
        %v1472 = vunpack.c.l.b16 %v694
        %v1473 = vunpack.c.h.b16 %v694
        %v1474 = vunpack.c.l.b16 %v695
        %v1475 = vunpack.c.h.b16 %v695
        %v1476 = vunpack.c.l.b16 %v696
        %v1477 = vunpack.c.h.b16 %v696
        %v1478 = vunpack.c.l.b16 %v697
        %v1479 = vunpack.c.h.b16 %v697
        %v1480 = vunpack.c.l.b16 %v698
        %v1481 = vunpack.c.h.b16 %v698
        %v1482 = vunpack.c.l.b16 %v699
        %v1483 = vunpack.c.h.b16 %v699
        %v1484 = vunpack.c.l.b16 %v700
        %v1485 = vunpack.c.h.b16 %v700
        %v1486 = vunpack.c.l.b16 %v701
        %v1487 = vunpack.c.h.b16 %v701
        %v1488 = vunpack.c.l.b16 %v702
        %v1489 = vunpack.c.h.b16 %v702
        %v1490 = vunpack.c.l.b16 %v703
        %v1491 = vunpack.c.h.b16 %v703
        %v1492 = vunpack.c.l.b16 %v704
        %v1493 = vunpack.c.h.b16 %v704
        %v1494 = vunpack.c.l.b16 %v705
        %v1495 = vunpack.c.h.b16 %v705
        %v1496 = vunpack.c.l.b16 %v706
        %v1497 = vunpack.c.h.b16 %v706
        %v1498 = vunpack.c.l.b16 %v707
        %v1499 = vunpack.c.h.b16 %v707
        %v1500 = vunpack.c.l.b16 %v708
        %v1501 = vunpack.c.h.b16 %v708
        %v1502 = vunpack.c.l.b16 %v709
        %v1503 = vunpack.c.h.b16 %v709
        %v1504 = vunpack.c.l.b16 %v710
        %v1505 = vunpack.c.h.b16 %v710
        %v1506 = vunpack.c.l.b16 %v711
        %v1507 = vunpack.c.h.b16 %v711
        %v1508 = vunpack.c.l.b16 %v712
        %v1509 = vunpack.c.h.b16 %v712
        %v1510 = vunpack.c.l.b16 %v713
        %v1511 = vunpack.c.h.b16 %v713
        %v1512 = vunpack.c.l.b16 %v714
        %v1513 = vunpack.c.h.b16 %v714
        %v1514 = vunpack.c.l.b16 %v715
        %v1515 = vunpack.c.h.b16 %v715
        %v1516 = vunpack.c.l.b16 %v716
        %v1517 = vunpack.c.h.b16 %v716
        %v1518 = vunpack.c.l.b16 %v717
        %v1519 = vunpack.c.h.b16 %v717
        %v1520 = vunpack.c.l.b16 %v718
        %v1521 = vunpack.c.h.b16 %v718
        %v1522 = vunpack.c.l.b16 %v719
        %v1523 = vunpack.c.h.b16 %v719
        %v1524 = vunpack.c.l.b16 %v720
        %v1525 = vunpack.c.h.b16 %v720
        %v1526 = vunpack.c.l.b16 %v721
        %v1527 = vunpack.c.h.b16 %v721
        %v1528 = vunpack.c.l.b16 %v722
        %v1529 = vunpack.c.h.b16 %v722
        %v1530 = vunpack.c.l.b16 %v723
        %v1531 = vunpack.c.h.b16 %v723
        %v1532 = vunpack.c.l.b16 %v724
        %v1533 = vunpack.c.h.b16 %v724
        %v1534 = vunpack.c.l.b16 %v725
        %v1535 = vunpack.c.h.b16 %v725
        %v1536 = vunpack.c.l.b16 %v726
        %v1537 = vunpack.c.h.b16 %v726
        %v1538 = vunpack.c.l.b16 %v727
        %v1539 = vunpack.c.h.b16 %v727
        %v1540 = vunpack.c.l.b16 %v728
        %v1541 = vunpack.c.h.b16 %v728
        %v1542 = vunpack.c.l.b16 %v729
        %v1543 = vunpack.c.h.b16 %v729
        %v1544 = vunpack.c.l.b16 %v730
        %v1545 = vunpack.c.h.b16 %v730
        %v1546 = vunpack.c.l.b16 %v731
        %v1547 = vunpack.c.h.b16 %v731
        %v1548 = vunpack.c.l.b16 %v732
        %v1549 = vunpack.c.h.b16 %v732
        %v1550 = vunpack.c.l.b16 %v733
        %v1551 = vunpack.c.h.b16 %v733
        %v1552 = vunpack.c.l.b16 %v734
        %v1553 = vunpack.c.h.b16 %v734
        %v1554 = vunpack.c.l.b16 %v735
        %v1555 = vunpack.c.h.b16 %v735
        %v1556 = vunpack.c.l.b16 %v736
        %v1557 = vunpack.c.h.b16 %v736
        %v1558 = vunpack.c.l.b16 %v737
        %v1559 = vunpack.c.h.b16 %v737
        %v1560 = vunpack.c.l.b16 %v738
        %v1561 = vunpack.c.h.b16 %v738
        %v1562 = vunpack.c.l.b16 %v739
        %v1563 = vunpack.c.h.b16 %v739
        %v1564 = vunpack.c.l.b16 %v740
        %v1565 = vunpack.c.h.b16 %v740
        %v1566 = vunpack.c.l.b16 %v741
        %v1567 = vunpack.c.h.b16 %v741
        %v1568 = vunpack.c.l.b16 %v742
        %v1569 = vunpack.c.h.b16 %v742
        %v1570 = vunpack.c.l.b16 %v743
        %v1571 = vunpack.c.h.b16 %v743
        %v1572 = vunpack.c.l.b16 %v744
        %v1573 = vunpack.c.h.b16 %v744
        %v1574 = vunpack.c.l.b16 %v745
        %v1575 = vunpack.c.h.b16 %v745
        %v1576 = vpack.c.b16 %v1068, %v1064
        %v1577 = vpack.c.b16 %v1069, %v1065
        %v1578 = vpack.c.b16 %v1070, %v1066
        %v1579 = vpack.c.b16 %v1071, %v1067
        %v1580 = vpack.c.b16 %v1076, %v1072
        %v1581 = vpack.c.b16 %v1077, %v1073
        %v1582 = vpack.c.b16 %v1078, %v1074
        %v1583 = vpack.c.b16 %v1079, %v1075
        %v1584 = vpack.c.b16 %v1084, %v1080
        %v1585 = vpack.c.b16 %v1085, %v1081
        %v1586 = vpack.c.b16 %v1086, %v1082
        %v1587 = vpack.c.b16 %v1087, %v1083
        %v1588 = vpack.c.b16 %v1092, %v1088
        %v1589 = vpack.c.b16 %v1093, %v1089
        %v1590 = vpack.c.b16 %v1094, %v1090
        %v1591 = vpack.c.b16 %v1095, %v1091
        %v1592 = vpack.c.b16 %v1100, %v1096
        %v1593 = vpack.c.b16 %v1101, %v1097
        %v1594 = vpack.c.b16 %v1102, %v1098
        %v1595 = vpack.c.b16 %v1103, %v1099
        %v1596 = vpack.c.b16 %v1108, %v1104
        %v1597 = vpack.c.b16 %v1109, %v1105
        %v1598 = vpack.c.b16 %v1110, %v1106
        %v1599 = vpack.c.b16 %v1111, %v1107
        %v1600 = vpack.c.b16 %v1116, %v1112
        %v1601 = vpack.c.b16 %v1117, %v1113
        %v1602 = vpack.c.b16 %v1118, %v1114
        %v1603 = vpack.c.b16 %v1119, %v1115
        %v1604 = vpack.c.b16 %v1124, %v1120
        %v1605 = vpack.c.b16 %v1125, %v1121
        %v1606 = vpack.c.b16 %v1126, %v1122
        %v1607 = vpack.c.b16 %v1127, %v1123
        %v1608 = vpack.c.b16 %v1132, %v1128
        %v1609 = vpack.c.b16 %v1133, %v1129
        %v1610 = vpack.c.b16 %v1134, %v1130
        %v1611 = vpack.c.b16 %v1135, %v1131
        %v1612 = vpack.c.b16 %v1140, %v1136
        %v1613 = vpack.c.b16 %v1141, %v1137
        %v1614 = vpack.c.b16 %v1142, %v1138
        %v1615 = vpack.c.b16 %v1143, %v1139
        %v1616 = vpack.c.b16 %v1148, %v1144
        %v1617 = vpack.c.b16 %v1149, %v1145
        %v1618 = vpack.c.b16 %v1150, %v1146
        %v1619 = vpack.c.b16 %v1151, %v1147
        %v1620 = vpack.c.b16 %v1156, %v1152
        %v1621 = vpack.c.b16 %v1157, %v1153
        %v1622 = vpack.c.b16 %v1158, %v1154
        %v1623 = vpack.c.b16 %v1159, %v1155
        %v1624 = vpack.c.b16 %v1164, %v1160
        %v1625 = vpack.c.b16 %v1165, %v1161
        %v1626 = vpack.c.b16 %v1166, %v1162
        %v1627 = vpack.c.b16 %v1167, %v1163
        %v1628 = vpack.c.b16 %v1172, %v1168
        %v1629 = vpack.c.b16 %v1173, %v1169
        %v1630 = vpack.c.b16 %v1174, %v1170
        %v1631 = vpack.c.b16 %v1175, %v1171
        %v1632 = vpack.c.b16 %v1180, %v1176
        %v1633 = vpack.c.b16 %v1181, %v1177
        %v1634 = vpack.c.b16 %v1182, %v1178
        %v1635 = vpack.c.b16 %v1183, %v1179
        %v1636 = vpack.c.b16 %v1188, %v1184
        %v1637 = vpack.c.b16 %v1189, %v1185
        %v1638 = vpack.c.b16 %v1190, %v1186
        %v1639 = vpack.c.b16 %v1191, %v1187
        %v1640 = vpack.c.b16 %v1196, %v1192
        %v1641 = vpack.c.b16 %v1197, %v1193
        %v1642 = vpack.c.b16 %v1198, %v1194
        %v1643 = vpack.c.b16 %v1199, %v1195
        %v1644 = vpack.c.b16 %v1204, %v1200
        %v1645 = vpack.c.b16 %v1205, %v1201
        %v1646 = vpack.c.b16 %v1206, %v1202
        %v1647 = vpack.c.b16 %v1207, %v1203
        %v1648 = vpack.c.b16 %v1212, %v1208
        %v1649 = vpack.c.b16 %v1213, %v1209
        %v1650 = vpack.c.b16 %v1214, %v1210
        %v1651 = vpack.c.b16 %v1215, %v1211
        %v1652 = vpack.c.b16 %v1220, %v1216
        %v1653 = vpack.c.b16 %v1221, %v1217
        %v1654 = vpack.c.b16 %v1222, %v1218
        %v1655 = vpack.c.b16 %v1223, %v1219
        %v1656 = vpack.c.b16 %v1228, %v1224
        %v1657 = vpack.c.b16 %v1229, %v1225
        %v1658 = vpack.c.b16 %v1230, %v1226
        %v1659 = vpack.c.b16 %v1231, %v1227
        %v1660 = vpack.c.b16 %v1236, %v1232
        %v1661 = vpack.c.b16 %v1237, %v1233
        %v1662 = vpack.c.b16 %v1238, %v1234
        %v1663 = vpack.c.b16 %v1239, %v1235
        %v1664 = vpack.c.b16 %v1244, %v1240
        %v1665 = vpack.c.b16 %v1245, %v1241
        %v1666 = vpack.c.b16 %v1246, %v1242
        %v1667 = vpack.c.b16 %v1247, %v1243
        %v1668 = vpack.c.b16 %v1252, %v1248
        %v1669 = vpack.c.b16 %v1253, %v1249
        %v1670 = vpack.c.b16 %v1254, %v1250
        %v1671 = vpack.c.b16 %v1255, %v1251
        %v1672 = vpack.c.b16 %v1260, %v1256
        %v1673 = vpack.c.b16 %v1261, %v1257
        %v1674 = vpack.c.b16 %v1262, %v1258
        %v1675 = vpack.c.b16 %v1263, %v1259
        %v1676 = vpack.c.b16 %v1268, %v1264
        %v1677 = vpack.c.b16 %v1269, %v1265
        %v1678 = vpack.c.b16 %v1270, %v1266
        %v1679 = vpack.c.b16 %v1271, %v1267
        %v1680 = vpack.c.b16 %v1276, %v1272
        %v1681 = vpack.c.b16 %v1277, %v1273
        %v1682 = vpack.c.b16 %v1278, %v1274
        %v1683 = vpack.c.b16 %v1279, %v1275
        %v1684 = vpack.c.b16 %v1284, %v1280
        %v1685 = vpack.c.b16 %v1285, %v1281
        %v1686 = vpack.c.b16 %v1286, %v1282
        %v1687 = vpack.c.b16 %v1287, %v1283
        %v1688 = vpack.c.b16 %v1292, %v1288
        %v1689 = vpack.c.b16 %v1293, %v1289
        %v1690 = vpack.c.b16 %v1294, %v1290
        %v1691 = vpack.c.b16 %v1295, %v1291
        %v1692 = vpack.c.b16 %v1300, %v1296
        %v1693 = vpack.c.b16 %v1301, %v1297
        %v1694 = vpack.c.b16 %v1302, %v1298
        %v1695 = vpack.c.b16 %v1303, %v1299
        %v1696 = vpack.c.b16 %v1308, %v1304
        %v1697 = vpack.c.b16 %v1309, %v1305
        %v1698 = vpack.c.b16 %v1310, %v1306
        %v1699 = vpack.c.b16 %v1311, %v1307
        %v1700 = vpack.c.b16 %v1316, %v1312
        %v1701 = vpack.c.b16 %v1317, %v1313
        %v1702 = vpack.c.b16 %v1318, %v1314
        %v1703 = vpack.c.b16 %v1319, %v1315
        %v1704 = vpack.c.b16 %v1324, %v1320
        %v1705 = vpack.c.b16 %v1325, %v1321
        %v1706 = vpack.c.b16 %v1326, %v1322
        %v1707 = vpack.c.b16 %v1327, %v1323
        %v1708 = vpack.c.b16 %v1332, %v1328
        %v1709 = vpack.c.b16 %v1333, %v1329
        %v1710 = vpack.c.b16 %v1334, %v1330
        %v1711 = vpack.c.b16 %v1335, %v1331
        %v1712 = vpack.c.b16 %v1340, %v1336
        %v1713 = vpack.c.b16 %v1341, %v1337
        %v1714 = vpack.c.b16 %v1342, %v1338
        %v1715 = vpack.c.b16 %v1343, %v1339
        %v1716 = vpack.c.b16 %v1348, %v1344
        %v1717 = vpack.c.b16 %v1349, %v1345
        %v1718 = vpack.c.b16 %v1350, %v1346
        %v1719 = vpack.c.b16 %v1351, %v1347
        %v1720 = vpack.c.b16 %v1356, %v1352
        %v1721 = vpack.c.b16 %v1357, %v1353
        %v1722 = vpack.c.b16 %v1358, %v1354
        %v1723 = vpack.c.b16 %v1359, %v1355
        %v1724 = vpack.c.b16 %v1364, %v1360
        %v1725 = vpack.c.b16 %v1365, %v1361
        %v1726 = vpack.c.b16 %v1366, %v1362
        %v1727 = vpack.c.b16 %v1367, %v1363
        %v1728 = vpack.c.b16 %v1372, %v1368
        %v1729 = vpack.c.b16 %v1373, %v1369
        %v1730 = vpack.c.b16 %v1374, %v1370
        %v1731 = vpack.c.b16 %v1375, %v1371
        %v1732 = vpack.c.b16 %v1380, %v1376
        %v1733 = vpack.c.b16 %v1381, %v1377
        %v1734 = vpack.c.b16 %v1382, %v1378
        %v1735 = vpack.c.b16 %v1383, %v1379
        %v1736 = vpack.c.b16 %v1388, %v1384
        %v1737 = vpack.c.b16 %v1389, %v1385
        %v1738 = vpack.c.b16 %v1390, %v1386
        %v1739 = vpack.c.b16 %v1391, %v1387
        %v1740 = vpack.c.b16 %v1396, %v1392
        %v1741 = vpack.c.b16 %v1397, %v1393
        %v1742 = vpack.c.b16 %v1398, %v1394
        %v1743 = vpack.c.b16 %v1399, %v1395
        %v1744 = vpack.c.b16 %v1404, %v1400
        %v1745 = vpack.c.b16 %v1405, %v1401
        %v1746 = vpack.c.b16 %v1406, %v1402
        %v1747 = vpack.c.b16 %v1407, %v1403
        %v1748 = vpack.c.b16 %v1412, %v1408
        %v1749 = vpack.c.b16 %v1413, %v1409
        %v1750 = vpack.c.b16 %v1414, %v1410
        %v1751 = vpack.c.b16 %v1415, %v1411
        %v1752 = vpack.c.b16 %v1420, %v1416
        %v1753 = vpack.c.b16 %v1421, %v1417
        %v1754 = vpack.c.b16 %v1422, %v1418
        %v1755 = vpack.c.b16 %v1423, %v1419
        %v1756 = vpack.c.b16 %v1428, %v1424
        %v1757 = vpack.c.b16 %v1429, %v1425
        %v1758 = vpack.c.b16 %v1430, %v1426
        %v1759 = vpack.c.b16 %v1431, %v1427
        %v1760 = vpack.c.b16 %v1436, %v1432
        %v1761 = vpack.c.b16 %v1437, %v1433
        %v1762 = vpack.c.b16 %v1438, %v1434
        %v1763 = vpack.c.b16 %v1439, %v1435
        %v1764 = vpack.c.b16 %v1444, %v1440
        %v1765 = vpack.c.b16 %v1445, %v1441
        %v1766 = vpack.c.b16 %v1446, %v1442
        %v1767 = vpack.c.b16 %v1447, %v1443
        %v1768 = vpack.c.b16 %v1452, %v1448
        %v1769 = vpack.c.b16 %v1453, %v1449
        %v1770 = vpack.c.b16 %v1454, %v1450
        %v1771 = vpack.c.b16 %v1455, %v1451
        %v1772 = vpack.c.b16 %v1460, %v1456
        %v1773 = vpack.c.b16 %v1461, %v1457
        %v1774 = vpack.c.b16 %v1462, %v1458
        %v1775 = vpack.c.b16 %v1463, %v1459
        %v1776 = vpack.c.b16 %v1468, %v1464
        %v1777 = vpack.c.b16 %v1469, %v1465
        %v1778 = vpack.c.b16 %v1470, %v1466
        %v1779 = vpack.c.b16 %v1471, %v1467
        %v1780 = vpack.c.b16 %v1476, %v1472
        %v1781 = vpack.c.b16 %v1477, %v1473
        %v1782 = vpack.c.b16 %v1478, %v1474
        %v1783 = vpack.c.b16 %v1479, %v1475
        %v1784 = vpack.c.b16 %v1484, %v1480
        %v1785 = vpack.c.b16 %v1485, %v1481
        %v1786 = vpack.c.b16 %v1486, %v1482
        %v1787 = vpack.c.b16 %v1487, %v1483
        %v1788 = vpack.c.b16 %v1492, %v1488
        %v1789 = vpack.c.b16 %v1493, %v1489
        %v1790 = vpack.c.b16 %v1494, %v1490
        %v1791 = vpack.c.b16 %v1495, %v1491
        %v1792 = vpack.c.b16 %v1500, %v1496
        %v1793 = vpack.c.b16 %v1501, %v1497
        %v1794 = vpack.c.b16 %v1502, %v1498
        %v1795 = vpack.c.b16 %v1503, %v1499
        %v1796 = vpack.c.b16 %v1508, %v1504
        %v1797 = vpack.c.b16 %v1509, %v1505
        %v1798 = vpack.c.b16 %v1510, %v1506
        %v1799 = vpack.c.b16 %v1511, %v1507
        %v1800 = vpack.c.b16 %v1516, %v1512
        %v1801 = vpack.c.b16 %v1517, %v1513
        %v1802 = vpack.c.b16 %v1518, %v1514
        %v1803 = vpack.c.b16 %v1519, %v1515
        %v1804 = vpack.c.b16 %v1524, %v1520
        %v1805 = vpack.c.b16 %v1525, %v1521
        %v1806 = vpack.c.b16 %v1526, %v1522
        %v1807 = vpack.c.b16 %v1527, %v1523
        %v1808 = vpack.c.b16 %v1532, %v1528
        %v1809 = vpack.c.b16 %v1533, %v1529
        %v1810 = vpack.c.b16 %v1534, %v1530
        %v1811 = vpack.c.b16 %v1535, %v1531
        %v1812 = vpack.c.b16 %v1540, %v1536
        %v1813 = vpack.c.b16 %v1541, %v1537
        %v1814 = vpack.c.b16 %v1542, %v1538
        %v1815 = vpack.c.b16 %v1543, %v1539
        %v1816 = vpack.c.b16 %v1548, %v1544
        %v1817 = vpack.c.b16 %v1549, %v1545
        %v1818 = vpack.c.b16 %v1550, %v1546
        %v1819 = vpack.c.b16 %v1551, %v1547
        %v1820 = vpack.c.b16 %v1556, %v1552
        %v1821 = vpack.c.b16 %v1557, %v1553
        %v1822 = vpack.c.b16 %v1558, %v1554
        %v1823 = vpack.c.b16 %v1559, %v1555
        %v1824 = vpack.c.b16 %v1564, %v1560
        %v1825 = vpack.c.b16 %v1565, %v1561
        %v1826 = vpack.c.b16 %v1566, %v1562
        %v1827 = vpack.c.b16 %v1567, %v1563
        %v1828 = vpack.c.b16 %v1572, %v1568
        %v1829 = vpack.c.b16 %v1573, %v1569
        %v1830 = vpack.c.b16 %v1574, %v1570
        %v1831 = vpack.c.b16 %v1575, %v1571
        %2088 = vmatprep.subr.bf16.mxu0 %v1577
        %2089 = vmatpush1.bf16.msra.mxu0 %v1576
        %2090 = vmatprep.subr.bf16.mxu0 %v1581
        %2091 = vmatpush1.bf16.msra.mxu0 %v1580
        %2092 = vmatprep.subr.bf16.mxu0 %v1585
        %2093 = vmatpush1.bf16.msra.mxu0 %v1584
        %2094 = vmatprep.subr.bf16.mxu0 %v1589
        %2095 = vmatpush1.bf16.msra.mxu0 %v1588
        %2096 = vmatprep.subr.bf16.mxu0 %v1593
        %2097 = vmatpush1.bf16.msra.mxu0 %v1592
        %2098 = vmatprep.subr.bf16.mxu0 %v1597
        %2099 = vmatpush1.bf16.msra.mxu0 %v1596
        %2100 = vmatprep.subr.bf16.mxu0 %v1601
        %2101 = vmatpush1.bf16.msra.mxu0 %v1600
        %2102 = vmatprep.subr.bf16.mxu0 %v1605
        %2103 = vmatpush1.bf16.msra.mxu0 %v1604
        %2104 = vmatprep.subr.bf16.mxu0 %v1609
        %2105 = vmatpush1.bf16.msra.mxu0 %v1608
        %2106 = vmatprep.subr.bf16.mxu0 %v1613
        %2107 = vmatpush1.bf16.msra.mxu0 %v1612
        %2108 = vmatprep.subr.bf16.mxu0 %v1617
        %2109 = vmatpush1.bf16.msra.mxu0 %v1616
        %2110 = vmatprep.subr.bf16.mxu0 %v1621
        %2111 = vmatpush1.bf16.msra.mxu0 %v1620
        %2112 = vmatprep.subr.bf16.mxu0 %v1625
        %2113 = vmatpush1.bf16.msra.mxu0 %v1624
        %2114 = vmatprep.subr.bf16.mxu0 %v1629
        %2115 = vmatpush1.bf16.msra.mxu0 %v1628
        %2116 = vmatprep.subr.bf16.mxu0 %v1633
        %2117 = vmatpush1.bf16.msra.mxu0 %v1632
        %2118 = vmatprep.subr.bf16.mxu0 %v1637
        %2119 = vmatpush1.bf16.msra.mxu0 %v1636
        %2120 = vmatprep.mubr.bf16.mxu0 %v793
        %2121 = vmatmul.mubr.bf16.gmra.mrb[0].mxu0 %v792
        %v2122 = vpop.f32.mrb[0].mxu0
        %v2123 = vadd.f32 %v751, %v2122
        %v2124 = vpop.f32.mrb[0].mxu0
        %v2125 = vadd.f32 %v755, %v2124
        %v2126 = vpop.f32.mrb[0].mxu0
        %v2127 = vadd.f32 %v751, %v2126
        %v2128 = vpop.f32.mrb[0].mxu0
        %v2129 = vadd.f32 %v755, %v2128
        %2130 = vdwg.mxu0
        %2131 = vmatprep.subr.bf16.mxu0 %v1641
        %2132 = vmatpush1.bf16.msra.mxu0 %v1640
        %2133 = vmatprep.subr.bf16.mxu0 %v1645
        %2134 = vmatpush1.bf16.msra.mxu0 %v1644
        %2135 = vmatprep.subr.bf16.mxu0 %v1649
        %2136 = vmatpush1.bf16.msra.mxu0 %v1648
        %2137 = vmatprep.subr.bf16.mxu0 %v1653
        %2138 = vmatpush1.bf16.msra.mxu0 %v1652
        %2139 = vmatprep.subr.bf16.mxu0 %v1657
        %2140 = vmatpush1.bf16.msra.mxu0 %v1656
        %2141 = vmatprep.subr.bf16.mxu0 %v1661
        %2142 = vmatpush1.bf16.msra.mxu0 %v1660
        %2143 = vmatprep.subr.bf16.mxu0 %v1665
        %2144 = vmatpush1.bf16.msra.mxu0 %v1664
        %2145 = vmatprep.subr.bf16.mxu0 %v1669
        %2146 = vmatpush1.bf16.msra.mxu0 %v1668
        %2147 = vmatprep.subr.bf16.mxu0 %v1673
        %2148 = vmatpush1.bf16.msra.mxu0 %v1672
        %2149 = vmatprep.subr.bf16.mxu0 %v1677
        %2150 = vmatpush1.bf16.msra.mxu0 %v1676
        %2151 = vmatprep.subr.bf16.mxu0 %v1681
        %2152 = vmatpush1.bf16.msra.mxu0 %v1680
        %2153 = vmatprep.subr.bf16.mxu0 %v1685
        %2154 = vmatpush1.bf16.msra.mxu0 %v1684
        %2155 = vmatprep.subr.bf16.mxu0 %v1689
        %2156 = vmatpush1.bf16.msra.mxu0 %v1688
        %2157 = vmatprep.subr.bf16.mxu0 %v1693
        %2158 = vmatpush1.bf16.msra.mxu0 %v1692
        %2159 = vmatprep.subr.bf16.mxu0 %v1697
        %2160 = vmatpush1.bf16.msra.mxu0 %v1696
        %2161 = vmatprep.subr.bf16.mxu0 %v1701
        %2162 = vmatpush1.bf16.msra.mxu0 %v1700
        %2163 = vmatprep.mubr.bf16.mxu0 %v795
        %2164 = vmatmul.mubr.bf16.gmra.mrb[0].mxu0 %v794
        %v2165 = vpop.f32.mrb[0].mxu0
        %v2166 = vadd.f32 %v2123, %v2165
        %v2167 = vpop.f32.mrb[0].mxu0
        %v2168 = vadd.f32 %v2125, %v2167
        %v2169 = vpop.f32.mrb[0].mxu0
        %v2170 = vadd.f32 %v2127, %v2169
        %v2171 = vpop.f32.mrb[0].mxu0
        %v2172 = vadd.f32 %v2129, %v2171
        %2173 = vdwg.mxu0
        %2174 = vmatprep.subr.bf16.mxu0 %v1705
        %2175 = vmatpush1.bf16.msra.mxu0 %v1704
        %2176 = vmatprep.subr.bf16.mxu0 %v1709
        %2177 = vmatpush1.bf16.msra.mxu0 %v1708
        %2178 = vmatprep.subr.bf16.mxu0 %v1713
        %2179 = vmatpush1.bf16.msra.mxu0 %v1712
        %2180 = vmatprep.subr.bf16.mxu0 %v1717
        %2181 = vmatpush1.bf16.msra.mxu0 %v1716
        %2182 = vmatprep.subr.bf16.mxu0 %v1721
        %2183 = vmatpush1.bf16.msra.mxu0 %v1720
        %2184 = vmatprep.subr.bf16.mxu0 %v1725
        %2185 = vmatpush1.bf16.msra.mxu0 %v1724
        %2186 = vmatprep.subr.bf16.mxu0 %v1729
        %2187 = vmatpush1.bf16.msra.mxu0 %v1728
        %2188 = vmatprep.subr.bf16.mxu0 %v1733
        %2189 = vmatpush1.bf16.msra.mxu0 %v1732
        %2190 = vmatprep.subr.bf16.mxu0 %v1737
        %2191 = vmatpush1.bf16.msra.mxu0 %v1736
        %2192 = vmatprep.subr.bf16.mxu0 %v1741
        %2193 = vmatpush1.bf16.msra.mxu0 %v1740
        %2194 = vmatprep.subr.bf16.mxu0 %v1745
        %2195 = vmatpush1.bf16.msra.mxu0 %v1744
        %2196 = vmatprep.subr.bf16.mxu0 %v1749
        %2197 = vmatpush1.bf16.msra.mxu0 %v1748
        %2198 = vmatprep.subr.bf16.mxu0 %v1753
        %2199 = vmatpush1.bf16.msra.mxu0 %v1752
        %2200 = vmatprep.subr.bf16.mxu0 %v1757
        %2201 = vmatpush1.bf16.msra.mxu0 %v1756
        %2202 = vmatprep.subr.bf16.mxu0 %v1761
        %2203 = vmatpush1.bf16.msra.mxu0 %v1760
        %2204 = vmatprep.subr.bf16.mxu0 %v1765
        %2205 = vmatpush1.bf16.msra.mxu0 %v1764
        %2206 = vmatprep.mubr.bf16.mxu0 %v797
        %2207 = vmatmul.mubr.bf16.gmra.mrb[0].mxu0 %v796
        %v2208 = vpop.f32.mrb[0].mxu0
        %v2209 = vadd.f32 %v2166, %v2208
        %v2210 = vpop.f32.mrb[0].mxu0
        %v2211 = vadd.f32 %v2168, %v2210
        %v2212 = vpop.f32.mrb[0].mxu0
        %v2213 = vadd.f32 %v2170, %v2212
        %v2214 = vpop.f32.mrb[0].mxu0
        %v2215 = vadd.f32 %v2172, %v2214
        %2216 = vdwg.mxu0
        %2217 = vmatprep.subr.bf16.mxu0 %v1769
        %2218 = vmatpush1.bf16.msra.mxu0 %v1768
        %2219 = vmatprep.subr.bf16.mxu0 %v1773
        %2220 = vmatpush1.bf16.msra.mxu0 %v1772
        %2221 = vmatprep.subr.bf16.mxu0 %v1777
        %2222 = vmatpush1.bf16.msra.mxu0 %v1776
        %2223 = vmatprep.subr.bf16.mxu0 %v1781
        %2224 = vmatpush1.bf16.msra.mxu0 %v1780
        %2225 = vmatprep.subr.bf16.mxu0 %v1785
        %2226 = vmatpush1.bf16.msra.mxu0 %v1784
        %2227 = vmatprep.subr.bf16.mxu0 %v1789
        %2228 = vmatpush1.bf16.msra.mxu0 %v1788
        %2229 = vmatprep.subr.bf16.mxu0 %v1793
        %2230 = vmatpush1.bf16.msra.mxu0 %v1792
        %2231 = vmatprep.subr.bf16.mxu0 %v1797
        %2232 = vmatpush1.bf16.msra.mxu0 %v1796
        %2233 = vmatprep.subr.bf16.mxu0 %v1801
        %2234 = vmatpush1.bf16.msra.mxu0 %v1800
        %2235 = vmatprep.subr.bf16.mxu0 %v1805
        %2236 = vmatpush1.bf16.msra.mxu0 %v1804
        %2237 = vmatprep.subr.bf16.mxu0 %v1809
        %2238 = vmatpush1.bf16.msra.mxu0 %v1808
        %2239 = vmatprep.subr.bf16.mxu0 %v1813
        %2240 = vmatpush1.bf16.msra.mxu0 %v1812
        %2241 = vmatprep.subr.bf16.mxu0 %v1817
        %2242 = vmatpush1.bf16.msra.mxu0 %v1816
        %2243 = vmatprep.subr.bf16.mxu0 %v1821
        %2244 = vmatpush1.bf16.msra.mxu0 %v1820
        %2245 = vmatprep.subr.bf16.mxu0 %v1825
        %2246 = vmatpush1.bf16.msra.mxu0 %v1824
        %2247 = vmatprep.subr.bf16.mxu0 %v1829
        %2248 = vmatpush1.bf16.msra.mxu0 %v1828
        %2249 = vmatprep.mubr.bf16.mxu0 %v799
        %2250 = vmatmul.mubr.bf16.gmra.mrb[0].mxu0 %v798
        %v2251 = vpop.f32.mrb[0].mxu0
        %v2252 = vadd.f32 %v2209, %v2251
        %v2253 = vpop.f32.mrb[0].mxu0
        %v2254 = vadd.f32 %v2211, %v2253
        %v2255 = vpop.f32.mrb[0].mxu0
        %v2256 = vadd.f32 %v2213, %v2255
        %v2257 = vpop.f32.mrb[0].mxu0
        %v2258 = vadd.f32 %v2215, %v2257
        %2259 = vdwg.mxu0
        %2260 = vmatprep.subr.bf16.mxu0 %v1579
        %2261 = vmatpush1.bf16.msra.mxu0 %v1578
        %2262 = vmatprep.subr.bf16.mxu0 %v1583
        %2263 = vmatpush1.bf16.msra.mxu0 %v1582
        %2264 = vmatprep.subr.bf16.mxu0 %v1587
        %2265 = vmatpush1.bf16.msra.mxu0 %v1586
        %2266 = vmatprep.subr.bf16.mxu0 %v1591
        %2267 = vmatpush1.bf16.msra.mxu0 %v1590
        %2268 = vmatprep.subr.bf16.mxu0 %v1595
        %2269 = vmatpush1.bf16.msra.mxu0 %v1594
        %2270 = vmatprep.subr.bf16.mxu0 %v1599
        %2271 = vmatpush1.bf16.msra.mxu0 %v1598
        %2272 = vmatprep.subr.bf16.mxu0 %v1603
        %2273 = vmatpush1.bf16.msra.mxu0 %v1602
        %2274 = vmatprep.subr.bf16.mxu0 %v1607
        %2275 = vmatpush1.bf16.msra.mxu0 %v1606
        %2276 = vmatprep.subr.bf16.mxu0 %v1611
        %2277 = vmatpush1.bf16.msra.mxu0 %v1610
        %2278 = vmatprep.subr.bf16.mxu0 %v1615
        %2279 = vmatpush1.bf16.msra.mxu0 %v1614
        %2280 = vmatprep.subr.bf16.mxu0 %v1619
        %2281 = vmatpush1.bf16.msra.mxu0 %v1618
        %2282 = vmatprep.subr.bf16.mxu0 %v1623
        %2283 = vmatpush1.bf16.msra.mxu0 %v1622
        %2284 = vmatprep.subr.bf16.mxu0 %v1627
        %2285 = vmatpush1.bf16.msra.mxu0 %v1626
        %2286 = vmatprep.subr.bf16.mxu0 %v1631
        %2287 = vmatpush1.bf16.msra.mxu0 %v1630
        %2288 = vmatprep.subr.bf16.mxu0 %v1635
        %2289 = vmatpush1.bf16.msra.mxu0 %v1634
        %2290 = vmatprep.subr.bf16.mxu0 %v1639
        %2291 = vmatpush1.bf16.msra.mxu0 %v1638
        %2292 = vmatprep.mubr.bf16.mxu0 %v793
        %2293 = vmatmul.mubr.bf16.gmra.mrb[0].mxu0 %v792
        %v2294 = vpop.f32.mrb[0].mxu0
        %v2295 = vadd.f32 %v759, %v2294
        %v2296 = vpop.f32.mrb[0].mxu0
        %v2297 = vadd.f32 %v763, %v2296
        %v2298 = vpop.f32.mrb[0].mxu0
        %v2299 = vadd.f32 %v759, %v2298
        %v2300 = vpop.f32.mrb[0].mxu0
        %v2301 = vadd.f32 %v763, %v2300
        %2302 = vdwg.mxu0
        %2303 = vmatprep.subr.bf16.mxu0 %v1643
        %2304 = vmatpush1.bf16.msra.mxu0 %v1642
        %2305 = vmatprep.subr.bf16.mxu0 %v1647
        %2306 = vmatpush1.bf16.msra.mxu0 %v1646
        %2307 = vmatprep.subr.bf16.mxu0 %v1651
        %2308 = vmatpush1.bf16.msra.mxu0 %v1650
        %2309 = vmatprep.subr.bf16.mxu0 %v1655
        %2310 = vmatpush1.bf16.msra.mxu0 %v1654
        %2311 = vmatprep.subr.bf16.mxu0 %v1659
        %2312 = vmatpush1.bf16.msra.mxu0 %v1658
        %2313 = vmatprep.subr.bf16.mxu0 %v1663
        %2314 = vmatpush1.bf16.msra.mxu0 %v1662
        %2315 = vmatprep.subr.bf16.mxu0 %v1667
        %2316 = vmatpush1.bf16.msra.mxu0 %v1666
        %2317 = vmatprep.subr.bf16.mxu0 %v1671
        %2318 = vmatpush1.bf16.msra.mxu0 %v1670
        %2319 = vmatprep.subr.bf16.mxu0 %v1675
        %2320 = vmatpush1.bf16.msra.mxu0 %v1674
        %2321 = vmatprep.subr.bf16.mxu0 %v1679
        %2322 = vmatpush1.bf16.msra.mxu0 %v1678
        %2323 = vmatprep.subr.bf16.mxu0 %v1683
        %2324 = vmatpush1.bf16.msra.mxu0 %v1682
        %2325 = vmatprep.subr.bf16.mxu0 %v1687
        %2326 = vmatpush1.bf16.msra.mxu0 %v1686
        %2327 = vmatprep.subr.bf16.mxu0 %v1691
        %2328 = vmatpush1.bf16.msra.mxu0 %v1690
        %2329 = vmatprep.subr.bf16.mxu0 %v1695
        %2330 = vmatpush1.bf16.msra.mxu0 %v1694
        %2331 = vmatprep.subr.bf16.mxu0 %v1699
        %2332 = vmatpush1.bf16.msra.mxu0 %v1698
        %2333 = vmatprep.subr.bf16.mxu0 %v1703
        %2334 = vmatpush1.bf16.msra.mxu0 %v1702
        %2335 = vmatprep.mubr.bf16.mxu0 %v795
        %2336 = vmatmul.mubr.bf16.gmra.mrb[0].mxu0 %v794
        %v2337 = vpop.f32.mrb[0].mxu0
        %v2338 = vadd.f32 %v2295, %v2337
        %v2339 = vpop.f32.mrb[0].mxu0
        %v2340 = vadd.f32 %v2297, %v2339
        %v2341 = vpop.f32.mrb[0].mxu0
        %v2342 = vadd.f32 %v2299, %v2341
        %v2343 = vpop.f32.mrb[0].mxu0
        %v2344 = vadd.f32 %v2301, %v2343
        %2345 = vdwg.mxu0
        %2346 = vmatprep.subr.bf16.mxu0 %v1707
        %2347 = vmatpush1.bf16.msra.mxu0 %v1706
        %2348 = vmatprep.subr.bf16.mxu0 %v1711
        %2349 = vmatpush1.bf16.msra.mxu0 %v1710
        %2350 = vmatprep.subr.bf16.mxu0 %v1715
        %2351 = vmatpush1.bf16.msra.mxu0 %v1714
        %2352 = vmatprep.subr.bf16.mxu0 %v1719
        %2353 = vmatpush1.bf16.msra.mxu0 %v1718
        %2354 = vmatprep.subr.bf16.mxu0 %v1723
        %2355 = vmatpush1.bf16.msra.mxu0 %v1722
        %2356 = vmatprep.subr.bf16.mxu0 %v1727
        %2357 = vmatpush1.bf16.msra.mxu0 %v1726
        %2358 = vmatprep.subr.bf16.mxu0 %v1731
        %2359 = vmatpush1.bf16.msra.mxu0 %v1730
        %2360 = vmatprep.subr.bf16.mxu0 %v1735
        %2361 = vmatpush1.bf16.msra.mxu0 %v1734
        %2362 = vmatprep.subr.bf16.mxu0 %v1739
        %2363 = vmatpush1.bf16.msra.mxu0 %v1738
        %2364 = vmatprep.subr.bf16.mxu0 %v1743
        %2365 = vmatpush1.bf16.msra.mxu0 %v1742
        %2366 = vmatprep.subr.bf16.mxu0 %v1747
        %2367 = vmatpush1.bf16.msra.mxu0 %v1746
        %2368 = vmatprep.subr.bf16.mxu0 %v1751
        %2369 = vmatpush1.bf16.msra.mxu0 %v1750
        %2370 = vmatprep.subr.bf16.mxu0 %v1755
        %2371 = vmatpush1.bf16.msra.mxu0 %v1754
        %2372 = vmatprep.subr.bf16.mxu0 %v1759
        %2373 = vmatpush1.bf16.msra.mxu0 %v1758
        %2374 = vmatprep.subr.bf16.mxu0 %v1763
        %2375 = vmatpush1.bf16.msra.mxu0 %v1762
        %2376 = vmatprep.subr.bf16.mxu0 %v1767
        %2377 = vmatpush1.bf16.msra.mxu0 %v1766
        %2378 = vmatprep.mubr.bf16.mxu0 %v797
        %2379 = vmatmul.mubr.bf16.gmra.mrb[0].mxu0 %v796
        %v2380 = vpop.f32.mrb[0].mxu0
        %v2381 = vadd.f32 %v2338, %v2380
        %v2382 = vpop.f32.mrb[0].mxu0
        %v2383 = vadd.f32 %v2340, %v2382
        %v2384 = vpop.f32.mrb[0].mxu0
        %v2385 = vadd.f32 %v2342, %v2384
        %v2386 = vpop.f32.mrb[0].mxu0
        %v2387 = vadd.f32 %v2344, %v2386
        %2388 = vdwg.mxu0
        %2389 = vmatprep.subr.bf16.mxu0 %v1771
        %2390 = vmatpush1.bf16.msra.mxu0 %v1770
        %2391 = vmatprep.subr.bf16.mxu0 %v1775
        %2392 = vmatpush1.bf16.msra.mxu0 %v1774
        %2393 = vmatprep.subr.bf16.mxu0 %v1779
        %2394 = vmatpush1.bf16.msra.mxu0 %v1778
        %2395 = vmatprep.subr.bf16.mxu0 %v1783
        %2396 = vmatpush1.bf16.msra.mxu0 %v1782
        %2397 = vmatprep.subr.bf16.mxu0 %v1787
        %2398 = vmatpush1.bf16.msra.mxu0 %v1786
        %2399 = vmatprep.subr.bf16.mxu0 %v1791
        %2400 = vmatpush1.bf16.msra.mxu0 %v1790
        %2401 = vmatprep.subr.bf16.mxu0 %v1795
        %2402 = vmatpush1.bf16.msra.mxu0 %v1794
        %2403 = vmatprep.subr.bf16.mxu0 %v1799
        %2404 = vmatpush1.bf16.msra.mxu0 %v1798
        %2405 = vmatprep.subr.bf16.mxu0 %v1803
        %2406 = vmatpush1.bf16.msra.mxu0 %v1802
        %2407 = vmatprep.subr.bf16.mxu0 %v1807
        %2408 = vmatpush1.bf16.msra.mxu0 %v1806
        %2409 = vmatprep.subr.bf16.mxu0 %v1811
        %2410 = vmatpush1.bf16.msra.mxu0 %v1810
        %2411 = vmatprep.subr.bf16.mxu0 %v1815
        %2412 = vmatpush1.bf16.msra.mxu0 %v1814
        %2413 = vmatprep.subr.bf16.mxu0 %v1819
        %2414 = vmatpush1.bf16.msra.mxu0 %v1818
        %2415 = vmatprep.subr.bf16.mxu0 %v1823
        %2416 = vmatpush1.bf16.msra.mxu0 %v1822
        %2417 = vmatprep.subr.bf16.mxu0 %v1827
        %2418 = vmatpush1.bf16.msra.mxu0 %v1826
        %2419 = vmatprep.subr.bf16.mxu0 %v1831
        %2420 = vmatpush1.bf16.msra.mxu0 %v1830
        %2421 = vmatprep.mubr.bf16.mxu0 %v799
        %2422 = vmatmul.mubr.bf16.gmra.mrb[0].mxu0 %v798
        %v2423 = vpop.f32.mrb[0].mxu0
        %v2424 = vadd.f32 %v2381, %v2423
        %v2425 = vpop.f32.mrb[0].mxu0
        %v2426 = vadd.f32 %v2383, %v2425
        %v2427 = vpop.f32.mrb[0].mxu0
        %v2428 = vadd.f32 %v2385, %v2427
        %v2429 = vpop.f32.mrb[0].mxu0
        %v2430 = vadd.f32 %v2387, %v2429
        %2431 = vdwg.mxu0
        %vm2432 = vcmp.ge.f32.partialorder %v2252, 0.0
        %vm2433 = vcmp.ge.f32.partialorder %v2254, 0.0
        %vm2434 = vcmp.ge.f32.partialorder %v2424, 0.0
        %vm2435 = vcmp.ge.f32.partialorder %v2426, 0.0
        %vm2436 = vcmp.ge.f32.partialorder %v2256, 0.0
        %vm2437 = vcmp.ge.f32.partialorder %v2258, 0.0
        %vm2438 = vcmp.ge.f32.partialorder %v2428, 0.0
        %vm2439 = vcmp.ge.f32.partialorder %v2430, 0.0
        %v2440 = vmul.f32 %v2252, 0.01
        %v2441 = vmul.f32 %v2254, 0.01
        %v2442 = vmul.f32 %v2424, 0.01
        %v2443 = vmul.f32 %v2426, 0.01
        %v2444 = vmul.f32 %v2256, 0.01
        %v2445 = vmul.f32 %v2258, 0.01
        %v2446 = vmul.f32 %v2428, 0.01
        %v2447 = vmul.f32 %v2430, 0.01
        %v2448 = vsel %vm2432, %v2252, %v2440
        %v2449 = vsel %vm2433, %v2254, %v2441
        %v2450 = vsel %vm2434, %v2424, %v2442
        %v2451 = vsel %vm2435, %v2426, %v2443
        %v2452 = vsel %vm2436, %v2256, %v2444
        %v2453 = vsel %vm2437, %v2258, %v2445
        %v2454 = vsel %vm2438, %v2428, %v2446
        %v2455 = vsel %vm2439, %v2430, %v2447
        %v2456 = vpack.c.bf16 %v2452, %v2448
        %v2457 = vpack.c.bf16 %v2453, %v2449
        %v2458 = vpack.c.bf16 %v2454, %v2450
        %v2459 = vpack.c.bf16 %v2455, %v2451
        %v2460 = vld [vmem:[#allocation7] sm:$0xff]
        %v2461 = vld [vmem:[#allocation7 + $0x8] sm:$0xff]
        %v2462 = vld [vmem:[#allocation7 + $0x10] sm:$0xff]
        %v2463 = vld [vmem:[#allocation7 + $0x18] sm:$0xff]
        %v2464 = vld [vmem:[#allocation7 + $0x20] sm:$0xff]
        %v2465 = vld [vmem:[#allocation7 + $0x28] sm:$0xff]
        %v2466 = vld [vmem:[#allocation7 + $0x30] sm:$0xff]
        %v2467 = vld [vmem:[#allocation7 + $0x38] sm:$0xff]
        %v2468 = vld [vmem:[#allocation7 + $0x40] sm:$0xff]
        %v2469 = vld [vmem:[#allocation7 + $0x48] sm:$0xff]
        %v2470 = vld [vmem:[#allocation7 + $0x50] sm:$0xff]
        %v2471 = vld [vmem:[#allocation7 + $0x58] sm:$0xff]
        %v2472 = vld [vmem:[#allocation7 + $0x60] sm:$0xff]
        %v2473 = vld [vmem:[#allocation7 + $0x68] sm:$0xff]
        %v2474 = vld [vmem:[#allocation7 + $0x70] sm:$0xff]
        %v2475 = vld [vmem:[#allocation7 + $0x78] sm:$0xff]
        %v2476 = vld [vmem:[#allocation7 + $0x80] sm:$0xff]
        %v2477 = vld [vmem:[#allocation7 + $0x88] sm:$0xff]
        %v2478 = vld [vmem:[#allocation7 + $0x90] sm:$0xff]
        %v2479 = vld [vmem:[#allocation7 + $0x98] sm:$0xff]
        %v2480 = vld [vmem:[#allocation7 + $0xa0] sm:$0xff]
        %v2481 = vld [vmem:[#allocation7 + $0xa8] sm:$0xff]
        %v2482 = vld [vmem:[#allocation7 + $0xb0] sm:$0xff]
        %v2483 = vld [vmem:[#allocation7 + $0xb8] sm:$0xff]
        %v2484 = vld [vmem:[#allocation7 + $0xc0] sm:$0xff]
        %v2485 = vld [vmem:[#allocation7 + $0xc8] sm:$0xff]
        %v2486 = vld [vmem:[#allocation7 + $0xd0] sm:$0xff]
        %v2487 = vld [vmem:[#allocation7 + $0xd8] sm:$0xff]
        %v2488 = vld [vmem:[#allocation7 + $0xe0] sm:$0xff]
        %v2489 = vld [vmem:[#allocation7 + $0xe8] sm:$0xff]
        %v2490 = vld [vmem:[#allocation7 + $0xf0] sm:$0xff]
        %v2491 = vld [vmem:[#allocation7 + $0xf8] sm:$0xff]
        %v2492 = vld [vmem:[#allocation7 + $0x100] sm:$0xff]
        %v2493 = vld [vmem:[#allocation7 + $0x108] sm:$0xff]
        %v2494 = vld [vmem:[#allocation7 + $0x110] sm:$0xff]
        %v2495 = vld [vmem:[#allocation7 + $0x118] sm:$0xff]
        %v2496 = vld [vmem:[#allocation7 + $0x120] sm:$0xff]
        %v2497 = vld [vmem:[#allocation7 + $0x128] sm:$0xff]
        %v2498 = vld [vmem:[#allocation7 + $0x130] sm:$0xff]
        %v2499 = vld [vmem:[#allocation7 + $0x138] sm:$0xff]
        %v2500 = vld [vmem:[#allocation7 + $0x140] sm:$0xff]
        %v2501 = vld [vmem:[#allocation7 + $0x148] sm:$0xff]
        %v2502 = vld [vmem:[#allocation7 + $0x150] sm:$0xff]
        %v2503 = vld [vmem:[#allocation7 + $0x158] sm:$0xff]
        %v2504 = vld [vmem:[#allocation7 + $0x160] sm:$0xff]
        %v2505 = vld [vmem:[#allocation7 + $0x168] sm:$0xff]
        %v2506 = vld [vmem:[#allocation7 + $0x170] sm:$0xff]
        %v2507 = vld [vmem:[#allocation7 + $0x178] sm:$0xff]
        %v2508 = vld [vmem:[#allocation7 + $0x180] sm:$0xff]
        %v2509 = vld [vmem:[#allocation7 + $0x188] sm:$0xff]
        %v2510 = vld [vmem:[#allocation7 + $0x190] sm:$0xff]
        %v2511 = vld [vmem:[#allocation7 + $0x198] sm:$0xff]
        %v2512 = vld [vmem:[#allocation7 + $0x1a0] sm:$0xff]
        %v2513 = vld [vmem:[#allocation7 + $0x1a8] sm:$0xff]
        %v2514 = vld [vmem:[#allocation7 + $0x1b0] sm:$0xff]
        %v2515 = vld [vmem:[#allocation7 + $0x1b8] sm:$0xff]
        %v2516 = vld [vmem:[#allocation7 + $0x1c0] sm:$0xff]
        %v2517 = vld [vmem:[#allocation7 + $0x1c8] sm:$0xff]
        %v2518 = vld [vmem:[#allocation7 + $0x1d0] sm:$0xff]
        %v2519 = vld [vmem:[#allocation7 + $0x1d8] sm:$0xff]
        %v2520 = vld [vmem:[#allocation7 + $0x1e0] sm:$0xff]
        %v2521 = vld [vmem:[#allocation7 + $0x1e8] sm:$0xff]
        %v2522 = vld [vmem:[#allocation7 + $0x1f0] sm:$0xff]
        %v2523 = vld [vmem:[#allocation7 + $0x1f8] sm:$0xff]
        %v2524 = vld [vmem:[#allocation7 + $0x200] sm:$0xff]
        %v2525 = vld [vmem:[#allocation7 + $0x208] sm:$0xff]
        %v2526 = vld [vmem:[#allocation7 + $0x210] sm:$0xff]
        %v2527 = vld [vmem:[#allocation7 + $0x218] sm:$0xff]
        %v2528 = vld [vmem:[#allocation7 + $0x220] sm:$0xff]
        %v2529 = vld [vmem:[#allocation7 + $0x228] sm:$0xff]
        %v2530 = vld [vmem:[#allocation7 + $0x230] sm:$0xff]
        %v2531 = vld [vmem:[#allocation7 + $0x238] sm:$0xff]
        %v2532 = vld [vmem:[#allocation7 + $0x240] sm:$0xff]
        %v2533 = vld [vmem:[#allocation7 + $0x248] sm:$0xff]
        %v2534 = vld [vmem:[#allocation7 + $0x250] sm:$0xff]
        %v2535 = vld [vmem:[#allocation7 + $0x258] sm:$0xff]
        %v2536 = vld [vmem:[#allocation7 + $0x260] sm:$0xff]
        %v2537 = vld [vmem:[#allocation7 + $0x268] sm:$0xff]
        %v2538 = vld [vmem:[#allocation7 + $0x270] sm:$0xff]
        %v2539 = vld [vmem:[#allocation7 + $0x278] sm:$0xff]
        %v2540 = vld [vmem:[#allocation7 + $0x280] sm:$0xff]
        %v2541 = vld [vmem:[#allocation7 + $0x288] sm:$0xff]
        %v2542 = vld [vmem:[#allocation7 + $0x290] sm:$0xff]
        %v2543 = vld [vmem:[#allocation7 + $0x298] sm:$0xff]
        %v2544 = vld [vmem:[#allocation7 + $0x2a0] sm:$0xff]
        %v2545 = vld [vmem:[#allocation7 + $0x2a8] sm:$0xff]
        %v2546 = vld [vmem:[#allocation7 + $0x2b0] sm:$0xff]
        %v2547 = vld [vmem:[#allocation7 + $0x2b8] sm:$0xff]
        %v2548 = vld [vmem:[#allocation7 + $0x2c0] sm:$0xff]
        %v2549 = vld [vmem:[#allocation7 + $0x2c8] sm:$0xff]
        %v2550 = vld [vmem:[#allocation7 + $0x2d0] sm:$0xff]
        %v2551 = vld [vmem:[#allocation7 + $0x2d8] sm:$0xff]
        %v2552 = vld [vmem:[#allocation7 + $0x2e0] sm:$0xff]
        %v2553 = vld [vmem:[#allocation7 + $0x2e8] sm:$0xff]
        %v2554 = vld [vmem:[#allocation7 + $0x2f0] sm:$0xff]
        %v2555 = vld [vmem:[#allocation7 + $0x2f8] sm:$0xff]
        %v2556 = vld [vmem:[#allocation7 + $0x300] sm:$0xff]
        %v2557 = vld [vmem:[#allocation7 + $0x308] sm:$0xff]
        %v2558 = vld [vmem:[#allocation7 + $0x310] sm:$0xff]
        %v2559 = vld [vmem:[#allocation7 + $0x318] sm:$0xff]
        %v2560 = vld [vmem:[#allocation7 + $0x320] sm:$0xff]
        %v2561 = vld [vmem:[#allocation7 + $0x328] sm:$0xff]
        %v2562 = vld [vmem:[#allocation7 + $0x330] sm:$0xff]
        %v2563 = vld [vmem:[#allocation7 + $0x338] sm:$0xff]
        %v2564 = vld [vmem:[#allocation7 + $0x340] sm:$0xff]
        %v2565 = vld [vmem:[#allocation7 + $0x348] sm:$0xff]
        %v2566 = vld [vmem:[#allocation7 + $0x350] sm:$0xff]
        %v2567 = vld [vmem:[#allocation7 + $0x358] sm:$0xff]
        %v2568 = vld [vmem:[#allocation7 + $0x360] sm:$0xff]
        %v2569 = vld [vmem:[#allocation7 + $0x368] sm:$0xff]
        %v2570 = vld [vmem:[#allocation7 + $0x370] sm:$0xff]
        %v2571 = vld [vmem:[#allocation7 + $0x378] sm:$0xff]
        %v2572 = vld [vmem:[#allocation7 + $0x380] sm:$0xff]
        %v2573 = vld [vmem:[#allocation7 + $0x388] sm:$0xff]
        %v2574 = vld [vmem:[#allocation7 + $0x390] sm:$0xff]
        %v2575 = vld [vmem:[#allocation7 + $0x398] sm:$0xff]
        %v2576 = vld [vmem:[#allocation7 + $0x3a0] sm:$0xff]
        %v2577 = vld [vmem:[#allocation7 + $0x3a8] sm:$0xff]
        %v2578 = vld [vmem:[#allocation7 + $0x3b0] sm:$0xff]
        %v2579 = vld [vmem:[#allocation7 + $0x3b8] sm:$0xff]
        %v2580 = vld [vmem:[#allocation7 + $0x3c0] sm:$0xff]
        %v2581 = vld [vmem:[#allocation7 + $0x3c8] sm:$0xff]
        %v2582 = vld [vmem:[#allocation7 + $0x3d0] sm:$0xff]
        %v2583 = vld [vmem:[#allocation7 + $0x3d8] sm:$0xff]
        %v2584 = vld [vmem:[#allocation7 + $0x3e0] sm:$0xff]
        %v2585 = vld [vmem:[#allocation7 + $0x3e8] sm:$0xff]
        %v2586 = vld [vmem:[#allocation7 + $0x3f0] sm:$0xff]
        %v2587 = vld [vmem:[#allocation7 + $0x3f8] sm:$0xff]
        %v2588 = vld [vmem:[%s4] sm:$0xf]
        %v2590 = vlaneseq
        %v2591 = vshrl.u32 %v2590, 7
        %v2592 = vsub.s32 0, %v2591
        %v2593 = vrot.slane %v2588, %v2592
        %v2594 = vlaneseq
        %v2595 = vshrl.u32 %v2594, 7
        %v2596 = vsub.s32 1, %v2595
        %v2597 = vrot.slane %v2588, %v2596
        %v2598 = vlaneseq
        %v2599 = vshrl.u32 %v2598, 7
        %v2600 = vsub.s32 2, %v2599
        %v2601 = vrot.slane %v2588, %v2600
        %v2602 = vlaneseq
        %v2603 = vshrl.u32 %v2602, 7
        %v2604 = vsub.s32 3, %v2603
        %v2605 = vrot.slane %v2588, %v2604
        %v2738 = vunpack.c.l.b16 %v2460
        %v2739 = vunpack.c.h.b16 %v2460
        %v2740 = vunpack.c.l.b16 %v2461
        %v2741 = vunpack.c.h.b16 %v2461
        %v2742 = vunpack.c.l.b16 %v2462
        %v2743 = vunpack.c.h.b16 %v2462
        %v2744 = vunpack.c.l.b16 %v2463
        %v2745 = vunpack.c.h.b16 %v2463
        %v2746 = vunpack.c.l.b16 %v2464
        %v2747 = vunpack.c.h.b16 %v2464
        %v2748 = vunpack.c.l.b16 %v2465
        %v2749 = vunpack.c.h.b16 %v2465
        %v2750 = vunpack.c.l.b16 %v2466
        %v2751 = vunpack.c.h.b16 %v2466
        %v2752 = vunpack.c.l.b16 %v2467
        %v2753 = vunpack.c.h.b16 %v2467
        %v2754 = vunpack.c.l.b16 %v2468
        %v2755 = vunpack.c.h.b16 %v2468
        %v2756 = vunpack.c.l.b16 %v2469
        %v2757 = vunpack.c.h.b16 %v2469
        %v2758 = vunpack.c.l.b16 %v2470
        %v2759 = vunpack.c.h.b16 %v2470
        %v2760 = vunpack.c.l.b16 %v2471
        %v2761 = vunpack.c.h.b16 %v2471
        %v2762 = vunpack.c.l.b16 %v2472
        %v2763 = vunpack.c.h.b16 %v2472
        %v2764 = vunpack.c.l.b16 %v2473
        %v2765 = vunpack.c.h.b16 %v2473
        %v2766 = vunpack.c.l.b16 %v2474
        %v2767 = vunpack.c.h.b16 %v2474
        %v2768 = vunpack.c.l.b16 %v2475
        %v2769 = vunpack.c.h.b16 %v2475
        %v2770 = vunpack.c.l.b16 %v2476
        %v2771 = vunpack.c.h.b16 %v2476
        %v2772 = vunpack.c.l.b16 %v2477
        %v2773 = vunpack.c.h.b16 %v2477
        %v2774 = vunpack.c.l.b16 %v2478
        %v2775 = vunpack.c.h.b16 %v2478
        %v2776 = vunpack.c.l.b16 %v2479
        %v2777 = vunpack.c.h.b16 %v2479
        %v2778 = vunpack.c.l.b16 %v2480
        %v2779 = vunpack.c.h.b16 %v2480
        %v2780 = vunpack.c.l.b16 %v2481
        %v2781 = vunpack.c.h.b16 %v2481
        %v2782 = vunpack.c.l.b16 %v2482
        %v2783 = vunpack.c.h.b16 %v2482
        %v2784 = vunpack.c.l.b16 %v2483
        %v2785 = vunpack.c.h.b16 %v2483
        %v2786 = vunpack.c.l.b16 %v2484
        %v2787 = vunpack.c.h.b16 %v2484
        %v2788 = vunpack.c.l.b16 %v2485
        %v2789 = vunpack.c.h.b16 %v2485
        %v2790 = vunpack.c.l.b16 %v2486
        %v2791 = vunpack.c.h.b16 %v2486
        %v2792 = vunpack.c.l.b16 %v2487
        %v2793 = vunpack.c.h.b16 %v2487
        %v2794 = vunpack.c.l.b16 %v2488
        %v2795 = vunpack.c.h.b16 %v2488
        %v2796 = vunpack.c.l.b16 %v2489
        %v2797 = vunpack.c.h.b16 %v2489
        %v2798 = vunpack.c.l.b16 %v2490
        %v2799 = vunpack.c.h.b16 %v2490
        %v2800 = vunpack.c.l.b16 %v2491
        %v2801 = vunpack.c.h.b16 %v2491
        %v2802 = vunpack.c.l.b16 %v2492
        %v2803 = vunpack.c.h.b16 %v2492
        %v2804 = vunpack.c.l.b16 %v2493
        %v2805 = vunpack.c.h.b16 %v2493
        %v2806 = vunpack.c.l.b16 %v2494
        %v2807 = vunpack.c.h.b16 %v2494
        %v2808 = vunpack.c.l.b16 %v2495
        %v2809 = vunpack.c.h.b16 %v2495
        %v2810 = vunpack.c.l.b16 %v2496
        %v2811 = vunpack.c.h.b16 %v2496
        %v2812 = vunpack.c.l.b16 %v2497
        %v2813 = vunpack.c.h.b16 %v2497
        %v2814 = vunpack.c.l.b16 %v2498
        %v2815 = vunpack.c.h.b16 %v2498
        %v2816 = vunpack.c.l.b16 %v2499
        %v2817 = vunpack.c.h.b16 %v2499
        %v2818 = vunpack.c.l.b16 %v2500
        %v2819 = vunpack.c.h.b16 %v2500
        %v2820 = vunpack.c.l.b16 %v2501
        %v2821 = vunpack.c.h.b16 %v2501
        %v2822 = vunpack.c.l.b16 %v2502
        %v2823 = vunpack.c.h.b16 %v2502
        %v2824 = vunpack.c.l.b16 %v2503
        %v2825 = vunpack.c.h.b16 %v2503
        %v2826 = vunpack.c.l.b16 %v2504
        %v2827 = vunpack.c.h.b16 %v2504
        %v2828 = vunpack.c.l.b16 %v2505
        %v2829 = vunpack.c.h.b16 %v2505
        %v2830 = vunpack.c.l.b16 %v2506
        %v2831 = vunpack.c.h.b16 %v2506
        %v2832 = vunpack.c.l.b16 %v2507
        %v2833 = vunpack.c.h.b16 %v2507
        %v2834 = vunpack.c.l.b16 %v2508
        %v2835 = vunpack.c.h.b16 %v2508
        %v2836 = vunpack.c.l.b16 %v2509
        %v2837 = vunpack.c.h.b16 %v2509
        %v2838 = vunpack.c.l.b16 %v2510
        %v2839 = vunpack.c.h.b16 %v2510
        %v2840 = vunpack.c.l.b16 %v2511
        %v2841 = vunpack.c.h.b16 %v2511
        %v2842 = vunpack.c.l.b16 %v2512
        %v2843 = vunpack.c.h.b16 %v2512
        %v2844 = vunpack.c.l.b16 %v2513
        %v2845 = vunpack.c.h.b16 %v2513
        %v2846 = vunpack.c.l.b16 %v2514
        %v2847 = vunpack.c.h.b16 %v2514
        %v2848 = vunpack.c.l.b16 %v2515
        %v2849 = vunpack.c.h.b16 %v2515
        %v2850 = vunpack.c.l.b16 %v2516
        %v2851 = vunpack.c.h.b16 %v2516
        %v2852 = vunpack.c.l.b16 %v2517
        %v2853 = vunpack.c.h.b16 %v2517
        %v2854 = vunpack.c.l.b16 %v2518
        %v2855 = vunpack.c.h.b16 %v2518
        %v2856 = vunpack.c.l.b16 %v2519
        %v2857 = vunpack.c.h.b16 %v2519
        %v2858 = vunpack.c.l.b16 %v2520
        %v2859 = vunpack.c.h.b16 %v2520
        %v2860 = vunpack.c.l.b16 %v2521
        %v2861 = vunpack.c.h.b16 %v2521
        %v2862 = vunpack.c.l.b16 %v2522
        %v2863 = vunpack.c.h.b16 %v2522
        %v2864 = vunpack.c.l.b16 %v2523
        %v2865 = vunpack.c.h.b16 %v2523
        %v2866 = vunpack.c.l.b16 %v2524
        %v2867 = vunpack.c.h.b16 %v2524
        %v2868 = vunpack.c.l.b16 %v2525
        %v2869 = vunpack.c.h.b16 %v2525
        %v2870 = vunpack.c.l.b16 %v2526
        %v2871 = vunpack.c.h.b16 %v2526
        %v2872 = vunpack.c.l.b16 %v2527
        %v2873 = vunpack.c.h.b16 %v2527
        %v2874 = vunpack.c.l.b16 %v2528
        %v2875 = vunpack.c.h.b16 %v2528
        %v2876 = vunpack.c.l.b16 %v2529
        %v2877 = vunpack.c.h.b16 %v2529
        %v2878 = vunpack.c.l.b16 %v2530
        %v2879 = vunpack.c.h.b16 %v2530
        %v2880 = vunpack.c.l.b16 %v2531
        %v2881 = vunpack.c.h.b16 %v2531
        %v2882 = vunpack.c.l.b16 %v2532
        %v2883 = vunpack.c.h.b16 %v2532
        %v2884 = vunpack.c.l.b16 %v2533
        %v2885 = vunpack.c.h.b16 %v2533
        %v2886 = vunpack.c.l.b16 %v2534
        %v2887 = vunpack.c.h.b16 %v2534
        %v2888 = vunpack.c.l.b16 %v2535
        %v2889 = vunpack.c.h.b16 %v2535
        %v2890 = vunpack.c.l.b16 %v2536
        %v2891 = vunpack.c.h.b16 %v2536
        %v2892 = vunpack.c.l.b16 %v2537
        %v2893 = vunpack.c.h.b16 %v2537
        %v2894 = vunpack.c.l.b16 %v2538
        %v2895 = vunpack.c.h.b16 %v2538
        %v2896 = vunpack.c.l.b16 %v2539
        %v2897 = vunpack.c.h.b16 %v2539
        %v2898 = vunpack.c.l.b16 %v2540
        %v2899 = vunpack.c.h.b16 %v2540
        %v2900 = vunpack.c.l.b16 %v2541
        %v2901 = vunpack.c.h.b16 %v2541
        %v2902 = vunpack.c.l.b16 %v2542
        %v2903 = vunpack.c.h.b16 %v2542
        %v2904 = vunpack.c.l.b16 %v2543
        %v2905 = vunpack.c.h.b16 %v2543
        %v2906 = vunpack.c.l.b16 %v2544
        %v2907 = vunpack.c.h.b16 %v2544
        %v2908 = vunpack.c.l.b16 %v2545
        %v2909 = vunpack.c.h.b16 %v2545
        %v2910 = vunpack.c.l.b16 %v2546
        %v2911 = vunpack.c.h.b16 %v2546
        %v2912 = vunpack.c.l.b16 %v2547
        %v2913 = vunpack.c.h.b16 %v2547
        %v2914 = vunpack.c.l.b16 %v2548
        %v2915 = vunpack.c.h.b16 %v2548
        %v2916 = vunpack.c.l.b16 %v2549
        %v2917 = vunpack.c.h.b16 %v2549
        %v2918 = vunpack.c.l.b16 %v2550
        %v2919 = vunpack.c.h.b16 %v2550
        %v2920 = vunpack.c.l.b16 %v2551
        %v2921 = vunpack.c.h.b16 %v2551
        %v2922 = vunpack.c.l.b16 %v2552
        %v2923 = vunpack.c.h.b16 %v2552
        %v2924 = vunpack.c.l.b16 %v2553
        %v2925 = vunpack.c.h.b16 %v2553
        %v2926 = vunpack.c.l.b16 %v2554
        %v2927 = vunpack.c.h.b16 %v2554
        %v2928 = vunpack.c.l.b16 %v2555
        %v2929 = vunpack.c.h.b16 %v2555
        %v2930 = vunpack.c.l.b16 %v2556
        %v2931 = vunpack.c.h.b16 %v2556
        %v2932 = vunpack.c.l.b16 %v2557
        %v2933 = vunpack.c.h.b16 %v2557
        %v2934 = vunpack.c.l.b16 %v2558
        %v2935 = vunpack.c.h.b16 %v2558
        %v2936 = vunpack.c.l.b16 %v2559
        %v2937 = vunpack.c.h.b16 %v2559
        %v2938 = vunpack.c.l.b16 %v2560
        %v2939 = vunpack.c.h.b16 %v2560
        %v2940 = vunpack.c.l.b16 %v2561
        %v2941 = vunpack.c.h.b16 %v2561
        %v2942 = vunpack.c.l.b16 %v2562
        %v2943 = vunpack.c.h.b16 %v2562
        %v2944 = vunpack.c.l.b16 %v2563
        %v2945 = vunpack.c.h.b16 %v2563
        %v2946 = vunpack.c.l.b16 %v2564
        %v2947 = vunpack.c.h.b16 %v2564
        %v2948 = vunpack.c.l.b16 %v2565
        %v2949 = vunpack.c.h.b16 %v2565
        %v2950 = vunpack.c.l.b16 %v2566
        %v2951 = vunpack.c.h.b16 %v2566
        %v2952 = vunpack.c.l.b16 %v2567
        %v2953 = vunpack.c.h.b16 %v2567
        %v2954 = vunpack.c.l.b16 %v2568
        %v2955 = vunpack.c.h.b16 %v2568
        %v2956 = vunpack.c.l.b16 %v2569
        %v2957 = vunpack.c.h.b16 %v2569
        %v2958 = vunpack.c.l.b16 %v2570
        %v2959 = vunpack.c.h.b16 %v2570
        %v2960 = vunpack.c.l.b16 %v2571
        %v2961 = vunpack.c.h.b16 %v2571
        %v2962 = vunpack.c.l.b16 %v2572
        %v2963 = vunpack.c.h.b16 %v2572
        %v2964 = vunpack.c.l.b16 %v2573
        %v2965 = vunpack.c.h.b16 %v2573
        %v2966 = vunpack.c.l.b16 %v2574
        %v2967 = vunpack.c.h.b16 %v2574
        %v2968 = vunpack.c.l.b16 %v2575
        %v2969 = vunpack.c.h.b16 %v2575
        %v2970 = vunpack.c.l.b16 %v2576
        %v2971 = vunpack.c.h.b16 %v2576
        %v2972 = vunpack.c.l.b16 %v2577
        %v2973 = vunpack.c.h.b16 %v2577
        %v2974 = vunpack.c.l.b16 %v2578
        %v2975 = vunpack.c.h.b16 %v2578
        %v2976 = vunpack.c.l.b16 %v2579
        %v2977 = vunpack.c.h.b16 %v2579
        %v2978 = vunpack.c.l.b16 %v2580
        %v2979 = vunpack.c.h.b16 %v2580
        %v2980 = vunpack.c.l.b16 %v2581
        %v2981 = vunpack.c.h.b16 %v2581
        %v2982 = vunpack.c.l.b16 %v2582
        %v2983 = vunpack.c.h.b16 %v2582
        %v2984 = vunpack.c.l.b16 %v2583
        %v2985 = vunpack.c.h.b16 %v2583
        %v2986 = vunpack.c.l.b16 %v2584
        %v2987 = vunpack.c.h.b16 %v2584
        %v2988 = vunpack.c.l.b16 %v2585
        %v2989 = vunpack.c.h.b16 %v2585
        %v2990 = vunpack.c.l.b16 %v2586
        %v2991 = vunpack.c.h.b16 %v2586
        %v2992 = vunpack.c.l.b16 %v2587
        %v2993 = vunpack.c.h.b16 %v2587
        %v2994 = vpack.c.b16 %v2742, %v2738
        %v2995 = vpack.c.b16 %v2743, %v2739
        %v2996 = vpack.c.b16 %v2744, %v2740
        %v2997 = vpack.c.b16 %v2745, %v2741
        %v2998 = vpack.c.b16 %v2750, %v2746
        %v2999 = vpack.c.b16 %v2751, %v2747
        %v3000 = vpack.c.b16 %v2752, %v2748
        %v3001 = vpack.c.b16 %v2753, %v2749
        %v3002 = vpack.c.b16 %v2758, %v2754
        %v3003 = vpack.c.b16 %v2759, %v2755
        %v3004 = vpack.c.b16 %v2760, %v2756
        %v3005 = vpack.c.b16 %v2761, %v2757
        %v3006 = vpack.c.b16 %v2766, %v2762
        %v3007 = vpack.c.b16 %v2767, %v2763
        %v3008 = vpack.c.b16 %v2768, %v2764
        %v3009 = vpack.c.b16 %v2769, %v2765
        %v3010 = vpack.c.b16 %v2774, %v2770
        %v3011 = vpack.c.b16 %v2775, %v2771
        %v3012 = vpack.c.b16 %v2776, %v2772
        %v3013 = vpack.c.b16 %v2777, %v2773
        %v3014 = vpack.c.b16 %v2782, %v2778
        %v3015 = vpack.c.b16 %v2783, %v2779
        %v3016 = vpack.c.b16 %v2784, %v2780
        %v3017 = vpack.c.b16 %v2785, %v2781
        %v3018 = vpack.c.b16 %v2790, %v2786
        %v3019 = vpack.c.b16 %v2791, %v2787
        %v3020 = vpack.c.b16 %v2792, %v2788
        %v3021 = vpack.c.b16 %v2793, %v2789
        %v3022 = vpack.c.b16 %v2798, %v2794
        %v3023 = vpack.c.b16 %v2799, %v2795
        %v3024 = vpack.c.b16 %v2800, %v2796
        %v3025 = vpack.c.b16 %v2801, %v2797
        %v3026 = vpack.c.b16 %v2806, %v2802
        %v3027 = vpack.c.b16 %v2807, %v2803
        %v3028 = vpack.c.b16 %v2808, %v2804
        %v3029 = vpack.c.b16 %v2809, %v2805
        %v3030 = vpack.c.b16 %v2814, %v2810
        %v3031 = vpack.c.b16 %v2815, %v2811
        %v3032 = vpack.c.b16 %v2816, %v2812
        %v3033 = vpack.c.b16 %v2817, %v2813
        %v3034 = vpack.c.b16 %v2822, %v2818
        %v3035 = vpack.c.b16 %v2823, %v2819
        %v3036 = vpack.c.b16 %v2824, %v2820
        %v3037 = vpack.c.b16 %v2825, %v2821
        %v3038 = vpack.c.b16 %v2830, %v2826
        %v3039 = vpack.c.b16 %v2831, %v2827
        %v3040 = vpack.c.b16 %v2832, %v2828
        %v3041 = vpack.c.b16 %v2833, %v2829
        %v3042 = vpack.c.b16 %v2838, %v2834
        %v3043 = vpack.c.b16 %v2839, %v2835
        %v3044 = vpack.c.b16 %v2840, %v2836
        %v3045 = vpack.c.b16 %v2841, %v2837
        %v3046 = vpack.c.b16 %v2846, %v2842
        %v3047 = vpack.c.b16 %v2847, %v2843
        %v3048 = vpack.c.b16 %v2848, %v2844
        %v3049 = vpack.c.b16 %v2849, %v2845
        %v3050 = vpack.c.b16 %v2854, %v2850
        %v3051 = vpack.c.b16 %v2855, %v2851
        %v3052 = vpack.c.b16 %v2856, %v2852
        %v3053 = vpack.c.b16 %v2857, %v2853
        %v3054 = vpack.c.b16 %v2862, %v2858
        %v3055 = vpack.c.b16 %v2863, %v2859
        %v3056 = vpack.c.b16 %v2864, %v2860
        %v3057 = vpack.c.b16 %v2865, %v2861
        %v3058 = vpack.c.b16 %v2870, %v2866
        %v3059 = vpack.c.b16 %v2871, %v2867
        %v3060 = vpack.c.b16 %v2872, %v2868
        %v3061 = vpack.c.b16 %v2873, %v2869
        %v3062 = vpack.c.b16 %v2878, %v2874
        %v3063 = vpack.c.b16 %v2879, %v2875
        %v3064 = vpack.c.b16 %v2880, %v2876
        %v3065 = vpack.c.b16 %v2881, %v2877
        %v3066 = vpack.c.b16 %v2886, %v2882
        %v3067 = vpack.c.b16 %v2887, %v2883
        %v3068 = vpack.c.b16 %v2888, %v2884
        %v3069 = vpack.c.b16 %v2889, %v2885
        %v3070 = vpack.c.b16 %v2894, %v2890
        %v3071 = vpack.c.b16 %v2895, %v2891
        %v3072 = vpack.c.b16 %v2896, %v2892
        %v3073 = vpack.c.b16 %v2897, %v2893
        %v3074 = vpack.c.b16 %v2902, %v2898
        %v3075 = vpack.c.b16 %v2903, %v2899
        %v3076 = vpack.c.b16 %v2904, %v2900
        %v3077 = vpack.c.b16 %v2905, %v2901
        %v3078 = vpack.c.b16 %v2910, %v2906
        %v3079 = vpack.c.b16 %v2911, %v2907
        %v3080 = vpack.c.b16 %v2912, %v2908
        %v3081 = vpack.c.b16 %v2913, %v2909
        %v3082 = vpack.c.b16 %v2918, %v2914
        %v3083 = vpack.c.b16 %v2919, %v2915
        %v3084 = vpack.c.b16 %v2920, %v2916
        %v3085 = vpack.c.b16 %v2921, %v2917
        %v3086 = vpack.c.b16 %v2926, %v2922
        %v3087 = vpack.c.b16 %v2927, %v2923
        %v3088 = vpack.c.b16 %v2928, %v2924
        %v3089 = vpack.c.b16 %v2929, %v2925
        %v3090 = vpack.c.b16 %v2934, %v2930
        %v3091 = vpack.c.b16 %v2935, %v2931
        %v3092 = vpack.c.b16 %v2936, %v2932
        %v3093 = vpack.c.b16 %v2937, %v2933
        %v3094 = vpack.c.b16 %v2942, %v2938
        %v3095 = vpack.c.b16 %v2943, %v2939
        %v3096 = vpack.c.b16 %v2944, %v2940
        %v3097 = vpack.c.b16 %v2945, %v2941
        %v3098 = vpack.c.b16 %v2950, %v2946
        %v3099 = vpack.c.b16 %v2951, %v2947
        %v3100 = vpack.c.b16 %v2952, %v2948
        %v3101 = vpack.c.b16 %v2953, %v2949
        %v3102 = vpack.c.b16 %v2958, %v2954
        %v3103 = vpack.c.b16 %v2959, %v2955
        %v3104 = vpack.c.b16 %v2960, %v2956
        %v3105 = vpack.c.b16 %v2961, %v2957
        %v3106 = vpack.c.b16 %v2966, %v2962
        %v3107 = vpack.c.b16 %v2967, %v2963
        %v3108 = vpack.c.b16 %v2968, %v2964
        %v3109 = vpack.c.b16 %v2969, %v2965
        %v3110 = vpack.c.b16 %v2974, %v2970
        %v3111 = vpack.c.b16 %v2975, %v2971
        %v3112 = vpack.c.b16 %v2976, %v2972
        %v3113 = vpack.c.b16 %v2977, %v2973
        %v3114 = vpack.c.b16 %v2982, %v2978
        %v3115 = vpack.c.b16 %v2983, %v2979
        %v3116 = vpack.c.b16 %v2984, %v2980
        %v3117 = vpack.c.b16 %v2985, %v2981
        %v3118 = vpack.c.b16 %v2990, %v2986
        %v3119 = vpack.c.b16 %v2991, %v2987
        %v3120 = vpack.c.b16 %v2992, %v2988
        %v3121 = vpack.c.b16 %v2993, %v2989
        %3250 = vmatprep.subr.bf16.mxu0 %v2995
        %3251 = vmatpush1.bf16.msra.mxu0 %v2994
        %3252 = vmatprep.subr.bf16.mxu0 %v2999
        %3253 = vmatpush1.bf16.msra.mxu0 %v2998
        %3254 = vmatprep.subr.bf16.mxu0 %v3003
        %3255 = vmatpush1.bf16.msra.mxu0 %v3002
        %3256 = vmatprep.subr.bf16.mxu0 %v3007
        %3257 = vmatpush1.bf16.msra.mxu0 %v3006
        %3258 = vmatprep.subr.bf16.mxu0 %v3011
        %3259 = vmatpush1.bf16.msra.mxu0 %v3010
        %3260 = vmatprep.subr.bf16.mxu0 %v3015
        %3261 = vmatpush1.bf16.msra.mxu0 %v3014
        %3262 = vmatprep.subr.bf16.mxu0 %v3019
        %3263 = vmatpush1.bf16.msra.mxu0 %v3018
        %3264 = vmatprep.subr.bf16.mxu0 %v3023
        %3265 = vmatpush1.bf16.msra.mxu0 %v3022
        %3266 = vmatprep.subr.bf16.mxu0 %v3027
        %3267 = vmatpush1.bf16.msra.mxu0 %v3026
        %3268 = vmatprep.subr.bf16.mxu0 %v3031
        %3269 = vmatpush1.bf16.msra.mxu0 %v3030
        %3270 = vmatprep.subr.bf16.mxu0 %v3035
        %3271 = vmatpush1.bf16.msra.mxu0 %v3034
        %3272 = vmatprep.subr.bf16.mxu0 %v3039
        %3273 = vmatpush1.bf16.msra.mxu0 %v3038
        %3274 = vmatprep.subr.bf16.mxu0 %v3043
        %3275 = vmatpush1.bf16.msra.mxu0 %v3042
        %3276 = vmatprep.subr.bf16.mxu0 %v3047
        %3277 = vmatpush1.bf16.msra.mxu0 %v3046
        %3278 = vmatprep.subr.bf16.mxu0 %v3051
        %3279 = vmatpush1.bf16.msra.mxu0 %v3050
        %3280 = vmatprep.subr.bf16.mxu0 %v3055
        %3281 = vmatpush1.bf16.msra.mxu0 %v3054
        %3282 = vmatprep.mubr.bf16.mxu0 %v2457
        %3283 = vmatmul.mubr.bf16.gmra.mrb[0].mxu0 %v2456
        %v3284 = vpop.f32.mrb[0].mxu0
        %v3285 = vadd.f32 %v2593, %v3284
        %v3286 = vpop.f32.mrb[0].mxu0
        %v3287 = vadd.f32 %v2597, %v3286
        %v3288 = vpop.f32.mrb[0].mxu0
        %v3289 = vadd.f32 %v2593, %v3288
        %v3290 = vpop.f32.mrb[0].mxu0
        %v3291 = vadd.f32 %v2597, %v3290
        %3292 = vdwg.mxu0
        %3293 = vmatprep.subr.bf16.mxu0 %v3059
        %3294 = vmatpush1.bf16.msra.mxu0 %v3058
        %3295 = vmatprep.subr.bf16.mxu0 %v3063
        %3296 = vmatpush1.bf16.msra.mxu0 %v3062
        %3297 = vmatprep.subr.bf16.mxu0 %v3067
        %3298 = vmatpush1.bf16.msra.mxu0 %v3066
        %3299 = vmatprep.subr.bf16.mxu0 %v3071
        %3300 = vmatpush1.bf16.msra.mxu0 %v3070
        %3301 = vmatprep.subr.bf16.mxu0 %v3075
        %3302 = vmatpush1.bf16.msra.mxu0 %v3074
        %3303 = vmatprep.subr.bf16.mxu0 %v3079
        %3304 = vmatpush1.bf16.msra.mxu0 %v3078
        %3305 = vmatprep.subr.bf16.mxu0 %v3083
        %3306 = vmatpush1.bf16.msra.mxu0 %v3082
        %3307 = vmatprep.subr.bf16.mxu0 %v3087
        %3308 = vmatpush1.bf16.msra.mxu0 %v3086
        %3309 = vmatprep.subr.bf16.mxu0 %v3091
        %3310 = vmatpush1.bf16.msra.mxu0 %v3090
        %3311 = vmatprep.subr.bf16.mxu0 %v3095
        %3312 = vmatpush1.bf16.msra.mxu0 %v3094
        %3313 = vmatprep.subr.bf16.mxu0 %v3099
        %3314 = vmatpush1.bf16.msra.mxu0 %v3098
        %3315 = vmatprep.subr.bf16.mxu0 %v3103
        %3316 = vmatpush1.bf16.msra.mxu0 %v3102
        %3317 = vmatprep.subr.bf16.mxu0 %v3107
        %3318 = vmatpush1.bf16.msra.mxu0 %v3106
        %3319 = vmatprep.subr.bf16.mxu0 %v3111
        %3320 = vmatpush1.bf16.msra.mxu0 %v3110
        %3321 = vmatprep.subr.bf16.mxu0 %v3115
        %3322 = vmatpush1.bf16.msra.mxu0 %v3114
        %3323 = vmatprep.subr.bf16.mxu0 %v3119
        %3324 = vmatpush1.bf16.msra.mxu0 %v3118
        %3325 = vmatprep.mubr.bf16.mxu0 %v2459
        %3326 = vmatmul.mubr.bf16.gmra.mrb[0].mxu0 %v2458
        %v3327 = vpop.f32.mrb[0].mxu0
        %v3328 = vadd.f32 %v3285, %v3327
        %v3329 = vpop.f32.mrb[0].mxu0
        %v3330 = vadd.f32 %v3287, %v3329
        %v3331 = vpop.f32.mrb[0].mxu0
        %v3332 = vadd.f32 %v3289, %v3331
        %v3333 = vpop.f32.mrb[0].mxu0
        %v3334 = vadd.f32 %v3291, %v3333
        %3335 = vdwg.mxu0
        %3336 = vmatprep.subr.bf16.mxu0 %v2997
        %3337 = vmatpush1.bf16.msra.mxu0 %v2996
        %3338 = vmatprep.subr.bf16.mxu0 %v3001
        %3339 = vmatpush1.bf16.msra.mxu0 %v3000
        %3340 = vmatprep.subr.bf16.mxu0 %v3005
        %3341 = vmatpush1.bf16.msra.mxu0 %v3004
        %3342 = vmatprep.subr.bf16.mxu0 %v3009
        %3343 = vmatpush1.bf16.msra.mxu0 %v3008
        %3344 = vmatprep.subr.bf16.mxu0 %v3013
        %3345 = vmatpush1.bf16.msra.mxu0 %v3012
        %3346 = vmatprep.subr.bf16.mxu0 %v3017
        %3347 = vmatpush1.bf16.msra.mxu0 %v3016
        %3348 = vmatprep.subr.bf16.mxu0 %v3021
        %3349 = vmatpush1.bf16.msra.mxu0 %v3020
        %3350 = vmatprep.subr.bf16.mxu0 %v3025
        %3351 = vmatpush1.bf16.msra.mxu0 %v3024
        %3352 = vmatprep.subr.bf16.mxu0 %v3029
        %3353 = vmatpush1.bf16.msra.mxu0 %v3028
        %3354 = vmatprep.subr.bf16.mxu0 %v3033
        %3355 = vmatpush1.bf16.msra.mxu0 %v3032
        %3356 = vmatprep.subr.bf16.mxu0 %v3037
        %3357 = vmatpush1.bf16.msra.mxu0 %v3036
        %3358 = vmatprep.subr.bf16.mxu0 %v3041
        %3359 = vmatpush1.bf16.msra.mxu0 %v3040
        %3360 = vmatprep.subr.bf16.mxu0 %v3045
        %3361 = vmatpush1.bf16.msra.mxu0 %v3044
        %3362 = vmatprep.subr.bf16.mxu0 %v3049
        %3363 = vmatpush1.bf16.msra.mxu0 %v3048
        %3364 = vmatprep.subr.bf16.mxu0 %v3053
        %3365 = vmatpush1.bf16.msra.mxu0 %v3052
        %3366 = vmatprep.subr.bf16.mxu0 %v3057
        %3367 = vmatpush1.bf16.msra.mxu0 %v3056
        %3368 = vmatprep.mubr.bf16.mxu0 %v2457
        %3369 = vmatmul.mubr.bf16.gmra.mrb[0].mxu0 %v2456
        %v3370 = vpop.f32.mrb[0].mxu0
        %v3371 = vadd.f32 %v2601, %v3370
        %v3372 = vpop.f32.mrb[0].mxu0
        %v3373 = vadd.f32 %v2605, %v3372
        %v3374 = vpop.f32.mrb[0].mxu0
        %v3375 = vadd.f32 %v2601, %v3374
        %v3376 = vpop.f32.mrb[0].mxu0
        %v3377 = vadd.f32 %v2605, %v3376
        %3378 = vdwg.mxu0
        %3379 = vmatprep.subr.bf16.mxu0 %v3061
        %3380 = vmatpush1.bf16.msra.mxu0 %v3060
        %3381 = vmatprep.subr.bf16.mxu0 %v3065
        %3382 = vmatpush1.bf16.msra.mxu0 %v3064
        %3383 = vmatprep.subr.bf16.mxu0 %v3069
        %3384 = vmatpush1.bf16.msra.mxu0 %v3068
        %3385 = vmatprep.subr.bf16.mxu0 %v3073
        %3386 = vmatpush1.bf16.msra.mxu0 %v3072
        %3387 = vmatprep.subr.bf16.mxu0 %v3077
        %3388 = vmatpush1.bf16.msra.mxu0 %v3076
        %3389 = vmatprep.subr.bf16.mxu0 %v3081
        %3390 = vmatpush1.bf16.msra.mxu0 %v3080
        %3391 = vmatprep.subr.bf16.mxu0 %v3085
        %3392 = vmatpush1.bf16.msra.mxu0 %v3084
        %3393 = vmatprep.subr.bf16.mxu0 %v3089
        %3394 = vmatpush1.bf16.msra.mxu0 %v3088
        %3395 = vmatprep.subr.bf16.mxu0 %v3093
        %3396 = vmatpush1.bf16.msra.mxu0 %v3092
        %3397 = vmatprep.subr.bf16.mxu0 %v3097
        %3398 = vmatpush1.bf16.msra.mxu0 %v3096
        %3399 = vmatprep.subr.bf16.mxu0 %v3101
        %3400 = vmatpush1.bf16.msra.mxu0 %v3100
        %3401 = vmatprep.subr.bf16.mxu0 %v3105
        %3402 = vmatpush1.bf16.msra.mxu0 %v3104
        %3403 = vmatprep.subr.bf16.mxu0 %v3109
        %3404 = vmatpush1.bf16.msra.mxu0 %v3108
        %3405 = vmatprep.subr.bf16.mxu0 %v3113
        %3406 = vmatpush1.bf16.msra.mxu0 %v3112
        %3407 = vmatprep.subr.bf16.mxu0 %v3117
        %3408 = vmatpush1.bf16.msra.mxu0 %v3116
        %3409 = vmatprep.subr.bf16.mxu0 %v3121
        %3410 = vmatpush1.bf16.msra.mxu0 %v3120
        %3411 = vmatprep.mubr.bf16.mxu0 %v2459
        %3412 = vmatmul.mubr.bf16.gmra.mrb[0].mxu0 %v2458
        %v3413 = vpop.f32.mrb[0].mxu0
        %v3414 = vadd.f32 %v3371, %v3413
        %v3415 = vpop.f32.mrb[0].mxu0
        %v3416 = vadd.f32 %v3373, %v3415
        %v3417 = vpop.f32.mrb[0].mxu0
        %v3418 = vadd.f32 %v3375, %v3417
        %v3419 = vpop.f32.mrb[0].mxu0
        %v3420 = vadd.f32 %v3377, %v3419
        %3421 = vdwg.mxu0
        %vm3422 = vcmp.ge.f32.partialorder %v3328, 0.0
        %vm3423 = vcmp.ge.f32.partialorder %v3330, 0.0
        %vm3424 = vcmp.ge.f32.partialorder %v3414, 0.0
        %vm3425 = vcmp.ge.f32.partialorder %v3416, 0.0
        %vm3426 = vcmp.ge.f32.partialorder %v3332, 0.0
        %vm3427 = vcmp.ge.f32.partialorder %v3334, 0.0
        %vm3428 = vcmp.ge.f32.partialorder %v3418, 0.0
        %vm3429 = vcmp.ge.f32.partialorder %v3420, 0.0
        %v3430 = vmul.f32 %v3328, 0.01
        %v3431 = vmul.f32 %v3330, 0.01
        %v3432 = vmul.f32 %v3414, 0.01
        %v3433 = vmul.f32 %v3416, 0.01
        %v3434 = vmul.f32 %v3332, 0.01
        %v3435 = vmul.f32 %v3334, 0.01
        %v3436 = vmul.f32 %v3418, 0.01
        %v3437 = vmul.f32 %v3420, 0.01
        %v3438 = vsel %vm3422, %v3328, %v3430
        %v3439 = vsel %vm3423, %v3330, %v3431
        %v3440 = vsel %vm3424, %v3414, %v3432
        %v3441 = vsel %vm3425, %v3416, %v3433
        %v3442 = vsel %vm3426, %v3332, %v3434
        %v3443 = vsel %vm3427, %v3334, %v3435
        %v3444 = vsel %vm3428, %v3418, %v3436
        %v3445 = vsel %vm3429, %v3420, %v3437
        %v3446 = vpack.c.bf16 %v3442, %v3438
        %v3447 = vpack.c.bf16 %v3443, %v3439
        %v3448 = vpack.c.bf16 %v3444, %v3440
        %v3449 = vpack.c.bf16 %v3445, %v3441
        %v3450 = vld [vmem:[#allocation8] sm:$0xff]
        %v3451 = vld [vmem:[#allocation8 + $0x8] sm:$0xff]
        %v3452 = vld [vmem:[#allocation8 + $0x10] sm:$0xff]
        %v3453 = vld [vmem:[#allocation8 + $0x18] sm:$0xff]
        %v3454 = vld [vmem:[#allocation8 + $0x20] sm:$0xff]
        %v3455 = vld [vmem:[#allocation8 + $0x28] sm:$0xff]
        %v3456 = vld [vmem:[#allocation8 + $0x30] sm:$0xff]
        %v3457 = vld [vmem:[#allocation8 + $0x38] sm:$0xff]
        %v3458 = vld [vmem:[#allocation8 + $0x40] sm:$0xff]
        %v3459 = vld [vmem:[#allocation8 + $0x48] sm:$0xff]
        %v3460 = vld [vmem:[#allocation8 + $0x50] sm:$0xff]
        %v3461 = vld [vmem:[#allocation8 + $0x58] sm:$0xff]
        %v3462 = vld [vmem:[#allocation8 + $0x60] sm:$0xff]
        %v3463 = vld [vmem:[#allocation8 + $0x68] sm:$0xff]
        %v3464 = vld [vmem:[#allocation8 + $0x70] sm:$0xff]
        %v3465 = vld [vmem:[#allocation8 + $0x78] sm:$0xff]
        %v3466 = vld [vmem:[#allocation8 + $0x80] sm:$0xff]
        %v3467 = vld [vmem:[#allocation8 + $0x88] sm:$0xff]
        %v3468 = vld [vmem:[#allocation8 + $0x90] sm:$0xff]
        %v3469 = vld [vmem:[#allocation8 + $0x98] sm:$0xff]
        %v3470 = vld [vmem:[#allocation8 + $0xa0] sm:$0xff]
        %v3471 = vld [vmem:[#allocation8 + $0xa8] sm:$0xff]
        %v3472 = vld [vmem:[#allocation8 + $0xb0] sm:$0xff]
        %v3473 = vld [vmem:[#allocation8 + $0xb8] sm:$0xff]
        %v3474 = vld [vmem:[#allocation8 + $0xc0] sm:$0xff]
        %v3475 = vld [vmem:[#allocation8 + $0xc8] sm:$0xff]
        %v3476 = vld [vmem:[#allocation8 + $0xd0] sm:$0xff]
        %v3477 = vld [vmem:[#allocation8 + $0xd8] sm:$0xff]
        %v3478 = vld [vmem:[#allocation8 + $0xe0] sm:$0xff]
        %v3479 = vld [vmem:[#allocation8 + $0xe8] sm:$0xff]
        %v3480 = vld [vmem:[#allocation8 + $0xf0] sm:$0xff]
        %v3481 = vld [vmem:[#allocation8 + $0xf8] sm:$0xff]
        %v3482 = vld [vmem:[#allocation8 + $0x100] sm:$0xff]
        %v3483 = vld [vmem:[#allocation8 + $0x108] sm:$0xff]
        %v3484 = vld [vmem:[#allocation8 + $0x110] sm:$0xff]
        %v3485 = vld [vmem:[#allocation8 + $0x118] sm:$0xff]
        %v3486 = vld [vmem:[#allocation8 + $0x120] sm:$0xff]
        %v3487 = vld [vmem:[#allocation8 + $0x128] sm:$0xff]
        %v3488 = vld [vmem:[#allocation8 + $0x130] sm:$0xff]
        %v3489 = vld [vmem:[#allocation8 + $0x138] sm:$0xff]
        %v3490 = vld [vmem:[#allocation8 + $0x140] sm:$0xff]
        %v3491 = vld [vmem:[#allocation8 + $0x148] sm:$0xff]
        %v3492 = vld [vmem:[#allocation8 + $0x150] sm:$0xff]
        %v3493 = vld [vmem:[#allocation8 + $0x158] sm:$0xff]
        %v3494 = vld [vmem:[#allocation8 + $0x160] sm:$0xff]
        %v3495 = vld [vmem:[#allocation8 + $0x168] sm:$0xff]
        %v3496 = vld [vmem:[#allocation8 + $0x170] sm:$0xff]
        %v3497 = vld [vmem:[#allocation8 + $0x178] sm:$0xff]
        %v3498 = vld [vmem:[#allocation8 + $0x180] sm:$0xff]
        %v3499 = vld [vmem:[#allocation8 + $0x188] sm:$0xff]
        %v3500 = vld [vmem:[#allocation8 + $0x190] sm:$0xff]
        %v3501 = vld [vmem:[#allocation8 + $0x198] sm:$0xff]
        %v3502 = vld [vmem:[#allocation8 + $0x1a0] sm:$0xff]
        %v3503 = vld [vmem:[#allocation8 + $0x1a8] sm:$0xff]
        %v3504 = vld [vmem:[#allocation8 + $0x1b0] sm:$0xff]
        %v3505 = vld [vmem:[#allocation8 + $0x1b8] sm:$0xff]
        %v3506 = vld [vmem:[#allocation8 + $0x1c0] sm:$0xff]
        %v3507 = vld [vmem:[#allocation8 + $0x1c8] sm:$0xff]
        %v3508 = vld [vmem:[#allocation8 + $0x1d0] sm:$0xff]
        %v3509 = vld [vmem:[#allocation8 + $0x1d8] sm:$0xff]
        %v3510 = vld [vmem:[#allocation8 + $0x1e0] sm:$0xff]
        %v3511 = vld [vmem:[#allocation8 + $0x1e8] sm:$0xff]
        %v3512 = vld [vmem:[#allocation8 + $0x1f0] sm:$0xff]
        %v3513 = vld [vmem:[#allocation8 + $0x1f8] sm:$0xff]
        %v3514 = vld [vmem:[#allocation8 + $0x200] sm:$0xff]
        %v3515 = vld [vmem:[#allocation8 + $0x208] sm:$0xff]
        %v3516 = vld [vmem:[#allocation8 + $0x210] sm:$0xff]
        %v3517 = vld [vmem:[#allocation8 + $0x218] sm:$0xff]
        %v3518 = vld [vmem:[#allocation8 + $0x220] sm:$0xff]
        %v3519 = vld [vmem:[#allocation8 + $0x228] sm:$0xff]
        %v3520 = vld [vmem:[#allocation8 + $0x230] sm:$0xff]
        %v3521 = vld [vmem:[#allocation8 + $0x238] sm:$0xff]
        %v3522 = vld [vmem:[#allocation8 + $0x240] sm:$0xff]
        %v3523 = vld [vmem:[#allocation8 + $0x248] sm:$0xff]
        %v3524 = vld [vmem:[#allocation8 + $0x250] sm:$0xff]
        %v3525 = vld [vmem:[#allocation8 + $0x258] sm:$0xff]
        %v3526 = vld [vmem:[#allocation8 + $0x260] sm:$0xff]
        %v3527 = vld [vmem:[#allocation8 + $0x268] sm:$0xff]
        %v3528 = vld [vmem:[#allocation8 + $0x270] sm:$0xff]
        %v3529 = vld [vmem:[#allocation8 + $0x278] sm:$0xff]
        %v3530 = vld [vmem:[#allocation8 + $0x280] sm:$0xff]
        %v3531 = vld [vmem:[#allocation8 + $0x288] sm:$0xff]
        %v3532 = vld [vmem:[#allocation8 + $0x290] sm:$0xff]
        %v3533 = vld [vmem:[#allocation8 + $0x298] sm:$0xff]
        %v3534 = vld [vmem:[#allocation8 + $0x2a0] sm:$0xff]
        %v3535 = vld [vmem:[#allocation8 + $0x2a8] sm:$0xff]
        %v3536 = vld [vmem:[#allocation8 + $0x2b0] sm:$0xff]
        %v3537 = vld [vmem:[#allocation8 + $0x2b8] sm:$0xff]
        %v3538 = vld [vmem:[#allocation8 + $0x2c0] sm:$0xff]
        %v3539 = vld [vmem:[#allocation8 + $0x2c8] sm:$0xff]
        %v3540 = vld [vmem:[#allocation8 + $0x2d0] sm:$0xff]
        %v3541 = vld [vmem:[#allocation8 + $0x2d8] sm:$0xff]
        %v3542 = vld [vmem:[#allocation8 + $0x2e0] sm:$0xff]
        %v3543 = vld [vmem:[#allocation8 + $0x2e8] sm:$0xff]
        %v3544 = vld [vmem:[#allocation8 + $0x2f0] sm:$0xff]
        %v3545 = vld [vmem:[#allocation8 + $0x2f8] sm:$0xff]
        %v3546 = vld [vmem:[#allocation8 + $0x300] sm:$0xff]
        %v3547 = vld [vmem:[#allocation8 + $0x308] sm:$0xff]
        %v3548 = vld [vmem:[#allocation8 + $0x310] sm:$0xff]
        %v3549 = vld [vmem:[#allocation8 + $0x318] sm:$0xff]
        %v3550 = vld [vmem:[#allocation8 + $0x320] sm:$0xff]
        %v3551 = vld [vmem:[#allocation8 + $0x328] sm:$0xff]
        %v3552 = vld [vmem:[#allocation8 + $0x330] sm:$0xff]
        %v3553 = vld [vmem:[#allocation8 + $0x338] sm:$0xff]
        %v3554 = vld [vmem:[#allocation8 + $0x340] sm:$0xff]
        %v3555 = vld [vmem:[#allocation8 + $0x348] sm:$0xff]
        %v3556 = vld [vmem:[#allocation8 + $0x350] sm:$0xff]
        %v3557 = vld [vmem:[#allocation8 + $0x358] sm:$0xff]
        %v3558 = vld [vmem:[#allocation8 + $0x360] sm:$0xff]
        %v3559 = vld [vmem:[#allocation8 + $0x368] sm:$0xff]
        %v3560 = vld [vmem:[#allocation8 + $0x370] sm:$0xff]
        %v3561 = vld [vmem:[#allocation8 + $0x378] sm:$0xff]
        %v3562 = vld [vmem:[#allocation8 + $0x380] sm:$0xff]
        %v3563 = vld [vmem:[#allocation8 + $0x388] sm:$0xff]
        %v3564 = vld [vmem:[#allocation8 + $0x390] sm:$0xff]
        %v3565 = vld [vmem:[#allocation8 + $0x398] sm:$0xff]
        %v3566 = vld [vmem:[#allocation8 + $0x3a0] sm:$0xff]
        %v3567 = vld [vmem:[#allocation8 + $0x3a8] sm:$0xff]
        %v3568 = vld [vmem:[#allocation8 + $0x3b0] sm:$0xff]
        %v3569 = vld [vmem:[#allocation8 + $0x3b8] sm:$0xff]
        %v3570 = vld [vmem:[#allocation8 + $0x3c0] sm:$0xff]
        %v3571 = vld [vmem:[#allocation8 + $0x3c8] sm:$0xff]
        %v3572 = vld [vmem:[#allocation8 + $0x3d0] sm:$0xff]
        %v3573 = vld [vmem:[#allocation8 + $0x3d8] sm:$0xff]
        %v3574 = vld [vmem:[#allocation8 + $0x3e0] sm:$0xff]
        %v3575 = vld [vmem:[#allocation8 + $0x3e8] sm:$0xff]
        %v3576 = vld [vmem:[#allocation8 + $0x3f0] sm:$0xff]
        %v3577 = vld [vmem:[#allocation8 + $0x3f8] sm:$0xff]
        %v3578 = vld [vmem:[%s6] sm:$0xf]
        %v3580 = vlaneseq
        %v3581 = vshrl.u32 %v3580, 7
        %v3582 = vsub.s32 0, %v3581
        %v3583 = vrot.slane %v3578, %v3582
        %v3584 = vlaneseq
        %v3585 = vshrl.u32 %v3584, 7
        %v3586 = vsub.s32 1, %v3585
        %v3587 = vrot.slane %v3578, %v3586
        %v3588 = vlaneseq
        %v3589 = vshrl.u32 %v3588, 7
        %v3590 = vsub.s32 2, %v3589
        %v3591 = vrot.slane %v3578, %v3590
        %v3592 = vlaneseq
        %v3593 = vshrl.u32 %v3592, 7
        %v3594 = vsub.s32 3, %v3593
        %v3595 = vrot.slane %v3578, %v3594
        %v3728 = vunpack.c.l.b16 %v3450
        %v3729 = vunpack.c.h.b16 %v3450
        %v3730 = vunpack.c.l.b16 %v3451
        %v3731 = vunpack.c.h.b16 %v3451
        %v3732 = vunpack.c.l.b16 %v3452
        %v3733 = vunpack.c.h.b16 %v3452
        %v3734 = vunpack.c.l.b16 %v3453
        %v3735 = vunpack.c.h.b16 %v3453
        %v3736 = vunpack.c.l.b16 %v3454
        %v3737 = vunpack.c.h.b16 %v3454
        %v3738 = vunpack.c.l.b16 %v3455
        %v3739 = vunpack.c.h.b16 %v3455
        %v3740 = vunpack.c.l.b16 %v3456
        %v3741 = vunpack.c.h.b16 %v3456
        %v3742 = vunpack.c.l.b16 %v3457
        %v3743 = vunpack.c.h.b16 %v3457
        %v3744 = vunpack.c.l.b16 %v3458
        %v3745 = vunpack.c.h.b16 %v3458
        %v3746 = vunpack.c.l.b16 %v3459
        %v3747 = vunpack.c.h.b16 %v3459
        %v3748 = vunpack.c.l.b16 %v3460
        %v3749 = vunpack.c.h.b16 %v3460
        %v3750 = vunpack.c.l.b16 %v3461
        %v3751 = vunpack.c.h.b16 %v3461
        %v3752 = vunpack.c.l.b16 %v3462
        %v3753 = vunpack.c.h.b16 %v3462
        %v3754 = vunpack.c.l.b16 %v3463
        %v3755 = vunpack.c.h.b16 %v3463
        %v3756 = vunpack.c.l.b16 %v3464
        %v3757 = vunpack.c.h.b16 %v3464
        %v3758 = vunpack.c.l.b16 %v3465
        %v3759 = vunpack.c.h.b16 %v3465
        %v3760 = vunpack.c.l.b16 %v3466
        %v3761 = vunpack.c.h.b16 %v3466
        %v3762 = vunpack.c.l.b16 %v3467
        %v3763 = vunpack.c.h.b16 %v3467
        %v3764 = vunpack.c.l.b16 %v3468
        %v3765 = vunpack.c.h.b16 %v3468
        %v3766 = vunpack.c.l.b16 %v3469
        %v3767 = vunpack.c.h.b16 %v3469
        %v3768 = vunpack.c.l.b16 %v3470
        %v3769 = vunpack.c.h.b16 %v3470
        %v3770 = vunpack.c.l.b16 %v3471
        %v3771 = vunpack.c.h.b16 %v3471
        %v3772 = vunpack.c.l.b16 %v3472
        %v3773 = vunpack.c.h.b16 %v3472
        %v3774 = vunpack.c.l.b16 %v3473
        %v3775 = vunpack.c.h.b16 %v3473
        %v3776 = vunpack.c.l.b16 %v3474
        %v3777 = vunpack.c.h.b16 %v3474
        %v3778 = vunpack.c.l.b16 %v3475
        %v3779 = vunpack.c.h.b16 %v3475
        %v3780 = vunpack.c.l.b16 %v3476
        %v3781 = vunpack.c.h.b16 %v3476
        %v3782 = vunpack.c.l.b16 %v3477
        %v3783 = vunpack.c.h.b16 %v3477
        %v3784 = vunpack.c.l.b16 %v3478
        %v3785 = vunpack.c.h.b16 %v3478
        %v3786 = vunpack.c.l.b16 %v3479
        %v3787 = vunpack.c.h.b16 %v3479
        %v3788 = vunpack.c.l.b16 %v3480
        %v3789 = vunpack.c.h.b16 %v3480
        %v3790 = vunpack.c.l.b16 %v3481
        %v3791 = vunpack.c.h.b16 %v3481
        %v3792 = vunpack.c.l.b16 %v3482
        %v3793 = vunpack.c.h.b16 %v3482
        %v3794 = vunpack.c.l.b16 %v3483
        %v3795 = vunpack.c.h.b16 %v3483
        %v3796 = vunpack.c.l.b16 %v3484
        %v3797 = vunpack.c.h.b16 %v3484
        %v3798 = vunpack.c.l.b16 %v3485
        %v3799 = vunpack.c.h.b16 %v3485
        %v3800 = vunpack.c.l.b16 %v3486
        %v3801 = vunpack.c.h.b16 %v3486
        %v3802 = vunpack.c.l.b16 %v3487
        %v3803 = vunpack.c.h.b16 %v3487
        %v3804 = vunpack.c.l.b16 %v3488
        %v3805 = vunpack.c.h.b16 %v3488
        %v3806 = vunpack.c.l.b16 %v3489
        %v3807 = vunpack.c.h.b16 %v3489
        %v3808 = vunpack.c.l.b16 %v3490
        %v3809 = vunpack.c.h.b16 %v3490
        %v3810 = vunpack.c.l.b16 %v3491
        %v3811 = vunpack.c.h.b16 %v3491
        %v3812 = vunpack.c.l.b16 %v3492
        %v3813 = vunpack.c.h.b16 %v3492
        %v3814 = vunpack.c.l.b16 %v3493
        %v3815 = vunpack.c.h.b16 %v3493
        %v3816 = vunpack.c.l.b16 %v3494
        %v3817 = vunpack.c.h.b16 %v3494
        %v3818 = vunpack.c.l.b16 %v3495
        %v3819 = vunpack.c.h.b16 %v3495
        %v3820 = vunpack.c.l.b16 %v3496
        %v3821 = vunpack.c.h.b16 %v3496
        %v3822 = vunpack.c.l.b16 %v3497
        %v3823 = vunpack.c.h.b16 %v3497
        %v3824 = vunpack.c.l.b16 %v3498
        %v3825 = vunpack.c.h.b16 %v3498
        %v3826 = vunpack.c.l.b16 %v3499
        %v3827 = vunpack.c.h.b16 %v3499
        %v3828 = vunpack.c.l.b16 %v3500
        %v3829 = vunpack.c.h.b16 %v3500
        %v3830 = vunpack.c.l.b16 %v3501
        %v3831 = vunpack.c.h.b16 %v3501
        %v3832 = vunpack.c.l.b16 %v3502
        %v3833 = vunpack.c.h.b16 %v3502
        %v3834 = vunpack.c.l.b16 %v3503
        %v3835 = vunpack.c.h.b16 %v3503
        %v3836 = vunpack.c.l.b16 %v3504
        %v3837 = vunpack.c.h.b16 %v3504
        %v3838 = vunpack.c.l.b16 %v3505
        %v3839 = vunpack.c.h.b16 %v3505
        %v3840 = vunpack.c.l.b16 %v3506
        %v3841 = vunpack.c.h.b16 %v3506
        %v3842 = vunpack.c.l.b16 %v3507
        %v3843 = vunpack.c.h.b16 %v3507
        %v3844 = vunpack.c.l.b16 %v3508
        %v3845 = vunpack.c.h.b16 %v3508
        %v3846 = vunpack.c.l.b16 %v3509
        %v3847 = vunpack.c.h.b16 %v3509
        %v3848 = vunpack.c.l.b16 %v3510
        %v3849 = vunpack.c.h.b16 %v3510
        %v3850 = vunpack.c.l.b16 %v3511
        %v3851 = vunpack.c.h.b16 %v3511
        %v3852 = vunpack.c.l.b16 %v3512
        %v3853 = vunpack.c.h.b16 %v3512
        %v3854 = vunpack.c.l.b16 %v3513
        %v3855 = vunpack.c.h.b16 %v3513
        %v3856 = vunpack.c.l.b16 %v3514
        %v3857 = vunpack.c.h.b16 %v3514
        %v3858 = vunpack.c.l.b16 %v3515
        %v3859 = vunpack.c.h.b16 %v3515
        %v3860 = vunpack.c.l.b16 %v3516
        %v3861 = vunpack.c.h.b16 %v3516
        %v3862 = vunpack.c.l.b16 %v3517
        %v3863 = vunpack.c.h.b16 %v3517
        %v3864 = vunpack.c.l.b16 %v3518
        %v3865 = vunpack.c.h.b16 %v3518
        %v3866 = vunpack.c.l.b16 %v3519
        %v3867 = vunpack.c.h.b16 %v3519
        %v3868 = vunpack.c.l.b16 %v3520
        %v3869 = vunpack.c.h.b16 %v3520
        %v3870 = vunpack.c.l.b16 %v3521
        %v3871 = vunpack.c.h.b16 %v3521
        %v3872 = vunpack.c.l.b16 %v3522
        %v3873 = vunpack.c.h.b16 %v3522
        %v3874 = vunpack.c.l.b16 %v3523
        %v3875 = vunpack.c.h.b16 %v3523
        %v3876 = vunpack.c.l.b16 %v3524
        %v3877 = vunpack.c.h.b16 %v3524
        %v3878 = vunpack.c.l.b16 %v3525
        %v3879 = vunpack.c.h.b16 %v3525
        %v3880 = vunpack.c.l.b16 %v3526
        %v3881 = vunpack.c.h.b16 %v3526
        %v3882 = vunpack.c.l.b16 %v3527
        %v3883 = vunpack.c.h.b16 %v3527
        %v3884 = vunpack.c.l.b16 %v3528
        %v3885 = vunpack.c.h.b16 %v3528
        %v3886 = vunpack.c.l.b16 %v3529
        %v3887 = vunpack.c.h.b16 %v3529
        %v3888 = vunpack.c.l.b16 %v3530
        %v3889 = vunpack.c.h.b16 %v3530
        %v3890 = vunpack.c.l.b16 %v3531
        %v3891 = vunpack.c.h.b16 %v3531
        %v3892 = vunpack.c.l.b16 %v3532
        %v3893 = vunpack.c.h.b16 %v3532
        %v3894 = vunpack.c.l.b16 %v3533
        %v3895 = vunpack.c.h.b16 %v3533
        %v3896 = vunpack.c.l.b16 %v3534
        %v3897 = vunpack.c.h.b16 %v3534
        %v3898 = vunpack.c.l.b16 %v3535
        %v3899 = vunpack.c.h.b16 %v3535
        %v3900 = vunpack.c.l.b16 %v3536
        %v3901 = vunpack.c.h.b16 %v3536
        %v3902 = vunpack.c.l.b16 %v3537
        %v3903 = vunpack.c.h.b16 %v3537
        %v3904 = vunpack.c.l.b16 %v3538
        %v3905 = vunpack.c.h.b16 %v3538
        %v3906 = vunpack.c.l.b16 %v3539
        %v3907 = vunpack.c.h.b16 %v3539
        %v3908 = vunpack.c.l.b16 %v3540
        %v3909 = vunpack.c.h.b16 %v3540
        %v3910 = vunpack.c.l.b16 %v3541
        %v3911 = vunpack.c.h.b16 %v3541
        %v3912 = vunpack.c.l.b16 %v3542
        %v3913 = vunpack.c.h.b16 %v3542
        %v3914 = vunpack.c.l.b16 %v3543
        %v3915 = vunpack.c.h.b16 %v3543
        %v3916 = vunpack.c.l.b16 %v3544
        %v3917 = vunpack.c.h.b16 %v3544
        %v3918 = vunpack.c.l.b16 %v3545
        %v3919 = vunpack.c.h.b16 %v3545
        %v3920 = vunpack.c.l.b16 %v3546
        %v3921 = vunpack.c.h.b16 %v3546
        %v3922 = vunpack.c.l.b16 %v3547
        %v3923 = vunpack.c.h.b16 %v3547
        %v3924 = vunpack.c.l.b16 %v3548
        %v3925 = vunpack.c.h.b16 %v3548
        %v3926 = vunpack.c.l.b16 %v3549
        %v3927 = vunpack.c.h.b16 %v3549
        %v3928 = vunpack.c.l.b16 %v3550
        %v3929 = vunpack.c.h.b16 %v3550
        %v3930 = vunpack.c.l.b16 %v3551
        %v3931 = vunpack.c.h.b16 %v3551
        %v3932 = vunpack.c.l.b16 %v3552
        %v3933 = vunpack.c.h.b16 %v3552
        %v3934 = vunpack.c.l.b16 %v3553
        %v3935 = vunpack.c.h.b16 %v3553
        %v3936 = vunpack.c.l.b16 %v3554
        %v3937 = vunpack.c.h.b16 %v3554
        %v3938 = vunpack.c.l.b16 %v3555
        %v3939 = vunpack.c.h.b16 %v3555
        %v3940 = vunpack.c.l.b16 %v3556
        %v3941 = vunpack.c.h.b16 %v3556
        %v3942 = vunpack.c.l.b16 %v3557
        %v3943 = vunpack.c.h.b16 %v3557
        %v3944 = vunpack.c.l.b16 %v3558
        %v3945 = vunpack.c.h.b16 %v3558
        %v3946 = vunpack.c.l.b16 %v3559
        %v3947 = vunpack.c.h.b16 %v3559
        %v3948 = vunpack.c.l.b16 %v3560
        %v3949 = vunpack.c.h.b16 %v3560
        %v3950 = vunpack.c.l.b16 %v3561
        %v3951 = vunpack.c.h.b16 %v3561
        %v3952 = vunpack.c.l.b16 %v3562
        %v3953 = vunpack.c.h.b16 %v3562
        %v3954 = vunpack.c.l.b16 %v3563
        %v3955 = vunpack.c.h.b16 %v3563
        %v3956 = vunpack.c.l.b16 %v3564
        %v3957 = vunpack.c.h.b16 %v3564
        %v3958 = vunpack.c.l.b16 %v3565
        %v3959 = vunpack.c.h.b16 %v3565
        %v3960 = vunpack.c.l.b16 %v3566
        %v3961 = vunpack.c.h.b16 %v3566
        %v3962 = vunpack.c.l.b16 %v3567
        %v3963 = vunpack.c.h.b16 %v3567
        %v3964 = vunpack.c.l.b16 %v3568
        %v3965 = vunpack.c.h.b16 %v3568
        %v3966 = vunpack.c.l.b16 %v3569
        %v3967 = vunpack.c.h.b16 %v3569
        %v3968 = vunpack.c.l.b16 %v3570
        %v3969 = vunpack.c.h.b16 %v3570
        %v3970 = vunpack.c.l.b16 %v3571
        %v3971 = vunpack.c.h.b16 %v3571
        %v3972 = vunpack.c.l.b16 %v3572
        %v3973 = vunpack.c.h.b16 %v3572
        %v3974 = vunpack.c.l.b16 %v3573
        %v3975 = vunpack.c.h.b16 %v3573
        %v3976 = vunpack.c.l.b16 %v3574
        %v3977 = vunpack.c.h.b16 %v3574
        %v3978 = vunpack.c.l.b16 %v3575
        %v3979 = vunpack.c.h.b16 %v3575
        %v3980 = vunpack.c.l.b16 %v3576
        %v3981 = vunpack.c.h.b16 %v3576
        %v3982 = vunpack.c.l.b16 %v3577
        %v3983 = vunpack.c.h.b16 %v3577
        %v3984 = vpack.c.b16 %v3732, %v3728
        %v3985 = vpack.c.b16 %v3733, %v3729
        %v3986 = vpack.c.b16 %v3734, %v3730
        %v3987 = vpack.c.b16 %v3735, %v3731
        %v3988 = vpack.c.b16 %v3740, %v3736
        %v3989 = vpack.c.b16 %v3741, %v3737
        %v3990 = vpack.c.b16 %v3742, %v3738
        %v3991 = vpack.c.b16 %v3743, %v3739
        %v3992 = vpack.c.b16 %v3748, %v3744
        %v3993 = vpack.c.b16 %v3749, %v3745
        %v3994 = vpack.c.b16 %v3750, %v3746
        %v3995 = vpack.c.b16 %v3751, %v3747
        %v3996 = vpack.c.b16 %v3756, %v3752
        %v3997 = vpack.c.b16 %v3757, %v3753
        %v3998 = vpack.c.b16 %v3758, %v3754
        %v3999 = vpack.c.b16 %v3759, %v3755
        %v4000 = vpack.c.b16 %v3764, %v3760
        %v4001 = vpack.c.b16 %v3765, %v3761
        %v4002 = vpack.c.b16 %v3766, %v3762
        %v4003 = vpack.c.b16 %v3767, %v3763
        %v4004 = vpack.c.b16 %v3772, %v3768
        %v4005 = vpack.c.b16 %v3773, %v3769
        %v4006 = vpack.c.b16 %v3774, %v3770
        %v4007 = vpack.c.b16 %v3775, %v3771
        %v4008 = vpack.c.b16 %v3780, %v3776
        %v4009 = vpack.c.b16 %v3781, %v3777
        %v4010 = vpack.c.b16 %v3782, %v3778
        %v4011 = vpack.c.b16 %v3783, %v3779
        %v4012 = vpack.c.b16 %v3788, %v3784
        %v4013 = vpack.c.b16 %v3789, %v3785
        %v4014 = vpack.c.b16 %v3790, %v3786
        %v4015 = vpack.c.b16 %v3791, %v3787
        %v4016 = vpack.c.b16 %v3796, %v3792
        %v4017 = vpack.c.b16 %v3797, %v3793
        %v4018 = vpack.c.b16 %v3798, %v3794
        %v4019 = vpack.c.b16 %v3799, %v3795
        %v4020 = vpack.c.b16 %v3804, %v3800
        %v4021 = vpack.c.b16 %v3805, %v3801
        %v4022 = vpack.c.b16 %v3806, %v3802
        %v4023 = vpack.c.b16 %v3807, %v3803
        %v4024 = vpack.c.b16 %v3812, %v3808
        %v4025 = vpack.c.b16 %v3813, %v3809
        %v4026 = vpack.c.b16 %v3814, %v3810
        %v4027 = vpack.c.b16 %v3815, %v3811
        %v4028 = vpack.c.b16 %v3820, %v3816
        %v4029 = vpack.c.b16 %v3821, %v3817
        %v4030 = vpack.c.b16 %v3822, %v3818
        %v4031 = vpack.c.b16 %v3823, %v3819
        %v4032 = vpack.c.b16 %v3828, %v3824
        %v4033 = vpack.c.b16 %v3829, %v3825
        %v4034 = vpack.c.b16 %v3830, %v3826
        %v4035 = vpack.c.b16 %v3831, %v3827
        %v4036 = vpack.c.b16 %v3836, %v3832
        %v4037 = vpack.c.b16 %v3837, %v3833
        %v4038 = vpack.c.b16 %v3838, %v3834
        %v4039 = vpack.c.b16 %v3839, %v3835
        %v4040 = vpack.c.b16 %v3844, %v3840
        %v4041 = vpack.c.b16 %v3845, %v3841
        %v4042 = vpack.c.b16 %v3846, %v3842
        %v4043 = vpack.c.b16 %v3847, %v3843
        %v4044 = vpack.c.b16 %v3852, %v3848
        %v4045 = vpack.c.b16 %v3853, %v3849
        %v4046 = vpack.c.b16 %v3854, %v3850
        %v4047 = vpack.c.b16 %v3855, %v3851
        %v4048 = vpack.c.b16 %v3860, %v3856
        %v4049 = vpack.c.b16 %v3861, %v3857
        %v4050 = vpack.c.b16 %v3862, %v3858
        %v4051 = vpack.c.b16 %v3863, %v3859
        %v4052 = vpack.c.b16 %v3868, %v3864
        %v4053 = vpack.c.b16 %v3869, %v3865
        %v4054 = vpack.c.b16 %v3870, %v3866
        %v4055 = vpack.c.b16 %v3871, %v3867
        %v4056 = vpack.c.b16 %v3876, %v3872
        %v4057 = vpack.c.b16 %v3877, %v3873
        %v4058 = vpack.c.b16 %v3878, %v3874
        %v4059 = vpack.c.b16 %v3879, %v3875
        %v4060 = vpack.c.b16 %v3884, %v3880
        %v4061 = vpack.c.b16 %v3885, %v3881
        %v4062 = vpack.c.b16 %v3886, %v3882
        %v4063 = vpack.c.b16 %v3887, %v3883
        %v4064 = vpack.c.b16 %v3892, %v3888
        %v4065 = vpack.c.b16 %v3893, %v3889
        %v4066 = vpack.c.b16 %v3894, %v3890
        %v4067 = vpack.c.b16 %v3895, %v3891
        %v4068 = vpack.c.b16 %v3900, %v3896
        %v4069 = vpack.c.b16 %v3901, %v3897
        %v4070 = vpack.c.b16 %v3902, %v3898
        %v4071 = vpack.c.b16 %v3903, %v3899
        %v4072 = vpack.c.b16 %v3908, %v3904
        %v4073 = vpack.c.b16 %v3909, %v3905
        %v4074 = vpack.c.b16 %v3910, %v3906
        %v4075 = vpack.c.b16 %v3911, %v3907
        %v4076 = vpack.c.b16 %v3916, %v3912
        %v4077 = vpack.c.b16 %v3917, %v3913
        %v4078 = vpack.c.b16 %v3918, %v3914
        %v4079 = vpack.c.b16 %v3919, %v3915
        %v4080 = vpack.c.b16 %v3924, %v3920
        %v4081 = vpack.c.b16 %v3925, %v3921
        %v4082 = vpack.c.b16 %v3926, %v3922
        %v4083 = vpack.c.b16 %v3927, %v3923
        %v4084 = vpack.c.b16 %v3932, %v3928
        %v4085 = vpack.c.b16 %v3933, %v3929
        %v4086 = vpack.c.b16 %v3934, %v3930
        %v4087 = vpack.c.b16 %v3935, %v3931
        %v4088 = vpack.c.b16 %v3940, %v3936
        %v4089 = vpack.c.b16 %v3941, %v3937
        %v4090 = vpack.c.b16 %v3942, %v3938
        %v4091 = vpack.c.b16 %v3943, %v3939
        %v4092 = vpack.c.b16 %v3948, %v3944
        %v4093 = vpack.c.b16 %v3949, %v3945
        %v4094 = vpack.c.b16 %v3950, %v3946
        %v4095 = vpack.c.b16 %v3951, %v3947
        %v4096 = vpack.c.b16 %v3956, %v3952
        %v4097 = vpack.c.b16 %v3957, %v3953
        %v4098 = vpack.c.b16 %v3958, %v3954
        %v4099 = vpack.c.b16 %v3959, %v3955
        %v4100 = vpack.c.b16 %v3964, %v3960
        %v4101 = vpack.c.b16 %v3965, %v3961
        %v4102 = vpack.c.b16 %v3966, %v3962
        %v4103 = vpack.c.b16 %v3967, %v3963
        %v4104 = vpack.c.b16 %v3972, %v3968
        %v4105 = vpack.c.b16 %v3973, %v3969
        %v4106 = vpack.c.b16 %v3974, %v3970
        %v4107 = vpack.c.b16 %v3975, %v3971
        %v4108 = vpack.c.b16 %v3980, %v3976
        %v4109 = vpack.c.b16 %v3981, %v3977
        %v4110 = vpack.c.b16 %v3982, %v3978
        %v4111 = vpack.c.b16 %v3983, %v3979
        %4240 = vmatprep.subr.bf16.mxu0 %v3985
        %4241 = vmatpush1.bf16.msra.mxu0 %v3984
        %4242 = vmatprep.subr.bf16.mxu0 %v3989
        %4243 = vmatpush1.bf16.msra.mxu0 %v3988
        %4244 = vmatprep.subr.bf16.mxu0 %v3993
        %4245 = vmatpush1.bf16.msra.mxu0 %v3992
        %4246 = vmatprep.subr.bf16.mxu0 %v3997
        %4247 = vmatpush1.bf16.msra.mxu0 %v3996
        %4248 = vmatprep.subr.bf16.mxu0 %v4001
        %4249 = vmatpush1.bf16.msra.mxu0 %v4000
        %4250 = vmatprep.subr.bf16.mxu0 %v4005
        %4251 = vmatpush1.bf16.msra.mxu0 %v4004
        %4252 = vmatprep.subr.bf16.mxu0 %v4009
        %4253 = vmatpush1.bf16.msra.mxu0 %v4008
        %4254 = vmatprep.subr.bf16.mxu0 %v4013
        %4255 = vmatpush1.bf16.msra.mxu0 %v4012
        %4256 = vmatprep.subr.bf16.mxu0 %v4017
        %4257 = vmatpush1.bf16.msra.mxu0 %v4016
        %4258 = vmatprep.subr.bf16.mxu0 %v4021
        %4259 = vmatpush1.bf16.msra.mxu0 %v4020
        %4260 = vmatprep.subr.bf16.mxu0 %v4025
        %4261 = vmatpush1.bf16.msra.mxu0 %v4024
        %4262 = vmatprep.subr.bf16.mxu0 %v4029
        %4263 = vmatpush1.bf16.msra.mxu0 %v4028
        %4264 = vmatprep.subr.bf16.mxu0 %v4033
        %4265 = vmatpush1.bf16.msra.mxu0 %v4032
        %4266 = vmatprep.subr.bf16.mxu0 %v4037
        %4267 = vmatpush1.bf16.msra.mxu0 %v4036
        %4268 = vmatprep.subr.bf16.mxu0 %v4041
        %4269 = vmatpush1.bf16.msra.mxu0 %v4040
        %4270 = vmatprep.subr.bf16.mxu0 %v4045
        %4271 = vmatpush1.bf16.msra.mxu0 %v4044
        %4272 = vmatprep.mubr.bf16.mxu0 %v3447
        %4273 = vmatmul.mubr.bf16.gmra.mrb[0].mxu0 %v3446
        %v4274 = vpop.f32.mrb[0].mxu0
        %v4275 = vadd.f32 %v3583, %v4274
        %v4276 = vpop.f32.mrb[0].mxu0
        %v4277 = vadd.f32 %v3587, %v4276
        %v4278 = vpop.f32.mrb[0].mxu0
        %v4279 = vadd.f32 %v3583, %v4278
        %v4280 = vpop.f32.mrb[0].mxu0
        %v4281 = vadd.f32 %v3587, %v4280
        %4282 = vdwg.mxu0
        %4283 = vmatprep.subr.bf16.mxu0 %v4049
        %4284 = vmatpush1.bf16.msra.mxu0 %v4048
        %4285 = vmatprep.subr.bf16.mxu0 %v4053
        %4286 = vmatpush1.bf16.msra.mxu0 %v4052
        %4287 = vmatprep.subr.bf16.mxu0 %v4057
        %4288 = vmatpush1.bf16.msra.mxu0 %v4056
        %4289 = vmatprep.subr.bf16.mxu0 %v4061
        %4290 = vmatpush1.bf16.msra.mxu0 %v4060
        %4291 = vmatprep.subr.bf16.mxu0 %v4065
        %4292 = vmatpush1.bf16.msra.mxu0 %v4064
        %4293 = vmatprep.subr.bf16.mxu0 %v4069
        %4294 = vmatpush1.bf16.msra.mxu0 %v4068
        %4295 = vmatprep.subr.bf16.mxu0 %v4073
        %4296 = vmatpush1.bf16.msra.mxu0 %v4072
        %4297 = vmatprep.subr.bf16.mxu0 %v4077
        %4298 = vmatpush1.bf16.msra.mxu0 %v4076
        %4299 = vmatprep.subr.bf16.mxu0 %v4081
        %4300 = vmatpush1.bf16.msra.mxu0 %v4080
        %4301 = vmatprep.subr.bf16.mxu0 %v4085
        %4302 = vmatpush1.bf16.msra.mxu0 %v4084
        %4303 = vmatprep.subr.bf16.mxu0 %v4089
        %4304 = vmatpush1.bf16.msra.mxu0 %v4088
        %4305 = vmatprep.subr.bf16.mxu0 %v4093
        %4306 = vmatpush1.bf16.msra.mxu0 %v4092
        %4307 = vmatprep.subr.bf16.mxu0 %v4097
        %4308 = vmatpush1.bf16.msra.mxu0 %v4096
        %4309 = vmatprep.subr.bf16.mxu0 %v4101
        %4310 = vmatpush1.bf16.msra.mxu0 %v4100
        %4311 = vmatprep.subr.bf16.mxu0 %v4105
        %4312 = vmatpush1.bf16.msra.mxu0 %v4104
        %4313 = vmatprep.subr.bf16.mxu0 %v4109
        %4314 = vmatpush1.bf16.msra.mxu0 %v4108
        %4315 = vmatprep.mubr.bf16.mxu0 %v3449
        %4316 = vmatmul.mubr.bf16.gmra.mrb[0].mxu0 %v3448
        %v4317 = vpop.f32.mrb[0].mxu0
        %v4318 = vadd.f32 %v4275, %v4317
        %v4319 = vpop.f32.mrb[0].mxu0
        %v4320 = vadd.f32 %v4277, %v4319
        %v4321 = vpop.f32.mrb[0].mxu0
        %v4322 = vadd.f32 %v4279, %v4321
        %v4323 = vpop.f32.mrb[0].mxu0
        %v4324 = vadd.f32 %v4281, %v4323
        %4325 = vdwg.mxu0
        %4326 = vmatprep.subr.bf16.mxu0 %v3987
        %4327 = vmatpush1.bf16.msra.mxu0 %v3986
        %4328 = vmatprep.subr.bf16.mxu0 %v3991
        %4329 = vmatpush1.bf16.msra.mxu0 %v3990
        %4330 = vmatprep.subr.bf16.mxu0 %v3995
        %4331 = vmatpush1.bf16.msra.mxu0 %v3994
        %4332 = vmatprep.subr.bf16.mxu0 %v3999
        %4333 = vmatpush1.bf16.msra.mxu0 %v3998
        %4334 = vmatprep.subr.bf16.mxu0 %v4003
        %4335 = vmatpush1.bf16.msra.mxu0 %v4002
        %4336 = vmatprep.subr.bf16.mxu0 %v4007
        %4337 = vmatpush1.bf16.msra.mxu0 %v4006
        %4338 = vmatprep.subr.bf16.mxu0 %v4011
        %4339 = vmatpush1.bf16.msra.mxu0 %v4010
        %4340 = vmatprep.subr.bf16.mxu0 %v4015
        %4341 = vmatpush1.bf16.msra.mxu0 %v4014
        %4342 = vmatprep.subr.bf16.mxu0 %v4019
        %4343 = vmatpush1.bf16.msra.mxu0 %v4018
        %4344 = vmatprep.subr.bf16.mxu0 %v4023
        %4345 = vmatpush1.bf16.msra.mxu0 %v4022
        %4346 = vmatprep.subr.bf16.mxu0 %v4027
        %4347 = vmatpush1.bf16.msra.mxu0 %v4026
        %4348 = vmatprep.subr.bf16.mxu0 %v4031
        %4349 = vmatpush1.bf16.msra.mxu0 %v4030
        %4350 = vmatprep.subr.bf16.mxu0 %v4035
        %4351 = vmatpush1.bf16.msra.mxu0 %v4034
        %4352 = vmatprep.subr.bf16.mxu0 %v4039
        %4353 = vmatpush1.bf16.msra.mxu0 %v4038
        %4354 = vmatprep.subr.bf16.mxu0 %v4043
        %4355 = vmatpush1.bf16.msra.mxu0 %v4042
        %4356 = vmatprep.subr.bf16.mxu0 %v4047
        %4357 = vmatpush1.bf16.msra.mxu0 %v4046
        %4358 = vmatprep.mubr.bf16.mxu0 %v3447
        %4359 = vmatmul.mubr.bf16.gmra.mrb[0].mxu0 %v3446
        %v4360 = vpop.f32.mrb[0].mxu0
        %v4361 = vadd.f32 %v3591, %v4360
        %v4362 = vpop.f32.mrb[0].mxu0
        %v4363 = vadd.f32 %v3595, %v4362
        %v4364 = vpop.f32.mrb[0].mxu0
        %v4365 = vadd.f32 %v3591, %v4364
        %v4366 = vpop.f32.mrb[0].mxu0
        %v4367 = vadd.f32 %v3595, %v4366
        %4368 = vdwg.mxu0
        %4369 = vmatprep.subr.bf16.mxu0 %v4051
        %4370 = vmatpush1.bf16.msra.mxu0 %v4050
        %4371 = vmatprep.subr.bf16.mxu0 %v4055
        %4372 = vmatpush1.bf16.msra.mxu0 %v4054
        %4373 = vmatprep.subr.bf16.mxu0 %v4059
        %4374 = vmatpush1.bf16.msra.mxu0 %v4058
        %4375 = vmatprep.subr.bf16.mxu0 %v4063
        %4376 = vmatpush1.bf16.msra.mxu0 %v4062
        %4377 = vmatprep.subr.bf16.mxu0 %v4067
        %4378 = vmatpush1.bf16.msra.mxu0 %v4066
        %4379 = vmatprep.subr.bf16.mxu0 %v4071
        %4380 = vmatpush1.bf16.msra.mxu0 %v4070
        %4381 = vmatprep.subr.bf16.mxu0 %v4075
        %4382 = vmatpush1.bf16.msra.mxu0 %v4074
        %4383 = vmatprep.subr.bf16.mxu0 %v4079
        %4384 = vmatpush1.bf16.msra.mxu0 %v4078
        %4385 = vmatprep.subr.bf16.mxu0 %v4083
        %4386 = vmatpush1.bf16.msra.mxu0 %v4082
        %4387 = vmatprep.subr.bf16.mxu0 %v4087
        %4388 = vmatpush1.bf16.msra.mxu0 %v4086
        %4389 = vmatprep.subr.bf16.mxu0 %v4091
        %4390 = vmatpush1.bf16.msra.mxu0 %v4090
        %4391 = vmatprep.subr.bf16.mxu0 %v4095
        %4392 = vmatpush1.bf16.msra.mxu0 %v4094
        %4393 = vmatprep.subr.bf16.mxu0 %v4099
        %4394 = vmatpush1.bf16.msra.mxu0 %v4098
        %4395 = vmatprep.subr.bf16.mxu0 %v4103
        %4396 = vmatpush1.bf16.msra.mxu0 %v4102
        %4397 = vmatprep.subr.bf16.mxu0 %v4107
        %4398 = vmatpush1.bf16.msra.mxu0 %v4106
        %4399 = vmatprep.subr.bf16.mxu0 %v4111
        %4400 = vmatpush1.bf16.msra.mxu0 %v4110
        %4401 = vmatprep.mubr.bf16.mxu0 %v3449
        %4402 = vmatmul.mubr.bf16.gmra.mrb[0].mxu0 %v3448
        %v4403 = vpop.f32.mrb[0].mxu0
        %v4404 = vadd.f32 %v4361, %v4403
        %v4405 = vpop.f32.mrb[0].mxu0
        %v4406 = vadd.f32 %v4363, %v4405
        %v4407 = vpop.f32.mrb[0].mxu0
        %v4408 = vadd.f32 %v4365, %v4407
        %v4409 = vpop.f32.mrb[0].mxu0
        %v4410 = vadd.f32 %v4367, %v4409
        %4411 = vdwg.mxu0
        %vm4412 = vcmp.ge.f32.partialorder %v4318, 0.0
        %vm4413 = vcmp.ge.f32.partialorder %v4320, 0.0
        %vm4414 = vcmp.ge.f32.partialorder %v4404, 0.0
        %vm4415 = vcmp.ge.f32.partialorder %v4406, 0.0
        %vm4416 = vcmp.ge.f32.partialorder %v4322, 0.0
        %vm4417 = vcmp.ge.f32.partialorder %v4324, 0.0
        %vm4418 = vcmp.ge.f32.partialorder %v4408, 0.0
        %vm4419 = vcmp.ge.f32.partialorder %v4410, 0.0
        %v4420 = vmul.f32 %v4318, 0.01
        %v4421 = vmul.f32 %v4320, 0.01
        %v4422 = vmul.f32 %v4404, 0.01
        %v4423 = vmul.f32 %v4406, 0.01
        %v4424 = vmul.f32 %v4322, 0.01
        %v4425 = vmul.f32 %v4324, 0.01
        %v4426 = vmul.f32 %v4408, 0.01
        %v4427 = vmul.f32 %v4410, 0.01
        %v4428 = vsel %vm4412, %v4318, %v4420
        %v4429 = vsel %vm4413, %v4320, %v4421
        %v4430 = vsel %vm4414, %v4404, %v4422
        %v4431 = vsel %vm4415, %v4406, %v4423
        %v4432 = vsel %vm4416, %v4322, %v4424
        %v4433 = vsel %vm4417, %v4324, %v4425
        %v4434 = vsel %vm4418, %v4408, %v4426
        %v4435 = vsel %vm4419, %v4410, %v4427
        %v4436 = vpack.c.bf16 %v4432, %v4428
        %v4437 = vpack.c.bf16 %v4433, %v4429
        %v4438 = vpack.c.bf16 %v4434, %v4430
        %v4439 = vpack.c.bf16 %v4435, %v4431
        %v4440 = vld [vmem:[#allocation10] sm:$0xff]
        %v4441 = vld [vmem:[#allocation10 + $0x8] sm:$0xff]
        %v4442 = vld [vmem:[#allocation10 + $0x10] sm:$0xff]
        %v4443 = vld [vmem:[#allocation10 + $0x18] sm:$0xff]
        %v4444 = vld [vmem:[#allocation10 + $0x20] sm:$0xff]
        %v4445 = vld [vmem:[#allocation10 + $0x28] sm:$0xff]
        %v4446 = vld [vmem:[#allocation10 + $0x30] sm:$0xff]
        %v4447 = vld [vmem:[#allocation10 + $0x38] sm:$0xff]
        %v4448 = vld [vmem:[#allocation10 + $0x40] sm:$0xff]
        %v4449 = vld [vmem:[#allocation10 + $0x48] sm:$0xff]
        %v4450 = vld [vmem:[#allocation10 + $0x50] sm:$0xff]
        %v4451 = vld [vmem:[#allocation10 + $0x58] sm:$0xff]
        %v4452 = vld [vmem:[#allocation10 + $0x60] sm:$0xff]
        %v4453 = vld [vmem:[#allocation10 + $0x68] sm:$0xff]
        %v4454 = vld [vmem:[#allocation10 + $0x70] sm:$0xff]
        %v4455 = vld [vmem:[#allocation10 + $0x78] sm:$0xff]
        %v4456 = vld [vmem:[#allocation10 + $0x80] sm:$0xff]
        %v4457 = vld [vmem:[#allocation10 + $0x88] sm:$0xff]
        %v4458 = vld [vmem:[#allocation10 + $0x90] sm:$0xff]
        %v4459 = vld [vmem:[#allocation10 + $0x98] sm:$0xff]
        %v4460 = vld [vmem:[#allocation10 + $0xa0] sm:$0xff]
        %v4461 = vld [vmem:[#allocation10 + $0xa8] sm:$0xff]
        %v4462 = vld [vmem:[#allocation10 + $0xb0] sm:$0xff]
        %v4463 = vld [vmem:[#allocation10 + $0xb8] sm:$0xff]
        %v4464 = vld [vmem:[#allocation10 + $0xc0] sm:$0xff]
        %v4465 = vld [vmem:[#allocation10 + $0xc8] sm:$0xff]
        %v4466 = vld [vmem:[#allocation10 + $0xd0] sm:$0xff]
        %v4467 = vld [vmem:[#allocation10 + $0xd8] sm:$0xff]
        %v4468 = vld [vmem:[#allocation10 + $0xe0] sm:$0xff]
        %v4469 = vld [vmem:[#allocation10 + $0xe8] sm:$0xff]
        %v4470 = vld [vmem:[#allocation10 + $0xf0] sm:$0xff]
        %v4471 = vld [vmem:[#allocation10 + $0xf8] sm:$0xff]
        %v4472 = vld [vmem:[#allocation10 + $0x100] sm:$0xff]
        %v4473 = vld [vmem:[#allocation10 + $0x108] sm:$0xff]
        %v4474 = vld [vmem:[#allocation10 + $0x110] sm:$0xff]
        %v4475 = vld [vmem:[#allocation10 + $0x118] sm:$0xff]
        %v4476 = vld [vmem:[#allocation10 + $0x120] sm:$0xff]
        %v4477 = vld [vmem:[#allocation10 + $0x128] sm:$0xff]
        %v4478 = vld [vmem:[#allocation10 + $0x130] sm:$0xff]
        %v4479 = vld [vmem:[#allocation10 + $0x138] sm:$0xff]
        %v4480 = vld [vmem:[#allocation10 + $0x140] sm:$0xff]
        %v4481 = vld [vmem:[#allocation10 + $0x148] sm:$0xff]
        %v4482 = vld [vmem:[#allocation10 + $0x150] sm:$0xff]
        %v4483 = vld [vmem:[#allocation10 + $0x158] sm:$0xff]
        %v4484 = vld [vmem:[#allocation10 + $0x160] sm:$0xff]
        %v4485 = vld [vmem:[#allocation10 + $0x168] sm:$0xff]
        %v4486 = vld [vmem:[#allocation10 + $0x170] sm:$0xff]
        %v4487 = vld [vmem:[#allocation10 + $0x178] sm:$0xff]
        %v4488 = vld [vmem:[#allocation10 + $0x180] sm:$0xff]
        %v4489 = vld [vmem:[#allocation10 + $0x188] sm:$0xff]
        %v4490 = vld [vmem:[#allocation10 + $0x190] sm:$0xff]
        %v4491 = vld [vmem:[#allocation10 + $0x198] sm:$0xff]
        %v4492 = vld [vmem:[#allocation10 + $0x1a0] sm:$0xff]
        %v4493 = vld [vmem:[#allocation10 + $0x1a8] sm:$0xff]
        %v4494 = vld [vmem:[#allocation10 + $0x1b0] sm:$0xff]
        %v4495 = vld [vmem:[#allocation10 + $0x1b8] sm:$0xff]
        %v4496 = vld [vmem:[#allocation10 + $0x1c0] sm:$0xff]
        %v4497 = vld [vmem:[#allocation10 + $0x1c8] sm:$0xff]
        %v4498 = vld [vmem:[#allocation10 + $0x1d0] sm:$0xff]
        %v4499 = vld [vmem:[#allocation10 + $0x1d8] sm:$0xff]
        %v4500 = vld [vmem:[#allocation10 + $0x1e0] sm:$0xff]
        %v4501 = vld [vmem:[#allocation10 + $0x1e8] sm:$0xff]
        %v4502 = vld [vmem:[#allocation10 + $0x1f0] sm:$0xff]
        %v4503 = vld [vmem:[#allocation10 + $0x1f8] sm:$0xff]
        %v4504 = vld [vmem:[#allocation10 + $0x200] sm:$0xff]
        %v4505 = vld [vmem:[#allocation10 + $0x208] sm:$0xff]
        %v4506 = vld [vmem:[#allocation10 + $0x210] sm:$0xff]
        %v4507 = vld [vmem:[#allocation10 + $0x218] sm:$0xff]
        %v4508 = vld [vmem:[#allocation10 + $0x220] sm:$0xff]
        %v4509 = vld [vmem:[#allocation10 + $0x228] sm:$0xff]
        %v4510 = vld [vmem:[#allocation10 + $0x230] sm:$0xff]
        %v4511 = vld [vmem:[#allocation10 + $0x238] sm:$0xff]
        %v4512 = vld [vmem:[#allocation10 + $0x240] sm:$0xff]
        %v4513 = vld [vmem:[#allocation10 + $0x248] sm:$0xff]
        %v4514 = vld [vmem:[#allocation10 + $0x250] sm:$0xff]
        %v4515 = vld [vmem:[#allocation10 + $0x258] sm:$0xff]
        %v4516 = vld [vmem:[#allocation10 + $0x260] sm:$0xff]
        %v4517 = vld [vmem:[#allocation10 + $0x268] sm:$0xff]
        %v4518 = vld [vmem:[#allocation10 + $0x270] sm:$0xff]
        %v4519 = vld [vmem:[#allocation10 + $0x278] sm:$0xff]
        %v4520 = vld [vmem:[#allocation10 + $0x280] sm:$0xff]
        %v4521 = vld [vmem:[#allocation10 + $0x288] sm:$0xff]
        %v4522 = vld [vmem:[#allocation10 + $0x290] sm:$0xff]
        %v4523 = vld [vmem:[#allocation10 + $0x298] sm:$0xff]
        %v4524 = vld [vmem:[#allocation10 + $0x2a0] sm:$0xff]
        %v4525 = vld [vmem:[#allocation10 + $0x2a8] sm:$0xff]
        %v4526 = vld [vmem:[#allocation10 + $0x2b0] sm:$0xff]
        %v4527 = vld [vmem:[#allocation10 + $0x2b8] sm:$0xff]
        %v4528 = vld [vmem:[#allocation10 + $0x2c0] sm:$0xff]
        %v4529 = vld [vmem:[#allocation10 + $0x2c8] sm:$0xff]
        %v4530 = vld [vmem:[#allocation10 + $0x2d0] sm:$0xff]
        %v4531 = vld [vmem:[#allocation10 + $0x2d8] sm:$0xff]
        %v4532 = vld [vmem:[#allocation10 + $0x2e0] sm:$0xff]
        %v4533 = vld [vmem:[#allocation10 + $0x2e8] sm:$0xff]
        %v4534 = vld [vmem:[#allocation10 + $0x2f0] sm:$0xff]
        %v4535 = vld [vmem:[#allocation10 + $0x2f8] sm:$0xff]
        %v4536 = vld [vmem:[#allocation10 + $0x300] sm:$0xff]
        %v4537 = vld [vmem:[#allocation10 + $0x308] sm:$0xff]
        %v4538 = vld [vmem:[#allocation10 + $0x310] sm:$0xff]
        %v4539 = vld [vmem:[#allocation10 + $0x318] sm:$0xff]
        %v4540 = vld [vmem:[#allocation10 + $0x320] sm:$0xff]
        %v4541 = vld [vmem:[#allocation10 + $0x328] sm:$0xff]
        %v4542 = vld [vmem:[#allocation10 + $0x330] sm:$0xff]
        %v4543 = vld [vmem:[#allocation10 + $0x338] sm:$0xff]
        %v4544 = vld [vmem:[#allocation10 + $0x340] sm:$0xff]
        %v4545 = vld [vmem:[#allocation10 + $0x348] sm:$0xff]
        %v4546 = vld [vmem:[#allocation10 + $0x350] sm:$0xff]
        %v4547 = vld [vmem:[#allocation10 + $0x358] sm:$0xff]
        %v4548 = vld [vmem:[#allocation10 + $0x360] sm:$0xff]
        %v4549 = vld [vmem:[#allocation10 + $0x368] sm:$0xff]
        %v4550 = vld [vmem:[#allocation10 + $0x370] sm:$0xff]
        %v4551 = vld [vmem:[#allocation10 + $0x378] sm:$0xff]
        %v4552 = vld [vmem:[#allocation10 + $0x380] sm:$0xff]
        %v4553 = vld [vmem:[#allocation10 + $0x388] sm:$0xff]
        %v4554 = vld [vmem:[#allocation10 + $0x390] sm:$0xff]
        %v4555 = vld [vmem:[#allocation10 + $0x398] sm:$0xff]
        %v4556 = vld [vmem:[#allocation10 + $0x3a0] sm:$0xff]
        %v4557 = vld [vmem:[#allocation10 + $0x3a8] sm:$0xff]
        %v4558 = vld [vmem:[#allocation10 + $0x3b0] sm:$0xff]
        %v4559 = vld [vmem:[#allocation10 + $0x3b8] sm:$0xff]
        %v4560 = vld [vmem:[#allocation10 + $0x3c0] sm:$0xff]
        %v4561 = vld [vmem:[#allocation10 + $0x3c8] sm:$0xff]
        %v4562 = vld [vmem:[#allocation10 + $0x3d0] sm:$0xff]
        %v4563 = vld [vmem:[#allocation10 + $0x3d8] sm:$0xff]
        %v4564 = vld [vmem:[#allocation10 + $0x3e0] sm:$0xff]
        %v4565 = vld [vmem:[#allocation10 + $0x3e8] sm:$0xff]
        %v4566 = vld [vmem:[#allocation10 + $0x3f0] sm:$0xff]
        %v4567 = vld [vmem:[#allocation10 + $0x3f8] sm:$0xff]
        %v4568 = vld [vmem:[%s8] sm:$0xf]
        %v4570 = vlaneseq
        %v4571 = vshrl.u32 %v4570, 7
        %v4572 = vsub.s32 0, %v4571
        %v4573 = vrot.slane %v4568, %v4572
        %v4574 = vlaneseq
        %v4575 = vshrl.u32 %v4574, 7
        %v4576 = vsub.s32 1, %v4575
        %v4577 = vrot.slane %v4568, %v4576
        %v4578 = vlaneseq
        %v4579 = vshrl.u32 %v4578, 7
        %v4580 = vsub.s32 2, %v4579
        %v4581 = vrot.slane %v4568, %v4580
        %v4582 = vlaneseq
        %v4583 = vshrl.u32 %v4582, 7
        %v4584 = vsub.s32 3, %v4583
        %v4585 = vrot.slane %v4568, %v4584
        %v4718 = vunpack.c.l.b16 %v4440
        %v4719 = vunpack.c.h.b16 %v4440
        %v4720 = vunpack.c.l.b16 %v4441
        %v4721 = vunpack.c.h.b16 %v4441
        %v4722 = vunpack.c.l.b16 %v4442
        %v4723 = vunpack.c.h.b16 %v4442
        %v4724 = vunpack.c.l.b16 %v4443
        %v4725 = vunpack.c.h.b16 %v4443
        %v4726 = vunpack.c.l.b16 %v4444
        %v4727 = vunpack.c.h.b16 %v4444
        %v4728 = vunpack.c.l.b16 %v4445
        %v4729 = vunpack.c.h.b16 %v4445
        %v4730 = vunpack.c.l.b16 %v4446
        %v4731 = vunpack.c.h.b16 %v4446
        %v4732 = vunpack.c.l.b16 %v4447
        %v4733 = vunpack.c.h.b16 %v4447
        %v4734 = vunpack.c.l.b16 %v4448
        %v4735 = vunpack.c.h.b16 %v4448
        %v4736 = vunpack.c.l.b16 %v4449
        %v4737 = vunpack.c.h.b16 %v4449
        %v4738 = vunpack.c.l.b16 %v4450
        %v4739 = vunpack.c.h.b16 %v4450
        %v4740 = vunpack.c.l.b16 %v4451
        %v4741 = vunpack.c.h.b16 %v4451
        %v4742 = vunpack.c.l.b16 %v4452
        %v4743 = vunpack.c.h.b16 %v4452
        %v4744 = vunpack.c.l.b16 %v4453
        %v4745 = vunpack.c.h.b16 %v4453
        %v4746 = vunpack.c.l.b16 %v4454
        %v4747 = vunpack.c.h.b16 %v4454
        %v4748 = vunpack.c.l.b16 %v4455
        %v4749 = vunpack.c.h.b16 %v4455
        %v4750 = vunpack.c.l.b16 %v4456
        %v4751 = vunpack.c.h.b16 %v4456
        %v4752 = vunpack.c.l.b16 %v4457
        %v4753 = vunpack.c.h.b16 %v4457
        %v4754 = vunpack.c.l.b16 %v4458
        %v4755 = vunpack.c.h.b16 %v4458
        %v4756 = vunpack.c.l.b16 %v4459
        %v4757 = vunpack.c.h.b16 %v4459
        %v4758 = vunpack.c.l.b16 %v4460
        %v4759 = vunpack.c.h.b16 %v4460
        %v4760 = vunpack.c.l.b16 %v4461
        %v4761 = vunpack.c.h.b16 %v4461
        %v4762 = vunpack.c.l.b16 %v4462
        %v4763 = vunpack.c.h.b16 %v4462
        %v4764 = vunpack.c.l.b16 %v4463
        %v4765 = vunpack.c.h.b16 %v4463
        %v4766 = vunpack.c.l.b16 %v4464
        %v4767 = vunpack.c.h.b16 %v4464
        %v4768 = vunpack.c.l.b16 %v4465
        %v4769 = vunpack.c.h.b16 %v4465
        %v4770 = vunpack.c.l.b16 %v4466
        %v4771 = vunpack.c.h.b16 %v4466
        %v4772 = vunpack.c.l.b16 %v4467
        %v4773 = vunpack.c.h.b16 %v4467
        %v4774 = vunpack.c.l.b16 %v4468
        %v4775 = vunpack.c.h.b16 %v4468
        %v4776 = vunpack.c.l.b16 %v4469
        %v4777 = vunpack.c.h.b16 %v4469
        %v4778 = vunpack.c.l.b16 %v4470
        %v4779 = vunpack.c.h.b16 %v4470
        %v4780 = vunpack.c.l.b16 %v4471
        %v4781 = vunpack.c.h.b16 %v4471
        %v4782 = vunpack.c.l.b16 %v4472
        %v4783 = vunpack.c.h.b16 %v4472
        %v4784 = vunpack.c.l.b16 %v4473
        %v4785 = vunpack.c.h.b16 %v4473
        %v4786 = vunpack.c.l.b16 %v4474
        %v4787 = vunpack.c.h.b16 %v4474
        %v4788 = vunpack.c.l.b16 %v4475
        %v4789 = vunpack.c.h.b16 %v4475
        %v4790 = vunpack.c.l.b16 %v4476
        %v4791 = vunpack.c.h.b16 %v4476
        %v4792 = vunpack.c.l.b16 %v4477
        %v4793 = vunpack.c.h.b16 %v4477
        %v4794 = vunpack.c.l.b16 %v4478
        %v4795 = vunpack.c.h.b16 %v4478
        %v4796 = vunpack.c.l.b16 %v4479
        %v4797 = vunpack.c.h.b16 %v4479
        %v4798 = vunpack.c.l.b16 %v4480
        %v4799 = vunpack.c.h.b16 %v4480
        %v4800 = vunpack.c.l.b16 %v4481
        %v4801 = vunpack.c.h.b16 %v4481
        %v4802 = vunpack.c.l.b16 %v4482
        %v4803 = vunpack.c.h.b16 %v4482
        %v4804 = vunpack.c.l.b16 %v4483
        %v4805 = vunpack.c.h.b16 %v4483
        %v4806 = vunpack.c.l.b16 %v4484
        %v4807 = vunpack.c.h.b16 %v4484
        %v4808 = vunpack.c.l.b16 %v4485
        %v4809 = vunpack.c.h.b16 %v4485
        %v4810 = vunpack.c.l.b16 %v4486
        %v4811 = vunpack.c.h.b16 %v4486
        %v4812 = vunpack.c.l.b16 %v4487
        %v4813 = vunpack.c.h.b16 %v4487
        %v4814 = vunpack.c.l.b16 %v4488
        %v4815 = vunpack.c.h.b16 %v4488
        %v4816 = vunpack.c.l.b16 %v4489
        %v4817 = vunpack.c.h.b16 %v4489
        %v4818 = vunpack.c.l.b16 %v4490
        %v4819 = vunpack.c.h.b16 %v4490
        %v4820 = vunpack.c.l.b16 %v4491
        %v4821 = vunpack.c.h.b16 %v4491
        %v4822 = vunpack.c.l.b16 %v4492
        %v4823 = vunpack.c.h.b16 %v4492
        %v4824 = vunpack.c.l.b16 %v4493
        %v4825 = vunpack.c.h.b16 %v4493
        %v4826 = vunpack.c.l.b16 %v4494
        %v4827 = vunpack.c.h.b16 %v4494
        %v4828 = vunpack.c.l.b16 %v4495
        %v4829 = vunpack.c.h.b16 %v4495
        %v4830 = vunpack.c.l.b16 %v4496
        %v4831 = vunpack.c.h.b16 %v4496
        %v4832 = vunpack.c.l.b16 %v4497
        %v4833 = vunpack.c.h.b16 %v4497
        %v4834 = vunpack.c.l.b16 %v4498
        %v4835 = vunpack.c.h.b16 %v4498
        %v4836 = vunpack.c.l.b16 %v4499
        %v4837 = vunpack.c.h.b16 %v4499
        %v4838 = vunpack.c.l.b16 %v4500
        %v4839 = vunpack.c.h.b16 %v4500
        %v4840 = vunpack.c.l.b16 %v4501
        %v4841 = vunpack.c.h.b16 %v4501
        %v4842 = vunpack.c.l.b16 %v4502
        %v4843 = vunpack.c.h.b16 %v4502
        %v4844 = vunpack.c.l.b16 %v4503
        %v4845 = vunpack.c.h.b16 %v4503
        %v4846 = vunpack.c.l.b16 %v4504
        %v4847 = vunpack.c.h.b16 %v4504
        %v4848 = vunpack.c.l.b16 %v4505
        %v4849 = vunpack.c.h.b16 %v4505
        %v4850 = vunpack.c.l.b16 %v4506
        %v4851 = vunpack.c.h.b16 %v4506
        %v4852 = vunpack.c.l.b16 %v4507
        %v4853 = vunpack.c.h.b16 %v4507
        %v4854 = vunpack.c.l.b16 %v4508
        %v4855 = vunpack.c.h.b16 %v4508
        %v4856 = vunpack.c.l.b16 %v4509
        %v4857 = vunpack.c.h.b16 %v4509
        %v4858 = vunpack.c.l.b16 %v4510
        %v4859 = vunpack.c.h.b16 %v4510
        %v4860 = vunpack.c.l.b16 %v4511
        %v4861 = vunpack.c.h.b16 %v4511
        %v4862 = vunpack.c.l.b16 %v4512
        %v4863 = vunpack.c.h.b16 %v4512
        %v4864 = vunpack.c.l.b16 %v4513
        %v4865 = vunpack.c.h.b16 %v4513
        %v4866 = vunpack.c.l.b16 %v4514
        %v4867 = vunpack.c.h.b16 %v4514
        %v4868 = vunpack.c.l.b16 %v4515
        %v4869 = vunpack.c.h.b16 %v4515
        %v4870 = vunpack.c.l.b16 %v4516
        %v4871 = vunpack.c.h.b16 %v4516
        %v4872 = vunpack.c.l.b16 %v4517
        %v4873 = vunpack.c.h.b16 %v4517
        %v4874 = vunpack.c.l.b16 %v4518
        %v4875 = vunpack.c.h.b16 %v4518
        %v4876 = vunpack.c.l.b16 %v4519
        %v4877 = vunpack.c.h.b16 %v4519
        %v4878 = vunpack.c.l.b16 %v4520
        %v4879 = vunpack.c.h.b16 %v4520
        %v4880 = vunpack.c.l.b16 %v4521
        %v4881 = vunpack.c.h.b16 %v4521
        %v4882 = vunpack.c.l.b16 %v4522
        %v4883 = vunpack.c.h.b16 %v4522
        %v4884 = vunpack.c.l.b16 %v4523
        %v4885 = vunpack.c.h.b16 %v4523
        %v4886 = vunpack.c.l.b16 %v4524
        %v4887 = vunpack.c.h.b16 %v4524
        %v4888 = vunpack.c.l.b16 %v4525
        %v4889 = vunpack.c.h.b16 %v4525
        %v4890 = vunpack.c.l.b16 %v4526
        %v4891 = vunpack.c.h.b16 %v4526
        %v4892 = vunpack.c.l.b16 %v4527
        %v4893 = vunpack.c.h.b16 %v4527
        %v4894 = vunpack.c.l.b16 %v4528
        %v4895 = vunpack.c.h.b16 %v4528
        %v4896 = vunpack.c.l.b16 %v4529
        %v4897 = vunpack.c.h.b16 %v4529
        %v4898 = vunpack.c.l.b16 %v4530
        %v4899 = vunpack.c.h.b16 %v4530
        %v4900 = vunpack.c.l.b16 %v4531
        %v4901 = vunpack.c.h.b16 %v4531
        %v4902 = vunpack.c.l.b16 %v4532
        %v4903 = vunpack.c.h.b16 %v4532
        %v4904 = vunpack.c.l.b16 %v4533
        %v4905 = vunpack.c.h.b16 %v4533
        %v4906 = vunpack.c.l.b16 %v4534
        %v4907 = vunpack.c.h.b16 %v4534
        %v4908 = vunpack.c.l.b16 %v4535
        %v4909 = vunpack.c.h.b16 %v4535
        %v4910 = vunpack.c.l.b16 %v4536
        %v4911 = vunpack.c.h.b16 %v4536
        %v4912 = vunpack.c.l.b16 %v4537
        %v4913 = vunpack.c.h.b16 %v4537
        %v4914 = vunpack.c.l.b16 %v4538
        %v4915 = vunpack.c.h.b16 %v4538
        %v4916 = vunpack.c.l.b16 %v4539
        %v4917 = vunpack.c.h.b16 %v4539
        %v4918 = vunpack.c.l.b16 %v4540
        %v4919 = vunpack.c.h.b16 %v4540
        %v4920 = vunpack.c.l.b16 %v4541
        %v4921 = vunpack.c.h.b16 %v4541
        %v4922 = vunpack.c.l.b16 %v4542
        %v4923 = vunpack.c.h.b16 %v4542
        %v4924 = vunpack.c.l.b16 %v4543
        %v4925 = vunpack.c.h.b16 %v4543
        %v4926 = vunpack.c.l.b16 %v4544
        %v4927 = vunpack.c.h.b16 %v4544
        %v4928 = vunpack.c.l.b16 %v4545
        %v4929 = vunpack.c.h.b16 %v4545
        %v4930 = vunpack.c.l.b16 %v4546
        %v4931 = vunpack.c.h.b16 %v4546
        %v4932 = vunpack.c.l.b16 %v4547
        %v4933 = vunpack.c.h.b16 %v4547
        %v4934 = vunpack.c.l.b16 %v4548
        %v4935 = vunpack.c.h.b16 %v4548
        %v4936 = vunpack.c.l.b16 %v4549
        %v4937 = vunpack.c.h.b16 %v4549
        %v4938 = vunpack.c.l.b16 %v4550
        %v4939 = vunpack.c.h.b16 %v4550
        %v4940 = vunpack.c.l.b16 %v4551
        %v4941 = vunpack.c.h.b16 %v4551
        %v4942 = vunpack.c.l.b16 %v4552
        %v4943 = vunpack.c.h.b16 %v4552
        %v4944 = vunpack.c.l.b16 %v4553
        %v4945 = vunpack.c.h.b16 %v4553
        %v4946 = vunpack.c.l.b16 %v4554
        %v4947 = vunpack.c.h.b16 %v4554
        %v4948 = vunpack.c.l.b16 %v4555
        %v4949 = vunpack.c.h.b16 %v4555
        %v4950 = vunpack.c.l.b16 %v4556
        %v4951 = vunpack.c.h.b16 %v4556
        %v4952 = vunpack.c.l.b16 %v4557
        %v4953 = vunpack.c.h.b16 %v4557
        %v4954 = vunpack.c.l.b16 %v4558
        %v4955 = vunpack.c.h.b16 %v4558
        %v4956 = vunpack.c.l.b16 %v4559
        %v4957 = vunpack.c.h.b16 %v4559
        %v4958 = vunpack.c.l.b16 %v4560
        %v4959 = vunpack.c.h.b16 %v4560
        %v4960 = vunpack.c.l.b16 %v4561
        %v4961 = vunpack.c.h.b16 %v4561
        %v4962 = vunpack.c.l.b16 %v4562
        %v4963 = vunpack.c.h.b16 %v4562
        %v4964 = vunpack.c.l.b16 %v4563
        %v4965 = vunpack.c.h.b16 %v4563
        %v4966 = vunpack.c.l.b16 %v4564
        %v4967 = vunpack.c.h.b16 %v4564
        %v4968 = vunpack.c.l.b16 %v4565
        %v4969 = vunpack.c.h.b16 %v4565
        %v4970 = vunpack.c.l.b16 %v4566
        %v4971 = vunpack.c.h.b16 %v4566
        %v4972 = vunpack.c.l.b16 %v4567
        %v4973 = vunpack.c.h.b16 %v4567
        %v4974 = vpack.c.b16 %v4722, %v4718
        %v4975 = vpack.c.b16 %v4723, %v4719
        %v4976 = vpack.c.b16 %v4724, %v4720
        %v4977 = vpack.c.b16 %v4725, %v4721
        %v4978 = vpack.c.b16 %v4730, %v4726
        %v4979 = vpack.c.b16 %v4731, %v4727
        %v4980 = vpack.c.b16 %v4732, %v4728
        %v4981 = vpack.c.b16 %v4733, %v4729
        %v4982 = vpack.c.b16 %v4738, %v4734
        %v4983 = vpack.c.b16 %v4739, %v4735
        %v4984 = vpack.c.b16 %v4740, %v4736
        %v4985 = vpack.c.b16 %v4741, %v4737
        %v4986 = vpack.c.b16 %v4746, %v4742
        %v4987 = vpack.c.b16 %v4747, %v4743
        %v4988 = vpack.c.b16 %v4748, %v4744
        %v4989 = vpack.c.b16 %v4749, %v4745
        %v4990 = vpack.c.b16 %v4754, %v4750
        %v4991 = vpack.c.b16 %v4755, %v4751
        %v4992 = vpack.c.b16 %v4756, %v4752
        %v4993 = vpack.c.b16 %v4757, %v4753
        %v4994 = vpack.c.b16 %v4762, %v4758
        %v4995 = vpack.c.b16 %v4763, %v4759
        %v4996 = vpack.c.b16 %v4764, %v4760
        %v4997 = vpack.c.b16 %v4765, %v4761
        %v4998 = vpack.c.b16 %v4770, %v4766
        %v4999 = vpack.c.b16 %v4771, %v4767
        %v5000 = vpack.c.b16 %v4772, %v4768
        %v5001 = vpack.c.b16 %v4773, %v4769
        %v5002 = vpack.c.b16 %v4778, %v4774
        %v5003 = vpack.c.b16 %v4779, %v4775
        %v5004 = vpack.c.b16 %v4780, %v4776
        %v5005 = vpack.c.b16 %v4781, %v4777
        %v5006 = vpack.c.b16 %v4786, %v4782
        %v5007 = vpack.c.b16 %v4787, %v4783
        %v5008 = vpack.c.b16 %v4788, %v4784
        %v5009 = vpack.c.b16 %v4789, %v4785
        %v5010 = vpack.c.b16 %v4794, %v4790
        %v5011 = vpack.c.b16 %v4795, %v4791
        %v5012 = vpack.c.b16 %v4796, %v4792
        %v5013 = vpack.c.b16 %v4797, %v4793
        %v5014 = vpack.c.b16 %v4802, %v4798
        %v5015 = vpack.c.b16 %v4803, %v4799
        %v5016 = vpack.c.b16 %v4804, %v4800
        %v5017 = vpack.c.b16 %v4805, %v4801
        %v5018 = vpack.c.b16 %v4810, %v4806
        %v5019 = vpack.c.b16 %v4811, %v4807
        %v5020 = vpack.c.b16 %v4812, %v4808
        %v5021 = vpack.c.b16 %v4813, %v4809
        %v5022 = vpack.c.b16 %v4818, %v4814
        %v5023 = vpack.c.b16 %v4819, %v4815
        %v5024 = vpack.c.b16 %v4820, %v4816
        %v5025 = vpack.c.b16 %v4821, %v4817
        %v5026 = vpack.c.b16 %v4826, %v4822
        %v5027 = vpack.c.b16 %v4827, %v4823
        %v5028 = vpack.c.b16 %v4828, %v4824
        %v5029 = vpack.c.b16 %v4829, %v4825
        %v5030 = vpack.c.b16 %v4834, %v4830
        %v5031 = vpack.c.b16 %v4835, %v4831
        %v5032 = vpack.c.b16 %v4836, %v4832
        %v5033 = vpack.c.b16 %v4837, %v4833
        %v5034 = vpack.c.b16 %v4842, %v4838
        %v5035 = vpack.c.b16 %v4843, %v4839
        %v5036 = vpack.c.b16 %v4844, %v4840
        %v5037 = vpack.c.b16 %v4845, %v4841
        %v5038 = vpack.c.b16 %v4850, %v4846
        %v5039 = vpack.c.b16 %v4851, %v4847
        %v5040 = vpack.c.b16 %v4852, %v4848
        %v5041 = vpack.c.b16 %v4853, %v4849
        %v5042 = vpack.c.b16 %v4858, %v4854
        %v5043 = vpack.c.b16 %v4859, %v4855
        %v5044 = vpack.c.b16 %v4860, %v4856
        %v5045 = vpack.c.b16 %v4861, %v4857
        %v5046 = vpack.c.b16 %v4866, %v4862
        %v5047 = vpack.c.b16 %v4867, %v4863
        %v5048 = vpack.c.b16 %v4868, %v4864
        %v5049 = vpack.c.b16 %v4869, %v4865
        %v5050 = vpack.c.b16 %v4874, %v4870
        %v5051 = vpack.c.b16 %v4875, %v4871
        %v5052 = vpack.c.b16 %v4876, %v4872
        %v5053 = vpack.c.b16 %v4877, %v4873
        %v5054 = vpack.c.b16 %v4882, %v4878
        %v5055 = vpack.c.b16 %v4883, %v4879
        %v5056 = vpack.c.b16 %v4884, %v4880
        %v5057 = vpack.c.b16 %v4885, %v4881
        %v5058 = vpack.c.b16 %v4890, %v4886
        %v5059 = vpack.c.b16 %v4891, %v4887
        %v5060 = vpack.c.b16 %v4892, %v4888
        %v5061 = vpack.c.b16 %v4893, %v4889
        %v5062 = vpack.c.b16 %v4898, %v4894
        %v5063 = vpack.c.b16 %v4899, %v4895
        %v5064 = vpack.c.b16 %v4900, %v4896
        %v5065 = vpack.c.b16 %v4901, %v4897
        %v5066 = vpack.c.b16 %v4906, %v4902
        %v5067 = vpack.c.b16 %v4907, %v4903
        %v5068 = vpack.c.b16 %v4908, %v4904
        %v5069 = vpack.c.b16 %v4909, %v4905
        %v5070 = vpack.c.b16 %v4914, %v4910
        %v5071 = vpack.c.b16 %v4915, %v4911
        %v5072 = vpack.c.b16 %v4916, %v4912
        %v5073 = vpack.c.b16 %v4917, %v4913
        %v5074 = vpack.c.b16 %v4922, %v4918
        %v5075 = vpack.c.b16 %v4923, %v4919
        %v5076 = vpack.c.b16 %v4924, %v4920
        %v5077 = vpack.c.b16 %v4925, %v4921
        %v5078 = vpack.c.b16 %v4930, %v4926
        %v5079 = vpack.c.b16 %v4931, %v4927
        %v5080 = vpack.c.b16 %v4932, %v4928
        %v5081 = vpack.c.b16 %v4933, %v4929
        %v5082 = vpack.c.b16 %v4938, %v4934
        %v5083 = vpack.c.b16 %v4939, %v4935
        %v5084 = vpack.c.b16 %v4940, %v4936
        %v5085 = vpack.c.b16 %v4941, %v4937
        %v5086 = vpack.c.b16 %v4946, %v4942
        %v5087 = vpack.c.b16 %v4947, %v4943
        %v5088 = vpack.c.b16 %v4948, %v4944
        %v5089 = vpack.c.b16 %v4949, %v4945
        %v5090 = vpack.c.b16 %v4954, %v4950
        %v5091 = vpack.c.b16 %v4955, %v4951
        %v5092 = vpack.c.b16 %v4956, %v4952
        %v5093 = vpack.c.b16 %v4957, %v4953
        %v5094 = vpack.c.b16 %v4962, %v4958
        %v5095 = vpack.c.b16 %v4963, %v4959
        %v5096 = vpack.c.b16 %v4964, %v4960
        %v5097 = vpack.c.b16 %v4965, %v4961
        %v5098 = vpack.c.b16 %v4970, %v4966
        %v5099 = vpack.c.b16 %v4971, %v4967
        %v5100 = vpack.c.b16 %v4972, %v4968
        %v5101 = vpack.c.b16 %v4973, %v4969
        %5230 = vmatprep.subr.bf16.mxu0 %v4975
        %5231 = vmatpush1.bf16.msra.mxu0 %v4974
        %5232 = vmatprep.subr.bf16.mxu0 %v4979
        %5233 = vmatpush1.bf16.msra.mxu0 %v4978
        %5234 = vmatprep.subr.bf16.mxu0 %v4983
        %5235 = vmatpush1.bf16.msra.mxu0 %v4982
        %5236 = vmatprep.subr.bf16.mxu0 %v4987
        %5237 = vmatpush1.bf16.msra.mxu0 %v4986
        %5238 = vmatprep.subr.bf16.mxu0 %v4991
        %5239 = vmatpush1.bf16.msra.mxu0 %v4990
        %5240 = vmatprep.subr.bf16.mxu0 %v4995
        %5241 = vmatpush1.bf16.msra.mxu0 %v4994
        %5242 = vmatprep.subr.bf16.mxu0 %v4999
        %5243 = vmatpush1.bf16.msra.mxu0 %v4998
        %5244 = vmatprep.subr.bf16.mxu0 %v5003
        %5245 = vmatpush1.bf16.msra.mxu0 %v5002
        %5246 = vmatprep.subr.bf16.mxu0 %v5007
        %5247 = vmatpush1.bf16.msra.mxu0 %v5006
        %5248 = vmatprep.subr.bf16.mxu0 %v5011
        %5249 = vmatpush1.bf16.msra.mxu0 %v5010
        %5250 = vmatprep.subr.bf16.mxu0 %v5015
        %5251 = vmatpush1.bf16.msra.mxu0 %v5014
        %5252 = vmatprep.subr.bf16.mxu0 %v5019
        %5253 = vmatpush1.bf16.msra.mxu0 %v5018
        %5254 = vmatprep.subr.bf16.mxu0 %v5023
        %5255 = vmatpush1.bf16.msra.mxu0 %v5022
        %5256 = vmatprep.subr.bf16.mxu0 %v5027
        %5257 = vmatpush1.bf16.msra.mxu0 %v5026
        %5258 = vmatprep.subr.bf16.mxu0 %v5031
        %5259 = vmatpush1.bf16.msra.mxu0 %v5030
        %5260 = vmatprep.subr.bf16.mxu0 %v5035
        %5261 = vmatpush1.bf16.msra.mxu0 %v5034
        %5262 = vmatprep.mubr.bf16.mxu0 %v4437
        %5263 = vmatmul.mubr.bf16.gmra.mrb[0].mxu0 %v4436
        %v5264 = vpop.f32.mrb[0].mxu0
        %v5265 = vadd.f32 %v4573, %v5264
        %v5266 = vpop.f32.mrb[0].mxu0
        %v5267 = vadd.f32 %v4577, %v5266
        %v5268 = vpop.f32.mrb[0].mxu0
        %v5269 = vadd.f32 %v4573, %v5268
        %v5270 = vpop.f32.mrb[0].mxu0
        %v5271 = vadd.f32 %v4577, %v5270
        %5272 = vdwg.mxu0
        %5273 = vmatprep.subr.bf16.mxu0 %v5039
        %5274 = vmatpush1.bf16.msra.mxu0 %v5038
        %5275 = vmatprep.subr.bf16.mxu0 %v5043
        %5276 = vmatpush1.bf16.msra.mxu0 %v5042
        %5277 = vmatprep.subr.bf16.mxu0 %v5047
        %5278 = vmatpush1.bf16.msra.mxu0 %v5046
        %5279 = vmatprep.subr.bf16.mxu0 %v5051
        %5280 = vmatpush1.bf16.msra.mxu0 %v5050
        %5281 = vmatprep.subr.bf16.mxu0 %v5055
        %5282 = vmatpush1.bf16.msra.mxu0 %v5054
        %5283 = vmatprep.subr.bf16.mxu0 %v5059
        %5284 = vmatpush1.bf16.msra.mxu0 %v5058
        %5285 = vmatprep.subr.bf16.mxu0 %v5063
        %5286 = vmatpush1.bf16.msra.mxu0 %v5062
        %5287 = vmatprep.subr.bf16.mxu0 %v5067
        %5288 = vmatpush1.bf16.msra.mxu0 %v5066
        %5289 = vmatprep.subr.bf16.mxu0 %v5071
        %5290 = vmatpush1.bf16.msra.mxu0 %v5070
        %5291 = vmatprep.subr.bf16.mxu0 %v5075
        %5292 = vmatpush1.bf16.msra.mxu0 %v5074
        %5293 = vmatprep.subr.bf16.mxu0 %v5079
        %5294 = vmatpush1.bf16.msra.mxu0 %v5078
        %5295 = vmatprep.subr.bf16.mxu0 %v5083
        %5296 = vmatpush1.bf16.msra.mxu0 %v5082
        %5297 = vmatprep.subr.bf16.mxu0 %v5087
        %5298 = vmatpush1.bf16.msra.mxu0 %v5086
        %5299 = vmatprep.subr.bf16.mxu0 %v5091
        %5300 = vmatpush1.bf16.msra.mxu0 %v5090
        %5301 = vmatprep.subr.bf16.mxu0 %v5095
        %5302 = vmatpush1.bf16.msra.mxu0 %v5094
        %5303 = vmatprep.subr.bf16.mxu0 %v5099
        %5304 = vmatpush1.bf16.msra.mxu0 %v5098
        %5305 = vmatprep.mubr.bf16.mxu0 %v4439
        %5306 = vmatmul.mubr.bf16.gmra.mrb[0].mxu0 %v4438
        %v5307 = vpop.f32.mrb[0].mxu0
        %v5308 = vadd.f32 %v5265, %v5307
        %v5309 = vpop.f32.mrb[0].mxu0
        %v5310 = vadd.f32 %v5267, %v5309
        %v5311 = vpop.f32.mrb[0].mxu0
        %v5312 = vadd.f32 %v5269, %v5311
        %v5313 = vpop.f32.mrb[0].mxu0
        %v5314 = vadd.f32 %v5271, %v5313
        %5315 = vdwg.mxu0
        %5316 = vmatprep.subr.bf16.mxu0 %v4977
        %5317 = vmatpush1.bf16.msra.mxu0 %v4976
        %5318 = vmatprep.subr.bf16.mxu0 %v4981
        %5319 = vmatpush1.bf16.msra.mxu0 %v4980
        %5320 = vmatprep.subr.bf16.mxu0 %v4985
        %5321 = vmatpush1.bf16.msra.mxu0 %v4984
        %5322 = vmatprep.subr.bf16.mxu0 %v4989
        %5323 = vmatpush1.bf16.msra.mxu0 %v4988
        %5324 = vmatprep.subr.bf16.mxu0 %v4993
        %5325 = vmatpush1.bf16.msra.mxu0 %v4992
        %5326 = vmatprep.subr.bf16.mxu0 %v4997
        %5327 = vmatpush1.bf16.msra.mxu0 %v4996
        %5328 = vmatprep.subr.bf16.mxu0 %v5001
        %5329 = vmatpush1.bf16.msra.mxu0 %v5000
        %5330 = vmatprep.subr.bf16.mxu0 %v5005
        %5331 = vmatpush1.bf16.msra.mxu0 %v5004
        %5332 = vmatprep.subr.bf16.mxu0 %v5009
        %5333 = vmatpush1.bf16.msra.mxu0 %v5008
        %5334 = vmatprep.subr.bf16.mxu0 %v5013
        %5335 = vmatpush1.bf16.msra.mxu0 %v5012
        %5336 = vmatprep.subr.bf16.mxu0 %v5017
        %5337 = vmatpush1.bf16.msra.mxu0 %v5016
        %5338 = vmatprep.subr.bf16.mxu0 %v5021
        %5339 = vmatpush1.bf16.msra.mxu0 %v5020
        %5340 = vmatprep.subr.bf16.mxu0 %v5025
        %5341 = vmatpush1.bf16.msra.mxu0 %v5024
        %5342 = vmatprep.subr.bf16.mxu0 %v5029
        %5343 = vmatpush1.bf16.msra.mxu0 %v5028
        %5344 = vmatprep.subr.bf16.mxu0 %v5033
        %5345 = vmatpush1.bf16.msra.mxu0 %v5032
        %5346 = vmatprep.subr.bf16.mxu0 %v5037
        %5347 = vmatpush1.bf16.msra.mxu0 %v5036
        %5348 = vmatprep.mubr.bf16.mxu0 %v4437
        %5349 = vmatmul.mubr.bf16.gmra.mrb[0].mxu0 %v4436
        %v5350 = vpop.f32.mrb[0].mxu0
        %v5351 = vadd.f32 %v4581, %v5350
        %v5352 = vpop.f32.mrb[0].mxu0
        %v5353 = vadd.f32 %v4585, %v5352
        %v5354 = vpop.f32.mrb[0].mxu0
        %v5355 = vadd.f32 %v4581, %v5354
        %v5356 = vpop.f32.mrb[0].mxu0
        %v5357 = vadd.f32 %v4585, %v5356
        %5358 = vdwg.mxu0
        %5359 = vmatprep.subr.bf16.mxu0 %v5041
        %5360 = vmatpush1.bf16.msra.mxu0 %v5040
        %5361 = vmatprep.subr.bf16.mxu0 %v5045
        %5362 = vmatpush1.bf16.msra.mxu0 %v5044
        %5363 = vmatprep.subr.bf16.mxu0 %v5049
        %5364 = vmatpush1.bf16.msra.mxu0 %v5048
        %5365 = vmatprep.subr.bf16.mxu0 %v5053
        %5366 = vmatpush1.bf16.msra.mxu0 %v5052
        %5367 = vmatprep.subr.bf16.mxu0 %v5057
        %5368 = vmatpush1.bf16.msra.mxu0 %v5056
        %5369 = vmatprep.subr.bf16.mxu0 %v5061
        %5370 = vmatpush1.bf16.msra.mxu0 %v5060
        %5371 = vmatprep.subr.bf16.mxu0 %v5065
        %5372 = vmatpush1.bf16.msra.mxu0 %v5064
        %5373 = vmatprep.subr.bf16.mxu0 %v5069
        %5374 = vmatpush1.bf16.msra.mxu0 %v5068
        %5375 = vmatprep.subr.bf16.mxu0 %v5073
        %5376 = vmatpush1.bf16.msra.mxu0 %v5072
        %5377 = vmatprep.subr.bf16.mxu0 %v5077
        %5378 = vmatpush1.bf16.msra.mxu0 %v5076
        %5379 = vmatprep.subr.bf16.mxu0 %v5081
        %5380 = vmatpush1.bf16.msra.mxu0 %v5080
        %5381 = vmatprep.subr.bf16.mxu0 %v5085
        %5382 = vmatpush1.bf16.msra.mxu0 %v5084
        %5383 = vmatprep.subr.bf16.mxu0 %v5089
        %5384 = vmatpush1.bf16.msra.mxu0 %v5088
        %5385 = vmatprep.subr.bf16.mxu0 %v5093
        %5386 = vmatpush1.bf16.msra.mxu0 %v5092
        %5387 = vmatprep.subr.bf16.mxu0 %v5097
        %5388 = vmatpush1.bf16.msra.mxu0 %v5096
        %5389 = vmatprep.subr.bf16.mxu0 %v5101
        %5390 = vmatpush1.bf16.msra.mxu0 %v5100
        %5391 = vmatprep.mubr.bf16.mxu0 %v4439
        %5392 = vmatmul.mubr.bf16.gmra.mrb[0].mxu0 %v4438
        %v5393 = vpop.f32.mrb[0].mxu0
        %v5394 = vadd.f32 %v5351, %v5393
        %v5395 = vpop.f32.mrb[0].mxu0
        %v5396 = vadd.f32 %v5353, %v5395
        %v5397 = vpop.f32.mrb[0].mxu0
        %v5398 = vadd.f32 %v5355, %v5397
        %v5399 = vpop.f32.mrb[0].mxu0
        %v5400 = vadd.f32 %v5357, %v5399
        %5401 = vdwg.mxu0
        %vm5402 = vcmp.ge.f32.partialorder %v5308, 0.0
        %vm5403 = vcmp.ge.f32.partialorder %v5310, 0.0
        %vm5404 = vcmp.ge.f32.partialorder %v5394, 0.0
        %vm5405 = vcmp.ge.f32.partialorder %v5396, 0.0
        %vm5406 = vcmp.ge.f32.partialorder %v5312, 0.0
        %vm5407 = vcmp.ge.f32.partialorder %v5314, 0.0
        %vm5408 = vcmp.ge.f32.partialorder %v5398, 0.0
        %vm5409 = vcmp.ge.f32.partialorder %v5400, 0.0
        %v5410 = vmul.f32 %v5308, 0.01
        %v5411 = vmul.f32 %v5310, 0.01
        %v5412 = vmul.f32 %v5394, 0.01
        %v5413 = vmul.f32 %v5396, 0.01
        %v5414 = vmul.f32 %v5312, 0.01
        %v5415 = vmul.f32 %v5314, 0.01
        %v5416 = vmul.f32 %v5398, 0.01
        %v5417 = vmul.f32 %v5400, 0.01
        %v5418 = vsel %vm5402, %v5308, %v5410
        %v5419 = vsel %vm5403, %v5310, %v5411
        %v5420 = vsel %vm5404, %v5394, %v5412
        %v5421 = vsel %vm5405, %v5396, %v5413
        %v5422 = vsel %vm5406, %v5312, %v5414
        %v5423 = vsel %vm5407, %v5314, %v5415
        %v5424 = vsel %vm5408, %v5398, %v5416
        %v5425 = vsel %vm5409, %v5400, %v5417
        %v5426 = vpack.c.bf16 %v5422, %v5418
        %v5427 = vpack.c.bf16 %v5423, %v5419
        %v5428 = vpack.c.bf16 %v5424, %v5420
        %v5429 = vpack.c.bf16 %v5425, %v5421
        %v5430 = vld [vmem:[#allocation11] sm:$0xf]
        %v5431 = vld [vmem:[#allocation11 + $0x4] sm:$0xf]
        %v5432 = vld [vmem:[#allocation11 + $0x8] sm:$0xf]
        %v5433 = vld [vmem:[#allocation11 + $0xc] sm:$0xf]
        %v5434 = vld [vmem:[#allocation11 + $0x10] sm:$0xf]
        %v5435 = vld [vmem:[#allocation11 + $0x14] sm:$0xf]
        %v5436 = vld [vmem:[#allocation11 + $0x18] sm:$0xf]
        %v5437 = vld [vmem:[#allocation11 + $0x1c] sm:$0xf]
        %v5438 = vld [vmem:[#allocation11 + $0x20] sm:$0xf]
        %v5439 = vld [vmem:[#allocation11 + $0x24] sm:$0xf]
        %v5440 = vld [vmem:[#allocation11 + $0x28] sm:$0xf]
        %v5441 = vld [vmem:[#allocation11 + $0x2c] sm:$0xf]
        %v5442 = vld [vmem:[#allocation11 + $0x30] sm:$0xf]
        %v5443 = vld [vmem:[#allocation11 + $0x34] sm:$0xf]
        %v5444 = vld [vmem:[#allocation11 + $0x38] sm:$0xf]
        %v5445 = vld [vmem:[#allocation11 + $0x3c] sm:$0xf]
        %v5446 = vld [vmem:[#allocation11 + $0x40] sm:$0xf]
        %v5447 = vld [vmem:[#allocation11 + $0x44] sm:$0xf]
        %v5448 = vld [vmem:[#allocation11 + $0x48] sm:$0xf]
        %v5449 = vld [vmem:[#allocation11 + $0x4c] sm:$0xf]
        %v5450 = vld [vmem:[#allocation11 + $0x50] sm:$0xf]
        %v5451 = vld [vmem:[#allocation11 + $0x54] sm:$0xf]
        %v5452 = vld [vmem:[#allocation11 + $0x58] sm:$0xf]
        %v5453 = vld [vmem:[#allocation11 + $0x5c] sm:$0xf]
        %v5454 = vld [vmem:[#allocation11 + $0x60] sm:$0xf]
        %v5455 = vld [vmem:[#allocation11 + $0x64] sm:$0xf]
        %v5456 = vld [vmem:[#allocation11 + $0x68] sm:$0xf]
        %v5457 = vld [vmem:[#allocation11 + $0x6c] sm:$0xf]
        %v5458 = vld [vmem:[#allocation11 + $0x70] sm:$0xf]
        %v5459 = vld [vmem:[#allocation11 + $0x74] sm:$0xf]
        %v5460 = vld [vmem:[#allocation11 + $0x78] sm:$0xf]
        %v5461 = vld [vmem:[#allocation11 + $0x7c] sm:$0xf]
        %v5462 = vld [vmem:[#allocation11 + $0x80] sm:$0xf]
        %v5463 = vld [vmem:[#allocation11 + $0x84] sm:$0xf]
        %v5464 = vld [vmem:[#allocation11 + $0x88] sm:$0xf]
        %v5465 = vld [vmem:[#allocation11 + $0x8c] sm:$0xf]
        %v5466 = vld [vmem:[#allocation11 + $0x90] sm:$0xf]
        %v5467 = vld [vmem:[#allocation11 + $0x94] sm:$0xf]
        %v5468 = vld [vmem:[#allocation11 + $0x98] sm:$0xf]
        %v5469 = vld [vmem:[#allocation11 + $0x9c] sm:$0xf]
        %v5470 = vld [vmem:[#allocation11 + $0xa0] sm:$0xf]
        %v5471 = vld [vmem:[#allocation11 + $0xa4] sm:$0xf]
        %v5472 = vld [vmem:[#allocation11 + $0xa8] sm:$0xf]
        %v5473 = vld [vmem:[#allocation11 + $0xac] sm:$0xf]
        %v5474 = vld [vmem:[#allocation11 + $0xb0] sm:$0xf]
        %v5475 = vld [vmem:[#allocation11 + $0xb4] sm:$0xf]
        %v5476 = vld [vmem:[#allocation11 + $0xb8] sm:$0xf]
        %v5477 = vld [vmem:[#allocation11 + $0xbc] sm:$0xf]
        %v5478 = vld [vmem:[#allocation11 + $0xc0] sm:$0xf]
        %v5479 = vld [vmem:[#allocation11 + $0xc4] sm:$0xf]
        %v5480 = vld [vmem:[#allocation11 + $0xc8] sm:$0xf]
        %v5481 = vld [vmem:[#allocation11 + $0xcc] sm:$0xf]
        %v5482 = vld [vmem:[#allocation11 + $0xd0] sm:$0xf]
        %v5483 = vld [vmem:[#allocation11 + $0xd4] sm:$0xf]
        %v5484 = vld [vmem:[#allocation11 + $0xd8] sm:$0xf]
        %v5485 = vld [vmem:[#allocation11 + $0xdc] sm:$0xf]
        %v5486 = vld [vmem:[#allocation11 + $0xe0] sm:$0xf]
        %v5487 = vld [vmem:[#allocation11 + $0xe4] sm:$0xf]
        %v5488 = vld [vmem:[#allocation11 + $0xe8] sm:$0xf]
        %v5489 = vld [vmem:[#allocation11 + $0xec] sm:$0xf]
        %v5490 = vld [vmem:[#allocation11 + $0xf0] sm:$0xf]
        %v5491 = vld [vmem:[#allocation11 + $0xf4] sm:$0xf]
        %v5492 = vld [vmem:[#allocation11 + $0xf8] sm:$0xf]
        %v5493 = vld [vmem:[#allocation11 + $0xfc] sm:$0xf]
        %v5494 = vld [vmem:[%s10] sm:$0x1]
        %v5496 = vlaneseq
        %v5497 = vshrl.u32 %v5496, 7
        %v5498 = vsub.s32 0, %v5497
        %v5499 = vrot.slane %v5494, %v5498
        %v5565 = vunpack.c.l.b16 %v5430
        %v5566 = vunpack.c.l.b16 %v5431
        %v5567 = vunpack.c.l.b16 %v5432
        %v5568 = vunpack.c.l.b16 %v5433
        %v5569 = vunpack.c.l.b16 %v5434
        %v5570 = vunpack.c.l.b16 %v5435
        %v5571 = vunpack.c.l.b16 %v5436
        %v5572 = vunpack.c.l.b16 %v5437
        %v5573 = vunpack.c.l.b16 %v5438
        %v5574 = vunpack.c.l.b16 %v5439
        %v5575 = vunpack.c.l.b16 %v5440
        %v5576 = vunpack.c.l.b16 %v5441
        %v5577 = vunpack.c.l.b16 %v5442
        %v5578 = vunpack.c.l.b16 %v5443
        %v5579 = vunpack.c.l.b16 %v5444
        %v5580 = vunpack.c.l.b16 %v5445
        %v5581 = vunpack.c.l.b16 %v5446
        %v5582 = vunpack.c.l.b16 %v5447
        %v5583 = vunpack.c.l.b16 %v5448
        %v5584 = vunpack.c.l.b16 %v5449
        %v5585 = vunpack.c.l.b16 %v5450
        %v5586 = vunpack.c.l.b16 %v5451
        %v5587 = vunpack.c.l.b16 %v5452
        %v5588 = vunpack.c.l.b16 %v5453
        %v5589 = vunpack.c.l.b16 %v5454
        %v5590 = vunpack.c.l.b16 %v5455
        %v5591 = vunpack.c.l.b16 %v5456
        %v5592 = vunpack.c.l.b16 %v5457
        %v5593 = vunpack.c.l.b16 %v5458
        %v5594 = vunpack.c.l.b16 %v5459
        %v5595 = vunpack.c.l.b16 %v5460
        %v5596 = vunpack.c.l.b16 %v5461
        %v5597 = vunpack.c.l.b16 %v5462
        %v5598 = vunpack.c.l.b16 %v5463
        %v5599 = vunpack.c.l.b16 %v5464
        %v5600 = vunpack.c.l.b16 %v5465
        %v5601 = vunpack.c.l.b16 %v5466
        %v5602 = vunpack.c.l.b16 %v5467
        %v5603 = vunpack.c.l.b16 %v5468
        %v5604 = vunpack.c.l.b16 %v5469
        %v5605 = vunpack.c.l.b16 %v5470
        %v5606 = vunpack.c.l.b16 %v5471
        %v5607 = vunpack.c.l.b16 %v5472
        %v5608 = vunpack.c.l.b16 %v5473
        %v5609 = vunpack.c.l.b16 %v5474
        %v5610 = vunpack.c.l.b16 %v5475
        %v5611 = vunpack.c.l.b16 %v5476
        %v5612 = vunpack.c.l.b16 %v5477
        %v5613 = vunpack.c.l.b16 %v5478
        %v5614 = vunpack.c.l.b16 %v5479
        %v5615 = vunpack.c.l.b16 %v5480
        %v5616 = vunpack.c.l.b16 %v5481
        %v5617 = vunpack.c.l.b16 %v5482
        %v5618 = vunpack.c.l.b16 %v5483
        %v5619 = vunpack.c.l.b16 %v5484
        %v5620 = vunpack.c.l.b16 %v5485
        %v5621 = vunpack.c.l.b16 %v5486
        %v5622 = vunpack.c.l.b16 %v5487
        %v5623 = vunpack.c.l.b16 %v5488
        %v5624 = vunpack.c.l.b16 %v5489
        %v5625 = vunpack.c.l.b16 %v5490
        %v5626 = vunpack.c.l.b16 %v5491
        %v5627 = vunpack.c.l.b16 %v5492
        %v5628 = vunpack.c.l.b16 %v5493
        %v5629 = vpack.c.b16 %v5566, %v5565
        %v5630 = vpack.c.b16 %v5568, %v5567
        %v5631 = vpack.c.b16 %v5570, %v5569
        %v5632 = vpack.c.b16 %v5572, %v5571
        %v5633 = vpack.c.b16 %v5574, %v5573
        %v5634 = vpack.c.b16 %v5576, %v5575
        %v5635 = vpack.c.b16 %v5578, %v5577
        %v5636 = vpack.c.b16 %v5580, %v5579
        %v5637 = vpack.c.b16 %v5582, %v5581
        %v5638 = vpack.c.b16 %v5584, %v5583
        %v5639 = vpack.c.b16 %v5586, %v5585
        %v5640 = vpack.c.b16 %v5588, %v5587
        %v5641 = vpack.c.b16 %v5590, %v5589
        %v5642 = vpack.c.b16 %v5592, %v5591
        %v5643 = vpack.c.b16 %v5594, %v5593
        %v5644 = vpack.c.b16 %v5596, %v5595
        %v5645 = vpack.c.b16 %v5598, %v5597
        %v5646 = vpack.c.b16 %v5600, %v5599
        %v5647 = vpack.c.b16 %v5602, %v5601
        %v5648 = vpack.c.b16 %v5604, %v5603
        %v5649 = vpack.c.b16 %v5606, %v5605
        %v5650 = vpack.c.b16 %v5608, %v5607
        %v5651 = vpack.c.b16 %v5610, %v5609
        %v5652 = vpack.c.b16 %v5612, %v5611
        %v5653 = vpack.c.b16 %v5614, %v5613
        %v5654 = vpack.c.b16 %v5616, %v5615
        %v5655 = vpack.c.b16 %v5618, %v5617
        %v5656 = vpack.c.b16 %v5620, %v5619
        %v5657 = vpack.c.b16 %v5622, %v5621
        %v5658 = vpack.c.b16 %v5624, %v5623
        %v5659 = vpack.c.b16 %v5626, %v5625
        %v5660 = vpack.c.b16 %v5628, %v5627
        %5693 = vmatprep.subr.bf16.mxu0 0
        %5694 = vmatpush1.bf16.msra.mxu0 %v5629
        %5695 = vmatprep.subr.bf16.mxu0 0
        %5696 = vmatpush1.bf16.msra.mxu0 %v5630
        %5697 = vmatprep.subr.bf16.mxu0 0
        %5698 = vmatpush1.bf16.msra.mxu0 %v5631
        %5699 = vmatprep.subr.bf16.mxu0 0
        %5700 = vmatpush1.bf16.msra.mxu0 %v5632
        %5701 = vmatprep.subr.bf16.mxu0 0
        %5702 = vmatpush1.bf16.msra.mxu0 %v5633
        %5703 = vmatprep.subr.bf16.mxu0 0
        %5704 = vmatpush1.bf16.msra.mxu0 %v5634
        %5705 = vmatprep.subr.bf16.mxu0 0
        %5706 = vmatpush1.bf16.msra.mxu0 %v5635
        %5707 = vmatprep.subr.bf16.mxu0 0
        %5708 = vmatpush1.bf16.msra.mxu0 %v5636
        %5709 = vmatprep.subr.bf16.mxu0 0
        %5710 = vmatpush1.bf16.msra.mxu0 %v5637
        %5711 = vmatprep.subr.bf16.mxu0 0
        %5712 = vmatpush1.bf16.msra.mxu0 %v5638
        %5713 = vmatprep.subr.bf16.mxu0 0
        %5714 = vmatpush1.bf16.msra.mxu0 %v5639
        %5715 = vmatprep.subr.bf16.mxu0 0
        %5716 = vmatpush1.bf16.msra.mxu0 %v5640
        %5717 = vmatprep.subr.bf16.mxu0 0
        %5718 = vmatpush1.bf16.msra.mxu0 %v5641
        %5719 = vmatprep.subr.bf16.mxu0 0
        %5720 = vmatpush1.bf16.msra.mxu0 %v5642
        %5721 = vmatprep.subr.bf16.mxu0 0
        %5722 = vmatpush1.bf16.msra.mxu0 %v5643
        %5723 = vmatprep.subr.bf16.mxu0 0
        %5724 = vmatpush1.bf16.msra.mxu0 %v5644
        %5725 = vmatprep.mubr.bf16.mxu0 %v5427
        %5726 = vmatmul.mubr.bf16.gmra.mrb[0].mxu0 %v5426
        %v5727 = vpop.f32.mrb[0].mxu0
        %v5728 = vadd.f32 %v5499, %v5727
        %v5729 = vpop.f32.mrb[0].mxu0
        %v5730 = vpop.f32.mrb[0].mxu0
        %v5731 = vadd.f32 %v5499, %v5730
        %v5732 = vpop.f32.mrb[0].mxu0
        %5733 = vdwg.mxu0
        %5734 = vmatprep.subr.bf16.mxu0 0
        %5735 = vmatpush1.bf16.msra.mxu0 %v5645
        %5736 = vmatprep.subr.bf16.mxu0 0
        %5737 = vmatpush1.bf16.msra.mxu0 %v5646
        %5738 = vmatprep.subr.bf16.mxu0 0
        %5739 = vmatpush1.bf16.msra.mxu0 %v5647
        %5740 = vmatprep.subr.bf16.mxu0 0
        %5741 = vmatpush1.bf16.msra.mxu0 %v5648
        %5742 = vmatprep.subr.bf16.mxu0 0
        %5743 = vmatpush1.bf16.msra.mxu0 %v5649
        %5744 = vmatprep.subr.bf16.mxu0 0
        %5745 = vmatpush1.bf16.msra.mxu0 %v5650
        %5746 = vmatprep.subr.bf16.mxu0 0
        %5747 = vmatpush1.bf16.msra.mxu0 %v5651
        %5748 = vmatprep.subr.bf16.mxu0 0
        %5749 = vmatpush1.bf16.msra.mxu0 %v5652
        %5750 = vmatprep.subr.bf16.mxu0 0
        %5751 = vmatpush1.bf16.msra.mxu0 %v5653
        %5752 = vmatprep.subr.bf16.mxu0 0
        %5753 = vmatpush1.bf16.msra.mxu0 %v5654
        %5754 = vmatprep.subr.bf16.mxu0 0
        %5755 = vmatpush1.bf16.msra.mxu0 %v5655
        %5756 = vmatprep.subr.bf16.mxu0 0
        %5757 = vmatpush1.bf16.msra.mxu0 %v5656
        %5758 = vmatprep.subr.bf16.mxu0 0
        %5759 = vmatpush1.bf16.msra.mxu0 %v5657
        %5760 = vmatprep.subr.bf16.mxu0 0
        %5761 = vmatpush1.bf16.msra.mxu0 %v5658
        %5762 = vmatprep.subr.bf16.mxu0 0
        %5763 = vmatpush1.bf16.msra.mxu0 %v5659
        %5764 = vmatprep.subr.bf16.mxu0 0
        %5765 = vmatpush1.bf16.msra.mxu0 %v5660
        %5766 = vmatprep.mubr.bf16.mxu0 %v5429
        %5767 = vmatmul.mubr.bf16.gmra.mrb[0].mxu0 %v5428
        %v5768 = vpop.f32.mrb[0].mxu0
        %v5769 = vadd.f32 %v5728, %v5768
        %v5770 = vpop.f32.mrb[0].mxu0
        %v5771 = vpop.f32.mrb[0].mxu0
        %v5772 = vadd.f32 %v5731, %v5771
        %v5773 = vpop.f32.mrb[0].mxu0
        %5774 = vdwg.mxu0
        %v5775 = vpack.c.bf16 %v5772, %v5769
        %v5777 = vunpack.c.l.b16 %v5775
        %v5778 = vunpack.c.h.b16 %v5775
        %v5779 = vpack.c.b16 %v5777, %v5777
        %v5780 = vpack.c.b16 %v5778, %v5778
        %5783 = vst [vmem:[%s478] sm:$0xf] %v5779
        %5784 = vst [vmem:[%s478 + $0x4] sm:$0xf] %v5780
        %s5785 = sand.u32 %s275, 1
        %s5786 = scalar_lea.sflag [#allocation4], %s5785
        %s5787 = sand.u32 %s275, 1
        %s5788 = smul.addr %s5787, 8
        %s5789 = scalar_lea.vmem [#allocation13], %s5788
        // Predicated region
        $region89: #{tpu_custom_call.1} parent=63 // pred_check
          %p5790 = pneg %p285
        $region90: #{tpu_custom_call.1} parent=63 // pred_check_branch
          %5792 = sbr.rel (%p5790) target = $region92
        $region91: #{tpu_custom_call.1} parent=63 // pred_region
          %s5793 = smul.u32 2, %s31
          %s5795 = ssub.s32 128, 128
          %5796 = vsyncadd %s5786, %s5795
          %s5797 = smul.addr %s5793, 64
          %s5798 = scalar_lea.hbm %s11, %s5797
          %s5799 = sshll.u32 %s5789, 4
          %s5800 = int_to_ptr.vmem [resolvable:$true] %s5799
          %5805 = dma.vmem_to_hbm [thread:$0]  %s5800, 128, %s5798, %s5786, 64, 64, 4
        $region92: #{tpu_custom_call.1} parent=63 // pred_fallthru
          _
      $region64: #{tpu_custom_call.1} parent=5 // pred_fallthru
        _
      %p5806 = scmp.le.s32.totalorder 2, %s26
      // Predicated region
      $region93: #{tpu_custom_call.1} parent=5 // pred_check
        %p5807 = pneg %p5806
      $region94: #{tpu_custom_call.1} parent=5 // pred_check_branch
        %5809 = sbr.rel (%p5807) target = $region96
      $region95: #{tpu_custom_call.1} parent=5 // pred_region
        %s5810 = ssub.s32 %s26, 2
        // Predicated region
        $region97: #{tpu_custom_call.1} parent=95 // pred_check
          %p5811 = pneg %p291
        $region98: #{tpu_custom_call.1} parent=95 // pred_check_branch
          %5813 = sbr.rel (%p5811) target = $region100
        $region99: #{tpu_custom_call.1} parent=95 // pred_region
          %s5814 = sand.u32 %s276, 1
          %s5815 = scalar_lea.sflag [#allocation4], %s5814
          %s5816 = sand.u32 %s276, 1
          %s5817 = smul.addr %s5816, 8
          %s5818 = scalar_lea.vmem [#allocation13], %s5817
          %5819 = dma.done %s5815, 128
        $region100: #{tpu_custom_call.1} parent=95 // pred_fallthru
          _
      $region96: #{tpu_custom_call.1} parent=5 // pred_fallthru
        _
    $region6: #{tpu_custom_call.1} parent=1 // loop_footer
      %s30 = sadd.s32 1, %s26
    $region7: #{tpu_custom_call.1} parent=1 // loop_footer_branch
      %25 = sbr.rel target = $region3
    $region8: #{tpu_custom_call.1} parent=1 // loop_exit
      _
    %5820 = vsyncpa [#allocation3], 1
    %s5821 = scalar_lea.sflag [#allocation3], 1
    %5822 = vsyncpa %s5821, 1
    %5823 = vsyncpa [#allocation6], 1
    %5824 = vsyncpa [#allocation9], 1
    %5825 = vsyncpa [#allocation12], 1
    %5826 = vsyncpa [#allocation4], 1
    %s5827 = scalar_lea.sflag [#allocation4], 1
    %5828 = vsyncpa %s5827, 1

// kernel: tpu_custom_call.1
$region0: #{tpu_custom_call.1}
  #allocation0 [shape = 'u32[]', space=smem, size = 0x4, offset = 0x4, fixed_abs, tag = 'smem constant byte address 0x4 - core index']
  #allocation1 [shape = 'u32[144,128]{1,0:T(1,128)}', space=vmem, size = 0x12000, scoped, tag = 'internal scratch']
  %s0 = inlined_call_operand.hbm [shape: bf16[32,1024], index: 0, kind: input, shape index: {}]
  %s1 = inlined_call_operand.hbm [shape: bf16[1024,512], index: 1, kind: input, shape index: {}]
  %s2 = inlined_call_operand.vmem [shape: f32[1,512], index: 2, kind: input, shape index: {}]
  %s3 = inlined_call_operand.hbm [shape: bf16[512,512], index: 3, kind: input, shape index: {}]
  %s4 = inlined_call_operand.vmem [shape: f32[1,512], index: 4, kind: input, shape index: {}]
  %s5 = inlined_call_operand.hbm [shape: bf16[512,512], index: 5, kind: input, shape index: {}]
  %s6 = inlined_call_operand.vmem [shape: f32[1,512], index: 6, kind: input, shape index: {}]
  %s7 = inlined_call_operand.hbm [shape: bf16[512,512], index: 7, kind: input, shape index: {}]
  %s8 = inlined_call_operand.vmem [shape: f32[1,512], index: 8, kind: input, shape index: {}]
  %s9 = inlined_call_operand.hbm [shape: bf16[512,128], index: 9, kind: input, shape index: {}]
  %s10 = inlined_call_operand.vmem [shape: f32[1,128], index: 10, kind: input, shape index: {}]
  %s11 = inlined_call_operand.hbm [shape: bf16[32,128], index: 11, kind: output, shape index: {}]
  %s12 = sld [smem:[#allocation0]]
  $region101: #{tpu_custom_call.1} parent=0
    _
  %s14 = ssub.s32 1, %s12
  %s15 = scalar_select 0, %s14, %s12
  $region1: #{tpu_custom_call.1} parent=0
    #allocation2 [shape = 'u8[65536]{0}', space=vmem, size = 0x10000, scoped, tag = 'input window, operand 0']
    #allocation3 [shape = 's32[2]{0}', space=sflag, size = 0x8, scoped, tag = 'scoped memory for tpu_custom_call.1']
    #allocation4 [shape = 's32[2]{0}', space=sflag, size = 0x8, scoped, tag = 'scoped memory for tpu_custom_call.1']
    #allocation5 [shape = 'u8[1048576]{0}', space=vmem, size = 0x100000, scoped, tag = 'input window, operand 1, single buffered']
    #allocation6 [shape = 's32[1]{0}', space=sflag, size = 0x4, scoped, tag = 'scoped memory for tpu_custom_call.1']
    #allocation7 [shape = 'u8[524288]{0}', space=vmem, size = 0x80000, scoped, tag = 'input window, operand 3, single buffered']
    #allocation8 [shape = 'u8[524288]{0}', space=vmem, size = 0x80000, scoped, tag = 'input window, operand 5, single buffered']
    #allocation9 [shape = 's32[1]{0}', space=sflag, size = 0x4, scoped, tag = 'scoped memory for tpu_custom_call.1']
    #allocation10 [shape = 'u8[524288]{0}', space=vmem, size = 0x80000, scoped, tag = 'input window, operand 7, single buffered']
    #allocation11 [shape = 'u8[131072]{0}', space=vmem, size = 0x20000, scoped, tag = 'input window, operand 9, single buffered']
    #allocation12 [shape = 's32[1]{0}', space=sflag, size = 0x4, scoped, tag = 'scoped memory for tpu_custom_call.1']
    #allocation13 [shape = 'u8[8192]{0}', space=vmem, size = 0x2000, scoped, tag = 'output window, operand 0']
    %16 = vsyncpa [#allocation3], 0
    %s17 = scalar_lea.sflag [#allocation3], 1
    %18 = vsyncpa %s17, 0
    %19 = vsyncpa [#allocation6], 0
    %20 = vsyncpa [#allocation9], 0
    %21 = vsyncpa [#allocation12], 0
    %22 = vsyncpa [#allocation4], 0
    %s23 = scalar_lea.sflag [#allocation4], 1
    %24 = vsyncpa %s23, 0
    loop: start=0, step=1, limit=4
    $region2: #{tpu_custom_call.1} parent=1 // loop_pre_header
      _
    $region3: #{tpu_custom_call.1} parent=1 // loop_header
      %s26 = sphi 0, %s30
      %p27 = scmp.ge.s32.totalorder %s26, 4
      %s36 = sphi 0, %s38
      %s39 = sphi 0, %s36
      %s40 = sphi 0, %s39
      %s56 = sphi 0, %s40
      %s60 = sphi 0, %s60
      %s62 = sphi 0, %s60
      %s63 = sphi 0, %s62
      %s77 = sphi 0, %s63
      %s81 = sphi 0, %s81
      %s83 = sphi 0, %s81
      %s84 = sphi 0, %s83
      %s98 = sphi 0, %s84
      %s102 = sphi 0, %s102
      %s104 = sphi 0, %s102
      %s105 = sphi 0, %s104
      %s119 = sphi 0, %s105
      %s123 = sphi 0, %s123
      %s125 = sphi 0, %s123
      %s126 = sphi 0, %s125
      %s140 = sphi 0, %s126
      %s144 = sphi 0, %s144
      %s146 = sphi 0, %s144
      %s147 = sphi 0, %s146
      %s161 = sphi 0, %s147
      %s165 = sphi 0, %s165
      %s167 = sphi 0, %s165
      %s168 = sphi 0, %s167
      %s182 = sphi 0, %s168
      %s186 = sphi 0, %s186
      %s188 = sphi 0, %s186
      %s189 = sphi 0, %s188
      %s203 = sphi 0, %s189
      %s207 = sphi 0, %s207
      %s209 = sphi 0, %s207
      %s210 = sphi 0, %s209
      %s224 = sphi 0, %s210
      %s228 = sphi 0, %s228
      %s230 = sphi 0, %s228
      %s231 = sphi 0, %s230
      %s245 = sphi 0, %s231
      %s249 = sphi 0, %s249
      %s251 = sphi 0, %s249
      %s252 = sphi 0, %s251
      %s266 = sphi 0, %s252
      %s272 = sphi 0, %s274
      %s275 = sphi 0, %s272
      %s276 = sphi 0, %s275
      %s292 = sphi 0, %s276
    $region4: #{tpu_custom_call.1} parent=1 // loop_header_branch
      %29 = sbr.rel (%p27) target = $region8
    $region5: #{tpu_custom_call.1} parent=1 // loop_body
      %s31 = ssub.s32 %s26, 1
      %s32 = ssub.s32 %s26, 2
      %s33 = sadd.s32 %s26, 1
      %s34 = ssub.s32 %s26, %s33
      %p35 = scmp.eq.s32.totalorder %s34, 0
      %s37 = sadd.s32 %s36, 1
      %s38 = scalar_select %p35, %s36, %s37
      %p41 = pneg %p35
      %p42 = scmp.eq.s32.totalorder %s26, 1
      %p43 = por %p41, %p42
      %p44 = scmp.ne.s32.totalorder %s36, %s39
      %p45 = scmp.eq.s32.totalorder %s26, 0
      %p46 = por %p44, %p45
      %p47 = scmp.ne.s32.totalorder %s36, %s39
      %p48 = scmp.eq.s32.totalorder %s31, 1
      %p49 = por %p47, %p48
      %p50 = scmp.ne.s32.totalorder %s39, %s40
      %p51 = scmp.eq.s32.totalorder %s31, 0
      %p52 = por %p50, %p51
      %p53 = scmp.ne.s32.totalorder %s39, %s40
      %p54 = scmp.eq.s32.totalorder %s32, 1
      %p55 = por %p53, %p54
      %p57 = scmp.ne.s32.totalorder %s40, %s56
      %p58 = scmp.eq.s32.totalorder %s32, 0
      %p59 = por %p57, %p58
      %s61 = sadd.s32 %s60, 1
      %p64 = scmp.eq.s32.totalorder %s26, 1
      %p65 = scmp.ne.s32.totalorder %s60, %s62
      %p66 = scmp.eq.s32.totalorder %s26, 0
      %p67 = por %p65, %p66
      %p68 = scmp.ne.s32.totalorder %s60, %s62
      %p69 = scmp.eq.s32.totalorder %s31, 1
      %p70 = por %p68, %p69
      %p71 = scmp.ne.s32.totalorder %s62, %s63
      %p72 = scmp.eq.s32.totalorder %s31, 0
      %p73 = por %p71, %p72
      %p74 = scmp.ne.s32.totalorder %s62, %s63
      %p75 = scmp.eq.s32.totalorder %s32, 1
      %p76 = por %p74, %p75
      %p78 = scmp.ne.s32.totalorder %s63, %s77
      %p79 = scmp.eq.s32.totalorder %s32, 0
      %p80 = por %p78, %p79
      %s82 = sadd.s32 %s81, 1
      %p85 = scmp.eq.s32.totalorder %s26, 1
      %p86 = scmp.ne.s32.totalorder %s81, %s83
      %p87 = scmp.eq.s32.totalorder %s26, 0
      %p88 = por %p86, %p87
      %p89 = scmp.ne.s32.totalorder %s81, %s83
      %p90 = scmp.eq.s32.totalorder %s31, 1
      %p91 = por %p89, %p90
      %p92 = scmp.ne.s32.totalorder %s83, %s84
      %p93 = scmp.eq.s32.totalorder %s31, 0
      %p94 = por %p92, %p93
      %p95 = scmp.ne.s32.totalorder %s83, %s84
      %p96 = scmp.eq.s32.totalorder %s32, 1
      %p97 = por %p95, %p96
      %p99 = scmp.ne.s32.totalorder %s84, %s98
      %p100 = scmp.eq.s32.totalorder %s32, 0
      %p101 = por %p99, %p100
      %s103 = sadd.s32 %s102, 1
      %p106 = scmp.eq.s32.totalorder %s26, 1
      %p107 = scmp.ne.s32.totalorder %s102, %s104
      %p108 = scmp.eq.s32.totalorder %s26, 0
      %p109 = por %p107, %p108
      %p110 = scmp.ne.s32.totalorder %s102, %s104
      %p111 = scmp.eq.s32.totalorder %s31, 1
      %p112 = por %p110, %p111
      %p113 = scmp.ne.s32.totalorder %s104, %s105
      %p114 = scmp.eq.s32.totalorder %s31, 0
      %p115 = por %p113, %p114
      %p116 = scmp.ne.s32.totalorder %s104, %s105
      %p117 = scmp.eq.s32.totalorder %s32, 1
      %p118 = por %p116, %p117
      %p120 = scmp.ne.s32.totalorder %s105, %s119
      %p121 = scmp.eq.s32.totalorder %s32, 0
      %p122 = por %p120, %p121
      %s124 = sadd.s32 %s123, 1
      %p127 = scmp.eq.s32.totalorder %s26, 1
      %p128 = scmp.ne.s32.totalorder %s123, %s125
      %p129 = scmp.eq.s32.totalorder %s26, 0
      %p130 = por %p128, %p129
      %p131 = scmp.ne.s32.totalorder %s123, %s125
      %p132 = scmp.eq.s32.totalorder %s31, 1
      %p133 = por %p131, %p132
      %p134 = scmp.ne.s32.totalorder %s125, %s126
      %p135 = scmp.eq.s32.totalorder %s31, 0
      %p136 = por %p134, %p135
      %p137 = scmp.ne.s32.totalorder %s125, %s126
      %p138 = scmp.eq.s32.totalorder %s32, 1
      %p139 = por %p137, %p138
      %p141 = scmp.ne.s32.totalorder %s126, %s140
      %p142 = scmp.eq.s32.totalorder %s32, 0
      %p143 = por %p141, %p142
      %s145 = sadd.s32 %s144, 1
      %p148 = scmp.eq.s32.totalorder %s26, 1
      %p149 = scmp.ne.s32.totalorder %s144, %s146
      %p150 = scmp.eq.s32.totalorder %s26, 0
      %p151 = por %p149, %p150
      %p152 = scmp.ne.s32.totalorder %s144, %s146
      %p153 = scmp.eq.s32.totalorder %s31, 1
      %p154 = por %p152, %p153
      %p155 = scmp.ne.s32.totalorder %s146, %s147
      %p156 = scmp.eq.s32.totalorder %s31, 0
      %p157 = por %p155, %p156
      %p158 = scmp.ne.s32.totalorder %s146, %s147
      %p159 = scmp.eq.s32.totalorder %s32, 1
      %p160 = por %p158, %p159
      %p162 = scmp.ne.s32.totalorder %s147, %s161
      %p163 = scmp.eq.s32.totalorder %s32, 0
      %p164 = por %p162, %p163
      %s166 = sadd.s32 %s165, 1
      %p169 = scmp.eq.s32.totalorder %s26, 1
      %p170 = scmp.ne.s32.totalorder %s165, %s167
      %p171 = scmp.eq.s32.totalorder %s26, 0
      %p172 = por %p170, %p171
      %p173 = scmp.ne.s32.totalorder %s165, %s167
      %p174 = scmp.eq.s32.totalorder %s31, 1
      %p175 = por %p173, %p174
      %p176 = scmp.ne.s32.totalorder %s167, %s168
      %p177 = scmp.eq.s32.totalorder %s31, 0
      %p178 = por %p176, %p177
      %p179 = scmp.ne.s32.totalorder %s167, %s168
      %p180 = scmp.eq.s32.totalorder %s32, 1
      %p181 = por %p179, %p180
      %p183 = scmp.ne.s32.totalorder %s168, %s182
      %p184 = scmp.eq.s32.totalorder %s32, 0
      %p185 = por %p183, %p184
      %s187 = sadd.s32 %s186, 1
      %p190 = scmp.eq.s32.totalorder %s26, 1
      %p191 = scmp.ne.s32.totalorder %s186, %s188
      %p192 = scmp.eq.s32.totalorder %s26, 0
      %p193 = por %p191, %p192
      %p194 = scmp.ne.s32.totalorder %s186, %s188
      %p195 = scmp.eq.s32.totalorder %s31, 1
      %p196 = por %p194, %p195
      %p197 = scmp.ne.s32.totalorder %s188, %s189
      %p198 = scmp.eq.s32.totalorder %s31, 0
      %p199 = por %p197, %p198
      %p200 = scmp.ne.s32.totalorder %s188, %s189
      %p201 = scmp.eq.s32.totalorder %s32, 1
      %p202 = por %p200, %p201
      %p204 = scmp.ne.s32.totalorder %s189, %s203
      %p205 = scmp.eq.s32.totalorder %s32, 0
      %p206 = por %p204, %p205
      %s208 = sadd.s32 %s207, 1
      %p211 = scmp.eq.s32.totalorder %s26, 1
      %p212 = scmp.ne.s32.totalorder %s207, %s209
      %p213 = scmp.eq.s32.totalorder %s26, 0
      %p214 = por %p212, %p213
      %p215 = scmp.ne.s32.totalorder %s207, %s209
      %p216 = scmp.eq.s32.totalorder %s31, 1
      %p217 = por %p215, %p216
      %p218 = scmp.ne.s32.totalorder %s209, %s210
      %p219 = scmp.eq.s32.totalorder %s31, 0
      %p220 = por %p218, %p219
      %p221 = scmp.ne.s32.totalorder %s209, %s210
      %p222 = scmp.eq.s32.totalorder %s32, 1
      %p223 = por %p221, %p222
      %p225 = scmp.ne.s32.totalorder %s210, %s224
      %p226 = scmp.eq.s32.totalorder %s32, 0
      %p227 = por %p225, %p226
      %s229 = sadd.s32 %s228, 1
      %p232 = scmp.eq.s32.totalorder %s26, 1
      %p233 = scmp.ne.s32.totalorder %s228, %s230
      %p234 = scmp.eq.s32.totalorder %s26, 0
      %p235 = por %p233, %p234
      %p236 = scmp.ne.s32.totalorder %s228, %s230
      %p237 = scmp.eq.s32.totalorder %s31, 1
      %p238 = por %p236, %p237
      %p239 = scmp.ne.s32.totalorder %s230, %s231
      %p240 = scmp.eq.s32.totalorder %s31, 0
      %p241 = por %p239, %p240
      %p242 = scmp.ne.s32.totalorder %s230, %s231
      %p243 = scmp.eq.s32.totalorder %s32, 1
      %p244 = por %p242, %p243
      %p246 = scmp.ne.s32.totalorder %s231, %s245
      %p247 = scmp.eq.s32.totalorder %s32, 0
      %p248 = por %p246, %p247
      %s250 = sadd.s32 %s249, 1
      %p253 = scmp.eq.s32.totalorder %s26, 1
      %p254 = scmp.ne.s32.totalorder %s249, %s251
      %p255 = scmp.eq.s32.totalorder %s26, 0
      %p256 = por %p254, %p255
      %p257 = scmp.ne.s32.totalorder %s249, %s251
      %p258 = scmp.eq.s32.totalorder %s31, 1
      %p259 = por %p257, %p258
      %p260 = scmp.ne.s32.totalorder %s251, %s252
      %p261 = scmp.eq.s32.totalorder %s31, 0
      %p262 = por %p260, %p261
      %p263 = scmp.ne.s32.totalorder %s251, %s252
      %p264 = scmp.eq.s32.totalorder %s32, 1
      %p265 = por %p263, %p264
      %p267 = scmp.ne.s32.totalorder %s252, %s266
      %p268 = scmp.eq.s32.totalorder %s32, 0
      %p269 = por %p267, %p268
      %s270 = ssub.s32 %s26, %s33
      %p271 = scmp.eq.s32.totalorder %s270, 0
      %s273 = sadd.s32 %s272, 1
      %s274 = scalar_select %p271, %s272, %s273
      %p277 = pneg %p271
      %p278 = scmp.eq.s32.totalorder %s26, 1
      %p279 = por %p277, %p278
      %p280 = scmp.ne.s32.totalorder %s272, %s275
      %p281 = scmp.eq.s32.totalorder %s26, 0
      %p282 = por %p280, %p281
      %p283 = scmp.ne.s32.totalorder %s272, %s275
      %p284 = scmp.eq.s32.totalorder %s31, 1
      %p285 = por %p283, %p284
      %p286 = scmp.ne.s32.totalorder %s275, %s276
      %p287 = scmp.eq.s32.totalorder %s31, 0
      %p288 = por %p286, %p287
      %p289 = scmp.ne.s32.totalorder %s275, %s276
      %p290 = scmp.eq.s32.totalorder %s32, 1
      %p291 = por %p289, %p290
      %p293 = scmp.ne.s32.totalorder %s276, %s292
      %p294 = scmp.eq.s32.totalorder %s32, 0
      %p295 = por %p293, %p294
      %p296 = scmp.le.s32.totalorder 1, %s26
      %p297 = scmp.lt.s32.totalorder %s26, 3
      %p298 = pnand %p296, %p297
      %p299 = pneg %p298
      // Predicated region
      $region9: #{tpu_custom_call.1} parent=5 // pred_check
        _
      $region10: #{tpu_custom_call.1} parent=5 // pred_check_branch
        %301 = sbr.rel (%p298) target = $region12
      $region11: #{tpu_custom_call.1} parent=5 // pred_region
        %s302 = ssub.s32 %s26, 1
        // Predicated region
        $region13: #{tpu_custom_call.1} parent=11 // pred_check
          %p303 = pneg %p73
        $region14: #{tpu_custom_call.1} parent=11 // pred_check_branch
          %305 = sbr.rel (%p303) target = $region16
        $region15: #{tpu_custom_call.1} parent=11 // pred_region
          %s307 = ssub.s32 32768, 32768
          %308 = vsyncadd [#allocation6], %s307
          %s309 = sshll.u32 [#allocation5], 4
          %s310 = int_to_ptr.vmem [resolvable:$true] %s309
          %315 = dma.hbm_to_vmem [thread:$0]  %s1, 32768, %s310, [#allocation6], 256, 256, 16
        $region16: #{tpu_custom_call.1} parent=11 // pred_fallthru
          _
        // Predicated region
        $region17: #{tpu_custom_call.1} parent=11 // pred_check
          %p316 = pneg %p94
        $region18: #{tpu_custom_call.1} parent=11 // pred_check_branch
          %318 = sbr.rel (%p316) target = $region20
        $region19: #{tpu_custom_call.1} parent=11 // pred_region
          _
        $region20: #{tpu_custom_call.1} parent=11 // pred_fallthru
          _
        // Predicated region
        $region21: #{tpu_custom_call.1} parent=11 // pred_check
          %p319 = pneg %p115
        $region22: #{tpu_custom_call.1} parent=11 // pred_check_branch
          %321 = sbr.rel (%p319) target = $region24
        $region23: #{tpu_custom_call.1} parent=11 // pred_region
          %s323 = ssub.s32 16384, 16384
          %324 = vsyncadd [#allocation6], %s323
          %s325 = sshll.u32 [#allocation7], 4
          %s326 = int_to_ptr.vmem [resolvable:$true] %s325
          %331 = dma.hbm_to_vmem [thread:$0]  %s3, 16384, %s326, [#allocation6], 256, 256, 16
        $region24: #{tpu_custom_call.1} parent=11 // pred_fallthru
          _
        // Predicated region
        $region25: #{tpu_custom_call.1} parent=11 // pred_check
          %p332 = pneg %p136
        $region26: #{tpu_custom_call.1} parent=11 // pred_check_branch
          %334 = sbr.rel (%p332) target = $region28
        $region27: #{tpu_custom_call.1} parent=11 // pred_region
          _
        $region28: #{tpu_custom_call.1} parent=11 // pred_fallthru
          _
        // Predicated region
        $region29: #{tpu_custom_call.1} parent=11 // pred_check
          %p335 = pneg %p157
        $region30: #{tpu_custom_call.1} parent=11 // pred_check_branch
          %337 = sbr.rel (%p335) target = $region32
        $region31: #{tpu_custom_call.1} parent=11 // pred_region
          %s339 = ssub.s32 16384, 16384
          %340 = vsyncadd [#allocation9], %s339
          %s341 = sshll.u32 [#allocation8], 4
          %s342 = int_to_ptr.vmem [resolvable:$true] %s341
          %347 = dma.hbm_to_vmem [thread:$0]  %s5, 16384, %s342, [#allocation9], 256, 256, 16
        $region32: #{tpu_custom_call.1} parent=11 // pred_fallthru
          _
        // Predicated region
        $region33: #{tpu_custom_call.1} parent=11 // pred_check
          %p348 = pneg %p178
        $region34: #{tpu_custom_call.1} parent=11 // pred_check_branch
          %350 = sbr.rel (%p348) target = $region36
        $region35: #{tpu_custom_call.1} parent=11 // pred_region
          _
        $region36: #{tpu_custom_call.1} parent=11 // pred_fallthru
          _
        // Predicated region
        $region37: #{tpu_custom_call.1} parent=11 // pred_check
          %p351 = pneg %p199
        $region38: #{tpu_custom_call.1} parent=11 // pred_check_branch
          %353 = sbr.rel (%p351) target = $region40
        $region39: #{tpu_custom_call.1} parent=11 // pred_region
          %s355 = ssub.s32 16384, 16384
          %356 = vsyncadd [#allocation9], %s355
          %s357 = sshll.u32 [#allocation10], 4
          %s358 = int_to_ptr.vmem [resolvable:$true] %s357
          %363 = dma.hbm_to_vmem [thread:$0]  %s7, 16384, %s358, [#allocation9], 256, 256, 16
        $region40: #{tpu_custom_call.1} parent=11 // pred_fallthru
          _
        // Predicated region
        $region41: #{tpu_custom_call.1} parent=11 // pred_check
          %p364 = pneg %p220
        $region42: #{tpu_custom_call.1} parent=11 // pred_check_branch
          %366 = sbr.rel (%p364) target = $region44
        $region43: #{tpu_custom_call.1} parent=11 // pred_region
          _
        $region44: #{tpu_custom_call.1} parent=11 // pred_fallthru
          _
        // Predicated region
        $region45: #{tpu_custom_call.1} parent=11 // pred_check
          %p367 = pneg %p241
        $region46: #{tpu_custom_call.1} parent=11 // pred_check_branch
          %369 = sbr.rel (%p367) target = $region48
        $region47: #{tpu_custom_call.1} parent=11 // pred_region
          %s371 = ssub.s32 4096, 4096
          %372 = vsyncadd [#allocation12], %s371
          %s373 = sshll.u32 [#allocation11], 4
          %s374 = int_to_ptr.vmem [resolvable:$true] %s373
          %379 = dma.hbm_to_vmem [thread:$0]  %s9, 4096, %s374, [#allocation12], 64, 64, 4
        $region48: #{tpu_custom_call.1} parent=11 // pred_fallthru
          _
        // Predicated region
        $region49: #{tpu_custom_call.1} parent=11 // pred_check
          %p380 = pneg %p262
        $region50: #{tpu_custom_call.1} parent=11 // pred_check_branch
          %382 = sbr.rel (%p380) target = $region52
        $region51: #{tpu_custom_call.1} parent=11 // pred_region
          _
        $region52: #{tpu_custom_call.1} parent=11 // pred_fallthru
          _
      $region12: #{tpu_custom_call.1} parent=5 // pred_fallthru
        _
      %p383 = scmp.lt.s32.totalorder %s26, 2
      // Predicated region
      $region53: #{tpu_custom_call.1} parent=5 // pred_check
        %p384 = pneg %p383
      $region54: #{tpu_custom_call.1} parent=5 // pred_check_branch
        %386 = sbr.rel (%p384) target = $region56
      $region55: #{tpu_custom_call.1} parent=5 // pred_region
        // Predicated region
        $region57: #{tpu_custom_call.1} parent=55 // pred_check
          %p387 = pneg %p46
        $region58: #{tpu_custom_call.1} parent=55 // pred_check_branch
          %389 = sbr.rel (%p387) target = $region60
        $region59: #{tpu_custom_call.1} parent=55 // pred_region
          %s390 = sand.u32 %s36, 1
          %s391 = scalar_lea.sflag [#allocation3], %s390
          %s392 = sand.u32 %s36, 1
          %s393 = smul.addr %s392, 64
          %s394 = scalar_lea.vmem [#allocation2], %s393
          %s395 = smul.u32 2, %s26
          %s397 = ssub.s32 1024, 1024
          %398 = vsyncadd %s391, %s397
          %s399 = smul.addr %s395, 8
          %s400 = smul.addr %s399, 64
          %s401 = scalar_lea.hbm %s0, %s400
          %s402 = sshll.u32 %s394, 4
          %s403 = int_to_ptr.vmem [resolvable:$true] %s402
          %408 = dma.hbm_to_vmem [thread:$0]  %s401, 1024, %s403, %s391, 512, 512, 32
        $region60: #{tpu_custom_call.1} parent=55 // pred_fallthru
          _
      $region56: #{tpu_custom_call.1} parent=5 // pred_fallthru
        _
      %p409 = scmp.le.s32.totalorder 1, %s26
      %p410 = scmp.lt.s32.totalorder %s26, 3
      %p411 = pnand %p409, %p410
      %p412 = pneg %p411
      // Predicated region
      $region61: #{tpu_custom_call.1} parent=5 // pred_check
        _
      $region62: #{tpu_custom_call.1} parent=5 // pred_check_branch
        %414 = sbr.rel (%p411) target = $region64
      $region63: #{tpu_custom_call.1} parent=5 // pred_region
        %s415 = ssub.s32 %s26, 1
        %s416 = sand.u32 %s39, 1
        %s417 = scalar_lea.sflag [#allocation3], %s416
        %s418 = sand.u32 %s39, 1
        %s419 = smul.addr %s418, 64
        %s420 = scalar_lea.vmem [#allocation2], %s419
        // Predicated region
        $region65: #{tpu_custom_call.1} parent=63 // pred_check
          %p421 = pneg %p52
        $region66: #{tpu_custom_call.1} parent=63 // pred_check_branch
          %423 = sbr.rel (%p421) target = $region68
        $region67: #{tpu_custom_call.1} parent=63 // pred_region
          %424 = dma.done %s417, 1024
        $region68: #{tpu_custom_call.1} parent=63 // pred_fallthru
          _
        // Predicated region
        $region69: #{tpu_custom_call.1} parent=63 // pred_check
          %p425 = pneg %p73
        $region70: #{tpu_custom_call.1} parent=63 // pred_check_branch
          %427 = sbr.rel (%p425) target = $region72
        $region71: #{tpu_custom_call.1} parent=63 // pred_region
          %428 = dma.done [#allocation6], 32768
        $region72: #{tpu_custom_call.1} parent=63 // pred_fallthru
          _
        // Predicated region
        $region73: #{tpu_custom_call.1} parent=63 // pred_check
          %p429 = pneg %p115
        $region74: #{tpu_custom_call.1} parent=63 // pred_check_branch
          %431 = sbr.rel (%p429) target = $region76
        $region75: #{tpu_custom_call.1} parent=63 // pred_region
          %432 = dma.done [#allocation6], 16384
        $region76: #{tpu_custom_call.1} parent=63 // pred_fallthru
          _
        // Predicated region
        $region77: #{tpu_custom_call.1} parent=63 // pred_check
          %p433 = pneg %p157
        $region78: #{tpu_custom_call.1} parent=63 // pred_check_branch
          %435 = sbr.rel (%p433) target = $region80
        $region79: #{tpu_custom_call.1} parent=63 // pred_region
          %436 = dma.done [#allocation9], 16384
        $region80: #{tpu_custom_call.1} parent=63 // pred_fallthru
          _
        // Predicated region
        $region81: #{tpu_custom_call.1} parent=63 // pred_check
          %p437 = pneg %p199
        $region82: #{tpu_custom_call.1} parent=63 // pred_check_branch
          %439 = sbr.rel (%p437) target = $region84
        $region83: #{tpu_custom_call.1} parent=63 // pred_region
          %440 = dma.done [#allocation9], 16384
        $region84: #{tpu_custom_call.1} parent=63 // pred_fallthru
          _
        // Predicated region
        $region85: #{tpu_custom_call.1} parent=63 // pred_check
          %p441 = pneg %p241
        $region86: #{tpu_custom_call.1} parent=63 // pred_check_branch
          %443 = sbr.rel (%p441) target = $region88
        $region87: #{tpu_custom_call.1} parent=63 // pred_region
          %444 = dma.done [#allocation12], 4096
        $region88: #{tpu_custom_call.1} parent=63 // pred_fallthru
          _
        %s445 = sand.u32 %s39, 1
        %s446 = scalar_lea.sflag [#allocation3], %s445
        %s447 = sand.u32 %s39, 1
        %s448 = smul.addr %s447, 64
        %s449 = scalar_lea.vmem [#allocation2], %s448
        %p450 = pneg %p52
        %p451 = pneg %p49
        %p452 = pneg %p73
        %p453 = pneg %p70
        %p454 = pneg %p94
        %p455 = pneg %p91
        %p456 = pneg %p115
        %p457 = pneg %p112
        %p458 = pneg %p136
        %p459 = pneg %p133
        %p460 = pneg %p157
        %p461 = pneg %p154
        %p462 = pneg %p178
        %p463 = pneg %p175
        %p464 = pneg %p199
        %p465 = pneg %p196
        %p466 = pneg %p220
        %p467 = pneg %p217
        %p468 = pneg %p241
        %p469 = pneg %p238
        %p470 = pneg %p262
        %p471 = pneg %p259
        %p472 = pneg %p288
        %p473 = pneg %p285
        %s474 = sand.u32 %s275, 1
        %s475 = scalar_lea.sflag [#allocation4], %s474
        %s476 = sand.u32 %s275, 1
        %s477 = smul.addr %s476, 8
        %s478 = scalar_lea.vmem [#allocation13], %s477
        %s479 = smul.u32 2, %s31
        %s480 = smul.u32 2, %s31
        %v482 = vld [vmem:[%s420] sm:$0xff]
        %v483 = vld [vmem:[%s420 + $0x8] sm:$0xff]
        %v484 = vld [vmem:[%s420 + $0x10] sm:$0xff]
        %v485 = vld [vmem:[%s420 + $0x18] sm:$0xff]
        %v486 = vld [vmem:[%s420 + $0x20] sm:$0xff]
        %v487 = vld [vmem:[%s420 + $0x28] sm:$0xff]
        %v488 = vld [vmem:[%s420 + $0x30] sm:$0xff]
        %v489 = vld [vmem:[%s420 + $0x38] sm:$0xff]
        %v490 = vld [vmem:[#allocation5] sm:$0xff]
        %v491 = vld [vmem:[#allocation5 + $0x8] sm:$0xff]
        %v492 = vld [vmem:[#allocation5 + $0x10] sm:$0xff]
        %v493 = vld [vmem:[#allocation5 + $0x18] sm:$0xff]
        %v494 = vld [vmem:[#allocation5 + $0x20] sm:$0xff]
        %v495 = vld [vmem:[#allocation5 + $0x28] sm:$0xff]
        %v496 = vld [vmem:[#allocation5 + $0x30] sm:$0xff]
        %v497 = vld [vmem:[#allocation5 + $0x38] sm:$0xff]
        %v498 = vld [vmem:[#allocation5 + $0x40] sm:$0xff]
        %v499 = vld [vmem:[#allocation5 + $0x48] sm:$0xff]
        %v500 = vld [vmem:[#allocation5 + $0x50] sm:$0xff]
        %v501 = vld [vmem:[#allocation5 + $0x58] sm:$0xff]
        %v502 = vld [vmem:[#allocation5 + $0x60] sm:$0xff]
        %v503 = vld [vmem:[#allocation5 + $0x68] sm:$0xff]
        %v504 = vld [vmem:[#allocation5 + $0x70] sm:$0xff]
        %v505 = vld [vmem:[#allocation5 + $0x78] sm:$0xff]
        %v506 = vld [vmem:[#allocation5 + $0x80] sm:$0xff]
        %v507 = vld [vmem:[#allocation5 + $0x88] sm:$0xff]
        %v508 = vld [vmem:[#allocation5 + $0x90] sm:$0xff]
        %v509 = vld [vmem:[#allocation5 + $0x98] sm:$0xff]
        %v510 = vld [vmem:[#allocation5 + $0xa0] sm:$0xff]
        %v511 = vld [vmem:[#allocation5 + $0xa8] sm:$0xff]
        %v512 = vld [vmem:[#allocation5 + $0xb0] sm:$0xff]
        %v513 = vld [vmem:[#allocation5 + $0xb8] sm:$0xff]
        %v514 = vld [vmem:[#allocation5 + $0xc0] sm:$0xff]
        %v515 = vld [vmem:[#allocation5 + $0xc8] sm:$0xff]
        %v516 = vld [vmem:[#allocation5 + $0xd0] sm:$0xff]
        %v517 = vld [vmem:[#allocation5 + $0xd8] sm:$0xff]
        %v518 = vld [vmem:[#allocation5 + $0xe0] sm:$0xff]
        %v519 = vld [vmem:[#allocation5 + $0xe8] sm:$0xff]
        %v520 = vld [vmem:[#allocation5 + $0xf0] sm:$0xff]
        %v521 = vld [vmem:[#allocation5 + $0xf8] sm:$0xff]
        %v522 = vld [vmem:[#allocation5 + $0x100] sm:$0xff]
        %v523 = vld [vmem:[#allocation5 + $0x108] sm:$0xff]
        %v524 = vld [vmem:[#allocation5 + $0x110] sm:$0xff]
        %v525 = vld [vmem:[#allocation5 + $0x118] sm:$0xff]
        %v526 = vld [vmem:[#allocation5 + $0x120] sm:$0xff]
        %v527 = vld [vmem:[#allocation5 + $0x128] sm:$0xff]
        %v528 = vld [vmem:[#allocation5 + $0x130] sm:$0xff]
        %v529 = vld [vmem:[#allocation5 + $0x138] sm:$0xff]
        %v530 = vld [vmem:[#allocation5 + $0x140] sm:$0xff]
        %v531 = vld [vmem:[#allocation5 + $0x148] sm:$0xff]
        %v532 = vld [vmem:[#allocation5 + $0x150] sm:$0xff]
        %v533 = vld [vmem:[#allocation5 + $0x158] sm:$0xff]
        %v534 = vld [vmem:[#allocation5 + $0x160] sm:$0xff]
        %v535 = vld [vmem:[#allocation5 + $0x168] sm:$0xff]
        %v536 = vld [vmem:[#allocation5 + $0x170] sm:$0xff]
        %v537 = vld [vmem:[#allocation5 + $0x178] sm:$0xff]
        %v538 = vld [vmem:[#allocation5 + $0x180] sm:$0xff]
        %v539 = vld [vmem:[#allocation5 + $0x188] sm:$0xff]
        %v540 = vld [vmem:[#allocation5 + $0x190] sm:$0xff]
        %v541 = vld [vmem:[#allocation5 + $0x198] sm:$0xff]
        %v542 = vld [vmem:[#allocation5 + $0x1a0] sm:$0xff]
        %v543 = vld [vmem:[#allocation5 + $0x1a8] sm:$0xff]
        %v544 = vld [vmem:[#allocation5 + $0x1b0] sm:$0xff]
        %v545 = vld [vmem:[#allocation5 + $0x1b8] sm:$0xff]
        %v546 = vld [vmem:[#allocation5 + $0x1c0] sm:$0xff]
        %v547 = vld [vmem:[#allocation5 + $0x1c8] sm:$0xff]
        %v548 = vld [vmem:[#allocation5 + $0x1d0] sm:$0xff]
        %v549 = vld [vmem:[#allocation5 + $0x1d8] sm:$0xff]
        %v550 = vld [vmem:[#allocation5 + $0x1e0] sm:$0xff]
        %v551 = vld [vmem:[#allocation5 + $0x1e8] sm:$0xff]
        %v552 = vld [vmem:[#allocation5 + $0x1f0] sm:$0xff]
        %v553 = vld [vmem:[#allocation5 + $0x1f8] sm:$0xff]
        %v554 = vld [vmem:[#allocation5 + $0x200] sm:$0xff]
        %v555 = vld [vmem:[#allocation5 + $0x208] sm:$0xff]
        %v556 = vld [vmem:[#allocation5 + $0x210] sm:$0xff]
        %v557 = vld [vmem:[#allocation5 + $0x218] sm:$0xff]
        %v558 = vld [vmem:[#allocation5 + $0x220] sm:$0xff]
        %v559 = vld [vmem:[#allocation5 + $0x228] sm:$0xff]
        %v560 = vld [vmem:[#allocation5 + $0x230] sm:$0xff]
        %v561 = vld [vmem:[#allocation5 + $0x238] sm:$0xff]
        %v562 = vld [vmem:[#allocation5 + $0x240] sm:$0xff]
        %v563 = vld [vmem:[#allocation5 + $0x248] sm:$0xff]
        %v564 = vld [vmem:[#allocation5 + $0x250] sm:$0xff]
        %v565 = vld [vmem:[#allocation5 + $0x258] sm:$0xff]
        %v566 = vld [vmem:[#allocation5 + $0x260] sm:$0xff]
        %v567 = vld [vmem:[#allocation5 + $0x268] sm:$0xff]
        %v568 = vld [vmem:[#allocation5 + $0x270] sm:$0xff]
        %v569 = vld [vmem:[#allocation5 + $0x278] sm:$0xff]
        %v570 = vld [vmem:[#allocation5 + $0x280] sm:$0xff]
        %v571 = vld [vmem:[#allocation5 + $0x288] sm:$0xff]
        %v572 = vld [vmem:[#allocation5 + $0x290] sm:$0xff]
        %v573 = vld [vmem:[#allocation5 + $0x298] sm:$0xff]
        %v574 = vld [vmem:[#allocation5 + $0x2a0] sm:$0xff]
        %v575 = vld [vmem:[#allocation5 + $0x2a8] sm:$0xff]
        %v576 = vld [vmem:[#allocation5 + $0x2b0] sm:$0xff]
        %v577 = vld [vmem:[#allocation5 + $0x2b8] sm:$0xff]
        %v578 = vld [vmem:[#allocation5 + $0x2c0] sm:$0xff]
        %v579 = vld [vmem:[#allocation5 + $0x2c8] sm:$0xff]
        %v580 = vld [vmem:[#allocation5 + $0x2d0] sm:$0xff]
        %v581 = vld [vmem:[#allocation5 + $0x2d8] sm:$0xff]
        %v582 = vld [vmem:[#allocation5 + $0x2e0] sm:$0xff]
        %v583 = vld [vmem:[#allocation5 + $0x2e8] sm:$0xff]
        %v584 = vld [vmem:[#allocation5 + $0x2f0] sm:$0xff]
        %v585 = vld [vmem:[#allocation5 + $0x2f8] sm:$0xff]
        %v586 = vld [vmem:[#allocation5 + $0x300] sm:$0xff]
        %v587 = vld [vmem:[#allocation5 + $0x308] sm:$0xff]
        %v588 = vld [vmem:[#allocation5 + $0x310] sm:$0xff]
        %v589 = vld [vmem:[#allocation5 + $0x318] sm:$0xff]
        %v590 = vld [vmem:[#allocation5 + $0x320] sm:$0xff]
        %v591 = vld [vmem:[#allocation5 + $0x328] sm:$0xff]
        %v592 = vld [vmem:[#allocation5 + $0x330] sm:$0xff]
        %v593 = vld [vmem:[#allocation5 + $0x338] sm:$0xff]
        %v594 = vld [vmem:[#allocation5 + $0x340] sm:$0xff]
        %v595 = vld [vmem:[#allocation5 + $0x348] sm:$0xff]
        %v596 = vld [vmem:[#allocation5 + $0x350] sm:$0xff]
        %v597 = vld [vmem:[#allocation5 + $0x358] sm:$0xff]
        %v598 = vld [vmem:[#allocation5 + $0x360] sm:$0xff]
        %v599 = vld [vmem:[#allocation5 + $0x368] sm:$0xff]
        %v600 = vld [vmem:[#allocation5 + $0x370] sm:$0xff]
        %v601 = vld [vmem:[#allocation5 + $0x378] sm:$0xff]
        %v602 = vld [vmem:[#allocation5 + $0x380] sm:$0xff]
        %v603 = vld [vmem:[#allocation5 + $0x388] sm:$0xff]
        %v604 = vld [vmem:[#allocation5 + $0x390] sm:$0xff]
        %v605 = vld [vmem:[#allocation5 + $0x398] sm:$0xff]
        %v606 = vld [vmem:[#allocation5 + $0x3a0] sm:$0xff]
        %v607 = vld [vmem:[#allocation5 + $0x3a8] sm:$0xff]
        %v608 = vld [vmem:[#allocation5 + $0x3b0] sm:$0xff]
        %v609 = vld [vmem:[#allocation5 + $0x3b8] sm:$0xff]
        %v610 = vld [vmem:[#allocation5 + $0x3c0] sm:$0xff]
        %v611 = vld [vmem:[#allocation5 + $0x3c8] sm:$0xff]
        %v612 = vld [vmem:[#allocation5 + $0x3d0] sm:$0xff]
        %v613 = vld [vmem:[#allocation5 + $0x3d8] sm:$0xff]
        %v614 = vld [vmem:[#allocation5 + $0x3e0] sm:$0xff]
        %v615 = vld [vmem:[#allocation5 + $0x3e8] sm:$0xff]
        %v616 = vld [vmem:[#allocation5 + $0x3f0] sm:$0xff]
        %v617 = vld [vmem:[#allocation5 + $0x3f8] sm:$0xff]
        %v618 = vld [vmem:[#allocation5 + $0x400] sm:$0xff]
        %v619 = vld [vmem:[#allocation5 + $0x408] sm:$0xff]
        %v620 = vld [vmem:[#allocation5 + $0x410] sm:$0xff]
        %v621 = vld [vmem:[#allocation5 + $0x418] sm:$0xff]
        %v622 = vld [vmem:[#allocation5 + $0x420] sm:$0xff]
        %v623 = vld [vmem:[#allocation5 + $0x428] sm:$0xff]
        %v624 = vld [vmem:[#allocation5 + $0x430] sm:$0xff]
        %v625 = vld [vmem:[#allocation5 + $0x438] sm:$0xff]
        %v626 = vld [vmem:[#allocation5 + $0x440] sm:$0xff]
        %v627 = vld [vmem:[#allocation5 + $0x448] sm:$0xff]
        %v628 = vld [vmem:[#allocation5 + $0x450] sm:$0xff]
        %v629 = vld [vmem:[#allocation5 + $0x458] sm:$0xff]
        %v630 = vld [vmem:[#allocation5 + $0x460] sm:$0xff]
        %v631 = vld [vmem:[#allocation5 + $0x468] sm:$0xff]
        %v632 = vld [vmem:[#allocation5 + $0x470] sm:$0xff]
        %v633 = vld [vmem:[#allocation5 + $0x478] sm:$0xff]
        %v634 = vld [vmem:[#allocation5 + $0x480] sm:$0xff]
        %v635 = vld [vmem:[#allocation5 + $0x488] sm:$0xff]
        %v636 = vld [vmem:[#allocation5 + $0x490] sm:$0xff]
        %v637 = vld [vmem:[#allocation5 + $0x498] sm:$0xff]
        %v638 = vld [vmem:[#allocation5 + $0x4a0] sm:$0xff]
        %v639 = vld [vmem:[#allocation5 + $0x4a8] sm:$0xff]
        %v640 = vld [vmem:[#allocation5 + $0x4b0] sm:$0xff]
        %v641 = vld [vmem:[#allocation5 + $0x4b8] sm:$0xff]
        %v642 = vld [vmem:[#allocation5 + $0x4c0] sm:$0xff]
        %v643 = vld [vmem:[#allocation5 + $0x4c8] sm:$0xff]
        %v644 = vld [vmem:[#allocation5 + $0x4d0] sm:$0xff]
        %v645 = vld [vmem:[#allocation5 + $0x4d8] sm:$0xff]
        %v646 = vld [vmem:[#allocation5 + $0x4e0] sm:$0xff]
        %v647 = vld [vmem:[#allocation5 + $0x4e8] sm:$0xff]
        %v648 = vld [vmem:[#allocation5 + $0x4f0] sm:$0xff]
        %v649 = vld [vmem:[#allocation5 + $0x4f8] sm:$0xff]
        %v650 = vld [vmem:[#allocation5 + $0x500] sm:$0xff]
        %v651 = vld [vmem:[#allocation5 + $0x508] sm:$0xff]
        %v652 = vld [vmem:[#allocation5 + $0x510] sm:$0xff]
        %v653 = vld [vmem:[#allocation5 + $0x518] sm:$0xff]
        %v654 = vld [vmem:[#allocation5 + $0x520] sm:$0xff]
        %v655 = vld [vmem:[#allocation5 + $0x528] sm:$0xff]
        %v656 = vld [vmem:[#allocation5 + $0x530] sm:$0xff]
        %v657 = vld [vmem:[#allocation5 + $0x538] sm:$0xff]
        %v658 = vld [vmem:[#allocation5 + $0x540] sm:$0xff]
        %v659 = vld [vmem:[#allocation5 + $0x548] sm:$0xff]
        %v660 = vld [vmem:[#allocation5 + $0x550] sm:$0xff]
        %v661 = vld [vmem:[#allocation5 + $0x558] sm:$0xff]
        %v662 = vld [vmem:[#allocation5 + $0x560] sm:$0xff]
        %v663 = vld [vmem:[#allocation5 + $0x568] sm:$0xff]
        %v664 = vld [vmem:[#allocation5 + $0x570] sm:$0xff]
        %v665 = vld [vmem:[#allocation5 + $0x578] sm:$0xff]
        %v666 = vld [vmem:[#allocation5 + $0x580] sm:$0xff]
        %v667 = vld [vmem:[#allocation5 + $0x588] sm:$0xff]
        %v668 = vld [vmem:[#allocation5 + $0x590] sm:$0xff]
        %v669 = vld [vmem:[#allocation5 + $0x598] sm:$0xff]
        %v670 = vld [vmem:[#allocation5 + $0x5a0] sm:$0xff]
        %v671 = vld [vmem:[#allocation5 + $0x5a8] sm:$0xff]
        %v672 = vld [vmem:[#allocation5 + $0x5b0] sm:$0xff]
        %v673 = vld [vmem:[#allocation5 + $0x5b8] sm:$0xff]
        %v674 = vld [vmem:[#allocation5 + $0x5c0] sm:$0xff]
        %v675 = vld [vmem:[#allocation5 + $0x5c8] sm:$0xff]
        %v676 = vld [vmem:[#allocation5 + $0x5d0] sm:$0xff]
        %v677 = vld [vmem:[#allocation5 + $0x5d8] sm:$0xff]
        %v678 = vld [vmem:[#allocation5 + $0x5e0] sm:$0xff]
        %v679 = vld [vmem:[#allocation5 + $0x5e8] sm:$0xff]
        %v680 = vld [vmem:[#allocation5 + $0x5f0] sm:$0xff]
        %v681 = vld [vmem:[#allocation5 + $0x5f8] sm:$0xff]
        %v682 = vld [vmem:[#allocation5 + $0x600] sm:$0xff]
        %v683 = vld [vmem:[#allocation5 + $0x608] sm:$0xff]
        %v684 = vld [vmem:[#allocation5 + $0x610] sm:$0xff]
        %v685 = vld [vmem:[#allocation5 + $0x618] sm:$0xff]
        %v686 = vld [vmem:[#allocation5 + $0x620] sm:$0xff]
        %v687 = vld [vmem:[#allocation5 + $0x628] sm:$0xff]
        %v688 = vld [vmem:[#allocation5 + $0x630] sm:$0xff]
        %v689 = vld [vmem:[#allocation5 + $0x638] sm:$0xff]
        %v690 = vld [vmem:[#allocation5 + $0x640] sm:$0xff]
        %v691 = vld [vmem:[#allocation5 + $0x648] sm:$0xff]
        %v692 = vld [vmem:[#allocation5 + $0x650] sm:$0xff]
        %v693 = vld [vmem:[#allocation5 + $0x658] sm:$0xff]
        %v694 = vld [vmem:[#allocation5 + $0x660] sm:$0xff]
        %v695 = vld [vmem:[#allocation5 + $0x668] sm:$0xff]
        %v696 = vld [vmem:[#allocation5 + $0x670] sm:$0xff]
        %v697 = vld [vmem:[#allocation5 + $0x678] sm:$0xff]
        %v698 = vld [vmem:[#allocation5 + $0x680] sm:$0xff]
        %v699 = vld [vmem:[#allocation5 + $0x688] sm:$0xff]
        %v700 = vld [vmem:[#allocation5 + $0x690] sm:$0xff]
        %v701 = vld [vmem:[#allocation5 + $0x698] sm:$0xff]
        %v702 = vld [vmem:[#allocation5 + $0x6a0] sm:$0xff]
        %v703 = vld [vmem:[#allocation5 + $0x6a8] sm:$0xff]
        %v704 = vld [vmem:[#allocation5 + $0x6b0] sm:$0xff]
        %v705 = vld [vmem:[#allocation5 + $0x6b8] sm:$0xff]
        %v706 = vld [vmem:[#allocation5 + $0x6c0] sm:$0xff]
        %v707 = vld [vmem:[#allocation5 + $0x6c8] sm:$0xff]
        %v708 = vld [vmem:[#allocation5 + $0x6d0] sm:$0xff]
        %v709 = vld [vmem:[#allocation5 + $0x6d8] sm:$0xff]
        %v710 = vld [vmem:[#allocation5 + $0x6e0] sm:$0xff]
        %v711 = vld [vmem:[#allocation5 + $0x6e8] sm:$0xff]
        %v712 = vld [vmem:[#allocation5 + $0x6f0] sm:$0xff]
        %v713 = vld [vmem:[#allocation5 + $0x6f8] sm:$0xff]
        %v714 = vld [vmem:[#allocation5 + $0x700] sm:$0xff]
        %v715 = vld [vmem:[#allocation5 + $0x708] sm:$0xff]
        %v716 = vld [vmem:[#allocation5 + $0x710] sm:$0xff]
        %v717 = vld [vmem:[#allocation5 + $0x718] sm:$0xff]
        %v718 = vld [vmem:[#allocation5 + $0x720] sm:$0xff]
        %v719 = vld [vmem:[#allocation5 + $0x728] sm:$0xff]
        %v720 = vld [vmem:[#allocation5 + $0x730] sm:$0xff]
        %v721 = vld [vmem:[#allocation5 + $0x738] sm:$0xff]
        %v722 = vld [vmem:[#allocation5 + $0x740] sm:$0xff]
        %v723 = vld [vmem:[#allocation5 + $0x748] sm:$0xff]
        %v724 = vld [vmem:[#allocation5 + $0x750] sm:$0xff]
        %v725 = vld [vmem:[#allocation5 + $0x758] sm:$0xff]
        %v726 = vld [vmem:[#allocation5 + $0x760] sm:$0xff]
        %v727 = vld [vmem:[#allocation5 + $0x768] sm:$0xff]
        %v728 = vld [vmem:[#allocation5 + $0x770] sm:$0xff]
        %v729 = vld [vmem:[#allocation5 + $0x778] sm:$0xff]
        %v730 = vld [vmem:[#allocation5 + $0x780] sm:$0xff]
        %v731 = vld [vmem:[#allocation5 + $0x788] sm:$0xff]
        %v732 = vld [vmem:[#allocation5 + $0x790] sm:$0xff]
        %v733 = vld [vmem:[#allocation5 + $0x798] sm:$0xff]
        %v734 = vld [vmem:[#allocation5 + $0x7a0] sm:$0xff]
        %v735 = vld [vmem:[#allocation5 + $0x7a8] sm:$0xff]
        %v736 = vld [vmem:[#allocation5 + $0x7b0] sm:$0xff]
        %v737 = vld [vmem:[#allocation5 + $0x7b8] sm:$0xff]
        %v738 = vld [vmem:[#allocation5 + $0x7c0] sm:$0xff]
        %v739 = vld [vmem:[#allocation5 + $0x7c8] sm:$0xff]
        %v740 = vld [vmem:[#allocation5 + $0x7d0] sm:$0xff]
        %v741 = vld [vmem:[#allocation5 + $0x7d8] sm:$0xff]
        %v742 = vld [vmem:[#allocation5 + $0x7e0] sm:$0xff]
        %v743 = vld [vmem:[#allocation5 + $0x7e8] sm:$0xff]
        %v744 = vld [vmem:[#allocation5 + $0x7f0] sm:$0xff]
        %v745 = vld [vmem:[#allocation5 + $0x7f8] sm:$0xff]
        %v746 = vld [vmem:[%s2] sm:$0xf]
        %v748 = vlaneseq
        %v749 = vshrl.u32 %v748, 7
        %v750 = vsub.s32 0, %v749
        %v751 = vrot.slane %v746, %v750
        %v752 = vlaneseq
        %v753 = vshrl.u32 %v752, 7
        %v754 = vsub.s32 1, %v753
        %v755 = vrot.slane %v746, %v754
        %v756 = vlaneseq
        %v757 = vshrl.u32 %v756, 7
        %v758 = vsub.s32 2, %v757
        %v759 = vrot.slane %v746, %v758
        %v760 = vlaneseq
        %v761 = vshrl.u32 %v760, 7
        %v762 = vsub.s32 3, %v761
        %v763 = vrot.slane %v746, %v762
        %v776 = vunpack.c.l.b16 %v482
        %v777 = vunpack.c.h.b16 %v482
        %v778 = vunpack.c.l.b16 %v483
        %v779 = vunpack.c.h.b16 %v483
        %v780 = vunpack.c.l.b16 %v484
        %v781 = vunpack.c.h.b16 %v484
        %v782 = vunpack.c.l.b16 %v485
        %v783 = vunpack.c.h.b16 %v485
        %v784 = vunpack.c.l.b16 %v486
        %v785 = vunpack.c.h.b16 %v486
        %v786 = vunpack.c.l.b16 %v487
        %v787 = vunpack.c.h.b16 %v487
        %v788 = vunpack.c.l.b16 %v488
        %v789 = vunpack.c.h.b16 %v488
        %v790 = vunpack.c.l.b16 %v489
        %v791 = vunpack.c.h.b16 %v489
        %v792 = vpack.c.b16 %v784, %v776
        %v793 = vpack.c.b16 %v785, %v777
        %v794 = vpack.c.b16 %v786, %v778
        %v795 = vpack.c.b16 %v787, %v779
        %v796 = vpack.c.b16 %v788, %v780
        %v797 = vpack.c.b16 %v789, %v781
        %v798 = vpack.c.b16 %v790, %v782
        %v799 = vpack.c.b16 %v791, %v783
        %v1064 = vunpack.c.l.b16 %v490
        %v1065 = vunpack.c.h.b16 %v490
        %v1066 = vunpack.c.l.b16 %v491
        %v1067 = vunpack.c.h.b16 %v491
        %v1068 = vunpack.c.l.b16 %v492
        %v1069 = vunpack.c.h.b16 %v492
        %v1070 = vunpack.c.l.b16 %v493
        %v1071 = vunpack.c.h.b16 %v493
        %v1072 = vunpack.c.l.b16 %v494
        %v1073 = vunpack.c.h.b16 %v494
        %v1074 = vunpack.c.l.b16 %v495
        %v1075 = vunpack.c.h.b16 %v495
        %v1076 = vunpack.c.l.b16 %v496
        %v1077 = vunpack.c.h.b16 %v496
        %v1078 = vunpack.c.l.b16 %v497
        %v1079 = vunpack.c.h.b16 %v497
        %v1080 = vunpack.c.l.b16 %v498
        %v1081 = vunpack.c.h.b16 %v498
        %v1082 = vunpack.c.l.b16 %v499
        %v1083 = vunpack.c.h.b16 %v499
        %v1084 = vunpack.c.l.b16 %v500
        %v1085 = vunpack.c.h.b16 %v500
        %v1086 = vunpack.c.l.b16 %v501
        %v1087 = vunpack.c.h.b16 %v501
        %v1088 = vunpack.c.l.b16 %v502
        %v1089 = vunpack.c.h.b16 %v502
        %v1090 = vunpack.c.l.b16 %v503
        %v1091 = vunpack.c.h.b16 %v503
        %v1092 = vunpack.c.l.b16 %v504
        %v1093 = vunpack.c.h.b16 %v504
        %v1094 = vunpack.c.l.b16 %v505
        %v1095 = vunpack.c.h.b16 %v505
        %v1096 = vunpack.c.l.b16 %v506
        %v1097 = vunpack.c.h.b16 %v506
        %v1098 = vunpack.c.l.b16 %v507
        %v1099 = vunpack.c.h.b16 %v507
        %v1100 = vunpack.c.l.b16 %v508
        %v1101 = vunpack.c.h.b16 %v508
        %v1102 = vunpack.c.l.b16 %v509
        %v1103 = vunpack.c.h.b16 %v509
        %v1104 = vunpack.c.l.b16 %v510
        %v1105 = vunpack.c.h.b16 %v510
        %v1106 = vunpack.c.l.b16 %v511
        %v1107 = vunpack.c.h.b16 %v511
        %v1108 = vunpack.c.l.b16 %v512
        %v1109 = vunpack.c.h.b16 %v512
        %v1110 = vunpack.c.l.b16 %v513
        %v1111 = vunpack.c.h.b16 %v513
        %v1112 = vunpack.c.l.b16 %v514
        %v1113 = vunpack.c.h.b16 %v514
        %v1114 = vunpack.c.l.b16 %v515
        %v1115 = vunpack.c.h.b16 %v515
        %v1116 = vunpack.c.l.b16 %v516
        %v1117 = vunpack.c.h.b16 %v516
        %v1118 = vunpack.c.l.b16 %v517
        %v1119 = vunpack.c.h.b16 %v517
        %v1120 = vunpack.c.l.b16 %v518
        %v1121 = vunpack.c.h.b16 %v518
        %v1122 = vunpack.c.l.b16 %v519
        %v1123 = vunpack.c.h.b16 %v519
        %v1124 = vunpack.c.l.b16 %v520
        %v1125 = vunpack.c.h.b16 %v520
        %v1126 = vunpack.c.l.b16 %v521
        %v1127 = vunpack.c.h.b16 %v521
        %v1128 = vunpack.c.l.b16 %v522
        %v1129 = vunpack.c.h.b16 %v522
        %v1130 = vunpack.c.l.b16 %v523
        %v1131 = vunpack.c.h.b16 %v523
        %v1132 = vunpack.c.l.b16 %v524
        %v1133 = vunpack.c.h.b16 %v524
        %v1134 = vunpack.c.l.b16 %v525
        %v1135 = vunpack.c.h.b16 %v525
        %v1136 = vunpack.c.l.b16 %v526
        %v1137 = vunpack.c.h.b16 %v526
        %v1138 = vunpack.c.l.b16 %v527
        %v1139 = vunpack.c.h.b16 %v527
        %v1140 = vunpack.c.l.b16 %v528
        %v1141 = vunpack.c.h.b16 %v528
        %v1142 = vunpack.c.l.b16 %v529
        %v1143 = vunpack.c.h.b16 %v529
        %v1144 = vunpack.c.l.b16 %v530
        %v1145 = vunpack.c.h.b16 %v530
        %v1146 = vunpack.c.l.b16 %v531
        %v1147 = vunpack.c.h.b16 %v531
        %v1148 = vunpack.c.l.b16 %v532
        %v1149 = vunpack.c.h.b16 %v532
        %v1150 = vunpack.c.l.b16 %v533
        %v1151 = vunpack.c.h.b16 %v533
        %v1152 = vunpack.c.l.b16 %v534
        %v1153 = vunpack.c.h.b16 %v534
        %v1154 = vunpack.c.l.b16 %v535
        %v1155 = vunpack.c.h.b16 %v535
        %v1156 = vunpack.c.l.b16 %v536
        %v1157 = vunpack.c.h.b16 %v536
        %v1158 = vunpack.c.l.b16 %v537
        %v1159 = vunpack.c.h.b16 %v537
        %v1160 = vunpack.c.l.b16 %v538
        %v1161 = vunpack.c.h.b16 %v538
        %v1162 = vunpack.c.l.b16 %v539
        %v1163 = vunpack.c.h.b16 %v539
        %v1164 = vunpack.c.l.b16 %v540
        %v1165 = vunpack.c.h.b16 %v540
        %v1166 = vunpack.c.l.b16 %v541
        %v1167 = vunpack.c.h.b16 %v541
        %v1168 = vunpack.c.l.b16 %v542
        %v1169 = vunpack.c.h.b16 %v542
        %v1170 = vunpack.c.l.b16 %v543
        %v1171 = vunpack.c.h.b16 %v543
        %v1172 = vunpack.c.l.b16 %v544
        %v1173 = vunpack.c.h.b16 %v544
        %v1174 = vunpack.c.l.b16 %v545
        %v1175 = vunpack.c.h.b16 %v545
        %v1176 = vunpack.c.l.b16 %v546
        %v1177 = vunpack.c.h.b16 %v546
        %v1178 = vunpack.c.l.b16 %v547
        %v1179 = vunpack.c.h.b16 %v547
        %v1180 = vunpack.c.l.b16 %v548
        %v1181 = vunpack.c.h.b16 %v548
        %v1182 = vunpack.c.l.b16 %v549
        %v1183 = vunpack.c.h.b16 %v549
        %v1184 = vunpack.c.l.b16 %v550
        %v1185 = vunpack.c.h.b16 %v550
        %v1186 = vunpack.c.l.b16 %v551
        %v1187 = vunpack.c.h.b16 %v551
        %v1188 = vunpack.c.l.b16 %v552
        %v1189 = vunpack.c.h.b16 %v552
        %v1190 = vunpack.c.l.b16 %v553
        %v1191 = vunpack.c.h.b16 %v553
        %v1192 = vunpack.c.l.b16 %v554
        %v1193 = vunpack.c.h.b16 %v554
        %v1194 = vunpack.c.l.b16 %v555
        %v1195 = vunpack.c.h.b16 %v555
        %v1196 = vunpack.c.l.b16 %v556
        %v1197 = vunpack.c.h.b16 %v556
        %v1198 = vunpack.c.l.b16 %v557
        %v1199 = vunpack.c.h.b16 %v557
        %v1200 = vunpack.c.l.b16 %v558
        %v1201 = vunpack.c.h.b16 %v558
        %v1202 = vunpack.c.l.b16 %v559
        %v1203 = vunpack.c.h.b16 %v559
        %v1204 = vunpack.c.l.b16 %v560
        %v1205 = vunpack.c.h.b16 %v560
        %v1206 = vunpack.c.l.b16 %v561
        %v1207 = vunpack.c.h.b16 %v561
        %v1208 = vunpack.c.l.b16 %v562
        %v1209 = vunpack.c.h.b16 %v562
        %v1210 = vunpack.c.l.b16 %v563
        %v1211 = vunpack.c.h.b16 %v563
        %v1212 = vunpack.c.l.b16 %v564
        %v1213 = vunpack.c.h.b16 %v564
        %v1214 = vunpack.c.l.b16 %v565
        %v1215 = vunpack.c.h.b16 %v565
        %v1216 = vunpack.c.l.b16 %v566
        %v1217 = vunpack.c.h.b16 %v566
        %v1218 = vunpack.c.l.b16 %v567
        %v1219 = vunpack.c.h.b16 %v567
        %v1220 = vunpack.c.l.b16 %v568
        %v1221 = vunpack.c.h.b16 %v568
        %v1222 = vunpack.c.l.b16 %v569
        %v1223 = vunpack.c.h.b16 %v569
        %v1224 = vunpack.c.l.b16 %v570
        %v1225 = vunpack.c.h.b16 %v570
        %v1226 = vunpack.c.l.b16 %v571
        %v1227 = vunpack.c.h.b16 %v571
        %v1228 = vunpack.c.l.b16 %v572
        %v1229 = vunpack.c.h.b16 %v572
        %v1230 = vunpack.c.l.b16 %v573
        %v1231 = vunpack.c.h.b16 %v573
        %v1232 = vunpack.c.l.b16 %v574
        %v1233 = vunpack.c.h.b16 %v574
        %v1234 = vunpack.c.l.b16 %v575
        %v1235 = vunpack.c.h.b16 %v575
        %v1236 = vunpack.c.l.b16 %v576
        %v1237 = vunpack.c.h.b16 %v576
        %v1238 = vunpack.c.l.b16 %v577
        %v1239 = vunpack.c.h.b16 %v577
        %v1240 = vunpack.c.l.b16 %v578
        %v1241 = vunpack.c.h.b16 %v578
        %v1242 = vunpack.c.l.b16 %v579
        %v1243 = vunpack.c.h.b16 %v579
        %v1244 = vunpack.c.l.b16 %v580
        %v1245 = vunpack.c.h.b16 %v580
        %v1246 = vunpack.c.l.b16 %v581
        %v1247 = vunpack.c.h.b16 %v581
        %v1248 = vunpack.c.l.b16 %v582
        %v1249 = vunpack.c.h.b16 %v582
        %v1250 = vunpack.c.l.b16 %v583
        %v1251 = vunpack.c.h.b16 %v583
        %v1252 = vunpack.c.l.b16 %v584
        %v1253 = vunpack.c.h.b16 %v584
        %v1254 = vunpack.c.l.b16 %v585
        %v1255 = vunpack.c.h.b16 %v585
        %v1256 = vunpack.c.l.b16 %v586
        %v1257 = vunpack.c.h.b16 %v586
        %v1258 = vunpack.c.l.b16 %v587
        %v1259 = vunpack.c.h.b16 %v587
        %v1260 = vunpack.c.l.b16 %v588
        %v1261 = vunpack.c.h.b16 %v588
        %v1262 = vunpack.c.l.b16 %v589
        %v1263 = vunpack.c.h.b16 %v589
        %v1264 = vunpack.c.l.b16 %v590
        %v1265 = vunpack.c.h.b16 %v590
        %v1266 = vunpack.c.l.b16 %v591
        %v1267 = vunpack.c.h.b16 %v591
        %v1268 = vunpack.c.l.b16 %v592
        %v1269 = vunpack.c.h.b16 %v592
        %v1270 = vunpack.c.l.b16 %v593
        %v1271 = vunpack.c.h.b16 %v593
        %v1272 = vunpack.c.l.b16 %v594
        %v1273 = vunpack.c.h.b16 %v594
        %v1274 = vunpack.c.l.b16 %v595
        %v1275 = vunpack.c.h.b16 %v595
        %v1276 = vunpack.c.l.b16 %v596
        %v1277 = vunpack.c.h.b16 %v596
        %v1278 = vunpack.c.l.b16 %v597
        %v1279 = vunpack.c.h.b16 %v597
        %v1280 = vunpack.c.l.b16 %v598
        %v1281 = vunpack.c.h.b16 %v598
        %v1282 = vunpack.c.l.b16 %v599
        %v1283 = vunpack.c.h.b16 %v599
        %v1284 = vunpack.c.l.b16 %v600
        %v1285 = vunpack.c.h.b16 %v600
        %v1286 = vunpack.c.l.b16 %v601
        %v1287 = vunpack.c.h.b16 %v601
        %v1288 = vunpack.c.l.b16 %v602
        %v1289 = vunpack.c.h.b16 %v602
        %v1290 = vunpack.c.l.b16 %v603
        %v1291 = vunpack.c.h.b16 %v603
        %v1292 = vunpack.c.l.b16 %v604
        %v1293 = vunpack.c.h.b16 %v604
        %v1294 = vunpack.c.l.b16 %v605
        %v1295 = vunpack.c.h.b16 %v605
        %v1296 = vunpack.c.l.b16 %v606
        %v1297 = vunpack.c.h.b16 %v606
        %v1298 = vunpack.c.l.b16 %v607
        %v1299 = vunpack.c.h.b16 %v607
        %v1300 = vunpack.c.l.b16 %v608
        %v1301 = vunpack.c.h.b16 %v608
        %v1302 = vunpack.c.l.b16 %v609
        %v1303 = vunpack.c.h.b16 %v609
        %v1304 = vunpack.c.l.b16 %v610
        %v1305 = vunpack.c.h.b16 %v610
        %v1306 = vunpack.c.l.b16 %v611
        %v1307 = vunpack.c.h.b16 %v611
        %v1308 = vunpack.c.l.b16 %v612
        %v1309 = vunpack.c.h.b16 %v612
        %v1310 = vunpack.c.l.b16 %v613
        %v1311 = vunpack.c.h.b16 %v613
        %v1312 = vunpack.c.l.b16 %v614
        %v1313 = vunpack.c.h.b16 %v614
        %v1314 = vunpack.c.l.b16 %v615
        %v1315 = vunpack.c.h.b16 %v615
        %v1316 = vunpack.c.l.b16 %v616
        %v1317 = vunpack.c.h.b16 %v616
        %v1318 = vunpack.c.l.b16 %v617
        %v1319 = vunpack.c.h.b16 %v617
        %v1320 = vunpack.c.l.b16 %v618
        %v1321 = vunpack.c.h.b16 %v618
        %v1322 = vunpack.c.l.b16 %v619
        %v1323 = vunpack.c.h.b16 %v619
        %v1324 = vunpack.c.l.b16 %v620
        %v1325 = vunpack.c.h.b16 %v620
        %v1326 = vunpack.c.l.b16 %v621
        %v1327 = vunpack.c.h.b16 %v621
        %v1328 = vunpack.c.l.b16 %v622
        %v1329 = vunpack.c.h.b16 %v622
        %v1330 = vunpack.c.l.b16 %v623
        %v1331 = vunpack.c.h.b16 %v623
        %v1332 = vunpack.c.l.b16 %v624
        %v1333 = vunpack.c.h.b16 %v624
        %v1334 = vunpack.c.l.b16 %v625
        %v1335 = vunpack.c.h.b16 %v625
        %v1336 = vunpack.c.l.b16 %v626
        %v1337 = vunpack.c.h.b16 %v626
        %v1338 = vunpack.c.l.b16 %v627
        %v1339 = vunpack.c.h.b16 %v627
        %v1340 = vunpack.c.l.b16 %v628
        %v1341 = vunpack.c.h.b16 %v628
        %v1342 = vunpack.c.l.b16 %v629
        %v1343 = vunpack.c.h.b16 %v629
        %v1344 = vunpack.c.l.b16 %v630
        %v1345 = vunpack.c.h.b16 %v630
        %v1346 = vunpack.c.l.b16 %v631
        %v1347 = vunpack.c.h.b16 %v631
        %v1348 = vunpack.c.l.b16 %v632
        %v1349 = vunpack.c.h.b16 %v632
        %v1350 = vunpack.c.l.b16 %v633
        %v1351 = vunpack.c.h.b16 %v633
        %v1352 = vunpack.c.l.b16 %v634
        %v1353 = vunpack.c.h.b16 %v634
        %v1354 = vunpack.c.l.b16 %v635
        %v1355 = vunpack.c.h.b16 %v635
        %v1356 = vunpack.c.l.b16 %v636
        %v1357 = vunpack.c.h.b16 %v636
        %v1358 = vunpack.c.l.b16 %v637
        %v1359 = vunpack.c.h.b16 %v637
        %v1360 = vunpack.c.l.b16 %v638
        %v1361 = vunpack.c.h.b16 %v638
        %v1362 = vunpack.c.l.b16 %v639
        %v1363 = vunpack.c.h.b16 %v639
        %v1364 = vunpack.c.l.b16 %v640
        %v1365 = vunpack.c.h.b16 %v640
        %v1366 = vunpack.c.l.b16 %v641
        %v1367 = vunpack.c.h.b16 %v641
        %v1368 = vunpack.c.l.b16 %v642
        %v1369 = vunpack.c.h.b16 %v642
        %v1370 = vunpack.c.l.b16 %v643
        %v1371 = vunpack.c.h.b16 %v643
        %v1372 = vunpack.c.l.b16 %v644
        %v1373 = vunpack.c.h.b16 %v644
        %v1374 = vunpack.c.l.b16 %v645
        %v1375 = vunpack.c.h.b16 %v645
        %v1376 = vunpack.c.l.b16 %v646
        %v1377 = vunpack.c.h.b16 %v646
        %v1378 = vunpack.c.l.b16 %v647
        %v1379 = vunpack.c.h.b16 %v647
        %v1380 = vunpack.c.l.b16 %v648
        %v1381 = vunpack.c.h.b16 %v648
        %v1382 = vunpack.c.l.b16 %v649
        %v1383 = vunpack.c.h.b16 %v649
        %v1384 = vunpack.c.l.b16 %v650
        %v1385 = vunpack.c.h.b16 %v650
        %v1386 = vunpack.c.l.b16 %v651
        %v1387 = vunpack.c.h.b16 %v651
        %v1388 = vunpack.c.l.b16 %v652
        %v1389 = vunpack.c.h.b16 %v652
        %v1390 = vunpack.c.l.b16 %v653
        %v1391 = vunpack.c.h.b16 %v653
        %v1392 = vunpack.c.l.b16 %v654
        %v1393 = vunpack.c.h.b16 %v654
        %v1394 = vunpack.c.l.b16 %v655
        %v1395 = vunpack.c.h.b16 %v655
        %v1396 = vunpack.c.l.b16 %v656
        %v1397 = vunpack.c.h.b16 %v656
        %v1398 = vunpack.c.l.b16 %v657
        %v1399 = vunpack.c.h.b16 %v657
        %v1400 = vunpack.c.l.b16 %v658
        %v1401 = vunpack.c.h.b16 %v658
        %v1402 = vunpack.c.l.b16 %v659
        %v1403 = vunpack.c.h.b16 %v659
        %v1404 = vunpack.c.l.b16 %v660
        %v1405 = vunpack.c.h.b16 %v660
        %v1406 = vunpack.c.l.b16 %v661
        %v1407 = vunpack.c.h.b16 %v661
        %v1408 = vunpack.c.l.b16 %v662
        %v1409 = vunpack.c.h.b16 %v662
        %v1410 = vunpack.c.l.b16 %v663
        %v1411 = vunpack.c.h.b16 %v663
        %v1412 = vunpack.c.l.b16 %v664
        %v1413 = vunpack.c.h.b16 %v664
        %v1414 = vunpack.c.l.b16 %v665
        %v1415 = vunpack.c.h.b16 %v665
        %v1416 = vunpack.c.l.b16 %v666
        %v1417 = vunpack.c.h.b16 %v666
        %v1418 = vunpack.c.l.b16 %v667
        %v1419 = vunpack.c.h.b16 %v667
        %v1420 = vunpack.c.l.b16 %v668
        %v1421 = vunpack.c.h.b16 %v668
        %v1422 = vunpack.c.l.b16 %v669
        %v1423 = vunpack.c.h.b16 %v669
        %v1424 = vunpack.c.l.b16 %v670
        %v1425 = vunpack.c.h.b16 %v670
        %v1426 = vunpack.c.l.b16 %v671
        %v1427 = vunpack.c.h.b16 %v671
        %v1428 = vunpack.c.l.b16 %v672
        %v1429 = vunpack.c.h.b16 %v672
        %v1430 = vunpack.c.l.b16 %v673
        %v1431 = vunpack.c.h.b16 %v673
        %v1432 = vunpack.c.l.b16 %v674
        %v1433 = vunpack.c.h.b16 %v674
        %v1434 = vunpack.c.l.b16 %v675
        %v1435 = vunpack.c.h.b16 %v675
        %v1436 = vunpack.c.l.b16 %v676
        %v1437 = vunpack.c.h.b16 %v676
        %v1438 = vunpack.c.l.b16 %v677
        %v1439 = vunpack.c.h.b16 %v677
        %v1440 = vunpack.c.l.b16 %v678
        %v1441 = vunpack.c.h.b16 %v678
        %v1442 = vunpack.c.l.b16 %v679
        %v1443 = vunpack.c.h.b16 %v679
        %v1444 = vunpack.c.l.b16 %v680
        %v1445 = vunpack.c.h.b16 %v680
        %v1446 = vunpack.c.l.b16 %v681
        %v1447 = vunpack.c.h.b16 %v681
        %v1448 = vunpack.c.l.b16 %v682
        %v1449 = vunpack.c.h.b16 %v682
        %v1450 = vunpack.c.l.b16 %v683
        %v1451 = vunpack.c.h.b16 %v683
        %v1452 = vunpack.c.l.b16 %v684
        %v1453 = vunpack.c.h.b16 %v684
        %v1454 = vunpack.c.l.b16 %v685
        %v1455 = vunpack.c.h.b16 %v685
        %v1456 = vunpack.c.l.b16 %v686
        %v1457 = vunpack.c.h.b16 %v686
        %v1458 = vunpack.c.l.b16 %v687
        %v1459 = vunpack.c.h.b16 %v687
        %v1460 = vunpack.c.l.b16 %v688
        %v1461 = vunpack.c.h.b16 %v688
        %v1462 = vunpack.c.l.b16 %v689
        %v1463 = vunpack.c.h.b16 %v689
        %v1464 = vunpack.c.l.b16 %v690
        %v1465 = vunpack.c.h.b16 %v690
        %v1466 = vunpack.c.l.b16 %v691
        %v1467 = vunpack.c.h.b16 %v691
        %v1468 = vunpack.c.l.b16 %v692
        %v1469 = vunpack.c.h.b16 %v692
        %v1470 = vunpack.c.l.b16 %v693
        %v1471 = vunpack.c.h.b16 %v693
        %v1472 = vunpack.c.l.b16 %v694
        %v1473 = vunpack.c.h.b16 %v694
        %v1474 = vunpack.c.l.b16 %v695
        %v1475 = vunpack.c.h.b16 %v695
        %v1476 = vunpack.c.l.b16 %v696
        %v1477 = vunpack.c.h.b16 %v696
        %v1478 = vunpack.c.l.b16 %v697
        %v1479 = vunpack.c.h.b16 %v697
        %v1480 = vunpack.c.l.b16 %v698
        %v1481 = vunpack.c.h.b16 %v698
        %v1482 = vunpack.c.l.b16 %v699
        %v1483 = vunpack.c.h.b16 %v699
        %v1484 = vunpack.c.l.b16 %v700
        %v1485 = vunpack.c.h.b16 %v700
        %v1486 = vunpack.c.l.b16 %v701
        %v1487 = vunpack.c.h.b16 %v701
        %v1488 = vunpack.c.l.b16 %v702
        %v1489 = vunpack.c.h.b16 %v702
        %v1490 = vunpack.c.l.b16 %v703
        %v1491 = vunpack.c.h.b16 %v703
        %v1492 = vunpack.c.l.b16 %v704
        %v1493 = vunpack.c.h.b16 %v704
        %v1494 = vunpack.c.l.b16 %v705
        %v1495 = vunpack.c.h.b16 %v705
        %v1496 = vunpack.c.l.b16 %v706
        %v1497 = vunpack.c.h.b16 %v706
        %v1498 = vunpack.c.l.b16 %v707
        %v1499 = vunpack.c.h.b16 %v707
        %v1500 = vunpack.c.l.b16 %v708
        %v1501 = vunpack.c.h.b16 %v708
        %v1502 = vunpack.c.l.b16 %v709
        %v1503 = vunpack.c.h.b16 %v709
        %v1504 = vunpack.c.l.b16 %v710
        %v1505 = vunpack.c.h.b16 %v710
        %v1506 = vunpack.c.l.b16 %v711
        %v1507 = vunpack.c.h.b16 %v711
        %v1508 = vunpack.c.l.b16 %v712
        %v1509 = vunpack.c.h.b16 %v712
        %v1510 = vunpack.c.l.b16 %v713
        %v1511 = vunpack.c.h.b16 %v713
        %v1512 = vunpack.c.l.b16 %v714
        %v1513 = vunpack.c.h.b16 %v714
        %v1514 = vunpack.c.l.b16 %v715
        %v1515 = vunpack.c.h.b16 %v715
        %v1516 = vunpack.c.l.b16 %v716
        %v1517 = vunpack.c.h.b16 %v716
        %v1518 = vunpack.c.l.b16 %v717
        %v1519 = vunpack.c.h.b16 %v717
        %v1520 = vunpack.c.l.b16 %v718
        %v1521 = vunpack.c.h.b16 %v718
        %v1522 = vunpack.c.l.b16 %v719
        %v1523 = vunpack.c.h.b16 %v719
        %v1524 = vunpack.c.l.b16 %v720
        %v1525 = vunpack.c.h.b16 %v720
        %v1526 = vunpack.c.l.b16 %v721
        %v1527 = vunpack.c.h.b16 %v721
        %v1528 = vunpack.c.l.b16 %v722
        %v1529 = vunpack.c.h.b16 %v722
        %v1530 = vunpack.c.l.b16 %v723
        %v1531 = vunpack.c.h.b16 %v723
        %v1532 = vunpack.c.l.b16 %v724
        %v1533 = vunpack.c.h.b16 %v724
        %v1534 = vunpack.c.l.b16 %v725
        %v1535 = vunpack.c.h.b16 %v725
        %v1536 = vunpack.c.l.b16 %v726
        %v1537 = vunpack.c.h.b16 %v726
        %v1538 = vunpack.c.l.b16 %v727
        %v1539 = vunpack.c.h.b16 %v727
        %v1540 = vunpack.c.l.b16 %v728
        %v1541 = vunpack.c.h.b16 %v728
        %v1542 = vunpack.c.l.b16 %v729
        %v1543 = vunpack.c.h.b16 %v729
        %v1544 = vunpack.c.l.b16 %v730
        %v1545 = vunpack.c.h.b16 %v730
        %v1546 = vunpack.c.l.b16 %v731
        %v1547 = vunpack.c.h.b16 %v731
        %v1548 = vunpack.c.l.b16 %v732
        %v1549 = vunpack.c.h.b16 %v732
        %v1550 = vunpack.c.l.b16 %v733
        %v1551 = vunpack.c.h.b16 %v733
        %v1552 = vunpack.c.l.b16 %v734
        %v1553 = vunpack.c.h.b16 %v734
        %v1554 = vunpack.c.l.b16 %v735
        %v1555 = vunpack.c.h.b16 %v735
        %v1556 = vunpack.c.l.b16 %v736
        %v1557 = vunpack.c.h.b16 %v736
        %v1558 = vunpack.c.l.b16 %v737
        %v1559 = vunpack.c.h.b16 %v737
        %v1560 = vunpack.c.l.b16 %v738
        %v1561 = vunpack.c.h.b16 %v738
        %v1562 = vunpack.c.l.b16 %v739
        %v1563 = vunpack.c.h.b16 %v739
        %v1564 = vunpack.c.l.b16 %v740
        %v1565 = vunpack.c.h.b16 %v740
        %v1566 = vunpack.c.l.b16 %v741
        %v1567 = vunpack.c.h.b16 %v741
        %v1568 = vunpack.c.l.b16 %v742
        %v1569 = vunpack.c.h.b16 %v742
        %v1570 = vunpack.c.l.b16 %v743
        %v1571 = vunpack.c.h.b16 %v743
        %v1572 = vunpack.c.l.b16 %v744
        %v1573 = vunpack.c.h.b16 %v744
        %v1574 = vunpack.c.l.b16 %v745
        %v1575 = vunpack.c.h.b16 %v745
        %v1576 = vpack.c.b16 %v1068, %v1064
        %v1577 = vpack.c.b16 %v1069, %v1065
        %v1578 = vpack.c.b16 %v1070, %v1066
        %v1579 = vpack.c.b16 %v1071, %v1067
        %v1580 = vpack.c.b16 %v1076, %v1072
        %v1581 = vpack.c.b16 %v1077, %v1073
        %v1582 = vpack.c.b16 %v1078, %v1074
        %v1583 = vpack.c.b16 %v1079, %v1075
        %v1584 = vpack.c.b16 %v1084, %v1080
        %v1585 = vpack.c.b16 %v1085, %v1081
        %v1586 = vpack.c.b16 %v1086, %v1082
        %v1587 = vpack.c.b16 %v1087, %v1083
        %v1588 = vpack.c.b16 %v1092, %v1088
        %v1589 = vpack.c.b16 %v1093, %v1089
        %v1590 = vpack.c.b16 %v1094, %v1090
        %v1591 = vpack.c.b16 %v1095, %v1091
        %v1592 = vpack.c.b16 %v1100, %v1096
        %v1593 = vpack.c.b16 %v1101, %v1097
        %v1594 = vpack.c.b16 %v1102, %v1098
        %v1595 = vpack.c.b16 %v1103, %v1099
        %v1596 = vpack.c.b16 %v1108, %v1104
        %v1597 = vpack.c.b16 %v1109, %v1105
        %v1598 = vpack.c.b16 %v1110, %v1106
        %v1599 = vpack.c.b16 %v1111, %v1107
        %v1600 = vpack.c.b16 %v1116, %v1112
        %v1601 = vpack.c.b16 %v1117, %v1113
        %v1602 = vpack.c.b16 %v1118, %v1114
        %v1603 = vpack.c.b16 %v1119, %v1115
        %v1604 = vpack.c.b16 %v1124, %v1120
        %v1605 = vpack.c.b16 %v1125, %v1121
        %v1606 = vpack.c.b16 %v1126, %v1122
        %v1607 = vpack.c.b16 %v1127, %v1123
        %v1608 = vpack.c.b16 %v1132, %v1128
        %v1609 = vpack.c.b16 %v1133, %v1129
        %v1610 = vpack.c.b16 %v1134, %v1130
        %v1611 = vpack.c.b16 %v1135, %v1131
        %v1612 = vpack.c.b16 %v1140, %v1136
        %v1613 = vpack.c.b16 %v1141, %v1137
        %v1614 = vpack.c.b16 %v1142, %v1138
        %v1615 = vpack.c.b16 %v1143, %v1139
        %v1616 = vpack.c.b16 %v1148, %v1144
        %v1617 = vpack.c.b16 %v1149, %v1145
        %v1618 = vpack.c.b16 %v1150, %v1146
        %v1619 = vpack.c.b16 %v1151, %v1147
        %v1620 = vpack.c.b16 %v1156, %v1152
        %v1621 = vpack.c.b16 %v1157, %v1153
        %v1622 = vpack.c.b16 %v1158, %v1154
        %v1623 = vpack.c.b16 %v1159, %v1155
        %v1624 = vpack.c.b16 %v1164, %v1160
        %v1625 = vpack.c.b16 %v1165, %v1161
        %v1626 = vpack.c.b16 %v1166, %v1162
        %v1627 = vpack.c.b16 %v1167, %v1163
        %v1628 = vpack.c.b16 %v1172, %v1168
        %v1629 = vpack.c.b16 %v1173, %v1169
        %v1630 = vpack.c.b16 %v1174, %v1170
        %v1631 = vpack.c.b16 %v1175, %v1171
        %v1632 = vpack.c.b16 %v1180, %v1176
        %v1633 = vpack.c.b16 %v1181, %v1177
        %v1634 = vpack.c.b16 %v1182, %v1178
        %v1635 = vpack.c.b16 %v1183, %v1179
        %v1636 = vpack.c.b16 %v1188, %v1184
        %v1637 = vpack.c.b16 %v1189, %v1185
        %v1638 = vpack.c.b16 %v1190, %v1186
        %v1639 = vpack.c.b16 %v1191, %v1187
        %v1640 = vpack.c.b16 %v1196, %v1192
        %v1641 = vpack.c.b16 %v1197, %v1193
        %v1642 = vpack.c.b16 %v1198, %v1194
        %v1643 = vpack.c.b16 %v1199, %v1195
        %v1644 = vpack.c.b16 %v1204, %v1200
        %v1645 = vpack.c.b16 %v1205, %v1201
        %v1646 = vpack.c.b16 %v1206, %v1202
        %v1647 = vpack.c.b16 %v1207, %v1203
        %v1648 = vpack.c.b16 %v1212, %v1208
        %v1649 = vpack.c.b16 %v1213, %v1209
        %v1650 = vpack.c.b16 %v1214, %v1210
        %v1651 = vpack.c.b16 %v1215, %v1211
        %v1652 = vpack.c.b16 %v1220, %v1216
        %v1653 = vpack.c.b16 %v1221, %v1217
        %v1654 = vpack.c.b16 %v1222, %v1218
        %v1655 = vpack.c.b16 %v1223, %v1219
        %v1656 = vpack.c.b16 %v1228, %v1224
        %v1657 = vpack.c.b16 %v1229, %v1225
        %v1658 = vpack.c.b16 %v1230, %v1226
        %v1659 = vpack.c.b16 %v1231, %v1227
        %v1660 = vpack.c.b16 %v1236, %v1232
        %v1661 = vpack.c.b16 %v1237, %v1233
        %v1662 = vpack.c.b16 %v1238, %v1234
        %v1663 = vpack.c.b16 %v1239, %v1235
        %v1664 = vpack.c.b16 %v1244, %v1240
        %v1665 = vpack.c.b16 %v1245, %v1241
        %v1666 = vpack.c.b16 %v1246, %v1242
        %v1667 = vpack.c.b16 %v1247, %v1243
        %v1668 = vpack.c.b16 %v1252, %v1248
        %v1669 = vpack.c.b16 %v1253, %v1249
        %v1670 = vpack.c.b16 %v1254, %v1250
        %v1671 = vpack.c.b16 %v1255, %v1251
        %v1672 = vpack.c.b16 %v1260, %v1256
        %v1673 = vpack.c.b16 %v1261, %v1257
        %v1674 = vpack.c.b16 %v1262, %v1258
        %v1675 = vpack.c.b16 %v1263, %v1259
        %v1676 = vpack.c.b16 %v1268, %v1264
        %v1677 = vpack.c.b16 %v1269, %v1265
        %v1678 = vpack.c.b16 %v1270, %v1266
        %v1679 = vpack.c.b16 %v1271, %v1267
        %v1680 = vpack.c.b16 %v1276, %v1272
        %v1681 = vpack.c.b16 %v1277, %v1273
        %v1682 = vpack.c.b16 %v1278, %v1274
        %v1683 = vpack.c.b16 %v1279, %v1275
        %v1684 = vpack.c.b16 %v1284, %v1280
        %v1685 = vpack.c.b16 %v1285, %v1281
        %v1686 = vpack.c.b16 %v1286, %v1282
        %v1687 = vpack.c.b16 %v1287, %v1283
        %v1688 = vpack.c.b16 %v1292, %v1288
        %v1689 = vpack.c.b16 %v1293, %v1289
        %v1690 = vpack.c.b16 %v1294, %v1290
        %v1691 = vpack.c.b16 %v1295, %v1291
        %v1692 = vpack.c.b16 %v1300, %v1296
        %v1693 = vpack.c.b16 %v1301, %v1297
        %v1694 = vpack.c.b16 %v1302, %v1298
        %v1695 = vpack.c.b16 %v1303, %v1299
        %v1696 = vpack.c.b16 %v1308, %v1304
        %v1697 = vpack.c.b16 %v1309, %v1305
        %v1698 = vpack.c.b16 %v1310, %v1306
        %v1699 = vpack.c.b16 %v1311, %v1307
        %v1700 = vpack.c.b16 %v1316, %v1312
        %v1701 = vpack.c.b16 %v1317, %v1313
        %v1702 = vpack.c.b16 %v1318, %v1314
        %v1703 = vpack.c.b16 %v1319, %v1315
        %v1704 = vpack.c.b16 %v1324, %v1320
        %v1705 = vpack.c.b16 %v1325, %v1321
        %v1706 = vpack.c.b16 %v1326, %v1322
        %v1707 = vpack.c.b16 %v1327, %v1323
        %v1708 = vpack.c.b16 %v1332, %v1328
        %v1709 = vpack.c.b16 %v1333, %v1329
        %v1710 = vpack.c.b16 %v1334, %v1330
        %v1711 = vpack.c.b16 %v1335, %v1331
        %v1712 = vpack.c.b16 %v1340, %v1336
        %v1713 = vpack.c.b16 %v1341, %v1337
        %v1714 = vpack.c.b16 %v1342, %v1338
        %v1715 = vpack.c.b16 %v1343, %v1339
        %v1716 = vpack.c.b16 %v1348, %v1344
        %v1717 = vpack.c.b16 %v1349, %v1345
        %v1718 = vpack.c.b16 %v1350, %v1346
        %v1719 = vpack.c.b16 %v1351, %v1347
        %v1720 = vpack.c.b16 %v1356, %v1352
        %v1721 = vpack.c.b16 %v1357, %v1353
        %v1722 = vpack.c.b16 %v1358, %v1354
        %v1723 = vpack.c.b16 %v1359, %v1355
        %v1724 = vpack.c.b16 %v1364, %v1360
        %v1725 = vpack.c.b16 %v1365, %v1361
        %v1726 = vpack.c.b16 %v1366, %v1362
        %v1727 = vpack.c.b16 %v1367, %v1363
        %v1728 = vpack.c.b16 %v1372, %v1368
        %v1729 = vpack.c.b16 %v1373, %v1369
        %v1730 = vpack.c.b16 %v1374, %v1370
        %v1731 = vpack.c.b16 %v1375, %v1371
        %v1732 = vpack.c.b16 %v1380, %v1376
        %v1733 = vpack.c.b16 %v1381, %v1377
        %v1734 = vpack.c.b16 %v1382, %v1378
        %v1735 = vpack.c.b16 %v1383, %v1379
        %v1736 = vpack.c.b16 %v1388, %v1384
        %v1737 = vpack.c.b16 %v1389, %v1385
        %v1738 = vpack.c.b16 %v1390, %v1386
        %v1739 = vpack.c.b16 %v1391, %v1387
        %v1740 = vpack.c.b16 %v1396, %v1392
        %v1741 = vpack.c.b16 %v1397, %v1393
        %v1742 = vpack.c.b16 %v1398, %v1394
        %v1743 = vpack.c.b16 %v1399, %v1395
        %v1744 = vpack.c.b16 %v1404, %v1400
        %v1745 = vpack.c.b16 %v1405, %v1401
        %v1746 = vpack.c.b16 %v1406, %v1402
        %v1747 = vpack.c.b16 %v1407, %v1403
        %v1748 = vpack.c.b16 %v1412, %v1408
        %v1749 = vpack.c.b16 %v1413, %v1409
        %v1750 = vpack.c.b16 %v1414, %v1410
        %v1751 = vpack.c.b16 %v1415, %v1411
        %v1752 = vpack.c.b16 %v1420, %v1416
        %v1753 = vpack.c.b16 %v1421, %v1417
        %v1754 = vpack.c.b16 %v1422, %v1418
        %v1755 = vpack.c.b16 %v1423, %v1419
        %v1756 = vpack.c.b16 %v1428, %v1424
        %v1757 = vpack.c.b16 %v1429, %v1425
        %v1758 = vpack.c.b16 %v1430, %v1426
        %v1759 = vpack.c.b16 %v1431, %v1427
        %v1760 = vpack.c.b16 %v1436, %v1432
        %v1761 = vpack.c.b16 %v1437, %v1433
        %v1762 = vpack.c.b16 %v1438, %v1434
        %v1763 = vpack.c.b16 %v1439, %v1435
        %v1764 = vpack.c.b16 %v1444, %v1440
        %v1765 = vpack.c.b16 %v1445, %v1441
        %v1766 = vpack.c.b16 %v1446, %v1442
        %v1767 = vpack.c.b16 %v1447, %v1443
        %v1768 = vpack.c.b16 %v1452, %v1448
        %v1769 = vpack.c.b16 %v1453, %v1449
        %v1770 = vpack.c.b16 %v1454, %v1450
        %v1771 = vpack.c.b16 %v1455, %v1451
        %v1772 = vpack.c.b16 %v1460, %v1456
        %v1773 = vpack.c.b16 %v1461, %v1457
        %v1774 = vpack.c.b16 %v1462, %v1458
        %v1775 = vpack.c.b16 %v1463, %v1459
        %v1776 = vpack.c.b16 %v1468, %v1464
        %v1777 = vpack.c.b16 %v1469, %v1465
        %v1778 = vpack.c.b16 %v1470, %v1466
        %v1779 = vpack.c.b16 %v1471, %v1467
        %v1780 = vpack.c.b16 %v1476, %v1472
        %v1781 = vpack.c.b16 %v1477, %v1473
        %v1782 = vpack.c.b16 %v1478, %v1474
        %v1783 = vpack.c.b16 %v1479, %v1475
        %v1784 = vpack.c.b16 %v1484, %v1480
        %v1785 = vpack.c.b16 %v1485, %v1481
        %v1786 = vpack.c.b16 %v1486, %v1482
        %v1787 = vpack.c.b16 %v1487, %v1483
        %v1788 = vpack.c.b16 %v1492, %v1488
        %v1789 = vpack.c.b16 %v1493, %v1489
        %v1790 = vpack.c.b16 %v1494, %v1490
        %v1791 = vpack.c.b16 %v1495, %v1491
        %v1792 = vpack.c.b16 %v1500, %v1496
        %v1793 = vpack.c.b16 %v1501, %v1497
        %v1794 = vpack.c.b16 %v1502, %v1498
        %v1795 = vpack.c.b16 %v1503, %v1499
        %v1796 = vpack.c.b16 %v1508, %v1504
        %v1797 = vpack.c.b16 %v1509, %v1505
        %v1798 = vpack.c.b16 %v1510, %v1506
        %v1799 = vpack.c.b16 %v1511, %v1507
        %v1800 = vpack.c.b16 %v1516, %v1512
        %v1801 = vpack.c.b16 %v1517, %v1513
        %v1802 = vpack.c.b16 %v1518, %v1514
        %v1803 = vpack.c.b16 %v1519, %v1515
        %v1804 = vpack.c.b16 %v1524, %v1520
        %v1805 = vpack.c.b16 %v1525, %v1521
        %v1806 = vpack.c.b16 %v1526, %v1522
        %v1807 = vpack.c.b16 %v1527, %v1523
        %v1808 = vpack.c.b16 %v1532, %v1528
        %v1809 = vpack.c.b16 %v1533, %v1529
        %v1810 = vpack.c.b16 %v1534, %v1530
        %v1811 = vpack.c.b16 %v1535, %v1531
        %v1812 = vpack.c.b16 %v1540, %v1536
        %v1813 = vpack.c.b16 %v1541, %v1537
        %v1814 = vpack.c.b16 %v1542, %v1538
        %v1815 = vpack.c.b16 %v1543, %v1539
        %v1816 = vpack.c.b16 %v1548, %v1544
        %v1817 = vpack.c.b16 %v1549, %v1545
        %v1818 = vpack.c.b16 %v1550, %v1546
        %v1819 = vpack.c.b16 %v1551, %v1547
        %v1820 = vpack.c.b16 %v1556, %v1552
        %v1821 = vpack.c.b16 %v1557, %v1553
        %v1822 = vpack.c.b16 %v1558, %v1554
        %v1823 = vpack.c.b16 %v1559, %v1555
        %v1824 = vpack.c.b16 %v1564, %v1560
        %v1825 = vpack.c.b16 %v1565, %v1561
        %v1826 = vpack.c.b16 %v1566, %v1562
        %v1827 = vpack.c.b16 %v1567, %v1563
        %v1828 = vpack.c.b16 %v1572, %v1568
        %v1829 = vpack.c.b16 %v1573, %v1569
        %v1830 = vpack.c.b16 %v1574, %v1570
        %v1831 = vpack.c.b16 %v1575, %v1571
        %2088 = vmatprep.subr.bf16.mxu0 %v1577
        %2089 = vmatpush1.bf16.msra.mxu0 %v1576
        %2090 = vmatprep.subr.bf16.mxu0 %v1581
        %2091 = vmatpush1.bf16.msra.mxu0 %v1580
        %2092 = vmatprep.subr.bf16.mxu0 %v1585
        %2093 = vmatpush1.bf16.msra.mxu0 %v1584
        %2094 = vmatprep.subr.bf16.mxu0 %v1589
        %2095 = vmatpush1.bf16.msra.mxu0 %v1588
        %2096 = vmatprep.subr.bf16.mxu0 %v1593
        %2097 = vmatpush1.bf16.msra.mxu0 %v1592
        %2098 = vmatprep.subr.bf16.mxu0 %v1597
        %2099 = vmatpush1.bf16.msra.mxu0 %v1596
        %2100 = vmatprep.subr.bf16.mxu0 %v1601
        %2101 = vmatpush1.bf16.msra.mxu0 %v1600
        %2102 = vmatprep.subr.bf16.mxu0 %v1605
        %2103 = vmatpush1.bf16.msra.mxu0 %v1604
        %2104 = vmatprep.subr.bf16.mxu0 %v1609
        %2105 = vmatpush1.bf16.msra.mxu0 %v1608
        %2106 = vmatprep.subr.bf16.mxu0 %v1613
        %2107 = vmatpush1.bf16.msra.mxu0 %v1612
        %2108 = vmatprep.subr.bf16.mxu0 %v1617
        %2109 = vmatpush1.bf16.msra.mxu0 %v1616
        %2110 = vmatprep.subr.bf16.mxu0 %v1621
        %2111 = vmatpush1.bf16.msra.mxu0 %v1620
        %2112 = vmatprep.subr.bf16.mxu0 %v1625
        %2113 = vmatpush1.bf16.msra.mxu0 %v1624
        %2114 = vmatprep.subr.bf16.mxu0 %v1629
        %2115 = vmatpush1.bf16.msra.mxu0 %v1628
        %2116 = vmatprep.subr.bf16.mxu0 %v1633
        %2117 = vmatpush1.bf16.msra.mxu0 %v1632
        %2118 = vmatprep.subr.bf16.mxu0 %v1637
        %2119 = vmatpush1.bf16.msra.mxu0 %v1636
        %2120 = vmatprep.mubr.bf16.mxu0 %v793
        %2121 = vmatmul.mubr.bf16.gmra.mrb[0].mxu0 %v792
        %v2122 = vpop.f32.mrb[0].mxu0
        %v2123 = vadd.f32 %v751, %v2122
        %v2124 = vpop.f32.mrb[0].mxu0
        %v2125 = vadd.f32 %v755, %v2124
        %v2126 = vpop.f32.mrb[0].mxu0
        %v2127 = vadd.f32 %v751, %v2126
        %v2128 = vpop.f32.mrb[0].mxu0
        %v2129 = vadd.f32 %v755, %v2128
        %2130 = vdwg.mxu0
        %2131 = vmatprep.subr.bf16.mxu0 %v1641
        %2132 = vmatpush1.bf16.msra.mxu0 %v1640
        %2133 = vmatprep.subr.bf16.mxu0 %v1645
        %2134 = vmatpush1.bf16.msra.mxu0 %v1644
        %2135 = vmatprep.subr.bf16.mxu0 %v1649
        %2136 = vmatpush1.bf16.msra.mxu0 %v1648
        %2137 = vmatprep.subr.bf16.mxu0 %v1653
        %2138 = vmatpush1.bf16.msra.mxu0 %v1652
        %2139 = vmatprep.subr.bf16.mxu0 %v1657
        %2140 = vmatpush1.bf16.msra.mxu0 %v1656
        %2141 = vmatprep.subr.bf16.mxu0 %v1661
        %2142 = vmatpush1.bf16.msra.mxu0 %v1660
        %2143 = vmatprep.subr.bf16.mxu0 %v1665
        %2144 = vmatpush1.bf16.msra.mxu0 %v1664
        %2145 = vmatprep.subr.bf16.mxu0 %v1669
        %2146 = vmatpush1.bf16.msra.mxu0 %v1668
        %2147 = vmatprep.subr.bf16.mxu0 %v1673
        %2148 = vmatpush1.bf16.msra.mxu0 %v1672
        %2149 = vmatprep.subr.bf16.mxu0 %v1677
        %2150 = vmatpush1.bf16.msra.mxu0 %v1676
        %2151 = vmatprep.subr.bf16.mxu0 %v1681
        %2152 = vmatpush1.bf16.msra.mxu0 %v1680
        %2153 = vmatprep.subr.bf16.mxu0 %v1685
        %2154 = vmatpush1.bf16.msra.mxu0 %v1684
        %2155 = vmatprep.subr.bf16.mxu0 %v1689
        %2156 = vmatpush1.bf16.msra.mxu0 %v1688
        %2157 = vmatprep.subr.bf16.mxu0 %v1693
        %2158 = vmatpush1.bf16.msra.mxu0 %v1692
        %2159 = vmatprep.subr.bf16.mxu0 %v1697
        %2160 = vmatpush1.bf16.msra.mxu0 %v1696
        %2161 = vmatprep.subr.bf16.mxu0 %v1701
        %2162 = vmatpush1.bf16.msra.mxu0 %v1700
        %2163 = vmatprep.mubr.bf16.mxu0 %v795
        %2164 = vmatmul.mubr.bf16.gmra.mrb[0].mxu0 %v794
        %v2165 = vpop.f32.mrb[0].mxu0
        %v2166 = vadd.f32 %v2123, %v2165
        %v2167 = vpop.f32.mrb[0].mxu0
        %v2168 = vadd.f32 %v2125, %v2167
        %v2169 = vpop.f32.mrb[0].mxu0
        %v2170 = vadd.f32 %v2127, %v2169
        %v2171 = vpop.f32.mrb[0].mxu0
        %v2172 = vadd.f32 %v2129, %v2171
        %2173 = vdwg.mxu0
        %2174 = vmatprep.subr.bf16.mxu0 %v1705
        %2175 = vmatpush1.bf16.msra.mxu0 %v1704
        %2176 = vmatprep.subr.bf16.mxu0 %v1709
        %2177 = vmatpush1.bf16.msra.mxu0 %v1708
        %2178 = vmatprep.subr.bf16.mxu0 %v1713
        %2179 = vmatpush1.bf16.msra.mxu0 %v1712
        %2180 = vmatprep.subr.bf16.mxu0 %v1717
        %2181 = vmatpush1.bf16.msra.mxu0 %v1716
        %2182 = vmatprep.subr.bf16.mxu0 %v1721
        %2183 = vmatpush1.bf16.msra.mxu0 %v1720
        %2184 = vmatprep.subr.bf16.mxu0 %v1725
        %2185 = vmatpush1.bf16.msra.mxu0 %v1724
        %2186 = vmatprep.subr.bf16.mxu0 %v1729
        %2187 = vmatpush1.bf16.msra.mxu0 %v1728
        %2188 = vmatprep.subr.bf16.mxu0 %v1733
        %2189 = vmatpush1.bf16.msra.mxu0 %v1732
        %2190 = vmatprep.subr.bf16.mxu0 %v1737
        %2191 = vmatpush1.bf16.msra.mxu0 %v1736
        %2192 = vmatprep.subr.bf16.mxu0 %v1741
        %2193 = vmatpush1.bf16.msra.mxu0 %v1740
        %2194 = vmatprep.subr.bf16.mxu0 %v1745
        %2195 = vmatpush1.bf16.msra.mxu0 %v1744
        %2196 = vmatprep.subr.bf16.mxu0 %v1749
        %2197 = vmatpush1.bf16.msra.mxu0 %v1748
        %2198 = vmatprep.subr.bf16.mxu0 %v1753
        %2199 = vmatpush1.bf16.msra.mxu0 %v1752
        %2200 = vmatprep.subr.bf16.mxu0 %v1757
        %2201 = vmatpush1.bf16.msra.mxu0 %v1756
        %2202 = vmatprep.subr.bf16.mxu0 %v1761
        %2203 = vmatpush1.bf16.msra.mxu0 %v1760
        %2204 = vmatprep.subr.bf16.mxu0 %v1765
        %2205 = vmatpush1.bf16.msra.mxu0 %v1764
        %2206 = vmatprep.mubr.bf16.mxu0 %v797
        %2207 = vmatmul.mubr.bf16.gmra.mrb[0].mxu0 %v796
        %v2208 = vpop.f32.mrb[0].mxu0
        %v2209 = vadd.f32 %v2166, %v2208
        %v2210 = vpop.f32.mrb[0].mxu0
        %v2211 = vadd.f32 %v2168, %v2210
        %v2212 = vpop.f32.mrb[0].mxu0
        %v2213 = vadd.f32 %v2170, %v2212
        %v2214 = vpop.f32.mrb[0].mxu0
        %v2215 = vadd.f32 %v2172, %v2214
        %2216 = vdwg.mxu0
        %2217 = vmatprep.subr.bf16.mxu0 %v1769
        %2218 = vmatpush1.bf16.msra.mxu0 %v1768
        %2219 = vmatprep.subr.bf16.mxu0 %v1773
        %2220 = vmatpush1.bf16.msra.mxu0 %v1772
        %2221 = vmatprep.subr.bf16.mxu0 %v1777
        %2222 = vmatpush1.bf16.msra.mxu0 %v1776
        %2223 = vmatprep.subr.bf16.mxu0 %v1781
        %2224 = vmatpush1.bf16.msra.mxu0 %v1780
        %2225 = vmatprep.subr.bf16.mxu0 %v1785
        %2226 = vmatpush1.bf16.msra.mxu0 %v1784
        %2227 = vmatprep.subr.bf16.mxu0 %v1789
        %2228 = vmatpush1.bf16.msra.mxu0 %v1788
        %2229 = vmatprep.subr.bf16.mxu0 %v1793
        %2230 = vmatpush1.bf16.msra.mxu0 %v1792
        %2231 = vmatprep.subr.bf16.mxu0 %v1797
        %2232 = vmatpush1.bf16.msra.mxu0 %v1796
        %2233 = vmatprep.subr.bf16.mxu0 %v1801
        %2234 = vmatpush1.bf16.msra.mxu0 %v1800
        %2235 = vmatprep.subr.bf16.mxu0 %v1805
        %2236 = vmatpush1.bf16.msra.mxu0 %v1804
        %2237 = vmatprep.subr.bf16.mxu0 %v1809
        %2238 = vmatpush1.bf16.msra.mxu0 %v1808
        %2239 = vmatprep.subr.bf16.mxu0 %v1813
        %2240 = vmatpush1.bf16.msra.mxu0 %v1812
        %2241 = vmatprep.subr.bf16.mxu0 %v1817
        %2242 = vmatpush1.bf16.msra.mxu0 %v1816
        %2243 = vmatprep.subr.bf16.mxu0 %v1821
        %2244 = vmatpush1.bf16.msra.mxu0 %v1820
        %2245 = vmatprep.subr.bf16.mxu0 %v1825
        %2246 = vmatpush1.bf16.msra.mxu0 %v1824
        %2247 = vmatprep.subr.bf16.mxu0 %v1829
        %2248 = vmatpush1.bf16.msra.mxu0 %v1828
        %2249 = vmatprep.mubr.bf16.mxu0 %v799
        %2250 = vmatmul.mubr.bf16.gmra.mrb[0].mxu0 %v798
        %v2251 = vpop.f32.mrb[0].mxu0
        %v2252 = vadd.f32 %v2209, %v2251
        %v2253 = vpop.f32.mrb[0].mxu0
        %v2254 = vadd.f32 %v2211, %v2253
        %v2255 = vpop.f32.mrb[0].mxu0
        %v2256 = vadd.f32 %v2213, %v2255
        %v2257 = vpop.f32.mrb[0].mxu0
        %v2258 = vadd.f32 %v2215, %v2257
        %2259 = vdwg.mxu0
        %2260 = vmatprep.subr.bf16.mxu0 %v1579
        %2261 = vmatpush1.bf16.msra.mxu0 %v1578
        %2262 = vmatprep.subr.bf16.mxu0 %v1583
        %2263 = vmatpush1.bf16.msra.mxu0 %v1582
        %2264 = vmatprep.subr.bf16.mxu0 %v1587
        %2265 = vmatpush1.bf16.msra.mxu0 %v1586
        %2266 = vmatprep.subr.bf16.mxu0 %v1591
        %2267 = vmatpush1.bf16.msra.mxu0 %v1590
        %2268 = vmatprep.subr.bf16.mxu0 %v1595
        %2269 = vmatpush1.bf16.msra.mxu0 %v1594
        %2270 = vmatprep.subr.bf16.mxu0 %v1599
        %2271 = vmatpush1.bf16.msra.mxu0 %v1598
        %2272 = vmatprep.subr.bf16.mxu0 %v1603
        %2273 = vmatpush1.bf16.msra.mxu0 %v1602
        %2274 = vmatprep.subr.bf16.mxu0 %v1607
        %2275 = vmatpush1.bf16.msra.mxu0 %v1606
        %2276 = vmatprep.subr.bf16.mxu0 %v1611
        %2277 = vmatpush1.bf16.msra.mxu0 %v1610
        %2278 = vmatprep.subr.bf16.mxu0 %v1615
        %2279 = vmatpush1.bf16.msra.mxu0 %v1614
        %2280 = vmatprep.subr.bf16.mxu0 %v1619
        %2281 = vmatpush1.bf16.msra.mxu0 %v1618
        %2282 = vmatprep.subr.bf16.mxu0 %v1623
        %2283 = vmatpush1.bf16.msra.mxu0 %v1622
        %2284 = vmatprep.subr.bf16.mxu0 %v1627
        %2285 = vmatpush1.bf16.msra.mxu0 %v1626
        %2286 = vmatprep.subr.bf16.mxu0 %v1631
        %2287 = vmatpush1.bf16.msra.mxu0 %v1630
        %2288 = vmatprep.subr.bf16.mxu0 %v1635
        %2289 = vmatpush1.bf16.msra.mxu0 %v1634
        %2290 = vmatprep.subr.bf16.mxu0 %v1639
        %2291 = vmatpush1.bf16.msra.mxu0 %v1638
        %2292 = vmatprep.mubr.bf16.mxu0 %v793
        %2293 = vmatmul.mubr.bf16.gmra.mrb[0].mxu0 %v792
        %v2294 = vpop.f32.mrb[0].mxu0
        %v2295 = vadd.f32 %v759, %v2294
        %v2296 = vpop.f32.mrb[0].mxu0
        %v2297 = vadd.f32 %v763, %v2296
        %v2298 = vpop.f32.mrb[0].mxu0
        %v2299 = vadd.f32 %v759, %v2298
        %v2300 = vpop.f32.mrb[0].mxu0
        %v2301 = vadd.f32 %v763, %v2300
        %2302 = vdwg.mxu0
        %2303 = vmatprep.subr.bf16.mxu0 %v1643
        %2304 = vmatpush1.bf16.msra.mxu0 %v1642
        %2305 = vmatprep.subr.bf16.mxu0 %v1647
        %2306 = vmatpush1.bf16.msra.mxu0 %v1646
        %2307 = vmatprep.subr.bf16.mxu0 %v1651
        %2308 = vmatpush1.bf16.msra.mxu0 %v1650
        %2309 = vmatprep.subr.bf16.mxu0 %v1655
        %2310 = vmatpush1.bf16.msra.mxu0 %v1654
        %2311 = vmatprep.subr.bf16.mxu0 %v1659
        %2312 = vmatpush1.bf16.msra.mxu0 %v1658
        %2313 = vmatprep.subr.bf16.mxu0 %v1663
        %2314 = vmatpush1.bf16.msra.mxu0 %v1662
        %2315 = vmatprep.subr.bf16.mxu0 %v1667
        %2316 = vmatpush1.bf16.msra.mxu0 %v1666
        %2317 = vmatprep.subr.bf16.mxu0 %v1671
        %2318 = vmatpush1.bf16.msra.mxu0 %v1670
        %2319 = vmatprep.subr.bf16.mxu0 %v1675
        %2320 = vmatpush1.bf16.msra.mxu0 %v1674
        %2321 = vmatprep.subr.bf16.mxu0 %v1679
        %2322 = vmatpush1.bf16.msra.mxu0 %v1678
        %2323 = vmatprep.subr.bf16.mxu0 %v1683
        %2324 = vmatpush1.bf16.msra.mxu0 %v1682
        %2325 = vmatprep.subr.bf16.mxu0 %v1687
        %2326 = vmatpush1.bf16.msra.mxu0 %v1686
        %2327 = vmatprep.subr.bf16.mxu0 %v1691
        %2328 = vmatpush1.bf16.msra.mxu0 %v1690
        %2329 = vmatprep.subr.bf16.mxu0 %v1695
        %2330 = vmatpush1.bf16.msra.mxu0 %v1694
        %2331 = vmatprep.subr.bf16.mxu0 %v1699
        %2332 = vmatpush1.bf16.msra.mxu0 %v1698
        %2333 = vmatprep.subr.bf16.mxu0 %v1703
        %2334 = vmatpush1.bf16.msra.mxu0 %v1702
        %2335 = vmatprep.mubr.bf16.mxu0 %v795
        %2336 = vmatmul.mubr.bf16.gmra.mrb[0].mxu0 %v794
        %v2337 = vpop.f32.mrb[0].mxu0
        %v2338 = vadd.f32 %v2295, %v2337
        %v2339 = vpop.f32.mrb[0].mxu0
        %v2340 = vadd.f32 %v2297, %v2339
        %v2341 = vpop.f32.mrb[0].mxu0
        %v2342 = vadd.f32 %v2299, %v2341
        %v2343 = vpop.f32.mrb[0].mxu0
        %v2344 = vadd.f32 %v2301, %v2343
        %2345 = vdwg.mxu0
        %2346 = vmatprep.subr.bf16.mxu0 %v1707
        %2347 = vmatpush1.bf16.msra.mxu0 %v1706
        %2348 = vmatprep.subr.bf16.mxu0 %v1711
        %2349 = vmatpush1.bf16.msra.mxu0 %v1710
        %2350 = vmatprep.subr.bf16.mxu0 %v1715
        %2351 = vmatpush1.bf16.msra.mxu0 %v1714
        %2352 = vmatprep.subr.bf16.mxu0 %v1719
        %2353 = vmatpush1.bf16.msra.mxu0 %v1718
        %2354 = vmatprep.subr.bf16.mxu0 %v1723
        %2355 = vmatpush1.bf16.msra.mxu0 %v1722
        %2356 = vmatprep.subr.bf16.mxu0 %v1727
        %2357 = vmatpush1.bf16.msra.mxu0 %v1726
        %2358 = vmatprep.subr.bf16.mxu0 %v1731
        %2359 = vmatpush1.bf16.msra.mxu0 %v1730
        %2360 = vmatprep.subr.bf16.mxu0 %v1735
        %2361 = vmatpush1.bf16.msra.mxu0 %v1734
        %2362 = vmatprep.subr.bf16.mxu0 %v1739
        %2363 = vmatpush1.bf16.msra.mxu0 %v1738
        %2364 = vmatprep.subr.bf16.mxu0 %v1743
        %2365 = vmatpush1.bf16.msra.mxu0 %v1742
        %2366 = vmatprep.subr.bf16.mxu0 %v1747
        %2367 = vmatpush1.bf16.msra.mxu0 %v1746
        %2368 = vmatprep.subr.bf16.mxu0 %v1751
        %2369 = vmatpush1.bf16.msra.mxu0 %v1750
        %2370 = vmatprep.subr.bf16.mxu0 %v1755
        %2371 = vmatpush1.bf16.msra.mxu0 %v1754
        %2372 = vmatprep.subr.bf16.mxu0 %v1759
        %2373 = vmatpush1.bf16.msra.mxu0 %v1758
        %2374 = vmatprep.subr.bf16.mxu0 %v1763
        %2375 = vmatpush1.bf16.msra.mxu0 %v1762
        %2376 = vmatprep.subr.bf16.mxu0 %v1767
        %2377 = vmatpush1.bf16.msra.mxu0 %v1766
        %2378 = vmatprep.mubr.bf16.mxu0 %v797
        %2379 = vmatmul.mubr.bf16.gmra.mrb[0].mxu0 %v796
        %v2380 = vpop.f32.mrb[0].mxu0
        %v2381 = vadd.f32 %v2338, %v2380
        %v2382 = vpop.f32.mrb[0].mxu0
        %v2383 = vadd.f32 %v2340, %v2382
        %v2384 = vpop.f32.mrb[0].mxu0
        %v2385 = vadd.f32 %v2342, %v2384
        %v2386 = vpop.f32.mrb[0].mxu0
        %v2387 = vadd.f32 %v2344, %v2386
        %2388 = vdwg.mxu0
        %2389 = vmatprep.subr.bf16.mxu0 %v1771
        %2390 = vmatpush1.bf16.msra.mxu0 %v1770
        %2391 = vmatprep.subr.bf16.mxu0 %v1775
        %2392 = vmatpush1.bf16.msra.mxu0 %v1774
        %2393 = vmatprep.subr.bf16.mxu0 %v1779
        %2394 = vmatpush1.bf16.msra.mxu0 %v1778
        %2395 = vmatprep.subr.bf16.mxu0 %v1783
        %2396 = vmatpush1.bf16.msra.mxu0 %v1782
        %2397 = vmatprep.subr.bf16.mxu0 %v1787
        %2398 = vmatpush1.bf16.msra.mxu0 %v1786
        %2399 = vmatprep.subr.bf16.mxu0 %v1791
        %2400 = vmatpush1.bf16.msra.mxu0 %v1790
        %2401 = vmatprep.subr.bf16.mxu0 %v1795
        %2402 = vmatpush1.bf16.msra.mxu0 %v1794
        %2403 = vmatprep.subr.bf16.mxu0 %v1799
        %2404 = vmatpush1.bf16.msra.mxu0 %v1798
        %2405 = vmatprep.subr.bf16.mxu0 %v1803
        %2406 = vmatpush1.bf16.msra.mxu0 %v1802
        %2407 = vmatprep.subr.bf16.mxu0 %v1807
        %2408 = vmatpush1.bf16.msra.mxu0 %v1806
        %2409 = vmatprep.subr.bf16.mxu0 %v1811
        %2410 = vmatpush1.bf16.msra.mxu0 %v1810
        %2411 = vmatprep.subr.bf16.mxu0 %v1815
        %2412 = vmatpush1.bf16.msra.mxu0 %v1814
        %2413 = vmatprep.subr.bf16.mxu0 %v1819
        %2414 = vmatpush1.bf16.msra.mxu0 %v1818
        %2415 = vmatprep.subr.bf16.mxu0 %v1823
        %2416 = vmatpush1.bf16.msra.mxu0 %v1822
        %2417 = vmatprep.subr.bf16.mxu0 %v1827
        %2418 = vmatpush1.bf16.msra.mxu0 %v1826
        %2419 = vmatprep.subr.bf16.mxu0 %v1831
        %2420 = vmatpush1.bf16.msra.mxu0 %v1830
        %2421 = vmatprep.mubr.bf16.mxu0 %v799
        %2422 = vmatmul.mubr.bf16.gmra.mrb[0].mxu0 %v798
        %v2423 = vpop.f32.mrb[0].mxu0
        %v2424 = vadd.f32 %v2381, %v2423
        %v2425 = vpop.f32.mrb[0].mxu0
        %v2426 = vadd.f32 %v2383, %v2425
        %v2427 = vpop.f32.mrb[0].mxu0
        %v2428 = vadd.f32 %v2385, %v2427
        %v2429 = vpop.f32.mrb[0].mxu0
        %v2430 = vadd.f32 %v2387, %v2429
        %2431 = vdwg.mxu0
        %vm2432 = vcmp.ge.f32.partialorder %v2252, 0.0
        %vm2433 = vcmp.ge.f32.partialorder %v2254, 0.0
        %vm2434 = vcmp.ge.f32.partialorder %v2424, 0.0
        %vm2435 = vcmp.ge.f32.partialorder %v2426, 0.0
        %vm2436 = vcmp.ge.f32.partialorder %v2256, 0.0
        %vm2437 = vcmp.ge.f32.partialorder %v2258, 0.0
        %vm2438 = vcmp.ge.f32.partialorder %v2428, 0.0
        %vm2439 = vcmp.ge.f32.partialorder %v2430, 0.0
        %v2440 = vmul.f32 %v2252, 0.01
        %v2441 = vmul.f32 %v2254, 0.01
        %v2442 = vmul.f32 %v2424, 0.01
        %v2443 = vmul.f32 %v2426, 0.01
        %v2444 = vmul.f32 %v2256, 0.01
        %v2445 = vmul.f32 %v2258, 0.01
        %v2446 = vmul.f32 %v2428, 0.01
        %v2447 = vmul.f32 %v2430, 0.01
        %v2448 = vsel %vm2432, %v2252, %v2440
        %v2449 = vsel %vm2433, %v2254, %v2441
        %v2450 = vsel %vm2434, %v2424, %v2442
        %v2451 = vsel %vm2435, %v2426, %v2443
        %v2452 = vsel %vm2436, %v2256, %v2444
        %v2453 = vsel %vm2437, %v2258, %v2445
        %v2454 = vsel %vm2438, %v2428, %v2446
        %v2455 = vsel %vm2439, %v2430, %v2447
        %v2456 = vpack.c.bf16 %v2452, %v2448
        %v2457 = vpack.c.bf16 %v2453, %v2449
        %v2458 = vpack.c.bf16 %v2454, %v2450
        %v2459 = vpack.c.bf16 %v2455, %v2451
        %v2460 = vld [vmem:[#allocation7] sm:$0xff]
        %v2461 = vld [vmem:[#allocation7 + $0x8] sm:$0xff]
        %v2462 = vld [vmem:[#allocation7 + $0x10] sm:$0xff]
        %v2463 = vld [vmem:[#allocation7 + $0x18] sm:$0xff]
        %v2464 = vld [vmem:[#allocation7 + $0x20] sm:$0xff]
        %v2465 = vld [vmem:[#allocation7 + $0x28] sm:$0xff]
        %v2466 = vld [vmem:[#allocation7 + $0x30] sm:$0xff]
        %v2467 = vld [vmem:[#allocation7 + $0x38] sm:$0xff]
        %v2468 = vld [vmem:[#allocation7 + $0x40] sm:$0xff]
        %v2469 = vld [vmem:[#allocation7 + $0x48] sm:$0xff]
        %v2470 = vld [vmem:[#allocation7 + $0x50] sm:$0xff]
        %v2471 = vld [vmem:[#allocation7 + $0x58] sm:$0xff]
        %v2472 = vld [vmem:[#allocation7 + $0x60] sm:$0xff]
        %v2473 = vld [vmem:[#allocation7 + $0x68] sm:$0xff]
        %v2474 = vld [vmem:[#allocation7 + $0x70] sm:$0xff]
        %v2475 = vld [vmem:[#allocation7 + $0x78] sm:$0xff]
        %v2476 = vld [vmem:[#allocation7 + $0x80] sm:$0xff]
        %v2477 = vld [vmem:[#allocation7 + $0x88] sm:$0xff]
        %v2478 = vld [vmem:[#allocation7 + $0x90] sm:$0xff]
        %v2479 = vld [vmem:[#allocation7 + $0x98] sm:$0xff]
        %v2480 = vld [vmem:[#allocation7 + $0xa0] sm:$0xff]
        %v2481 = vld [vmem:[#allocation7 + $0xa8] sm:$0xff]
        %v2482 = vld [vmem:[#allocation7 + $0xb0] sm:$0xff]
        %v2483 = vld [vmem:[#allocation7 + $0xb8] sm:$0xff]
        %v2484 = vld [vmem:[#allocation7 + $0xc0] sm:$0xff]
        %v2485 = vld [vmem:[#allocation7 + $0xc8] sm:$0xff]
        %v2486 = vld [vmem:[#allocation7 + $0xd0] sm:$0xff]
        %v2487 = vld [vmem:[#allocation7 + $0xd8] sm:$0xff]
        %v2488 = vld [vmem:[#allocation7 + $0xe0] sm:$0xff]
        %v2489 = vld [vmem:[#allocation7 + $0xe8] sm:$0xff]
        %v2490 = vld [vmem:[#allocation7 + $0xf0] sm:$0xff]
        %v2491 = vld [vmem:[#allocation7 + $0xf8] sm:$0xff]
        %v2492 = vld [vmem:[#allocation7 + $0x100] sm:$0xff]
        %v2493 = vld [vmem:[#allocation7 + $0x108] sm:$0xff]
        %v2494 = vld [vmem:[#allocation7 + $0x110] sm:$0xff]
        %v2495 = vld [vmem:[#allocation7 + $0x118] sm:$0xff]
        %v2496 = vld [vmem:[#allocation7 + $0x120] sm:$0xff]
        %v2497 = vld [vmem:[#allocation7 + $0x128] sm:$0xff]
        %v2498 = vld [vmem:[#allocation7 + $0x130] sm:$0xff]
        %v2499 = vld [vmem:[#allocation7 + $0x138] sm:$0xff]
        %v2500 = vld [vmem:[#allocation7 + $0x140] sm:$0xff]
        %v2501 = vld [vmem:[#allocation7 + $0x148] sm:$0xff]
        %v2502 = vld [vmem:[#allocation7 + $0x150] sm:$0xff]
        %v2503 = vld [vmem:[#allocation7 + $0x158] sm:$0xff]
        %v2504 = vld [vmem:[#allocation7 + $0x160] sm:$0xff]
        %v2505 = vld [vmem:[#allocation7 + $0x168] sm:$0xff]
        %v2506 = vld [vmem:[#allocation7 + $0x170] sm:$0xff]
        %v2507 = vld [vmem:[#allocation7 + $0x178] sm:$0xff]
        %v2508 = vld [vmem:[#allocation7 + $0x180] sm:$0xff]
        %v2509 = vld [vmem:[#allocation7 + $0x188] sm:$0xff]
        %v2510 = vld [vmem:[#allocation7 + $0x190] sm:$0xff]
        %v2511 = vld [vmem:[#allocation7 + $0x198] sm:$0xff]
        %v2512 = vld [vmem:[#allocation7 + $0x1a0] sm:$0xff]
        %v2513 = vld [vmem:[#allocation7 + $0x1a8] sm:$0xff]
        %v2514 = vld [vmem:[#allocation7 + $0x1b0] sm:$0xff]
        %v2515 = vld [vmem:[#allocation7 + $0x1b8] sm:$0xff]
        %v2516 = vld [vmem:[#allocation7 + $0x1c0] sm:$0xff]
        %v2517 = vld [vmem:[#allocation7 + $0x1c8] sm:$0xff]
        %v2518 = vld [vmem:[#allocation7 + $0x1d0] sm:$0xff]
        %v2519 = vld [vmem:[#allocation7 + $0x1d8] sm:$0xff]
        %v2520 = vld [vmem:[#allocation7 + $0x1e0] sm:$0xff]
        %v2521 = vld [vmem:[#allocation7 + $0x1e8] sm:$0xff]
        %v2522 = vld [vmem:[#allocation7 + $0x1f0] sm:$0xff]
        %v2523 = vld [vmem:[#allocation7 + $0x1f8] sm:$0xff]
        %v2524 = vld [vmem:[#allocation7 + $0x200] sm:$0xff]
        %v2525 = vld [vmem:[#allocation7 + $0x208] sm:$0xff]
        %v2526 = vld [vmem:[#allocation7 + $0x210] sm:$0xff]
        %v2527 = vld [vmem:[#allocation7 + $0x218] sm:$0xff]
        %v2528 = vld [vmem:[#allocation7 + $0x220] sm:$0xff]
        %v2529 = vld [vmem:[#allocation7 + $0x228] sm:$0xff]
        %v2530 = vld [vmem:[#allocation7 + $0x230] sm:$0xff]
        %v2531 = vld [vmem:[#allocation7 + $0x238] sm:$0xff]
        %v2532 = vld [vmem:[#allocation7 + $0x240] sm:$0xff]
        %v2533 = vld [vmem:[#allocation7 + $0x248] sm:$0xff]
        %v2534 = vld [vmem:[#allocation7 + $0x250] sm:$0xff]
        %v2535 = vld [vmem:[#allocation7 + $0x258] sm:$0xff]
        %v2536 = vld [vmem:[#allocation7 + $0x260] sm:$0xff]
        %v2537 = vld [vmem:[#allocation7 + $0x268] sm:$0xff]
        %v2538 = vld [vmem:[#allocation7 + $0x270] sm:$0xff]
        %v2539 = vld [vmem:[#allocation7 + $0x278] sm:$0xff]
        %v2540 = vld [vmem:[#allocation7 + $0x280] sm:$0xff]
        %v2541 = vld [vmem:[#allocation7 + $0x288] sm:$0xff]
        %v2542 = vld [vmem:[#allocation7 + $0x290] sm:$0xff]
        %v2543 = vld [vmem:[#allocation7 + $0x298] sm:$0xff]
        %v2544 = vld [vmem:[#allocation7 + $0x2a0] sm:$0xff]
        %v2545 = vld [vmem:[#allocation7 + $0x2a8] sm:$0xff]
        %v2546 = vld [vmem:[#allocation7 + $0x2b0] sm:$0xff]
        %v2547 = vld [vmem:[#allocation7 + $0x2b8] sm:$0xff]
        %v2548 = vld [vmem:[#allocation7 + $0x2c0] sm:$0xff]
        %v2549 = vld [vmem:[#allocation7 + $0x2c8] sm:$0xff]
        %v2550 = vld [vmem:[#allocation7 + $0x2d0] sm:$0xff]
        %v2551 = vld [vmem:[#allocation7 + $0x2d8] sm:$0xff]
        %v2552 = vld [vmem:[#allocation7 + $0x2e0] sm:$0xff]
        %v2553 = vld [vmem:[#allocation7 + $0x2e8] sm:$0xff]
        %v2554 = vld [vmem:[#allocation7 + $0x2f0] sm:$0xff]
        %v2555 = vld [vmem:[#allocation7 + $0x2f8] sm:$0xff]
        %v2556 = vld [vmem:[#allocation7 + $0x300] sm:$0xff]
        %v2557 = vld [vmem:[#allocation7 + $0x308] sm:$0xff]
        %v2558 = vld [vmem:[#allocation7 + $0x310] sm:$0xff]
        %v2559 = vld [vmem:[#allocation7 + $0x318] sm:$0xff]
        %v2560 = vld [vmem:[#allocation7 + $0x320] sm:$0xff]
        %v2561 = vld [vmem:[#allocation7 + $0x328] sm:$0xff]
        %v2562 = vld [vmem:[#allocation7 + $0x330] sm:$0xff]
        %v2563 = vld [vmem:[#allocation7 + $0x338] sm:$0xff]
        %v2564 = vld [vmem:[#allocation7 + $0x340] sm:$0xff]
        %v2565 = vld [vmem:[#allocation7 + $0x348] sm:$0xff]
        %v2566 = vld [vmem:[#allocation7 + $0x350] sm:$0xff]
        %v2567 = vld [vmem:[#allocation7 + $0x358] sm:$0xff]
        %v2568 = vld [vmem:[#allocation7 + $0x360] sm:$0xff]
        %v2569 = vld [vmem:[#allocation7 + $0x368] sm:$0xff]
        %v2570 = vld [vmem:[#allocation7 + $0x370] sm:$0xff]
        %v2571 = vld [vmem:[#allocation7 + $0x378] sm:$0xff]
        %v2572 = vld [vmem:[#allocation7 + $0x380] sm:$0xff]
        %v2573 = vld [vmem:[#allocation7 + $0x388] sm:$0xff]
        %v2574 = vld [vmem:[#allocation7 + $0x390] sm:$0xff]
        %v2575 = vld [vmem:[#allocation7 + $0x398] sm:$0xff]
        %v2576 = vld [vmem:[#allocation7 + $0x3a0] sm:$0xff]
        %v2577 = vld [vmem:[#allocation7 + $0x3a8] sm:$0xff]
        %v2578 = vld [vmem:[#allocation7 + $0x3b0] sm:$0xff]
        %v2579 = vld [vmem:[#allocation7 + $0x3b8] sm:$0xff]
        %v2580 = vld [vmem:[#allocation7 + $0x3c0] sm:$0xff]
        %v2581 = vld [vmem:[#allocation7 + $0x3c8] sm:$0xff]
        %v2582 = vld [vmem:[#allocation7 + $0x3d0] sm:$0xff]
        %v2583 = vld [vmem:[#allocation7 + $0x3d8] sm:$0xff]
        %v2584 = vld [vmem:[#allocation7 + $0x3e0] sm:$0xff]
        %v2585 = vld [vmem:[#allocation7 + $0x3e8] sm:$0xff]
        %v2586 = vld [vmem:[#allocation7 + $0x3f0] sm:$0xff]
        %v2587 = vld [vmem:[#allocation7 + $0x3f8] sm:$0xff]
        %v2588 = vld [vmem:[%s4] sm:$0xf]
        %v2590 = vlaneseq
        %v2591 = vshrl.u32 %v2590, 7
        %v2592 = vsub.s32 0, %v2591
        %v2593 = vrot.slane %v2588, %v2592
        %v2594 = vlaneseq
        %v2595 = vshrl.u32 %v2594, 7
        %v2596 = vsub.s32 1, %v2595
        %v2597 = vrot.slane %v2588, %v2596
        %v2598 = vlaneseq
        %v2599 = vshrl.u32 %v2598, 7
        %v2600 = vsub.s32 2, %v2599
        %v2601 = vrot.slane %v2588, %v2600
        %v2602 = vlaneseq
        %v2603 = vshrl.u32 %v2602, 7
        %v2604 = vsub.s32 3, %v2603
        %v2605 = vrot.slane %v2588, %v2604
        %v2738 = vunpack.c.l.b16 %v2460
        %v2739 = vunpack.c.h.b16 %v2460
        %v2740 = vunpack.c.l.b16 %v2461
        %v2741 = vunpack.c.h.b16 %v2461
        %v2742 = vunpack.c.l.b16 %v2462
        %v2743 = vunpack.c.h.b16 %v2462
        %v2744 = vunpack.c.l.b16 %v2463
        %v2745 = vunpack.c.h.b16 %v2463
        %v2746 = vunpack.c.l.b16 %v2464
        %v2747 = vunpack.c.h.b16 %v2464
        %v2748 = vunpack.c.l.b16 %v2465
        %v2749 = vunpack.c.h.b16 %v2465
        %v2750 = vunpack.c.l.b16 %v2466
        %v2751 = vunpack.c.h.b16 %v2466
        %v2752 = vunpack.c.l.b16 %v2467
        %v2753 = vunpack.c.h.b16 %v2467
        %v2754 = vunpack.c.l.b16 %v2468
        %v2755 = vunpack.c.h.b16 %v2468
        %v2756 = vunpack.c.l.b16 %v2469
        %v2757 = vunpack.c.h.b16 %v2469
        %v2758 = vunpack.c.l.b16 %v2470
        %v2759 = vunpack.c.h.b16 %v2470
        %v2760 = vunpack.c.l.b16 %v2471
        %v2761 = vunpack.c.h.b16 %v2471
        %v2762 = vunpack.c.l.b16 %v2472
        %v2763 = vunpack.c.h.b16 %v2472
        %v2764 = vunpack.c.l.b16 %v2473
        %v2765 = vunpack.c.h.b16 %v2473
        %v2766 = vunpack.c.l.b16 %v2474
        %v2767 = vunpack.c.h.b16 %v2474
        %v2768 = vunpack.c.l.b16 %v2475
        %v2769 = vunpack.c.h.b16 %v2475
        %v2770 = vunpack.c.l.b16 %v2476
        %v2771 = vunpack.c.h.b16 %v2476
        %v2772 = vunpack.c.l.b16 %v2477
        %v2773 = vunpack.c.h.b16 %v2477
        %v2774 = vunpack.c.l.b16 %v2478
        %v2775 = vunpack.c.h.b16 %v2478
        %v2776 = vunpack.c.l.b16 %v2479
        %v2777 = vunpack.c.h.b16 %v2479
        %v2778 = vunpack.c.l.b16 %v2480
        %v2779 = vunpack.c.h.b16 %v2480
        %v2780 = vunpack.c.l.b16 %v2481
        %v2781 = vunpack.c.h.b16 %v2481
        %v2782 = vunpack.c.l.b16 %v2482
        %v2783 = vunpack.c.h.b16 %v2482
        %v2784 = vunpack.c.l.b16 %v2483
        %v2785 = vunpack.c.h.b16 %v2483
        %v2786 = vunpack.c.l.b16 %v2484
        %v2787 = vunpack.c.h.b16 %v2484
        %v2788 = vunpack.c.l.b16 %v2485
        %v2789 = vunpack.c.h.b16 %v2485
        %v2790 = vunpack.c.l.b16 %v2486
        %v2791 = vunpack.c.h.b16 %v2486
        %v2792 = vunpack.c.l.b16 %v2487
        %v2793 = vunpack.c.h.b16 %v2487
        %v2794 = vunpack.c.l.b16 %v2488
        %v2795 = vunpack.c.h.b16 %v2488
        %v2796 = vunpack.c.l.b16 %v2489
        %v2797 = vunpack.c.h.b16 %v2489
        %v2798 = vunpack.c.l.b16 %v2490
        %v2799 = vunpack.c.h.b16 %v2490
        %v2800 = vunpack.c.l.b16 %v2491
        %v2801 = vunpack.c.h.b16 %v2491
        %v2802 = vunpack.c.l.b16 %v2492
        %v2803 = vunpack.c.h.b16 %v2492
        %v2804 = vunpack.c.l.b16 %v2493
        %v2805 = vunpack.c.h.b16 %v2493
        %v2806 = vunpack.c.l.b16 %v2494
        %v2807 = vunpack.c.h.b16 %v2494
        %v2808 = vunpack.c.l.b16 %v2495
        %v2809 = vunpack.c.h.b16 %v2495
        %v2810 = vunpack.c.l.b16 %v2496
        %v2811 = vunpack.c.h.b16 %v2496
        %v2812 = vunpack.c.l.b16 %v2497
        %v2813 = vunpack.c.h.b16 %v2497
        %v2814 = vunpack.c.l.b16 %v2498
        %v2815 = vunpack.c.h.b16 %v2498
        %v2816 = vunpack.c.l.b16 %v2499
        %v2817 = vunpack.c.h.b16 %v2499
        %v2818 = vunpack.c.l.b16 %v2500
        %v2819 = vunpack.c.h.b16 %v2500
        %v2820 = vunpack.c.l.b16 %v2501
        %v2821 = vunpack.c.h.b16 %v2501
        %v2822 = vunpack.c.l.b16 %v2502
        %v2823 = vunpack.c.h.b16 %v2502
        %v2824 = vunpack.c.l.b16 %v2503
        %v2825 = vunpack.c.h.b16 %v2503
        %v2826 = vunpack.c.l.b16 %v2504
        %v2827 = vunpack.c.h.b16 %v2504
        %v2828 = vunpack.c.l.b16 %v2505
        %v2829 = vunpack.c.h.b16 %v2505
        %v2830 = vunpack.c.l.b16 %v2506
        %v2831 = vunpack.c.h.b16 %v2506
        %v2832 = vunpack.c.l.b16 %v2507
        %v2833 = vunpack.c.h.b16 %v2507
        %v2834 = vunpack.c.l.b16 %v2508
        %v2835 = vunpack.c.h.b16 %v2508
        %v2836 = vunpack.c.l.b16 %v2509
        %v2837 = vunpack.c.h.b16 %v2509
        %v2838 = vunpack.c.l.b16 %v2510
        %v2839 = vunpack.c.h.b16 %v2510
        %v2840 = vunpack.c.l.b16 %v2511
        %v2841 = vunpack.c.h.b16 %v2511
        %v2842 = vunpack.c.l.b16 %v2512
        %v2843 = vunpack.c.h.b16 %v2512
        %v2844 = vunpack.c.l.b16 %v2513
        %v2845 = vunpack.c.h.b16 %v2513
        %v2846 = vunpack.c.l.b16 %v2514
        %v2847 = vunpack.c.h.b16 %v2514
        %v2848 = vunpack.c.l.b16 %v2515
        %v2849 = vunpack.c.h.b16 %v2515
        %v2850 = vunpack.c.l.b16 %v2516
        %v2851 = vunpack.c.h.b16 %v2516
        %v2852 = vunpack.c.l.b16 %v2517
        %v2853 = vunpack.c.h.b16 %v2517
        %v2854 = vunpack.c.l.b16 %v2518
        %v2855 = vunpack.c.h.b16 %v2518
        %v2856 = vunpack.c.l.b16 %v2519
        %v2857 = vunpack.c.h.b16 %v2519
        %v2858 = vunpack.c.l.b16 %v2520
        %v2859 = vunpack.c.h.b16 %v2520
        %v2860 = vunpack.c.l.b16 %v2521
        %v2861 = vunpack.c.h.b16 %v2521
        %v2862 = vunpack.c.l.b16 %v2522
        %v2863 = vunpack.c.h.b16 %v2522
        %v2864 = vunpack.c.l.b16 %v2523
        %v2865 = vunpack.c.h.b16 %v2523
        %v2866 = vunpack.c.l.b16 %v2524
        %v2867 = vunpack.c.h.b16 %v2524
        %v2868 = vunpack.c.l.b16 %v2525
        %v2869 = vunpack.c.h.b16 %v2525
        %v2870 = vunpack.c.l.b16 %v2526
        %v2871 = vunpack.c.h.b16 %v2526
        %v2872 = vunpack.c.l.b16 %v2527
        %v2873 = vunpack.c.h.b16 %v2527
        %v2874 = vunpack.c.l.b16 %v2528
        %v2875 = vunpack.c.h.b16 %v2528
        %v2876 = vunpack.c.l.b16 %v2529
        %v2877 = vunpack.c.h.b16 %v2529
        %v2878 = vunpack.c.l.b16 %v2530
        %v2879 = vunpack.c.h.b16 %v2530
        %v2880 = vunpack.c.l.b16 %v2531
        %v2881 = vunpack.c.h.b16 %v2531
        %v2882 = vunpack.c.l.b16 %v2532
        %v2883 = vunpack.c.h.b16 %v2532
        %v2884 = vunpack.c.l.b16 %v2533
        %v2885 = vunpack.c.h.b16 %v2533
        %v2886 = vunpack.c.l.b16 %v2534
        %v2887 = vunpack.c.h.b16 %v2534
        %v2888 = vunpack.c.l.b16 %v2535
        %v2889 = vunpack.c.h.b16 %v2535
        %v2890 = vunpack.c.l.b16 %v2536
        %v2891 = vunpack.c.h.b16 %v2536
        %v2892 = vunpack.c.l.b16 %v2537
        %v2893 = vunpack.c.h.b16 %v2537
        %v2894 = vunpack.c.l.b16 %v2538
        %v2895 = vunpack.c.h.b16 %v2538
        %v2896 = vunpack.c.l.b16 %v2539
        %v2897 = vunpack.c.h.b16 %v2539
        %v2898 = vunpack.c.l.b16 %v2540
        %v2899 = vunpack.c.h.b16 %v2540
        %v2900 = vunpack.c.l.b16 %v2541
        %v2901 = vunpack.c.h.b16 %v2541
        %v2902 = vunpack.c.l.b16 %v2542
        %v2903 = vunpack.c.h.b16 %v2542
        %v2904 = vunpack.c.l.b16 %v2543
        %v2905 = vunpack.c.h.b16 %v2543
        %v2906 = vunpack.c.l.b16 %v2544
        %v2907 = vunpack.c.h.b16 %v2544
        %v2908 = vunpack.c.l.b16 %v2545
        %v2909 = vunpack.c.h.b16 %v2545
        %v2910 = vunpack.c.l.b16 %v2546
        %v2911 = vunpack.c.h.b16 %v2546
        %v2912 = vunpack.c.l.b16 %v2547
        %v2913 = vunpack.c.h.b16 %v2547
        %v2914 = vunpack.c.l.b16 %v2548
        %v2915 = vunpack.c.h.b16 %v2548
        %v2916 = vunpack.c.l.b16 %v2549
        %v2917 = vunpack.c.h.b16 %v2549
        %v2918 = vunpack.c.l.b16 %v2550
        %v2919 = vunpack.c.h.b16 %v2550
        %v2920 = vunpack.c.l.b16 %v2551
        %v2921 = vunpack.c.h.b16 %v2551
        %v2922 = vunpack.c.l.b16 %v2552
        %v2923 = vunpack.c.h.b16 %v2552
        %v2924 = vunpack.c.l.b16 %v2553
        %v2925 = vunpack.c.h.b16 %v2553
        %v2926 = vunpack.c.l.b16 %v2554
        %v2927 = vunpack.c.h.b16 %v2554
        %v2928 = vunpack.c.l.b16 %v2555
        %v2929 = vunpack.c.h.b16 %v2555
        %v2930 = vunpack.c.l.b16 %v2556
        %v2931 = vunpack.c.h.b16 %v2556
        %v2932 = vunpack.c.l.b16 %v2557
        %v2933 = vunpack.c.h.b16 %v2557
        %v2934 = vunpack.c.l.b16 %v2558
        %v2935 = vunpack.c.h.b16 %v2558
        %v2936 = vunpack.c.l.b16 %v2559
        %v2937 = vunpack.c.h.b16 %v2559
        %v2938 = vunpack.c.l.b16 %v2560
        %v2939 = vunpack.c.h.b16 %v2560
        %v2940 = vunpack.c.l.b16 %v2561
        %v2941 = vunpack.c.h.b16 %v2561
        %v2942 = vunpack.c.l.b16 %v2562
        %v2943 = vunpack.c.h.b16 %v2562
        %v2944 = vunpack.c.l.b16 %v2563
        %v2945 = vunpack.c.h.b16 %v2563
        %v2946 = vunpack.c.l.b16 %v2564
        %v2947 = vunpack.c.h.b16 %v2564
        %v2948 = vunpack.c.l.b16 %v2565
        %v2949 = vunpack.c.h.b16 %v2565
        %v2950 = vunpack.c.l.b16 %v2566
        %v2951 = vunpack.c.h.b16 %v2566
        %v2952 = vunpack.c.l.b16 %v2567
        %v2953 = vunpack.c.h.b16 %v2567
        %v2954 = vunpack.c.l.b16 %v2568
        %v2955 = vunpack.c.h.b16 %v2568
        %v2956 = vunpack.c.l.b16 %v2569
        %v2957 = vunpack.c.h.b16 %v2569
        %v2958 = vunpack.c.l.b16 %v2570
        %v2959 = vunpack.c.h.b16 %v2570
        %v2960 = vunpack.c.l.b16 %v2571
        %v2961 = vunpack.c.h.b16 %v2571
        %v2962 = vunpack.c.l.b16 %v2572
        %v2963 = vunpack.c.h.b16 %v2572
        %v2964 = vunpack.c.l.b16 %v2573
        %v2965 = vunpack.c.h.b16 %v2573
        %v2966 = vunpack.c.l.b16 %v2574
        %v2967 = vunpack.c.h.b16 %v2574
        %v2968 = vunpack.c.l.b16 %v2575
        %v2969 = vunpack.c.h.b16 %v2575
        %v2970 = vunpack.c.l.b16 %v2576
        %v2971 = vunpack.c.h.b16 %v2576
        %v2972 = vunpack.c.l.b16 %v2577
        %v2973 = vunpack.c.h.b16 %v2577
        %v2974 = vunpack.c.l.b16 %v2578
        %v2975 = vunpack.c.h.b16 %v2578
        %v2976 = vunpack.c.l.b16 %v2579
        %v2977 = vunpack.c.h.b16 %v2579
        %v2978 = vunpack.c.l.b16 %v2580
        %v2979 = vunpack.c.h.b16 %v2580
        %v2980 = vunpack.c.l.b16 %v2581
        %v2981 = vunpack.c.h.b16 %v2581
        %v2982 = vunpack.c.l.b16 %v2582
        %v2983 = vunpack.c.h.b16 %v2582
        %v2984 = vunpack.c.l.b16 %v2583
        %v2985 = vunpack.c.h.b16 %v2583
        %v2986 = vunpack.c.l.b16 %v2584
        %v2987 = vunpack.c.h.b16 %v2584
        %v2988 = vunpack.c.l.b16 %v2585
        %v2989 = vunpack.c.h.b16 %v2585
        %v2990 = vunpack.c.l.b16 %v2586
        %v2991 = vunpack.c.h.b16 %v2586
        %v2992 = vunpack.c.l.b16 %v2587
        %v2993 = vunpack.c.h.b16 %v2587
        %v2994 = vpack.c.b16 %v2742, %v2738
        %v2995 = vpack.c.b16 %v2743, %v2739
        %v2996 = vpack.c.b16 %v2744, %v2740
        %v2997 = vpack.c.b16 %v2745, %v2741
        %v2998 = vpack.c.b16 %v2750, %v2746
        %v2999 = vpack.c.b16 %v2751, %v2747
        %v3000 = vpack.c.b16 %v2752, %v2748
        %v3001 = vpack.c.b16 %v2753, %v2749
        %v3002 = vpack.c.b16 %v2758, %v2754
        %v3003 = vpack.c.b16 %v2759, %v2755
        %v3004 = vpack.c.b16 %v2760, %v2756
        %v3005 = vpack.c.b16 %v2761, %v2757
        %v3006 = vpack.c.b16 %v2766, %v2762
        %v3007 = vpack.c.b16 %v2767, %v2763
        %v3008 = vpack.c.b16 %v2768, %v2764
        %v3009 = vpack.c.b16 %v2769, %v2765
        %v3010 = vpack.c.b16 %v2774, %v2770
        %v3011 = vpack.c.b16 %v2775, %v2771
        %v3012 = vpack.c.b16 %v2776, %v2772
        %v3013 = vpack.c.b16 %v2777, %v2773
        %v3014 = vpack.c.b16 %v2782, %v2778
        %v3015 = vpack.c.b16 %v2783, %v2779
        %v3016 = vpack.c.b16 %v2784, %v2780
        %v3017 = vpack.c.b16 %v2785, %v2781
        %v3018 = vpack.c.b16 %v2790, %v2786
        %v3019 = vpack.c.b16 %v2791, %v2787
        %v3020 = vpack.c.b16 %v2792, %v2788
        %v3021 = vpack.c.b16 %v2793, %v2789
        %v3022 = vpack.c.b16 %v2798, %v2794
        %v3023 = vpack.c.b16 %v2799, %v2795
        %v3024 = vpack.c.b16 %v2800, %v2796
        %v3025 = vpack.c.b16 %v2801, %v2797
        %v3026 = vpack.c.b16 %v2806, %v2802
        %v3027 = vpack.c.b16 %v2807, %v2803
        %v3028 = vpack.c.b16 %v2808, %v2804
        %v3029 = vpack.c.b16 %v2809, %v2805
        %v3030 = vpack.c.b16 %v2814, %v2810
        %v3031 = vpack.c.b16 %v2815, %v2811
        %v3032 = vpack.c.b16 %v2816, %v2812
        %v3033 = vpack.c.b16 %v2817, %v2813
        %v3034 = vpack.c.b16 %v2822, %v2818
        %v3035 = vpack.c.b16 %v2823, %v2819
        %v3036 = vpack.c.b16 %v2824, %v2820
        %v3037 = vpack.c.b16 %v2825, %v2821
        %v3038 = vpack.c.b16 %v2830, %v2826
        %v3039 = vpack.c.b16 %v2831, %v2827
        %v3040 = vpack.c.b16 %v2832, %v2828
        %v3041 = vpack.c.b16 %v2833, %v2829
        %v3042 = vpack.c.b16 %v2838, %v2834
        %v3043 = vpack.c.b16 %v2839, %v2835
        %v3044 = vpack.c.b16 %v2840, %v2836
        %v3045 = vpack.c.b16 %v2841, %v2837
        %v3046 = vpack.c.b16 %v2846, %v2842
        %v3047 = vpack.c.b16 %v2847, %v2843
        %v3048 = vpack.c.b16 %v2848, %v2844
        %v3049 = vpack.c.b16 %v2849, %v2845
        %v3050 = vpack.c.b16 %v2854, %v2850
        %v3051 = vpack.c.b16 %v2855, %v2851
        %v3052 = vpack.c.b16 %v2856, %v2852
        %v3053 = vpack.c.b16 %v2857, %v2853
        %v3054 = vpack.c.b16 %v2862, %v2858
        %v3055 = vpack.c.b16 %v2863, %v2859
        %v3056 = vpack.c.b16 %v2864, %v2860
        %v3057 = vpack.c.b16 %v2865, %v2861
        %v3058 = vpack.c.b16 %v2870, %v2866
        %v3059 = vpack.c.b16 %v2871, %v2867
        %v3060 = vpack.c.b16 %v2872, %v2868
        %v3061 = vpack.c.b16 %v2873, %v2869
        %v3062 = vpack.c.b16 %v2878, %v2874
        %v3063 = vpack.c.b16 %v2879, %v2875
        %v3064 = vpack.c.b16 %v2880, %v2876
        %v3065 = vpack.c.b16 %v2881, %v2877
        %v3066 = vpack.c.b16 %v2886, %v2882
        %v3067 = vpack.c.b16 %v2887, %v2883
        %v3068 = vpack.c.b16 %v2888, %v2884
        %v3069 = vpack.c.b16 %v2889, %v2885
        %v3070 = vpack.c.b16 %v2894, %v2890
        %v3071 = vpack.c.b16 %v2895, %v2891
        %v3072 = vpack.c.b16 %v2896, %v2892
        %v3073 = vpack.c.b16 %v2897, %v2893
        %v3074 = vpack.c.b16 %v2902, %v2898
        %v3075 = vpack.c.b16 %v2903, %v2899
        %v3076 = vpack.c.b16 %v2904, %v2900
        %v3077 = vpack.c.b16 %v2905, %v2901
        %v3078 = vpack.c.b16 %v2910, %v2906
        %v3079 = vpack.c.b16 %v2911, %v2907
        %v3080 = vpack.c.b16 %v2912, %v2908
        %v3081 = vpack.c.b16 %v2913, %v2909
        %v3082 = vpack.c.b16 %v2918, %v2914
        %v3083 = vpack.c.b16 %v2919, %v2915
        %v3084 = vpack.c.b16 %v2920, %v2916
        %v3085 = vpack.c.b16 %v2921, %v2917
        %v3086 = vpack.c.b16 %v2926, %v2922
        %v3087 = vpack.c.b16 %v2927, %v2923
        %v3088 = vpack.c.b16 %v2928, %v2924
        %v3089 = vpack.c.b16 %v2929, %v2925
        %v3090 = vpack.c.b16 %v2934, %v2930
        %v3091 = vpack.c.b16 %v2935, %v2931
        %v3092 = vpack.c.b16 %v2936, %v2932
        %v3093 = vpack.c.b16 %v2937, %v2933
        %v3094 = vpack.c.b16 %v2942, %v2938
        %v3095 = vpack.c.b16 %v2943, %v2939
        %v3096 = vpack.c.b16 %v2944, %v2940
        %v3097 = vpack.c.b16 %v2945, %v2941
        %v3098 = vpack.c.b16 %v2950, %v2946
        %v3099 = vpack.c.b16 %v2951, %v2947
        %v3100 = vpack.c.b16 %v2952, %v2948
        %v3101 = vpack.c.b16 %v2953, %v2949
        %v3102 = vpack.c.b16 %v2958, %v2954
        %v3103 = vpack.c.b16 %v2959, %v2955
        %v3104 = vpack.c.b16 %v2960, %v2956
        %v3105 = vpack.c.b16 %v2961, %v2957
        %v3106 = vpack.c.b16 %v2966, %v2962
        %v3107 = vpack.c.b16 %v2967, %v2963
        %v3108 = vpack.c.b16 %v2968, %v2964
        %v3109 = vpack.c.b16 %v2969, %v2965
        %v3110 = vpack.c.b16 %v2974, %v2970
        %v3111 = vpack.c.b16 %v2975, %v2971
        %v3112 = vpack.c.b16 %v2976, %v2972
        %v3113 = vpack.c.b16 %v2977, %v2973
        %v3114 = vpack.c.b16 %v2982, %v2978
        %v3115 = vpack.c.b16 %v2983, %v2979
        %v3116 = vpack.c.b16 %v2984, %v2980
        %v3117 = vpack.c.b16 %v2985, %v2981
        %v3118 = vpack.c.b16 %v2990, %v2986
        %v3119 = vpack.c.b16 %v2991, %v2987
        %v3120 = vpack.c.b16 %v2992, %v2988
        %v3121 = vpack.c.b16 %v2993, %v2989
        %3250 = vmatprep.subr.bf16.mxu0 %v2995
        %3251 = vmatpush1.bf16.msra.mxu0 %v2994
        %3252 = vmatprep.subr.bf16.mxu0 %v2999
        %3253 = vmatpush1.bf16.msra.mxu0 %v2998
        %3254 = vmatprep.subr.bf16.mxu0 %v3003
        %3255 = vmatpush1.bf16.msra.mxu0 %v3002
        %3256 = vmatprep.subr.bf16.mxu0 %v3007
        %3257 = vmatpush1.bf16.msra.mxu0 %v3006
        %3258 = vmatprep.subr.bf16.mxu0 %v3011
        %3259 = vmatpush1.bf16.msra.mxu0 %v3010
        %3260 = vmatprep.subr.bf16.mxu0 %v3015
        %3261 = vmatpush1.bf16.msra.mxu0 %v3014
        %3262 = vmatprep.subr.bf16.mxu0 %v3019
        %3263 = vmatpush1.bf16.msra.mxu0 %v3018
        %3264 = vmatprep.subr.bf16.mxu0 %v3023
        %3265 = vmatpush1.bf16.msra.mxu0 %v3022
        %3266 = vmatprep.subr.bf16.mxu0 %v3027
        %3267 = vmatpush1.bf16.msra.mxu0 %v3026
        %3268 = vmatprep.subr.bf16.mxu0 %v3031
        %3269 = vmatpush1.bf16.msra.mxu0 %v3030
        %3270 = vmatprep.subr.bf16.mxu0 %v3035
        %3271 = vmatpush1.bf16.msra.mxu0 %v3034
        %3272 = vmatprep.subr.bf16.mxu0 %v3039
        %3273 = vmatpush1.bf16.msra.mxu0 %v3038
        %3274 = vmatprep.subr.bf16.mxu0 %v3043
        %3275 = vmatpush1.bf16.msra.mxu0 %v3042
        %3276 = vmatprep.subr.bf16.mxu0 %v3047
        %3277 = vmatpush1.bf16.msra.mxu0 %v3046
        %3278 = vmatprep.subr.bf16.mxu0 %v3051
        %3279 = vmatpush1.bf16.msra.mxu0 %v3050
        %3280 = vmatprep.subr.bf16.mxu0 %v3055
        %3281 = vmatpush1.bf16.msra.mxu0 %v3054
        %3282 = vmatprep.mubr.bf16.mxu0 %v2457
        %3283 = vmatmul.mubr.bf16.gmra.mrb[0].mxu0 %v2456
        %v3284 = vpop.f32.mrb[0].mxu0
        %v3285 = vadd.f32 %v2593, %v3284
        %v3286 = vpop.f32.mrb[0].mxu0
        %v3287 = vadd.f32 %v2597, %v3286
        %v3288 = vpop.f32.mrb[0].mxu0
        %v3289 = vadd.f32 %v2593, %v3288
        %v3290 = vpop.f32.mrb[0].mxu0
        %v3291 = vadd.f32 %v2597, %v3290
        %3292 = vdwg.mxu0
        %3293 = vmatprep.subr.bf16.mxu0 %v3059
        %3294 = vmatpush1.bf16.msra.mxu0 %v3058
        %3295 = vmatprep.subr.bf16.mxu0 %v3063
        %3296 = vmatpush1.bf16.msra.mxu0 %v3062
        %3297 = vmatprep.subr.bf16.mxu0 %v3067
        %3298 = vmatpush1.bf16.msra.mxu0 %v3066
        %3299 = vmatprep.subr.bf16.mxu0 %v3071
        %3300 = vmatpush1.bf16.msra.mxu0 %v3070
        %3301 = vmatprep.subr.bf16.mxu0 %v3075
        %3302 = vmatpush1.bf16.msra.mxu0 %v3074
        %3303 = vmatprep.subr.bf16.mxu0 %v3079
        %3304 = vmatpush1.bf16.msra.mxu0 %v3078
        %3305 = vmatprep.subr.bf16.mxu0 %v3083
        %3306 = vmatpush1.bf16.msra.mxu0 %v3082
        %3307 = vmatprep.subr.bf16.mxu0 %v3087
        %3308 = vmatpush1.bf16.msra.mxu0 %v3086
        %3309 = vmatprep.subr.bf16.mxu0 %v3091
        %3310 = vmatpush1.bf16.msra.mxu0 %v3090
        %3311 = vmatprep.subr.bf16.mxu0 %v3095
        %3312 = vmatpush1.bf16.msra.mxu0 %v3094
        %3313 = vmatprep.subr.bf16.mxu0 %v3099
        %3314 = vmatpush1.bf16.msra.mxu0 %v3098
        %3315 = vmatprep.subr.bf16.mxu0 %v3103
        %3316 = vmatpush1.bf16.msra.mxu0 %v3102
        %3317 = vmatprep.subr.bf16.mxu0 %v3107
        %3318 = vmatpush1.bf16.msra.mxu0 %v3106
        %3319 = vmatprep.subr.bf16.mxu0 %v3111
        %3320 = vmatpush1.bf16.msra.mxu0 %v3110
        %3321 = vmatprep.subr.bf16.mxu0 %v3115
        %3322 = vmatpush1.bf16.msra.mxu0 %v3114
        %3323 = vmatprep.subr.bf16.mxu0 %v3119
        %3324 = vmatpush1.bf16.msra.mxu0 %v3118
        %3325 = vmatprep.mubr.bf16.mxu0 %v2459
        %3326 = vmatmul.mubr.bf16.gmra.mrb[0].mxu0 %v2458
        %v3327 = vpop.f32.mrb[0].mxu0
        %v3328 = vadd.f32 %v3285, %v3327
        %v3329 = vpop.f32.mrb[0].mxu0
        %v3330 = vadd.f32 %v3287, %v3329
        %v3331 = vpop.f32.mrb[0].mxu0
        %v3332 = vadd.f32 %v3289, %v3331
        %v3333 = vpop.f32.mrb[0].mxu0
        %v3334 = vadd.f32 %v3291, %v3333
        %3335 = vdwg.mxu0
        %3336 = vmatprep.subr.bf16.mxu0 %v2997
        %3337 = vmatpush1.bf16.msra.mxu0 %v2996
        %3338 = vmatprep.subr.bf16.mxu0 %v3001
        %3339 = vmatpush1.bf16.msra.mxu0 %v3000
        %3340 = vmatprep.subr.bf16.mxu0 %v3005
        %3341 = vmatpush1.bf16.msra.mxu0 %v3004
        %3342 = vmatprep.subr.bf16.mxu0 %v3009
        %3343 = vmatpush1.bf16.msra.mxu0 %v3008
        %3344 = vmatprep.subr.bf16.mxu0 %v3013
        %3345 = vmatpush1.bf16.msra.mxu0 %v3012
        %3346 = vmatprep.subr.bf16.mxu0 %v3017
        %3347 = vmatpush1.bf16.msra.mxu0 %v3016
        %3348 = vmatprep.subr.bf16.mxu0 %v3021
        %3349 = vmatpush1.bf16.msra.mxu0 %v3020
        %3350 = vmatprep.subr.bf16.mxu0 %v3025
        %3351 = vmatpush1.bf16.msra.mxu0 %v3024
        %3352 = vmatprep.subr.bf16.mxu0 %v3029
        %3353 = vmatpush1.bf16.msra.mxu0 %v3028
        %3354 = vmatprep.subr.bf16.mxu0 %v3033
        %3355 = vmatpush1.bf16.msra.mxu0 %v3032
        %3356 = vmatprep.subr.bf16.mxu0 %v3037
        %3357 = vmatpush1.bf16.msra.mxu0 %v3036
        %3358 = vmatprep.subr.bf16.mxu0 %v3041
        %3359 = vmatpush1.bf16.msra.mxu0 %v3040
        %3360 = vmatprep.subr.bf16.mxu0 %v3045
        %3361 = vmatpush1.bf16.msra.mxu0 %v3044
        %3362 = vmatprep.subr.bf16.mxu0 %v3049
        %3363 = vmatpush1.bf16.msra.mxu0 %v3048
        %3364 = vmatprep.subr.bf16.mxu0 %v3053
        %3365 = vmatpush1.bf16.msra.mxu0 %v3052
        %3366 = vmatprep.subr.bf16.mxu0 %v3057
        %3367 = vmatpush1.bf16.msra.mxu0 %v3056
        %3368 = vmatprep.mubr.bf16.mxu0 %v2457
        %3369 = vmatmul.mubr.bf16.gmra.mrb[0].mxu0 %v2456
        %v3370 = vpop.f32.mrb[0].mxu0
        %v3371 = vadd.f32 %v2601, %v3370
        %v3372 = vpop.f32.mrb[0].mxu0
        %v3373 = vadd.f32 %v2605, %v3372
        %v3374 = vpop.f32.mrb[0].mxu0
        %v3375 = vadd.f32 %v2601, %v3374
        %v3376 = vpop.f32.mrb[0].mxu0
        %v3377 = vadd.f32 %v2605, %v3376
        %3378 = vdwg.mxu0
        %3379 = vmatprep.subr.bf16.mxu0 %v3061
        %3380 = vmatpush1.bf16.msra.mxu0 %v3060
        %3381 = vmatprep.subr.bf16.mxu0 %v3065
        %3382 = vmatpush1.bf16.msra.mxu0 %v3064
        %3383 = vmatprep.subr.bf16.mxu0 %v3069
        %3384 = vmatpush1.bf16.msra.mxu0 %v3068
        %3385 = vmatprep.subr.bf16.mxu0 %v3073
        %3386 = vmatpush1.bf16.msra.mxu0 %v3072
        %3387 = vmatprep.subr.bf16.mxu0 %v3077
        %3388 = vmatpush1.bf16.msra.mxu0 %v3076
        %3389 = vmatprep.subr.bf16.mxu0 %v3081
        %3390 = vmatpush1.bf16.msra.mxu0 %v3080
        %3391 = vmatprep.subr.bf16.mxu0 %v3085
        %3392 = vmatpush1.bf16.msra.mxu0 %v3084
        %3393 = vmatprep.subr.bf16.mxu0 %v3089
        %3394 = vmatpush1.bf16.msra.mxu0 %v3088
        %3395 = vmatprep.subr.bf16.mxu0 %v3093
        %3396 = vmatpush1.bf16.msra.mxu0 %v3092
        %3397 = vmatprep.subr.bf16.mxu0 %v3097
        %3398 = vmatpush1.bf16.msra.mxu0 %v3096
        %3399 = vmatprep.subr.bf16.mxu0 %v3101
        %3400 = vmatpush1.bf16.msra.mxu0 %v3100
        %3401 = vmatprep.subr.bf16.mxu0 %v3105
        %3402 = vmatpush1.bf16.msra.mxu0 %v3104
        %3403 = vmatprep.subr.bf16.mxu0 %v3109
        %3404 = vmatpush1.bf16.msra.mxu0 %v3108
        %3405 = vmatprep.subr.bf16.mxu0 %v3113
        %3406 = vmatpush1.bf16.msra.mxu0 %v3112
        %3407 = vmatprep.subr.bf16.mxu0 %v3117
        %3408 = vmatpush1.bf16.msra.mxu0 %v3116
        %3409 = vmatprep.subr.bf16.mxu0 %v3121
        %3410 = vmatpush1.bf16.msra.mxu0 %v3120
        %3411 = vmatprep.mubr.bf16.mxu0 %v2459
        %3412 = vmatmul.mubr.bf16.gmra.mrb[0].mxu0 %v2458
        %v3413 = vpop.f32.mrb[0].mxu0
        %v3414 = vadd.f32 %v3371, %v3413
        %v3415 = vpop.f32.mrb[0].mxu0
        %v3416 = vadd.f32 %v3373, %v3415
        %v3417 = vpop.f32.mrb[0].mxu0
        %v3418 = vadd.f32 %v3375, %v3417
        %v3419 = vpop.f32.mrb[0].mxu0
        %v3420 = vadd.f32 %v3377, %v3419
        %3421 = vdwg.mxu0
        %vm3422 = vcmp.ge.f32.partialorder %v3328, 0.0
        %vm3423 = vcmp.ge.f32.partialorder %v3330, 0.0
        %vm3424 = vcmp.ge.f32.partialorder %v3414, 0.0
        %vm3425 = vcmp.ge.f32.partialorder %v3416, 0.0
        %vm3426 = vcmp.ge.f32.partialorder %v3332, 0.0
        %vm3427 = vcmp.ge.f32.partialorder %v3334, 0.0
        %vm3428 = vcmp.ge.f32.partialorder %v3418, 0.0
        %vm3429 = vcmp.ge.f32.partialorder %v3420, 0.0
        %v3430 = vmul.f32 %v3328, 0.01
        %v3431 = vmul.f32 %v3330, 0.01
        %v3432 = vmul.f32 %v3414, 0.01
        %v3433 = vmul.f32 %v3416, 0.01
        %v3434 = vmul.f32 %v3332, 0.01
        %v3435 = vmul.f32 %v3334, 0.01
        %v3436 = vmul.f32 %v3418, 0.01
        %v3437 = vmul.f32 %v3420, 0.01
        %v3438 = vsel %vm3422, %v3328, %v3430
        %v3439 = vsel %vm3423, %v3330, %v3431
        %v3440 = vsel %vm3424, %v3414, %v3432
        %v3441 = vsel %vm3425, %v3416, %v3433
        %v3442 = vsel %vm3426, %v3332, %v3434
        %v3443 = vsel %vm3427, %v3334, %v3435
        %v3444 = vsel %vm3428, %v3418, %v3436
        %v3445 = vsel %vm3429, %v3420, %v3437
        %v3446 = vpack.c.bf16 %v3442, %v3438
        %v3447 = vpack.c.bf16 %v3443, %v3439
        %v3448 = vpack.c.bf16 %v3444, %v3440
        %v3449 = vpack.c.bf16 %v3445, %v3441
        %v3450 = vld [vmem:[#allocation8] sm:$0xff]
        %v3451 = vld [vmem:[#allocation8 + $0x8] sm:$0xff]
        %v3452 = vld [vmem:[#allocation8 + $0x10] sm:$0xff]
        %v3453 = vld [vmem:[#allocation8 + $0x18] sm:$0xff]
        %v3454 = vld [vmem:[#allocation8 + $0x20] sm:$0xff]
        %v3455 = vld [vmem:[#allocation8 + $0x28] sm:$0xff]
        %v3456 = vld [vmem:[#allocation8 + $0x30] sm:$0xff]
        %v3457 = vld [vmem:[#allocation8 + $0x38] sm:$0xff]
        %v3458 = vld [vmem:[#allocation8 + $0x40] sm:$0xff]
        %v3459 = vld [vmem:[#allocation8 + $0x48] sm:$0xff]
        %v3460 = vld [vmem:[#allocation8 + $0x50] sm:$0xff]
        %v3461 = vld [vmem:[#allocation8 + $0x58] sm:$0xff]
        %v3462 = vld [vmem:[#allocation8 + $0x60] sm:$0xff]
        %v3463 = vld [vmem:[#allocation8 + $0x68] sm:$0xff]
        %v3464 = vld [vmem:[#allocation8 + $0x70] sm:$0xff]
        %v3465 = vld [vmem:[#allocation8 + $0x78] sm:$0xff]
        %v3466 = vld [vmem:[#allocation8 + $0x80] sm:$0xff]
        %v3467 = vld [vmem:[#allocation8 + $0x88] sm:$0xff]
        %v3468 = vld [vmem:[#allocation8 + $0x90] sm:$0xff]
        %v3469 = vld [vmem:[#allocation8 + $0x98] sm:$0xff]
        %v3470 = vld [vmem:[#allocation8 + $0xa0] sm:$0xff]
        %v3471 = vld [vmem:[#allocation8 + $0xa8] sm:$0xff]
        %v3472 = vld [vmem:[#allocation8 + $0xb0] sm:$0xff]
        %v3473 = vld [vmem:[#allocation8 + $0xb8] sm:$0xff]
        %v3474 = vld [vmem:[#allocation8 + $0xc0] sm:$0xff]
        %v3475 = vld [vmem:[#allocation8 + $0xc8] sm:$0xff]
        %v3476 = vld [vmem:[#allocation8 + $0xd0] sm:$0xff]
        %v3477 = vld [vmem:[#allocation8 + $0xd8] sm:$0xff]
        %v3478 = vld [vmem:[#allocation8 + $0xe0] sm:$0xff]
        %v3479 = vld [vmem:[#allocation8 + $0xe8] sm:$0xff]
        %v3480 = vld [vmem:[#allocation8 + $0xf0] sm:$0xff]
        %v3481 = vld [vmem:[#allocation8 + $0xf8] sm:$0xff]
        %v3482 = vld [vmem:[#allocation8 + $0x100] sm:$0xff]
        %v3483 = vld [vmem:[#allocation8 + $0x108] sm:$0xff]
        %v3484 = vld [vmem:[#allocation8 + $0x110] sm:$0xff]
        %v3485 = vld [vmem:[#allocation8 + $0x118] sm:$0xff]
        %v3486 = vld [vmem:[#allocation8 + $0x120] sm:$0xff]
        %v3487 = vld [vmem:[#allocation8 + $0x128] sm:$0xff]
        %v3488 = vld [vmem:[#allocation8 + $0x130] sm:$0xff]
        %v3489 = vld [vmem:[#allocation8 + $0x138] sm:$0xff]
        %v3490 = vld [vmem:[#allocation8 + $0x140] sm:$0xff]
        %v3491 = vld [vmem:[#allocation8 + $0x148] sm:$0xff]
        %v3492 = vld [vmem:[#allocation8 + $0x150] sm:$0xff]
        %v3493 = vld [vmem:[#allocation8 + $0x158] sm:$0xff]
        %v3494 = vld [vmem:[#allocation8 + $0x160] sm:$0xff]
        %v3495 = vld [vmem:[#allocation8 + $0x168] sm:$0xff]
        %v3496 = vld [vmem:[#allocation8 + $0x170] sm:$0xff]
        %v3497 = vld [vmem:[#allocation8 + $0x178] sm:$0xff]
        %v3498 = vld [vmem:[#allocation8 + $0x180] sm:$0xff]
        %v3499 = vld [vmem:[#allocation8 + $0x188] sm:$0xff]
        %v3500 = vld [vmem:[#allocation8 + $0x190] sm:$0xff]
        %v3501 = vld [vmem:[#allocation8 + $0x198] sm:$0xff]
        %v3502 = vld [vmem:[#allocation8 + $0x1a0] sm:$0xff]
        %v3503 = vld [vmem:[#allocation8 + $0x1a8] sm:$0xff]
        %v3504 = vld [vmem:[#allocation8 + $0x1b0] sm:$0xff]
        %v3505 = vld [vmem:[#allocation8 + $0x1b8] sm:$0xff]
        %v3506 = vld [vmem:[#allocation8 + $0x1c0] sm:$0xff]
        %v3507 = vld [vmem:[#allocation8 + $0x1c8] sm:$0xff]
        %v3508 = vld [vmem:[#allocation8 + $0x1d0] sm:$0xff]
        %v3509 = vld [vmem:[#allocation8 + $0x1d8] sm:$0xff]
        %v3510 = vld [vmem:[#allocation8 + $0x1e0] sm:$0xff]
        %v3511 = vld [vmem:[#allocation8 + $0x1e8] sm:$0xff]
        %v3512 = vld [vmem:[#allocation8 + $0x1f0] sm:$0xff]
        %v3513 = vld [vmem:[#allocation8 + $0x1f8] sm:$0xff]
        %v3514 = vld [vmem:[#allocation8 + $0x200] sm:$0xff]
        %v3515 = vld [vmem:[#allocation8 + $0x208] sm:$0xff]
        %v3516 = vld [vmem:[#allocation8 + $0x210] sm:$0xff]
        %v3517 = vld [vmem:[#allocation8 + $0x218] sm:$0xff]
        %v3518 = vld [vmem:[#allocation8 + $0x220] sm:$0xff]
        %v3519 = vld [vmem:[#allocation8 + $0x228] sm:$0xff]
        %v3520 = vld [vmem:[#allocation8 + $0x230] sm:$0xff]
        %v3521 = vld [vmem:[#allocation8 + $0x238] sm:$0xff]
        %v3522 = vld [vmem:[#allocation8 + $0x240] sm:$0xff]
        %v3523 = vld [vmem:[#allocation8 + $0x248] sm:$0xff]
        %v3524 = vld [vmem:[#allocation8 + $0x250] sm:$0xff]
        %v3525 = vld [vmem:[#allocation8 + $0x258] sm:$0xff]
        %v3526 = vld [vmem:[#allocation8 + $0x260] sm:$0xff]
        %v3527 = vld [vmem:[#allocation8 + $0x268] sm:$0xff]
        %v3528 = vld [vmem:[#allocation8 + $0x270] sm:$0xff]
        %v3529 = vld [vmem:[#allocation8 + $0x278] sm:$0xff]
        %v3530 = vld [vmem:[#allocation8 + $0x280] sm:$0xff]
        %v3531 = vld [vmem:[#allocation8 + $0x288] sm:$0xff]
        %v3532 = vld [vmem:[#allocation8 + $0x290] sm:$0xff]
        %v3533 = vld [vmem:[#allocation8 + $0x298] sm:$0xff]
        %v3534 = vld [vmem:[#allocation8 + $0x2a0] sm:$0xff]
        %v3535 = vld [vmem:[#allocation8 + $0x2a8] sm:$0xff]
        %v3536 = vld [vmem:[#allocation8 + $0x2b0] sm:$0xff]
        %v3537 = vld [vmem:[#allocation8 + $0x2b8] sm:$0xff]
        %v3538 = vld [vmem:[#allocation8 + $0x2c0] sm:$0xff]
        %v3539 = vld [vmem:[#allocation8 + $0x2c8] sm:$0xff]
        %v3540 = vld [vmem:[#allocation8 + $0x2d0] sm:$0xff]
        %v3541 = vld [vmem:[#allocation8 + $0x2d8] sm:$0xff]
        %v3542 = vld [vmem:[#allocation8 + $0x2e0] sm:$0xff]
        %v3543 = vld [vmem:[#allocation8 + $0x2e8] sm:$0xff]
        %v3544 = vld [vmem:[#allocation8 + $0x2f0] sm:$0xff]
        %v3545 = vld [vmem:[#allocation8 + $0x2f8] sm:$0xff]
        %v3546 = vld [vmem:[#allocation8 + $0x300] sm:$0xff]
        %v3547 = vld [vmem:[#allocation8 + $0x308] sm:$0xff]
        %v3548 = vld [vmem:[#allocation8 + $0x310] sm:$0xff]
        %v3549 = vld [vmem:[#allocation8 + $0x318] sm:$0xff]
        %v3550 = vld [vmem:[#allocation8 + $0x320] sm:$0xff]
        %v3551 = vld [vmem:[#allocation8 + $0x328] sm:$0xff]
        %v3552 = vld [vmem:[#allocation8 + $0x330] sm:$0xff]
        %v3553 = vld [vmem:[#allocation8 + $0x338] sm:$0xff]
        %v3554 = vld [vmem:[#allocation8 + $0x340] sm:$0xff]
        %v3555 = vld [vmem:[#allocation8 + $0x348] sm:$0xff]
        %v3556 = vld [vmem:[#allocation8 + $0x350] sm:$0xff]
        %v3557 = vld [vmem:[#allocation8 + $0x358] sm:$0xff]
        %v3558 = vld [vmem:[#allocation8 + $0x360] sm:$0xff]
        %v3559 = vld [vmem:[#allocation8 + $0x368] sm:$0xff]
        %v3560 = vld [vmem:[#allocation8 + $0x370] sm:$0xff]
        %v3561 = vld [vmem:[#allocation8 + $0x378] sm:$0xff]
        %v3562 = vld [vmem:[#allocation8 + $0x380] sm:$0xff]
        %v3563 = vld [vmem:[#allocation8 + $0x388] sm:$0xff]
        %v3564 = vld [vmem:[#allocation8 + $0x390] sm:$0xff]
        %v3565 = vld [vmem:[#allocation8 + $0x398] sm:$0xff]
        %v3566 = vld [vmem:[#allocation8 + $0x3a0] sm:$0xff]
        %v3567 = vld [vmem:[#allocation8 + $0x3a8] sm:$0xff]
        %v3568 = vld [vmem:[#allocation8 + $0x3b0] sm:$0xff]
        %v3569 = vld [vmem:[#allocation8 + $0x3b8] sm:$0xff]
        %v3570 = vld [vmem:[#allocation8 + $0x3c0] sm:$0xff]
        %v3571 = vld [vmem:[#allocation8 + $0x3c8] sm:$0xff]
        %v3572 = vld [vmem:[#allocation8 + $0x3d0] sm:$0xff]
        %v3573 = vld [vmem:[#allocation8 + $0x3d8] sm:$0xff]
        %v3574 = vld [vmem:[#allocation8 + $0x3e0] sm:$0xff]
        %v3575 = vld [vmem:[#allocation8 + $0x3e8] sm:$0xff]
        %v3576 = vld [vmem:[#allocation8 + $0x3f0] sm:$0xff]
        %v3577 = vld [vmem:[#allocation8 + $0x3f8] sm:$0xff]
        %v3578 = vld [vmem:[%s6] sm:$0xf]
        %v3580 = vlaneseq
        %v3581 = vshrl.u32 %v3580, 7
        %v3582 = vsub.s32 0, %v3581
        %v3583 = vrot.slane %v3578, %v3582
        %v3584 = vlaneseq
        %v3585 = vshrl.u32 %v3584, 7
        %v3586 = vsub.s32 1, %v3585
        %v3587 = vrot.slane %v3578, %v3586
        %v3588 = vlaneseq
        %v3589 = vshrl.u32 %v3588, 7
        %v3590 = vsub.s32 2, %v3589
        %v3591 = vrot.slane %v3578, %v3590
        %v3592 = vlaneseq
        %v3593 = vshrl.u32 %v3592, 7
        %v3594 = vsub.s32 3, %v3593
        %v3595 = vrot.slane %v3578, %v3594
        %v3728 = vunpack.c.l.b16 %v3450
        %v3729 = vunpack.c.h.b16 %v3450
        %v3730 = vunpack.c.l.b16 %v3451
        %v3731 = vunpack.c.h.b16 %v3451
        %v3732 = vunpack.c.l.b16 %v3452
        %v3733 = vunpack.c.h.b16 %v3452
        %v3734 = vunpack.c.l.b16 %v3453
        %v3735 = vunpack.c.h.b16 %v3453
        %v3736 = vunpack.c.l.b16 %v3454
        %v3737 = vunpack.c.h.b16 %v3454
        %v3738 = vunpack.c.l.b16 %v3455
        %v3739 = vunpack.c.h.b16 %v3455
        %v3740 = vunpack.c.l.b16 %v3456
        %v3741 = vunpack.c.h.b16 %v3456
        %v3742 = vunpack.c.l.b16 %v3457
        %v3743 = vunpack.c.h.b16 %v3457
        %v3744 = vunpack.c.l.b16 %v3458
        %v3745 = vunpack.c.h.b16 %v3458
        %v3746 = vunpack.c.l.b16 %v3459
        %v3747 = vunpack.c.h.b16 %v3459
        %v3748 = vunpack.c.l.b16 %v3460
        %v3749 = vunpack.c.h.b16 %v3460
        %v3750 = vunpack.c.l.b16 %v3461
        %v3751 = vunpack.c.h.b16 %v3461
        %v3752 = vunpack.c.l.b16 %v3462
        %v3753 = vunpack.c.h.b16 %v3462
        %v3754 = vunpack.c.l.b16 %v3463
        %v3755 = vunpack.c.h.b16 %v3463
        %v3756 = vunpack.c.l.b16 %v3464
        %v3757 = vunpack.c.h.b16 %v3464
        %v3758 = vunpack.c.l.b16 %v3465
        %v3759 = vunpack.c.h.b16 %v3465
        %v3760 = vunpack.c.l.b16 %v3466
        %v3761 = vunpack.c.h.b16 %v3466
        %v3762 = vunpack.c.l.b16 %v3467
        %v3763 = vunpack.c.h.b16 %v3467
        %v3764 = vunpack.c.l.b16 %v3468
        %v3765 = vunpack.c.h.b16 %v3468
        %v3766 = vunpack.c.l.b16 %v3469
        %v3767 = vunpack.c.h.b16 %v3469
        %v3768 = vunpack.c.l.b16 %v3470
        %v3769 = vunpack.c.h.b16 %v3470
        %v3770 = vunpack.c.l.b16 %v3471
        %v3771 = vunpack.c.h.b16 %v3471
        %v3772 = vunpack.c.l.b16 %v3472
        %v3773 = vunpack.c.h.b16 %v3472
        %v3774 = vunpack.c.l.b16 %v3473
        %v3775 = vunpack.c.h.b16 %v3473
        %v3776 = vunpack.c.l.b16 %v3474
        %v3777 = vunpack.c.h.b16 %v3474
        %v3778 = vunpack.c.l.b16 %v3475
        %v3779 = vunpack.c.h.b16 %v3475
        %v3780 = vunpack.c.l.b16 %v3476
        %v3781 = vunpack.c.h.b16 %v3476
        %v3782 = vunpack.c.l.b16 %v3477
        %v3783 = vunpack.c.h.b16 %v3477
        %v3784 = vunpack.c.l.b16 %v3478
        %v3785 = vunpack.c.h.b16 %v3478
        %v3786 = vunpack.c.l.b16 %v3479
        %v3787 = vunpack.c.h.b16 %v3479
        %v3788 = vunpack.c.l.b16 %v3480
        %v3789 = vunpack.c.h.b16 %v3480
        %v3790 = vunpack.c.l.b16 %v3481
        %v3791 = vunpack.c.h.b16 %v3481
        %v3792 = vunpack.c.l.b16 %v3482
        %v3793 = vunpack.c.h.b16 %v3482
        %v3794 = vunpack.c.l.b16 %v3483
        %v3795 = vunpack.c.h.b16 %v3483
        %v3796 = vunpack.c.l.b16 %v3484
        %v3797 = vunpack.c.h.b16 %v3484
        %v3798 = vunpack.c.l.b16 %v3485
        %v3799 = vunpack.c.h.b16 %v3485
        %v3800 = vunpack.c.l.b16 %v3486
        %v3801 = vunpack.c.h.b16 %v3486
        %v3802 = vunpack.c.l.b16 %v3487
        %v3803 = vunpack.c.h.b16 %v3487
        %v3804 = vunpack.c.l.b16 %v3488
        %v3805 = vunpack.c.h.b16 %v3488
        %v3806 = vunpack.c.l.b16 %v3489
        %v3807 = vunpack.c.h.b16 %v3489
        %v3808 = vunpack.c.l.b16 %v3490
        %v3809 = vunpack.c.h.b16 %v3490
        %v3810 = vunpack.c.l.b16 %v3491
        %v3811 = vunpack.c.h.b16 %v3491
        %v3812 = vunpack.c.l.b16 %v3492
        %v3813 = vunpack.c.h.b16 %v3492
        %v3814 = vunpack.c.l.b16 %v3493
        %v3815 = vunpack.c.h.b16 %v3493
        %v3816 = vunpack.c.l.b16 %v3494
        %v3817 = vunpack.c.h.b16 %v3494
        %v3818 = vunpack.c.l.b16 %v3495
        %v3819 = vunpack.c.h.b16 %v3495
        %v3820 = vunpack.c.l.b16 %v3496
        %v3821 = vunpack.c.h.b16 %v3496
        %v3822 = vunpack.c.l.b16 %v3497
        %v3823 = vunpack.c.h.b16 %v3497
        %v3824 = vunpack.c.l.b16 %v3498
        %v3825 = vunpack.c.h.b16 %v3498
        %v3826 = vunpack.c.l.b16 %v3499
        %v3827 = vunpack.c.h.b16 %v3499
        %v3828 = vunpack.c.l.b16 %v3500
        %v3829 = vunpack.c.h.b16 %v3500
        %v3830 = vunpack.c.l.b16 %v3501
        %v3831 = vunpack.c.h.b16 %v3501
        %v3832 = vunpack.c.l.b16 %v3502
        %v3833 = vunpack.c.h.b16 %v3502
        %v3834 = vunpack.c.l.b16 %v3503
        %v3835 = vunpack.c.h.b16 %v3503
        %v3836 = vunpack.c.l.b16 %v3504
        %v3837 = vunpack.c.h.b16 %v3504
        %v3838 = vunpack.c.l.b16 %v3505
        %v3839 = vunpack.c.h.b16 %v3505
        %v3840 = vunpack.c.l.b16 %v3506
        %v3841 = vunpack.c.h.b16 %v3506
        %v3842 = vunpack.c.l.b16 %v3507
        %v3843 = vunpack.c.h.b16 %v3507
        %v3844 = vunpack.c.l.b16 %v3508
        %v3845 = vunpack.c.h.b16 %v3508
        %v3846 = vunpack.c.l.b16 %v3509
        %v3847 = vunpack.c.h.b16 %v3509
        %v3848 = vunpack.c.l.b16 %v3510
        %v3849 = vunpack.c.h.b16 %v3510
        %v3850 = vunpack.c.l.b16 %v3511
        %v3851 = vunpack.c.h.b16 %v3511
        %v3852 = vunpack.c.l.b16 %v3512
        %v3853 = vunpack.c.h.b16 %v3512
        %v3854 = vunpack.c.l.b16 %v3513
        %v3855 = vunpack.c.h.b16 %v3513
        %v3856 = vunpack.c.l.b16 %v3514
        %v3857 = vunpack.c.h.b16 %v3514
        %v3858 = vunpack.c.l.b16 %v3515
        %v3859 = vunpack.c.h.b16 %v3515
        %v3860 = vunpack.c.l.b16 %v3516
        %v3861 = vunpack.c.h.b16 %v3516
        %v3862 = vunpack.c.l.b16 %v3517
        %v3863 = vunpack.c.h.b16 %v3517
        %v3864 = vunpack.c.l.b16 %v3518
        %v3865 = vunpack.c.h.b16 %v3518
        %v3866 = vunpack.c.l.b16 %v3519
        %v3867 = vunpack.c.h.b16 %v3519
        %v3868 = vunpack.c.l.b16 %v3520
        %v3869 = vunpack.c.h.b16 %v3520
        %v3870 = vunpack.c.l.b16 %v3521
        %v3871 = vunpack.c.h.b16 %v3521
        %v3872 = vunpack.c.l.b16 %v3522
        %v3873 = vunpack.c.h.b16 %v3522
        %v3874 = vunpack.c.l.b16 %v3523
        %v3875 = vunpack.c.h.b16 %v3523
        %v3876 = vunpack.c.l.b16 %v3524
        %v3877 = vunpack.c.h.b16 %v3524
        %v3878 = vunpack.c.l.b16 %v3525
        %v3879 = vunpack.c.h.b16 %v3525
        %v3880 = vunpack.c.l.b16 %v3526
        %v3881 = vunpack.c.h.b16 %v3526
        %v3882 = vunpack.c.l.b16 %v3527
        %v3883 = vunpack.c.h.b16 %v3527
        %v3884 = vunpack.c.l.b16 %v3528
        %v3885 = vunpack.c.h.b16 %v3528
        %v3886 = vunpack.c.l.b16 %v3529
        %v3887 = vunpack.c.h.b16 %v3529
        %v3888 = vunpack.c.l.b16 %v3530
        %v3889 = vunpack.c.h.b16 %v3530
        %v3890 = vunpack.c.l.b16 %v3531
        %v3891 = vunpack.c.h.b16 %v3531
        %v3892 = vunpack.c.l.b16 %v3532
        %v3893 = vunpack.c.h.b16 %v3532
        %v3894 = vunpack.c.l.b16 %v3533
        %v3895 = vunpack.c.h.b16 %v3533
        %v3896 = vunpack.c.l.b16 %v3534
        %v3897 = vunpack.c.h.b16 %v3534
        %v3898 = vunpack.c.l.b16 %v3535
        %v3899 = vunpack.c.h.b16 %v3535
        %v3900 = vunpack.c.l.b16 %v3536
        %v3901 = vunpack.c.h.b16 %v3536
        %v3902 = vunpack.c.l.b16 %v3537
        %v3903 = vunpack.c.h.b16 %v3537
        %v3904 = vunpack.c.l.b16 %v3538
        %v3905 = vunpack.c.h.b16 %v3538
        %v3906 = vunpack.c.l.b16 %v3539
        %v3907 = vunpack.c.h.b16 %v3539
        %v3908 = vunpack.c.l.b16 %v3540
        %v3909 = vunpack.c.h.b16 %v3540
        %v3910 = vunpack.c.l.b16 %v3541
        %v3911 = vunpack.c.h.b16 %v3541
        %v3912 = vunpack.c.l.b16 %v3542
        %v3913 = vunpack.c.h.b16 %v3542
        %v3914 = vunpack.c.l.b16 %v3543
        %v3915 = vunpack.c.h.b16 %v3543
        %v3916 = vunpack.c.l.b16 %v3544
        %v3917 = vunpack.c.h.b16 %v3544
        %v3918 = vunpack.c.l.b16 %v3545
        %v3919 = vunpack.c.h.b16 %v3545
        %v3920 = vunpack.c.l.b16 %v3546
        %v3921 = vunpack.c.h.b16 %v3546
        %v3922 = vunpack.c.l.b16 %v3547
        %v3923 = vunpack.c.h.b16 %v3547
        %v3924 = vunpack.c.l.b16 %v3548
        %v3925 = vunpack.c.h.b16 %v3548
        %v3926 = vunpack.c.l.b16 %v3549
        %v3927 = vunpack.c.h.b16 %v3549
        %v3928 = vunpack.c.l.b16 %v3550
        %v3929 = vunpack.c.h.b16 %v3550
        %v3930 = vunpack.c.l.b16 %v3551
        %v3931 = vunpack.c.h.b16 %v3551
        %v3932 = vunpack.c.l.b16 %v3552
        %v3933 = vunpack.c.h.b16 %v3552
        %v3934 = vunpack.c.l.b16 %v3553
        %v3935 = vunpack.c.h.b16 %v3553
        %v3936 = vunpack.c.l.b16 %v3554
        %v3937 = vunpack.c.h.b16 %v3554
        %v3938 = vunpack.c.l.b16 %v3555
        %v3939 = vunpack.c.h.b16 %v3555
        %v3940 = vunpack.c.l.b16 %v3556
        %v3941 = vunpack.c.h.b16 %v3556
        %v3942 = vunpack.c.l.b16 %v3557
        %v3943 = vunpack.c.h.b16 %v3557
        %v3944 = vunpack.c.l.b16 %v3558
        %v3945 = vunpack.c.h.b16 %v3558
        %v3946 = vunpack.c.l.b16 %v3559
        %v3947 = vunpack.c.h.b16 %v3559
        %v3948 = vunpack.c.l.b16 %v3560
        %v3949 = vunpack.c.h.b16 %v3560
        %v3950 = vunpack.c.l.b16 %v3561
        %v3951 = vunpack.c.h.b16 %v3561
        %v3952 = vunpack.c.l.b16 %v3562
        %v3953 = vunpack.c.h.b16 %v3562
        %v3954 = vunpack.c.l.b16 %v3563
        %v3955 = vunpack.c.h.b16 %v3563
        %v3956 = vunpack.c.l.b16 %v3564
        %v3957 = vunpack.c.h.b16 %v3564
        %v3958 = vunpack.c.l.b16 %v3565
        %v3959 = vunpack.c.h.b16 %v3565
        %v3960 = vunpack.c.l.b16 %v3566
        %v3961 = vunpack.c.h.b16 %v3566
        %v3962 = vunpack.c.l.b16 %v3567
        %v3963 = vunpack.c.h.b16 %v3567
        %v3964 = vunpack.c.l.b16 %v3568
        %v3965 = vunpack.c.h.b16 %v3568
        %v3966 = vunpack.c.l.b16 %v3569
        %v3967 = vunpack.c.h.b16 %v3569
        %v3968 = vunpack.c.l.b16 %v3570
        %v3969 = vunpack.c.h.b16 %v3570
        %v3970 = vunpack.c.l.b16 %v3571
        %v3971 = vunpack.c.h.b16 %v3571
        %v3972 = vunpack.c.l.b16 %v3572
        %v3973 = vunpack.c.h.b16 %v3572
        %v3974 = vunpack.c.l.b16 %v3573
        %v3975 = vunpack.c.h.b16 %v3573
        %v3976 = vunpack.c.l.b16 %v3574
        %v3977 = vunpack.c.h.b16 %v3574
        %v3978 = vunpack.c.l.b16 %v3575
        %v3979 = vunpack.c.h.b16 %v3575
        %v3980 = vunpack.c.l.b16 %v3576
        %v3981 = vunpack.c.h.b16 %v3576
        %v3982 = vunpack.c.l.b16 %v3577
        %v3983 = vunpack.c.h.b16 %v3577
        %v3984 = vpack.c.b16 %v3732, %v3728
        %v3985 = vpack.c.b16 %v3733, %v3729
        %v3986 = vpack.c.b16 %v3734, %v3730
        %v3987 = vpack.c.b16 %v3735, %v3731
        %v3988 = vpack.c.b16 %v3740, %v3736
        %v3989 = vpack.c.b16 %v3741, %v3737
        %v3990 = vpack.c.b16 %v3742, %v3738
        %v3991 = vpack.c.b16 %v3743, %v3739
        %v3992 = vpack.c.b16 %v3748, %v3744
        %v3993 = vpack.c.b16 %v3749, %v3745
        %v3994 = vpack.c.b16 %v3750, %v3746
        %v3995 = vpack.c.b16 %v3751, %v3747
        %v3996 = vpack.c.b16 %v3756, %v3752
        %v3997 = vpack.c.b16 %v3757, %v3753
        %v3998 = vpack.c.b16 %v3758, %v3754
        %v3999 = vpack.c.b16 %v3759, %v3755
        %v4000 = vpack.c.b16 %v3764, %v3760
        %v4001 = vpack.c.b16 %v3765, %v3761
        %v4002 = vpack.c.b16 %v3766, %v3762
        %v4003 = vpack.c.b16 %v3767, %v3763
        %v4004 = vpack.c.b16 %v3772, %v3768
        %v4005 = vpack.c.b16 %v3773, %v3769
        %v4006 = vpack.c.b16 %v3774, %v3770
        %v4007 = vpack.c.b16 %v3775, %v3771
        %v4008 = vpack.c.b16 %v3780, %v3776
        %v4009 = vpack.c.b16 %v3781, %v3777
        %v4010 = vpack.c.b16 %v3782, %v3778
        %v4011 = vpack.c.b16 %v3783, %v3779
        %v4012 = vpack.c.b16 %v3788, %v3784
        %v4013 = vpack.c.b16 %v3789, %v3785
        %v4014 = vpack.c.b16 %v3790, %v3786
        %v4015 = vpack.c.b16 %v3791, %v3787
        %v4016 = vpack.c.b16 %v3796, %v3792
        %v4017 = vpack.c.b16 %v3797, %v3793
        %v4018 = vpack.c.b16 %v3798, %v3794
        %v4019 = vpack.c.b16 %v3799, %v3795
        %v4020 = vpack.c.b16 %v3804, %v3800
        %v4021 = vpack.c.b16 %v3805, %v3801
        %v4022 = vpack.c.b16 %v3806, %v3802
        %v4023 = vpack.c.b16 %v3807, %v3803
        %v4024 = vpack.c.b16 %v3812, %v3808
        %v4025 = vpack.c.b16 %v3813, %v3809
        %v4026 = vpack.c.b16 %v3814, %v3810
        %v4027 = vpack.c.b16 %v3815, %v3811
        %v4028 = vpack.c.b16 %v3820, %v3816
        %v4029 = vpack.c.b16 %v3821, %v3817
        %v4030 = vpack.c.b16 %v3822, %v3818
        %v4031 = vpack.c.b16 %v3823, %v3819
        %v4032 = vpack.c.b16 %v3828, %v3824
        %v4033 = vpack.c.b16 %v3829, %v3825
        %v4034 = vpack.c.b16 %v3830, %v3826
        %v4035 = vpack.c.b16 %v3831, %v3827
        %v4036 = vpack.c.b16 %v3836, %v3832
        %v4037 = vpack.c.b16 %v3837, %v3833
        %v4038 = vpack.c.b16 %v3838, %v3834
        %v4039 = vpack.c.b16 %v3839, %v3835
        %v4040 = vpack.c.b16 %v3844, %v3840
        %v4041 = vpack.c.b16 %v3845, %v3841
        %v4042 = vpack.c.b16 %v3846, %v3842
        %v4043 = vpack.c.b16 %v3847, %v3843
        %v4044 = vpack.c.b16 %v3852, %v3848
        %v4045 = vpack.c.b16 %v3853, %v3849
        %v4046 = vpack.c.b16 %v3854, %v3850
        %v4047 = vpack.c.b16 %v3855, %v3851
        %v4048 = vpack.c.b16 %v3860, %v3856
        %v4049 = vpack.c.b16 %v3861, %v3857
        %v4050 = vpack.c.b16 %v3862, %v3858
        %v4051 = vpack.c.b16 %v3863, %v3859
        %v4052 = vpack.c.b16 %v3868, %v3864
        %v4053 = vpack.c.b16 %v3869, %v3865
        %v4054 = vpack.c.b16 %v3870, %v3866
        %v4055 = vpack.c.b16 %v3871, %v3867
        %v4056 = vpack.c.b16 %v3876, %v3872
        %v4057 = vpack.c.b16 %v3877, %v3873
        %v4058 = vpack.c.b16 %v3878, %v3874
        %v4059 = vpack.c.b16 %v3879, %v3875
        %v4060 = vpack.c.b16 %v3884, %v3880
        %v4061 = vpack.c.b16 %v3885, %v3881
        %v4062 = vpack.c.b16 %v3886, %v3882
        %v4063 = vpack.c.b16 %v3887, %v3883
        %v4064 = vpack.c.b16 %v3892, %v3888
        %v4065 = vpack.c.b16 %v3893, %v3889
        %v4066 = vpack.c.b16 %v3894, %v3890
        %v4067 = vpack.c.b16 %v3895, %v3891
        %v4068 = vpack.c.b16 %v3900, %v3896
        %v4069 = vpack.c.b16 %v3901, %v3897
        %v4070 = vpack.c.b16 %v3902, %v3898
        %v4071 = vpack.c.b16 %v3903, %v3899
        %v4072 = vpack.c.b16 %v3908, %v3904
        %v4073 = vpack.c.b16 %v3909, %v3905
        %v4074 = vpack.c.b16 %v3910, %v3906
        %v4075 = vpack.c.b16 %v3911, %v3907
        %v4076 = vpack.c.b16 %v3916, %v3912
        %v4077 = vpack.c.b16 %v3917, %v3913
        %v4078 = vpack.c.b16 %v3918, %v3914
        %v4079 = vpack.c.b16 %v3919, %v3915
        %v4080 = vpack.c.b16 %v3924, %v3920
        %v4081 = vpack.c.b16 %v3925, %v3921
        %v4082 = vpack.c.b16 %v3926, %v3922
        %v4083 = vpack.c.b16 %v3927, %v3923
        %v4084 = vpack.c.b16 %v3932, %v3928
        %v4085 = vpack.c.b16 %v3933, %v3929
        %v4086 = vpack.c.b16 %v3934, %v3930
        %v4087 = vpack.c.b16 %v3935, %v3931
        %v4088 = vpack.c.b16 %v3940, %v3936
        %v4089 = vpack.c.b16 %v3941, %v3937
        %v4090 = vpack.c.b16 %v3942, %v3938
        %v4091 = vpack.c.b16 %v3943, %v3939
        %v4092 = vpack.c.b16 %v3948, %v3944
        %v4093 = vpack.c.b16 %v3949, %v3945
        %v4094 = vpack.c.b16 %v3950, %v3946
        %v4095 = vpack.c.b16 %v3951, %v3947
        %v4096 = vpack.c.b16 %v3956, %v3952
        %v4097 = vpack.c.b16 %v3957, %v3953
        %v4098 = vpack.c.b16 %v3958, %v3954
        %v4099 = vpack.c.b16 %v3959, %v3955
        %v4100 = vpack.c.b16 %v3964, %v3960
        %v4101 = vpack.c.b16 %v3965, %v3961
        %v4102 = vpack.c.b16 %v3966, %v3962
        %v4103 = vpack.c.b16 %v3967, %v3963
        %v4104 = vpack.c.b16 %v3972, %v3968
        %v4105 = vpack.c.b16 %v3973, %v3969
        %v4106 = vpack.c.b16 %v3974, %v3970
        %v4107 = vpack.c.b16 %v3975, %v3971
        %v4108 = vpack.c.b16 %v3980, %v3976
        %v4109 = vpack.c.b16 %v3981, %v3977
        %v4110 = vpack.c.b16 %v3982, %v3978
        %v4111 = vpack.c.b16 %v3983, %v3979
        %4240 = vmatprep.subr.bf16.mxu0 %v3985
        %4241 = vmatpush1.bf16.msra.mxu0 %v3984
        %4242 = vmatprep.subr.bf16.mxu0 %v3989
        %4243 = vmatpush1.bf16.msra.mxu0 %v3988
        %4244 = vmatprep.subr.bf16.mxu0 %v3993
        %4245 = vmatpush1.bf16.msra.mxu0 %v3992
        %4246 = vmatprep.subr.bf16.mxu0 %v3997
        %4247 = vmatpush1.bf16.msra.mxu0 %v3996
        %4248 = vmatprep.subr.bf16.mxu0 %v4001
        %4249 = vmatpush1.bf16.msra.mxu0 %v4000
        %4250 = vmatprep.subr.bf16.mxu0 %v4005
        %4251 = vmatpush1.bf16.msra.mxu0 %v4004
        %4252 = vmatprep.subr.bf16.mxu0 %v4009
        %4253 = vmatpush1.bf16.msra.mxu0 %v4008
        %4254 = vmatprep.subr.bf16.mxu0 %v4013
        %4255 = vmatpush1.bf16.msra.mxu0 %v4012
        %4256 = vmatprep.subr.bf16.mxu0 %v4017
        %4257 = vmatpush1.bf16.msra.mxu0 %v4016
        %4258 = vmatprep.subr.bf16.mxu0 %v4021
        %4259 = vmatpush1.bf16.msra.mxu0 %v4020
        %4260 = vmatprep.subr.bf16.mxu0 %v4025
        %4261 = vmatpush1.bf16.msra.mxu0 %v4024
        %4262 = vmatprep.subr.bf16.mxu0 %v4029
        %4263 = vmatpush1.bf16.msra.mxu0 %v4028
        %4264 = vmatprep.subr.bf16.mxu0 %v4033
        %4265 = vmatpush1.bf16.msra.mxu0 %v4032
        %4266 = vmatprep.subr.bf16.mxu0 %v4037
        %4267 = vmatpush1.bf16.msra.mxu0 %v4036
        %4268 = vmatprep.subr.bf16.mxu0 %v4041
        %4269 = vmatpush1.bf16.msra.mxu0 %v4040
        %4270 = vmatprep.subr.bf16.mxu0 %v4045
        %4271 = vmatpush1.bf16.msra.mxu0 %v4044
        %4272 = vmatprep.mubr.bf16.mxu0 %v3447
        %4273 = vmatmul.mubr.bf16.gmra.mrb[0].mxu0 %v3446
        %v4274 = vpop.f32.mrb[0].mxu0
        %v4275 = vadd.f32 %v3583, %v4274
        %v4276 = vpop.f32.mrb[0].mxu0
        %v4277 = vadd.f32 %v3587, %v4276
        %v4278 = vpop.f32.mrb[0].mxu0
        %v4279 = vadd.f32 %v3583, %v4278
        %v4280 = vpop.f32.mrb[0].mxu0
        %v4281 = vadd.f32 %v3587, %v4280
        %4282 = vdwg.mxu0
        %4283 = vmatprep.subr.bf16.mxu0 %v4049
        %4284 = vmatpush1.bf16.msra.mxu0 %v4048
        %4285 = vmatprep.subr.bf16.mxu0 %v4053
        %4286 = vmatpush1.bf16.msra.mxu0 %v4052
        %4287 = vmatprep.subr.bf16.mxu0 %v4057
        %4288 = vmatpush1.bf16.msra.mxu0 %v4056
        %4289 = vmatprep.subr.bf16.mxu0 %v4061
        %4290 = vmatpush1.bf16.msra.mxu0 %v4060
        %4291 = vmatprep.subr.bf16.mxu0 %v4065
        %4292 = vmatpush1.bf16.msra.mxu0 %v4064
        %4293 = vmatprep.subr.bf16.mxu0 %v4069
        %4294 = vmatpush1.bf16.msra.mxu0 %v4068
        %4295 = vmatprep.subr.bf16.mxu0 %v4073
        %4296 = vmatpush1.bf16.msra.mxu0 %v4072
        %4297 = vmatprep.subr.bf16.mxu0 %v4077
        %4298 = vmatpush1.bf16.msra.mxu0 %v4076
        %4299 = vmatprep.subr.bf16.mxu0 %v4081
        %4300 = vmatpush1.bf16.msra.mxu0 %v4080
        %4301 = vmatprep.subr.bf16.mxu0 %v4085
        %4302 = vmatpush1.bf16.msra.mxu0 %v4084
        %4303 = vmatprep.subr.bf16.mxu0 %v4089
        %4304 = vmatpush1.bf16.msra.mxu0 %v4088
        %4305 = vmatprep.subr.bf16.mxu0 %v4093
        %4306 = vmatpush1.bf16.msra.mxu0 %v4092
        %4307 = vmatprep.subr.bf16.mxu0 %v4097
        %4308 = vmatpush1.bf16.msra.mxu0 %v4096
        %4309 = vmatprep.subr.bf16.mxu0 %v4101
        %4310 = vmatpush1.bf16.msra.mxu0 %v4100
        %4311 = vmatprep.subr.bf16.mxu0 %v4105
        %4312 = vmatpush1.bf16.msra.mxu0 %v4104
        %4313 = vmatprep.subr.bf16.mxu0 %v4109
        %4314 = vmatpush1.bf16.msra.mxu0 %v4108
        %4315 = vmatprep.mubr.bf16.mxu0 %v3449
        %4316 = vmatmul.mubr.bf16.gmra.mrb[0].mxu0 %v3448
        %v4317 = vpop.f32.mrb[0].mxu0
        %v4318 = vadd.f32 %v4275, %v4317
        %v4319 = vpop.f32.mrb[0].mxu0
        %v4320 = vadd.f32 %v4277, %v4319
        %v4321 = vpop.f32.mrb[0].mxu0
        %v4322 = vadd.f32 %v4279, %v4321
        %v4323 = vpop.f32.mrb[0].mxu0
        %v4324 = vadd.f32 %v4281, %v4323
        %4325 = vdwg.mxu0
        %4326 = vmatprep.subr.bf16.mxu0 %v3987
        %4327 = vmatpush1.bf16.msra.mxu0 %v3986
        %4328 = vmatprep.subr.bf16.mxu0 %v3991
        %4329 = vmatpush1.bf16.msra.mxu0 %v3990
        %4330 = vmatprep.subr.bf16.mxu0 %v3995
        %4331 = vmatpush1.bf16.msra.mxu0 %v3994
        %4332 = vmatprep.subr.bf16.mxu0 %v3999
        %4333 = vmatpush1.bf16.msra.mxu0 %v3998
        %4334 = vmatprep.subr.bf16.mxu0 %v4003
        %4335 = vmatpush1.bf16.msra.mxu0 %v4002
        %4336 = vmatprep.subr.bf16.mxu0 %v4007
        %4337 = vmatpush1.bf16.msra.mxu0 %v4006
        %4338 = vmatprep.subr.bf16.mxu0 %v4011
        %4339 = vmatpush1.bf16.msra.mxu0 %v4010
        %4340 = vmatprep.subr.bf16.mxu0 %v4015
        %4341 = vmatpush1.bf16.msra.mxu0 %v4014
        %4342 = vmatprep.subr.bf16.mxu0 %v4019
        %4343 = vmatpush1.bf16.msra.mxu0 %v4018
        %4344 = vmatprep.subr.bf16.mxu0 %v4023
        %4345 = vmatpush1.bf16.msra.mxu0 %v4022
        %4346 = vmatprep.subr.bf16.mxu0 %v4027
        %4347 = vmatpush1.bf16.msra.mxu0 %v4026
        %4348 = vmatprep.subr.bf16.mxu0 %v4031
        %4349 = vmatpush1.bf16.msra.mxu0 %v4030
        %4350 = vmatprep.subr.bf16.mxu0 %v4035
        %4351 = vmatpush1.bf16.msra.mxu0 %v4034
        %4352 = vmatprep.subr.bf16.mxu0 %v4039
        %4353 = vmatpush1.bf16.msra.mxu0 %v4038
        %4354 = vmatprep.subr.bf16.mxu0 %v4043
        %4355 = vmatpush1.bf16.msra.mxu0 %v4042
        %4356 = vmatprep.subr.bf16.mxu0 %v4047
        %4357 = vmatpush1.bf16.msra.mxu0 %v4046
        %4358 = vmatprep.mubr.bf16.mxu0 %v3447
        %4359 = vmatmul.mubr.bf16.gmra.mrb[0].mxu0 %v3446
        %v4360 = vpop.f32.mrb[0].mxu0
        %v4361 = vadd.f32 %v3591, %v4360
        %v4362 = vpop.f32.mrb[0].mxu0
        %v4363 = vadd.f32 %v3595, %v4362
        %v4364 = vpop.f32.mrb[0].mxu0
        %v4365 = vadd.f32 %v3591, %v4364
        %v4366 = vpop.f32.mrb[0].mxu0
        %v4367 = vadd.f32 %v3595, %v4366
        %4368 = vdwg.mxu0
        %4369 = vmatprep.subr.bf16.mxu0 %v4051
        %4370 = vmatpush1.bf16.msra.mxu0 %v4050
        %4371 = vmatprep.subr.bf16.mxu0 %v4055
        %4372 = vmatpush1.bf16.msra.mxu0 %v4054
        %4373 = vmatprep.subr.bf16.mxu0 %v4059
        %4374 = vmatpush1.bf16.msra.mxu0 %v4058
        %4375 = vmatprep.subr.bf16.mxu0 %v4063
        %4376 = vmatpush1.bf16.msra.mxu0 %v4062
        %4377 = vmatprep.subr.bf16.mxu0 %v4067
        %4378 = vmatpush1.bf16.msra.mxu0 %v4066
        %4379 = vmatprep.subr.bf16.mxu0 %v4071
        %4380 = vmatpush1.bf16.msra.mxu0 %v4070
        %4381 = vmatprep.subr.bf16.mxu0 %v4075
        %4382 = vmatpush1.bf16.msra.mxu0 %v4074
        %4383 = vmatprep.subr.bf16.mxu0 %v4079
        %4384 = vmatpush1.bf16.msra.mxu0 %v4078
        %4385 = vmatprep.subr.bf16.mxu0 %v4083
        %4386 = vmatpush1.bf16.msra.mxu0 %v4082
        %4387 = vmatprep.subr.bf16.mxu0 %v4087
        %4388 = vmatpush1.bf16.msra.mxu0 %v4086
        %4389 = vmatprep.subr.bf16.mxu0 %v4091
        %4390 = vmatpush1.bf16.msra.mxu0 %v4090
        %4391 = vmatprep.subr.bf16.mxu0 %v4095
        %4392 = vmatpush1.bf16.msra.mxu0 %v4094
        %4393 = vmatprep.subr.bf16.mxu0 %v4099
        %4394 = vmatpush1.bf16.msra.mxu0 %v4098
        %4395 = vmatprep.subr.bf16.mxu0 %v4103
        %4396 = vmatpush1.bf16.msra.mxu0 %v4102
        %4397 = vmatprep.subr.bf16.mxu0 %v4107
        %4398 = vmatpush1.bf16.msra.mxu0 %v4106
        %4399 = vmatprep.subr.bf16.mxu0 %v4111
        %4400 = vmatpush1.bf16.msra.mxu0 %v4110
        %4401 = vmatprep.mubr.bf16.mxu0 %v3449
        %4402 = vmatmul.mubr.bf16.gmra.mrb[0].mxu0 %v3448
        %v4403 = vpop.f32.mrb[0].mxu0
        %v4404 = vadd.f32 %v4361, %v4403
        %v4405 = vpop.f32.mrb[0].mxu0
        %v4406 = vadd.f32 %v4363, %v4405
        %v4407 = vpop.f32.mrb[0].mxu0
        %v4408 = vadd.f32 %v4365, %v4407
        %v4409 = vpop.f32.mrb[0].mxu0
        %v4410 = vadd.f32 %v4367, %v4409
        %4411 = vdwg.mxu0
        %vm4412 = vcmp.ge.f32.partialorder %v4318, 0.0
        %vm4413 = vcmp.ge.f32.partialorder %v4320, 0.0
        %vm4414 = vcmp.ge.f32.partialorder %v4404, 0.0
        %vm4415 = vcmp.ge.f32.partialorder %v4406, 0.0
        %vm4416 = vcmp.ge.f32.partialorder %v4322, 0.0
        %vm4417 = vcmp.ge.f32.partialorder %v4324, 0.0
        %vm4418 = vcmp.ge.f32.partialorder %v4408, 0.0
        %vm4419 = vcmp.ge.f32.partialorder %v4410, 0.0
        %v4420 = vmul.f32 %v4318, 0.01
        %v4421 = vmul.f32 %v4320, 0.01
        %v4422 = vmul.f32 %v4404, 0.01
        %v4423 = vmul.f32 %v4406, 0.01
        %v4424 = vmul.f32 %v4322, 0.01
        %v4425 = vmul.f32 %v4324, 0.01
        %v4426 = vmul.f32 %v4408, 0.01
        %v4427 = vmul.f32 %v4410, 0.01
        %v4428 = vsel %vm4412, %v4318, %v4420
        %v4429 = vsel %vm4413, %v4320, %v4421
        %v4430 = vsel %vm4414, %v4404, %v4422
        %v4431 = vsel %vm4415, %v4406, %v4423
        %v4432 = vsel %vm4416, %v4322, %v4424
        %v4433 = vsel %vm4417, %v4324, %v4425
        %v4434 = vsel %vm4418, %v4408, %v4426
        %v4435 = vsel %vm4419, %v4410, %v4427
        %v4436 = vpack.c.bf16 %v4432, %v4428
        %v4437 = vpack.c.bf16 %v4433, %v4429
        %v4438 = vpack.c.bf16 %v4434, %v4430
        %v4439 = vpack.c.bf16 %v4435, %v4431
        %v4440 = vld [vmem:[#allocation10] sm:$0xff]
        %v4441 = vld [vmem:[#allocation10 + $0x8] sm:$0xff]
        %v4442 = vld [vmem:[#allocation10 + $0x10] sm:$0xff]
        %v4443 = vld [vmem:[#allocation10 + $0x18] sm:$0xff]
        %v4444 = vld [vmem:[#allocation10 + $0x20] sm:$0xff]
        %v4445 = vld [vmem:[#allocation10 + $0x28] sm:$0xff]
        %v4446 = vld [vmem:[#allocation10 + $0x30] sm:$0xff]
        %v4447 = vld [vmem:[#allocation10 + $0x38] sm:$0xff]
        %v4448 = vld [vmem:[#allocation10 + $0x40] sm:$0xff]
        %v4449 = vld [vmem:[#allocation10 + $0x48] sm:$0xff]
        %v4450 = vld [vmem:[#allocation10 + $0x50] sm:$0xff]
        %v4451 = vld [vmem:[#allocation10 + $0x58] sm:$0xff]
        %v4452 = vld [vmem:[#allocation10 + $0x60] sm:$0xff]
        %v4453 = vld [vmem:[#allocation10 + $0x68] sm:$0xff]
        %v4454 = vld [vmem:[#allocation10 + $0x70] sm:$0xff]
        %v4455 = vld [vmem:[#allocation10 + $0x78] sm:$0xff]
        %v4456 = vld [vmem:[#allocation10 + $0x80] sm:$0xff]
        %v4457 = vld [vmem:[#allocation10 + $0x88] sm:$0xff]
        %v4458 = vld [vmem:[#allocation10 + $0x90] sm:$0xff]
        %v4459 = vld [vmem:[#allocation10 + $0x98] sm:$0xff]
        %v4460 = vld [vmem:[#allocation10 + $0xa0] sm:$0xff]
        %v4461 = vld [vmem:[#allocation10 + $0xa8] sm:$0xff]
        %v4462 = vld [vmem:[#allocation10 + $0xb0] sm:$0xff]
        %v4463 = vld [vmem:[#allocation10 + $0xb8] sm:$0xff]
        %v4464 = vld [vmem:[#allocation10 + $0xc0] sm:$0xff]
        %v4465 = vld [vmem:[#allocation10 + $0xc8] sm:$0xff]
        %v4466 = vld [vmem:[#allocation10 + $0xd0] sm:$0xff]
        %v4467 = vld [vmem:[#allocation10 + $0xd8] sm:$0xff]
        %v4468 = vld [vmem:[#allocation10 + $0xe0] sm:$0xff]
        %v4469 = vld [vmem:[#allocation10 + $0xe8] sm:$0xff]
        %v4470 = vld [vmem:[#allocation10 + $0xf0] sm:$0xff]
        %v4471 = vld [vmem:[#allocation10 + $0xf8] sm:$0xff]
        %v4472 = vld [vmem:[#allocation10 + $0x100] sm:$0xff]
        %v4473 = vld [vmem:[#allocation10 + $0x108] sm:$0xff]
        %v4474 = vld [vmem:[#allocation10 + $0x110] sm:$0xff]
        %v4475 = vld [vmem:[#allocation10 + $0x118] sm:$0xff]
        %v4476 = vld [vmem:[#allocation10 + $0x120] sm:$0xff]
        %v4477 = vld [vmem:[#allocation10 + $0x128] sm:$0xff]
        %v4478 = vld [vmem:[#allocation10 + $0x130] sm:$0xff]
        %v4479 = vld [vmem:[#allocation10 + $0x138] sm:$0xff]
        %v4480 = vld [vmem:[#allocation10 + $0x140] sm:$0xff]
        %v4481 = vld [vmem:[#allocation10 + $0x148] sm:$0xff]
        %v4482 = vld [vmem:[#allocation10 + $0x150] sm:$0xff]
        %v4483 = vld [vmem:[#allocation10 + $0x158] sm:$0xff]
        %v4484 = vld [vmem:[#allocation10 + $0x160] sm:$0xff]
        %v4485 = vld [vmem:[#allocation10 + $0x168] sm:$0xff]
        %v4486 = vld [vmem:[#allocation10 + $0x170] sm:$0xff]
        %v4487 = vld [vmem:[#allocation10 + $0x178] sm:$0xff]
        %v4488 = vld [vmem:[#allocation10 + $0x180] sm:$0xff]
        %v4489 = vld [vmem:[#allocation10 + $0x188] sm:$0xff]
        %v4490 = vld [vmem:[#allocation10 + $0x190] sm:$0xff]
        %v4491 = vld [vmem:[#allocation10 + $0x198] sm:$0xff]
        %v4492 = vld [vmem:[#allocation10 + $0x1a0] sm:$0xff]
        %v4493 = vld [vmem:[#allocation10 + $0x1a8] sm:$0xff]
        %v4494 = vld [vmem:[#allocation10 + $0x1b0] sm:$0xff]
        %v4495 = vld [vmem:[#allocation10 + $0x1b8] sm:$0xff]
        %v4496 = vld [vmem:[#allocation10 + $0x1c0] sm:$0xff]
        %v4497 = vld [vmem:[#allocation10 + $0x1c8] sm:$0xff]
        %v4498 = vld [vmem:[#allocation10 + $0x1d0] sm:$0xff]
        %v4499 = vld [vmem:[#allocation10 + $0x1d8] sm:$0xff]
        %v4500 = vld [vmem:[#allocation10 + $0x1e0] sm:$0xff]
        %v4501 = vld [vmem:[#allocation10 + $0x1e8] sm:$0xff]
        %v4502 = vld [vmem:[#allocation10 + $0x1f0] sm:$0xff]
        %v4503 = vld [vmem:[#allocation10 + $0x1f8] sm:$0xff]
        %v4504 = vld [vmem:[#allocation10 + $0x200] sm:$0xff]
        %v4505 = vld [vmem:[#allocation10 + $0x208] sm:$0xff]
        %v4506 = vld [vmem:[#allocation10 + $0x210] sm:$0xff]
        %v4507 = vld [vmem:[#allocation10 + $0x218] sm:$0xff]
        %v4508 = vld [vmem:[#allocation10 + $0x220] sm:$0xff]
        %v4509 = vld [vmem:[#allocation10 + $0x228] sm:$0xff]
        %v4510 = vld [vmem:[#allocation10 + $0x230] sm:$0xff]
        %v4511 = vld [vmem:[#allocation10 + $0x238] sm:$0xff]
        %v4512 = vld [vmem:[#allocation10 + $0x240] sm:$0xff]
        %v4513 = vld [vmem:[#allocation10 + $0x248] sm:$0xff]
        %v4514 = vld [vmem:[#allocation10 + $0x250] sm:$0xff]
        %v4515 = vld [vmem:[#allocation10 + $0x258] sm:$0xff]
        %v4516 = vld [vmem:[#allocation10 + $0x260] sm:$0xff]
        %v4517 = vld [vmem:[#allocation10 + $0x268] sm:$0xff]
        %v4518 = vld [vmem:[#allocation10 + $0x270] sm:$0xff]
        %v4519 = vld [vmem:[#allocation10 + $0x278] sm:$0xff]
        %v4520 = vld [vmem:[#allocation10 + $0x280] sm:$0xff]
        %v4521 = vld [vmem:[#allocation10 + $0x288] sm:$0xff]
        %v4522 = vld [vmem:[#allocation10 + $0x290] sm:$0xff]
        %v4523 = vld [vmem:[#allocation10 + $0x298] sm:$0xff]
        %v4524 = vld [vmem:[#allocation10 + $0x2a0] sm:$0xff]
        %v4525 = vld [vmem:[#allocation10 + $0x2a8] sm:$0xff]
        %v4526 = vld [vmem:[#allocation10 + $0x2b0] sm:$0xff]
        %v4527 = vld [vmem:[#allocation10 + $0x2b8] sm:$0xff]
        %v4528 = vld [vmem:[#allocation10 + $0x2c0] sm:$0xff]
        %v4529 = vld [vmem:[#allocation10 + $0x2c8] sm:$0xff]
        %v4530 = vld [vmem:[#allocation10 + $0x2d0] sm:$0xff]
        %v4531 = vld [vmem:[#allocation10 + $0x2d8] sm:$0xff]
        %v4532 = vld [vmem:[#allocation10 + $0x2e0] sm:$0xff]
        %v4533 = vld [vmem:[#allocation10 + $0x2e8] sm:$0xff]
        %v4534 = vld [vmem:[#allocation10 + $0x2f0] sm:$0xff]
        %v4535 = vld [vmem:[#allocation10 + $0x2f8] sm:$0xff]
        %v4536 = vld [vmem:[#allocation10 + $0x300] sm:$0xff]
        %v4537 = vld [vmem:[#allocation10 + $0x308] sm:$0xff]
        %v4538 = vld [vmem:[#allocation10 + $0x310] sm:$0xff]
        %v4539 = vld [vmem:[#allocation10 + $0x318] sm:$0xff]
        %v4540 = vld [vmem:[#allocation10 + $0x320] sm:$0xff]
        %v4541 = vld [vmem:[#allocation10 + $0x328] sm:$0xff]
        %v4542 = vld [vmem:[#allocation10 + $0x330] sm:$0xff]
        %v4543 = vld [vmem:[#allocation10 + $0x338] sm:$0xff]
        %v4544 = vld [vmem:[#allocation10 + $0x340] sm:$0xff]
        %v4545 = vld [vmem:[#allocation10 + $0x348] sm:$0xff]
        %v4546 = vld [vmem:[#allocation10 + $0x350] sm:$0xff]
        %v4547 = vld [vmem:[#allocation10 + $0x358] sm:$0xff]
        %v4548 = vld [vmem:[#allocation10 + $0x360] sm:$0xff]
        %v4549 = vld [vmem:[#allocation10 + $0x368] sm:$0xff]
        %v4550 = vld [vmem:[#allocation10 + $0x370] sm:$0xff]
        %v4551 = vld [vmem:[#allocation10 + $0x378] sm:$0xff]
        %v4552 = vld [vmem:[#allocation10 + $0x380] sm:$0xff]
        %v4553 = vld [vmem:[#allocation10 + $0x388] sm:$0xff]
        %v4554 = vld [vmem:[#allocation10 + $0x390] sm:$0xff]
        %v4555 = vld [vmem:[#allocation10 + $0x398] sm:$0xff]
        %v4556 = vld [vmem:[#allocation10 + $0x3a0] sm:$0xff]
        %v4557 = vld [vmem:[#allocation10 + $0x3a8] sm:$0xff]
        %v4558 = vld [vmem:[#allocation10 + $0x3b0] sm:$0xff]
        %v4559 = vld [vmem:[#allocation10 + $0x3b8] sm:$0xff]
        %v4560 = vld [vmem:[#allocation10 + $0x3c0] sm:$0xff]
        %v4561 = vld [vmem:[#allocation10 + $0x3c8] sm:$0xff]
        %v4562 = vld [vmem:[#allocation10 + $0x3d0] sm:$0xff]
        %v4563 = vld [vmem:[#allocation10 + $0x3d8] sm:$0xff]
        %v4564 = vld [vmem:[#allocation10 + $0x3e0] sm:$0xff]
        %v4565 = vld [vmem:[#allocation10 + $0x3e8] sm:$0xff]
        %v4566 = vld [vmem:[#allocation10 + $0x3f0] sm:$0xff]
        %v4567 = vld [vmem:[#allocation10 + $0x3f8] sm:$0xff]
        %v4568 = vld [vmem:[%s8] sm:$0xf]
        %v4570 = vlaneseq
        %v4571 = vshrl.u32 %v4570, 7
        %v4572 = vsub.s32 0, %v4571
        %v4573 = vrot.slane %v4568, %v4572
        %v4574 = vlaneseq
        %v4575 = vshrl.u32 %v4574, 7
        %v4576 = vsub.s32 1, %v4575
        %v4577 = vrot.slane %v4568, %v4576
        %v4578 = vlaneseq
        %v4579 = vshrl.u32 %v4578, 7
        %v4580 = vsub.s32 2, %v4579
        %v4581 = vrot.slane %v4568, %v4580
        %v4582 = vlaneseq
        %v4583 = vshrl.u32 %v4582, 7
        %v4584 = vsub.s32 3, %v4583
        %v4585 = vrot.slane %v4568, %v4584
        %v4718 = vunpack.c.l.b16 %v4440
        %v4719 = vunpack.c.h.b16 %v4440
        %v4720 = vunpack.c.l.b16 %v4441
        %v4721 = vunpack.c.h.b16 %v4441
        %v4722 = vunpack.c.l.b16 %v4442
        %v4723 = vunpack.c.h.b16 %v4442
        %v4724 = vunpack.c.l.b16 %v4443
        %v4725 = vunpack.c.h.b16 %v4443
        %v4726 = vunpack.c.l.b16 %v4444
        %v4727 = vunpack.c.h.b16 %v4444
        %v4728 = vunpack.c.l.b16 %v4445
        %v4729 = vunpack.c.h.b16 %v4445
        %v4730 = vunpack.c.l.b16 %v4446
        %v4731 = vunpack.c.h.b16 %v4446
        %v4732 = vunpack.c.l.b16 %v4447
        %v4733 = vunpack.c.h.b16 %v4447
        %v4734 = vunpack.c.l.b16 %v4448
        %v4735 = vunpack.c.h.b16 %v4448
        %v4736 = vunpack.c.l.b16 %v4449
        %v4737 = vunpack.c.h.b16 %v4449
        %v4738 = vunpack.c.l.b16 %v4450
        %v4739 = vunpack.c.h.b16 %v4450
        %v4740 = vunpack.c.l.b16 %v4451
        %v4741 = vunpack.c.h.b16 %v4451
        %v4742 = vunpack.c.l.b16 %v4452
        %v4743 = vunpack.c.h.b16 %v4452
        %v4744 = vunpack.c.l.b16 %v4453
        %v4745 = vunpack.c.h.b16 %v4453
        %v4746 = vunpack.c.l.b16 %v4454
        %v4747 = vunpack.c.h.b16 %v4454
        %v4748 = vunpack.c.l.b16 %v4455
        %v4749 = vunpack.c.h.b16 %v4455
        %v4750 = vunpack.c.l.b16 %v4456
        %v4751 = vunpack.c.h.b16 %v4456
        %v4752 = vunpack.c.l.b16 %v4457
        %v4753 = vunpack.c.h.b16 %v4457
        %v4754 = vunpack.c.l.b16 %v4458
        %v4755 = vunpack.c.h.b16 %v4458
        %v4756 = vunpack.c.l.b16 %v4459
        %v4757 = vunpack.c.h.b16 %v4459
        %v4758 = vunpack.c.l.b16 %v4460
        %v4759 = vunpack.c.h.b16 %v4460
        %v4760 = vunpack.c.l.b16 %v4461
        %v4761 = vunpack.c.h.b16 %v4461
        %v4762 = vunpack.c.l.b16 %v4462
        %v4763 = vunpack.c.h.b16 %v4462
        %v4764 = vunpack.c.l.b16 %v4463
        %v4765 = vunpack.c.h.b16 %v4463
        %v4766 = vunpack.c.l.b16 %v4464
        %v4767 = vunpack.c.h.b16 %v4464
        %v4768 = vunpack.c.l.b16 %v4465
        %v4769 = vunpack.c.h.b16 %v4465
        %v4770 = vunpack.c.l.b16 %v4466
        %v4771 = vunpack.c.h.b16 %v4466
        %v4772 = vunpack.c.l.b16 %v4467
        %v4773 = vunpack.c.h.b16 %v4467
        %v4774 = vunpack.c.l.b16 %v4468
        %v4775 = vunpack.c.h.b16 %v4468
        %v4776 = vunpack.c.l.b16 %v4469
        %v4777 = vunpack.c.h.b16 %v4469
        %v4778 = vunpack.c.l.b16 %v4470
        %v4779 = vunpack.c.h.b16 %v4470
        %v4780 = vunpack.c.l.b16 %v4471
        %v4781 = vunpack.c.h.b16 %v4471
        %v4782 = vunpack.c.l.b16 %v4472
        %v4783 = vunpack.c.h.b16 %v4472
        %v4784 = vunpack.c.l.b16 %v4473
        %v4785 = vunpack.c.h.b16 %v4473
        %v4786 = vunpack.c.l.b16 %v4474
        %v4787 = vunpack.c.h.b16 %v4474
        %v4788 = vunpack.c.l.b16 %v4475
        %v4789 = vunpack.c.h.b16 %v4475
        %v4790 = vunpack.c.l.b16 %v4476
        %v4791 = vunpack.c.h.b16 %v4476
        %v4792 = vunpack.c.l.b16 %v4477
        %v4793 = vunpack.c.h.b16 %v4477
        %v4794 = vunpack.c.l.b16 %v4478
        %v4795 = vunpack.c.h.b16 %v4478
        %v4796 = vunpack.c.l.b16 %v4479
        %v4797 = vunpack.c.h.b16 %v4479
        %v4798 = vunpack.c.l.b16 %v4480
        %v4799 = vunpack.c.h.b16 %v4480
        %v4800 = vunpack.c.l.b16 %v4481
        %v4801 = vunpack.c.h.b16 %v4481
        %v4802 = vunpack.c.l.b16 %v4482
        %v4803 = vunpack.c.h.b16 %v4482
        %v4804 = vunpack.c.l.b16 %v4483
        %v4805 = vunpack.c.h.b16 %v4483
        %v4806 = vunpack.c.l.b16 %v4484
        %v4807 = vunpack.c.h.b16 %v4484
        %v4808 = vunpack.c.l.b16 %v4485
        %v4809 = vunpack.c.h.b16 %v4485
        %v4810 = vunpack.c.l.b16 %v4486
        %v4811 = vunpack.c.h.b16 %v4486
        %v4812 = vunpack.c.l.b16 %v4487
        %v4813 = vunpack.c.h.b16 %v4487
        %v4814 = vunpack.c.l.b16 %v4488
        %v4815 = vunpack.c.h.b16 %v4488
        %v4816 = vunpack.c.l.b16 %v4489
        %v4817 = vunpack.c.h.b16 %v4489
        %v4818 = vunpack.c.l.b16 %v4490
        %v4819 = vunpack.c.h.b16 %v4490
        %v4820 = vunpack.c.l.b16 %v4491
        %v4821 = vunpack.c.h.b16 %v4491
        %v4822 = vunpack.c.l.b16 %v4492
        %v4823 = vunpack.c.h.b16 %v4492
        %v4824 = vunpack.c.l.b16 %v4493
        %v4825 = vunpack.c.h.b16 %v4493
        %v4826 = vunpack.c.l.b16 %v4494
        %v4827 = vunpack.c.h.b16 %v4494
        %v4828 = vunpack.c.l.b16 %v4495
        %v4829 = vunpack.c.h.b16 %v4495
        %v4830 = vunpack.c.l.b16 %v4496
        %v4831 = vunpack.c.h.b16 %v4496
        %v4832 = vunpack.c.l.b16 %v4497
        %v4833 = vunpack.c.h.b16 %v4497
        %v4834 = vunpack.c.l.b16 %v4498
        %v4835 = vunpack.c.h.b16 %v4498
        %v4836 = vunpack.c.l.b16 %v4499
        %v4837 = vunpack.c.h.b16 %v4499
        %v4838 = vunpack.c.l.b16 %v4500
        %v4839 = vunpack.c.h.b16 %v4500
        %v4840 = vunpack.c.l.b16 %v4501
        %v4841 = vunpack.c.h.b16 %v4501
        %v4842 = vunpack.c.l.b16 %v4502
        %v4843 = vunpack.c.h.b16 %v4502
        %v4844 = vunpack.c.l.b16 %v4503
        %v4845 = vunpack.c.h.b16 %v4503
        %v4846 = vunpack.c.l.b16 %v4504
        %v4847 = vunpack.c.h.b16 %v4504
        %v4848 = vunpack.c.l.b16 %v4505
        %v4849 = vunpack.c.h.b16 %v4505
        %v4850 = vunpack.c.l.b16 %v4506
        %v4851 = vunpack.c.h.b16 %v4506
        %v4852 = vunpack.c.l.b16 %v4507
        %v4853 = vunpack.c.h.b16 %v4507
        %v4854 = vunpack.c.l.b16 %v4508
        %v4855 = vunpack.c.h.b16 %v4508
        %v4856 = vunpack.c.l.b16 %v4509
        %v4857 = vunpack.c.h.b16 %v4509
        %v4858 = vunpack.c.l.b16 %v4510
        %v4859 = vunpack.c.h.b16 %v4510
        %v4860 = vunpack.c.l.b16 %v4511
        %v4861 = vunpack.c.h.b16 %v4511
        %v4862 = vunpack.c.l.b16 %v4512
        %v4863 = vunpack.c.h.b16 %v4512
        %v4864 = vunpack.c.l.b16 %v4513
        %v4865 = vunpack.c.h.b16 %v4513
        %v4866 = vunpack.c.l.b16 %v4514
        %v4867 = vunpack.c.h.b16 %v4514
        %v4868 = vunpack.c.l.b16 %v4515
        %v4869 = vunpack.c.h.b16 %v4515
        %v4870 = vunpack.c.l.b16 %v4516
        %v4871 = vunpack.c.h.b16 %v4516
        %v4872 = vunpack.c.l.b16 %v4517
        %v4873 = vunpack.c.h.b16 %v4517
        %v4874 = vunpack.c.l.b16 %v4518
        %v4875 = vunpack.c.h.b16 %v4518
        %v4876 = vunpack.c.l.b16 %v4519
        %v4877 = vunpack.c.h.b16 %v4519
        %v4878 = vunpack.c.l.b16 %v4520
        %v4879 = vunpack.c.h.b16 %v4520
        %v4880 = vunpack.c.l.b16 %v4521
        %v4881 = vunpack.c.h.b16 %v4521
        %v4882 = vunpack.c.l.b16 %v4522
        %v4883 = vunpack.c.h.b16 %v4522
        %v4884 = vunpack.c.l.b16 %v4523
        %v4885 = vunpack.c.h.b16 %v4523
        %v4886 = vunpack.c.l.b16 %v4524
        %v4887 = vunpack.c.h.b16 %v4524
        %v4888 = vunpack.c.l.b16 %v4525
        %v4889 = vunpack.c.h.b16 %v4525
        %v4890 = vunpack.c.l.b16 %v4526
        %v4891 = vunpack.c.h.b16 %v4526
        %v4892 = vunpack.c.l.b16 %v4527
        %v4893 = vunpack.c.h.b16 %v4527
        %v4894 = vunpack.c.l.b16 %v4528
        %v4895 = vunpack.c.h.b16 %v4528
        %v4896 = vunpack.c.l.b16 %v4529
        %v4897 = vunpack.c.h.b16 %v4529
        %v4898 = vunpack.c.l.b16 %v4530
        %v4899 = vunpack.c.h.b16 %v4530
        %v4900 = vunpack.c.l.b16 %v4531
        %v4901 = vunpack.c.h.b16 %v4531
        %v4902 = vunpack.c.l.b16 %v4532
        %v4903 = vunpack.c.h.b16 %v4532
        %v4904 = vunpack.c.l.b16 %v4533
        %v4905 = vunpack.c.h.b16 %v4533
        %v4906 = vunpack.c.l.b16 %v4534
        %v4907 = vunpack.c.h.b16 %v4534
        %v4908 = vunpack.c.l.b16 %v4535
        %v4909 = vunpack.c.h.b16 %v4535
        %v4910 = vunpack.c.l.b16 %v4536
        %v4911 = vunpack.c.h.b16 %v4536
        %v4912 = vunpack.c.l.b16 %v4537
        %v4913 = vunpack.c.h.b16 %v4537
        %v4914 = vunpack.c.l.b16 %v4538
        %v4915 = vunpack.c.h.b16 %v4538
        %v4916 = vunpack.c.l.b16 %v4539
        %v4917 = vunpack.c.h.b16 %v4539
        %v4918 = vunpack.c.l.b16 %v4540
        %v4919 = vunpack.c.h.b16 %v4540
        %v4920 = vunpack.c.l.b16 %v4541
        %v4921 = vunpack.c.h.b16 %v4541
        %v4922 = vunpack.c.l.b16 %v4542
        %v4923 = vunpack.c.h.b16 %v4542
        %v4924 = vunpack.c.l.b16 %v4543
        %v4925 = vunpack.c.h.b16 %v4543
        %v4926 = vunpack.c.l.b16 %v4544
        %v4927 = vunpack.c.h.b16 %v4544
        %v4928 = vunpack.c.l.b16 %v4545
        %v4929 = vunpack.c.h.b16 %v4545
        %v4930 = vunpack.c.l.b16 %v4546
        %v4931 = vunpack.c.h.b16 %v4546
        %v4932 = vunpack.c.l.b16 %v4547
        %v4933 = vunpack.c.h.b16 %v4547
        %v4934 = vunpack.c.l.b16 %v4548
        %v4935 = vunpack.c.h.b16 %v4548
        %v4936 = vunpack.c.l.b16 %v4549
        %v4937 = vunpack.c.h.b16 %v4549
        %v4938 = vunpack.c.l.b16 %v4550
        %v4939 = vunpack.c.h.b16 %v4550
        %v4940 = vunpack.c.l.b16 %v4551
        %v4941 = vunpack.c.h.b16 %v4551
        %v4942 = vunpack.c.l.b16 %v4552
        %v4943 = vunpack.c.h.b16 %v4552
        %v4944 = vunpack.c.l.b16 %v4553
        %v4945 = vunpack.c.h.b16 %v4553
        %v4946 = vunpack.c.l.b16 %v4554
        %v4947 = vunpack.c.h.b16 %v4554
        %v4948 = vunpack.c.l.b16 %v4555
        %v4949 = vunpack.c.h.b16 %v4555
        %v4950 = vunpack.c.l.b16 %v4556
        %v4951 = vunpack.c.h.b16 %v4556
        %v4952 = vunpack.c.l.b16 %v4557
        %v4953 = vunpack.c.h.b16 %v4557
        %v4954 = vunpack.c.l.b16 %v4558
        %v4955 = vunpack.c.h.b16 %v4558
        %v4956 = vunpack.c.l.b16 %v4559
        %v4957 = vunpack.c.h.b16 %v4559
        %v4958 = vunpack.c.l.b16 %v4560
        %v4959 = vunpack.c.h.b16 %v4560
        %v4960 = vunpack.c.l.b16 %v4561
        %v4961 = vunpack.c.h.b16 %v4561
        %v4962 = vunpack.c.l.b16 %v4562
        %v4963 = vunpack.c.h.b16 %v4562
        %v4964 = vunpack.c.l.b16 %v4563
        %v4965 = vunpack.c.h.b16 %v4563
        %v4966 = vunpack.c.l.b16 %v4564
        %v4967 = vunpack.c.h.b16 %v4564
        %v4968 = vunpack.c.l.b16 %v4565
        %v4969 = vunpack.c.h.b16 %v4565
        %v4970 = vunpack.c.l.b16 %v4566
        %v4971 = vunpack.c.h.b16 %v4566
        %v4972 = vunpack.c.l.b16 %v4567
        %v4973 = vunpack.c.h.b16 %v4567
        %v4974 = vpack.c.b16 %v4722, %v4718
        %v4975 = vpack.c.b16 %v4723, %v4719
        %v4976 = vpack.c.b16 %v4724, %v4720
        %v4977 = vpack.c.b16 %v4725, %v4721
        %v4978 = vpack.c.b16 %v4730, %v4726
        %v4979 = vpack.c.b16 %v4731, %v4727
        %v4980 = vpack.c.b16 %v4732, %v4728
        %v4981 = vpack.c.b16 %v4733, %v4729
        %v4982 = vpack.c.b16 %v4738, %v4734
        %v4983 = vpack.c.b16 %v4739, %v4735
        %v4984 = vpack.c.b16 %v4740, %v4736
        %v4985 = vpack.c.b16 %v4741, %v4737
        %v4986 = vpack.c.b16 %v4746, %v4742
        %v4987 = vpack.c.b16 %v4747, %v4743
        %v4988 = vpack.c.b16 %v4748, %v4744
        %v4989 = vpack.c.b16 %v4749, %v4745
        %v4990 = vpack.c.b16 %v4754, %v4750
        %v4991 = vpack.c.b16 %v4755, %v4751
        %v4992 = vpack.c.b16 %v4756, %v4752
        %v4993 = vpack.c.b16 %v4757, %v4753
        %v4994 = vpack.c.b16 %v4762, %v4758
        %v4995 = vpack.c.b16 %v4763, %v4759
        %v4996 = vpack.c.b16 %v4764, %v4760
        %v4997 = vpack.c.b16 %v4765, %v4761
        %v4998 = vpack.c.b16 %v4770, %v4766
        %v4999 = vpack.c.b16 %v4771, %v4767
        %v5000 = vpack.c.b16 %v4772, %v4768
        %v5001 = vpack.c.b16 %v4773, %v4769
        %v5002 = vpack.c.b16 %v4778, %v4774
        %v5003 = vpack.c.b16 %v4779, %v4775
        %v5004 = vpack.c.b16 %v4780, %v4776
        %v5005 = vpack.c.b16 %v4781, %v4777
        %v5006 = vpack.c.b16 %v4786, %v4782
        %v5007 = vpack.c.b16 %v4787, %v4783
        %v5008 = vpack.c.b16 %v4788, %v4784
        %v5009 = vpack.c.b16 %v4789, %v4785
        %v5010 = vpack.c.b16 %v4794, %v4790
        %v5011 = vpack.c.b16 %v4795, %v4791
        %v5012 = vpack.c.b16 %v4796, %v4792
        %v5013 = vpack.c.b16 %v4797, %v4793
        %v5014 = vpack.c.b16 %v4802, %v4798
        %v5015 = vpack.c.b16 %v4803, %v4799
        %v5016 = vpack.c.b16 %v4804, %v4800
        %v5017 = vpack.c.b16 %v4805, %v4801
        %v5018 = vpack.c.b16 %v4810, %v4806
        %v5019 = vpack.c.b16 %v4811, %v4807
        %v5020 = vpack.c.b16 %v4812, %v4808
        %v5021 = vpack.c.b16 %v4813, %v4809
        %v5022 = vpack.c.b16 %v4818, %v4814
        %v5023 = vpack.c.b16 %v4819, %v4815
        %v5024 = vpack.c.b16 %v4820, %v4816
        %v5025 = vpack.c.b16 %v4821, %v4817
        %v5026 = vpack.c.b16 %v4826, %v4822
        %v5027 = vpack.c.b16 %v4827, %v4823
        %v5028 = vpack.c.b16 %v4828, %v4824
        %v5029 = vpack.c.b16 %v4829, %v4825
        %v5030 = vpack.c.b16 %v4834, %v4830
        %v5031 = vpack.c.b16 %v4835, %v4831
        %v5032 = vpack.c.b16 %v4836, %v4832
        %v5033 = vpack.c.b16 %v4837, %v4833
        %v5034 = vpack.c.b16 %v4842, %v4838
        %v5035 = vpack.c.b16 %v4843, %v4839
        %v5036 = vpack.c.b16 %v4844, %v4840
        %v5037 = vpack.c.b16 %v4845, %v4841
        %v5038 = vpack.c.b16 %v4850, %v4846
        %v5039 = vpack.c.b16 %v4851, %v4847
        %v5040 = vpack.c.b16 %v4852, %v4848
        %v5041 = vpack.c.b16 %v4853, %v4849
        %v5042 = vpack.c.b16 %v4858, %v4854
        %v5043 = vpack.c.b16 %v4859, %v4855
        %v5044 = vpack.c.b16 %v4860, %v4856
        %v5045 = vpack.c.b16 %v4861, %v4857
        %v5046 = vpack.c.b16 %v4866, %v4862
        %v5047 = vpack.c.b16 %v4867, %v4863
        %v5048 = vpack.c.b16 %v4868, %v4864
        %v5049 = vpack.c.b16 %v4869, %v4865
        %v5050 = vpack.c.b16 %v4874, %v4870
        %v5051 = vpack.c.b16 %v4875, %v4871
        %v5052 = vpack.c.b16 %v4876, %v4872
        %v5053 = vpack.c.b16 %v4877, %v4873
        %v5054 = vpack.c.b16 %v4882, %v4878
        %v5055 = vpack.c.b16 %v4883, %v4879
        %v5056 = vpack.c.b16 %v4884, %v4880
        %v5057 = vpack.c.b16 %v4885, %v4881
        %v5058 = vpack.c.b16 %v4890, %v4886
        %v5059 = vpack.c.b16 %v4891, %v4887
        %v5060 = vpack.c.b16 %v4892, %v4888
        %v5061 = vpack.c.b16 %v4893, %v4889
        %v5062 = vpack.c.b16 %v4898, %v4894
        %v5063 = vpack.c.b16 %v4899, %v4895
        %v5064 = vpack.c.b16 %v4900, %v4896
        %v5065 = vpack.c.b16 %v4901, %v4897
        %v5066 = vpack.c.b16 %v4906, %v4902
        %v5067 = vpack.c.b16 %v4907, %v4903
        %v5068 = vpack.c.b16 %v4908, %v4904
        %v5069 = vpack.c.b16 %v4909, %v4905
        %v5070 = vpack.c.b16 %v4914, %v4910
        %v5071 = vpack.c.b16 %v4915, %v4911
        %v5072 = vpack.c.b16 %v4916, %v4912
        %v5073 = vpack.c.b16 %v4917, %v4913
        %v5074 = vpack.c.b16 %v4922, %v4918
        %v5075 = vpack.c.b16 %v4923, %v4919
        %v5076 = vpack.c.b16 %v4924, %v4920
        %v5077 = vpack.c.b16 %v4925, %v4921
        %v5078 = vpack.c.b16 %v4930, %v4926
        %v5079 = vpack.c.b16 %v4931, %v4927
        %v5080 = vpack.c.b16 %v4932, %v4928
        %v5081 = vpack.c.b16 %v4933, %v4929
        %v5082 = vpack.c.b16 %v4938, %v4934
        %v5083 = vpack.c.b16 %v4939, %v4935
        %v5084 = vpack.c.b16 %v4940, %v4936
        %v5085 = vpack.c.b16 %v4941, %v4937
        %v5086 = vpack.c.b16 %v4946, %v4942
        %v5087 = vpack.c.b16 %v4947, %v4943
        %v5088 = vpack.c.b16 %v4948, %v4944
        %v5089 = vpack.c.b16 %v4949, %v4945
        %v5090 = vpack.c.b16 %v4954, %v4950
        %v5091 = vpack.c.b16 %v4955, %v4951
        %v5092 = vpack.c.b16 %v4956, %v4952
        %v5093 = vpack.c.b16 %v4957, %v4953
        %v5094 = vpack.c.b16 %v4962, %v4958
        %v5095 = vpack.c.b16 %v4963, %v4959
        %v5096 = vpack.c.b16 %v4964, %v4960
        %v5097 = vpack.c.b16 %v4965, %v4961
        %v5098 = vpack.c.b16 %v4970, %v4966
        %v5099 = vpack.c.b16 %v4971, %v4967
        %v5100 = vpack.c.b16 %v4972, %v4968
        %v5101 = vpack.c.b16 %v4973, %v4969
        %5230 = vmatprep.subr.bf16.mxu0 %v4975
        %5231 = vmatpush1.bf16.msra.mxu0 %v4974
        %5232 = vmatprep.subr.bf16.mxu0 %v4979
        %5233 = vmatpush1.bf16.msra.mxu0 %v4978
        %5234 = vmatprep.subr.bf16.mxu0 %v4983
        %5235 = vmatpush1.bf16.msra.mxu0 %v4982
        %5236 = vmatprep.subr.bf16.mxu0 %v4987
        %5237 = vmatpush1.bf16.msra.mxu0 %v4986
        %5238 = vmatprep.subr.bf16.mxu0 %v4991
        %5239 = vmatpush1.bf16.msra.mxu0 %v4990
        %5240 = vmatprep.subr.bf16.mxu0 %v4995
        %5241 = vmatpush1.bf16.msra.mxu0 %v4994
        %5242 = vmatprep.subr.bf16.mxu0 %v4999
        %5243 = vmatpush1.bf16.msra.mxu0 %v4998
        %5244 = vmatprep.subr.bf16.mxu0 %v5003
        %5245 = vmatpush1.bf16.msra.mxu0 %v5002
        %5246 = vmatprep.subr.bf16.mxu0 %v5007
        %5247 = vmatpush1.bf16.msra.mxu0 %v5006
        %5248 = vmatprep.subr.bf16.mxu0 %v5011
        %5249 = vmatpush1.bf16.msra.mxu0 %v5010
        %5250 = vmatprep.subr.bf16.mxu0 %v5015
        %5251 = vmatpush1.bf16.msra.mxu0 %v5014
        %5252 = vmatprep.subr.bf16.mxu0 %v5019
        %5253 = vmatpush1.bf16.msra.mxu0 %v5018
        %5254 = vmatprep.subr.bf16.mxu0 %v5023
        %5255 = vmatpush1.bf16.msra.mxu0 %v5022
        %5256 = vmatprep.subr.bf16.mxu0 %v5027
        %5257 = vmatpush1.bf16.msra.mxu0 %v5026
        %5258 = vmatprep.subr.bf16.mxu0 %v5031
        %5259 = vmatpush1.bf16.msra.mxu0 %v5030
        %5260 = vmatprep.subr.bf16.mxu0 %v5035
        %5261 = vmatpush1.bf16.msra.mxu0 %v5034
        %5262 = vmatprep.mubr.bf16.mxu0 %v4437
        %5263 = vmatmul.mubr.bf16.gmra.mrb[0].mxu0 %v4436
        %v5264 = vpop.f32.mrb[0].mxu0
        %v5265 = vadd.f32 %v4573, %v5264
        %v5266 = vpop.f32.mrb[0].mxu0
        %v5267 = vadd.f32 %v4577, %v5266
        %v5268 = vpop.f32.mrb[0].mxu0
        %v5269 = vadd.f32 %v4573, %v5268
        %v5270 = vpop.f32.mrb[0].mxu0
        %v5271 = vadd.f32 %v4577, %v5270
        %5272 = vdwg.mxu0
        %5273 = vmatprep.subr.bf16.mxu0 %v5039
        %5274 = vmatpush1.bf16.msra.mxu0 %v5038
        %5275 = vmatprep.subr.bf16.mxu0 %v5043
        %5276 = vmatpush1.bf16.msra.mxu0 %v5042
        %5277 = vmatprep.subr.bf16.mxu0 %v5047
        %5278 = vmatpush1.bf16.msra.mxu0 %v5046
        %5279 = vmatprep.subr.bf16.mxu0 %v5051
        %5280 = vmatpush1.bf16.msra.mxu0 %v5050
        %5281 = vmatprep.subr.bf16.mxu0 %v5055
        %5282 = vmatpush1.bf16.msra.mxu0 %v5054
        %5283 = vmatprep.subr.bf16.mxu0 %v5059
        %5284 = vmatpush1.bf16.msra.mxu0 %v5058
        %5285 = vmatprep.subr.bf16.mxu0 %v5063
        %5286 = vmatpush1.bf16.msra.mxu0 %v5062
        %5287 = vmatprep.subr.bf16.mxu0 %v5067
        %5288 = vmatpush1.bf16.msra.mxu0 %v5066
        %5289 = vmatprep.subr.bf16.mxu0 %v5071
        %5290 = vmatpush1.bf16.msra.mxu0 %v5070
        %5291 = vmatprep.subr.bf16.mxu0 %v5075
        %5292 = vmatpush1.bf16.msra.mxu0 %v5074
        %5293 = vmatprep.subr.bf16.mxu0 %v5079
        %5294 = vmatpush1.bf16.msra.mxu0 %v5078
        %5295 = vmatprep.subr.bf16.mxu0 %v5083
        %5296 = vmatpush1.bf16.msra.mxu0 %v5082
        %5297 = vmatprep.subr.bf16.mxu0 %v5087
        %5298 = vmatpush1.bf16.msra.mxu0 %v5086
        %5299 = vmatprep.subr.bf16.mxu0 %v5091
        %5300 = vmatpush1.bf16.msra.mxu0 %v5090
        %5301 = vmatprep.subr.bf16.mxu0 %v5095
        %5302 = vmatpush1.bf16.msra.mxu0 %v5094
        %5303 = vmatprep.subr.bf16.mxu0 %v5099
        %5304 = vmatpush1.bf16.msra.mxu0 %v5098
        %5305 = vmatprep.mubr.bf16.mxu0 %v4439
        %5306 = vmatmul.mubr.bf16.gmra.mrb[0].mxu0 %v4438
        %v5307 = vpop.f32.mrb[0].mxu0
        %v5308 = vadd.f32 %v5265, %v5307
        %v5309 = vpop.f32.mrb[0].mxu0
        %v5310 = vadd.f32 %v5267, %v5309
        %v5311 = vpop.f32.mrb[0].mxu0
        %v5312 = vadd.f32 %v5269, %v5311
        %v5313 = vpop.f32.mrb[0].mxu0
        %v5314 = vadd.f32 %v5271, %v5313
        %5315 = vdwg.mxu0
        %5316 = vmatprep.subr.bf16.mxu0 %v4977
        %5317 = vmatpush1.bf16.msra.mxu0 %v4976
        %5318 = vmatprep.subr.bf16.mxu0 %v4981
        %5319 = vmatpush1.bf16.msra.mxu0 %v4980
        %5320 = vmatprep.subr.bf16.mxu0 %v4985
        %5321 = vmatpush1.bf16.msra.mxu0 %v4984
        %5322 = vmatprep.subr.bf16.mxu0 %v4989
        %5323 = vmatpush1.bf16.msra.mxu0 %v4988
        %5324 = vmatprep.subr.bf16.mxu0 %v4993
        %5325 = vmatpush1.bf16.msra.mxu0 %v4992
        %5326 = vmatprep.subr.bf16.mxu0 %v4997
        %5327 = vmatpush1.bf16.msra.mxu0 %v4996
        %5328 = vmatprep.subr.bf16.mxu0 %v5001
        %5329 = vmatpush1.bf16.msra.mxu0 %v5000
        %5330 = vmatprep.subr.bf16.mxu0 %v5005
        %5331 = vmatpush1.bf16.msra.mxu0 %v5004
        %5332 = vmatprep.subr.bf16.mxu0 %v5009
        %5333 = vmatpush1.bf16.msra.mxu0 %v5008
        %5334 = vmatprep.subr.bf16.mxu0 %v5013
        %5335 = vmatpush1.bf16.msra.mxu0 %v5012
        %5336 = vmatprep.subr.bf16.mxu0 %v5017
        %5337 = vmatpush1.bf16.msra.mxu0 %v5016
        %5338 = vmatprep.subr.bf16.mxu0 %v5021
        %5339 = vmatpush1.bf16.msra.mxu0 %v5020
        %5340 = vmatprep.subr.bf16.mxu0 %v5025
        %5341 = vmatpush1.bf16.msra.mxu0 %v5024
        %5342 = vmatprep.subr.bf16.mxu0 %v5029
        %5343 = vmatpush1.bf16.msra.mxu0 %v5028
        %5344 = vmatprep.subr.bf16.mxu0 %v5033
        %5345 = vmatpush1.bf16.msra.mxu0 %v5032
        %5346 = vmatprep.subr.bf16.mxu0 %v5037
        %5347 = vmatpush1.bf16.msra.mxu0 %v5036
        %5348 = vmatprep.mubr.bf16.mxu0 %v4437
        %5349 = vmatmul.mubr.bf16.gmra.mrb[0].mxu0 %v4436
        %v5350 = vpop.f32.mrb[0].mxu0
        %v5351 = vadd.f32 %v4581, %v5350
        %v5352 = vpop.f32.mrb[0].mxu0
        %v5353 = vadd.f32 %v4585, %v5352
        %v5354 = vpop.f32.mrb[0].mxu0
        %v5355 = vadd.f32 %v4581, %v5354
        %v5356 = vpop.f32.mrb[0].mxu0
        %v5357 = vadd.f32 %v4585, %v5356
        %5358 = vdwg.mxu0
        %5359 = vmatprep.subr.bf16.mxu0 %v5041
        %5360 = vmatpush1.bf16.msra.mxu0 %v5040
        %5361 = vmatprep.subr.bf16.mxu0 %v5045
        %5362 = vmatpush1.bf16.msra.mxu0 %v5044
        %5363 = vmatprep.subr.bf16.mxu0 %v5049
        %5364 = vmatpush1.bf16.msra.mxu0 %v5048
        %5365 = vmatprep.subr.bf16.mxu0 %v5053
        %5366 = vmatpush1.bf16.msra.mxu0 %v5052
        %5367 = vmatprep.subr.bf16.mxu0 %v5057
        %5368 = vmatpush1.bf16.msra.mxu0 %v5056
        %5369 = vmatprep.subr.bf16.mxu0 %v5061
        %5370 = vmatpush1.bf16.msra.mxu0 %v5060
        %5371 = vmatprep.subr.bf16.mxu0 %v5065
        %5372 = vmatpush1.bf16.msra.mxu0 %v5064
        %5373 = vmatprep.subr.bf16.mxu0 %v5069
        %5374 = vmatpush1.bf16.msra.mxu0 %v5068
        %5375 = vmatprep.subr.bf16.mxu0 %v5073
        %5376 = vmatpush1.bf16.msra.mxu0 %v5072
        %5377 = vmatprep.subr.bf16.mxu0 %v5077
        %5378 = vmatpush1.bf16.msra.mxu0 %v5076
        %5379 = vmatprep.subr.bf16.mxu0 %v5081
        %5380 = vmatpush1.bf16.msra.mxu0 %v5080
        %5381 = vmatprep.subr.bf16.mxu0 %v5085
        %5382 = vmatpush1.bf16.msra.mxu0 %v5084
        %5383 = vmatprep.subr.bf16.mxu0 %v5089
        %5384 = vmatpush1.bf16.msra.mxu0 %v5088
        %5385 = vmatprep.subr.bf16.mxu0 %v5093
        %5386 = vmatpush1.bf16.msra.mxu0 %v5092
        %5387 = vmatprep.subr.bf16.mxu0 %v5097
        %5388 = vmatpush1.bf16.msra.mxu0 %v5096
        %5389 = vmatprep.subr.bf16.mxu0 %v5101
        %5390 = vmatpush1.bf16.msra.mxu0 %v5100
        %5391 = vmatprep.mubr.bf16.mxu0 %v4439
        %5392 = vmatmul.mubr.bf16.gmra.mrb[0].mxu0 %v4438
        %v5393 = vpop.f32.mrb[0].mxu0
        %v5394 = vadd.f32 %v5351, %v5393
        %v5395 = vpop.f32.mrb[0].mxu0
        %v5396 = vadd.f32 %v5353, %v5395
        %v5397 = vpop.f32.mrb[0].mxu0
        %v5398 = vadd.f32 %v5355, %v5397
        %v5399 = vpop.f32.mrb[0].mxu0
        %v5400 = vadd.f32 %v5357, %v5399
        %5401 = vdwg.mxu0
        %vm5402 = vcmp.ge.f32.partialorder %v5308, 0.0
        %vm5403 = vcmp.ge.f32.partialorder %v5310, 0.0
        %vm5404 = vcmp.ge.f32.partialorder %v5394, 0.0
        %vm5405 = vcmp.ge.f32.partialorder %v5396, 0.0
        %vm5406 = vcmp.ge.f32.partialorder %v5312, 0.0
        %vm5407 = vcmp.ge.f32.partialorder %v5314, 0.0
        %vm5408 = vcmp.ge.f32.partialorder %v5398, 0.0
        %vm5409 = vcmp.ge.f32.partialorder %v5400, 0.0
        %v5410 = vmul.f32 %v5308, 0.01
        %v5411 = vmul.f32 %v5310, 0.01
        %v5412 = vmul.f32 %v5394, 0.01
        %v5413 = vmul.f32 %v5396, 0.01
        %v5414 = vmul.f32 %v5312, 0.01
        %v5415 = vmul.f32 %v5314, 0.01
        %v5416 = vmul.f32 %v5398, 0.01
        %v5417 = vmul.f32 %v5400, 0.01
        %v5418 = vsel %vm5402, %v5308, %v5410
        %v5419 = vsel %vm5403, %v5310, %v5411
        %v5420 = vsel %vm5404, %v5394, %v5412
        %v5421 = vsel %vm5405, %v5396, %v5413
        %v5422 = vsel %vm5406, %v5312, %v5414
        %v5423 = vsel %vm5407, %v5314, %v5415
        %v5424 = vsel %vm5408, %v5398, %v5416
        %v5425 = vsel %vm5409, %v5400, %v5417
        %v5426 = vpack.c.bf16 %v5422, %v5418
        %v5427 = vpack.c.bf16 %v5423, %v5419
        %v5428 = vpack.c.bf16 %v5424, %v5420
        %v5429 = vpack.c.bf16 %v5425, %v5421
        %v5430 = vld [vmem:[#allocation11] sm:$0xf]
        %v5431 = vld [vmem:[#allocation11 + $0x4] sm:$0xf]
        %v5432 = vld [vmem:[#allocation11 + $0x8] sm:$0xf]
        %v5433 = vld [vmem:[#allocation11 + $0xc] sm:$0xf]
        %v5434 = vld [vmem:[#allocation11 + $0x10] sm:$0xf]
        %v5435 = vld [vmem:[#allocation11 + $0x14] sm:$0xf]
        %v5436 = vld [vmem:[#allocation11 + $0x18] sm:$0xf]
        %v5437 = vld [vmem:[#allocation11 + $0x1c] sm:$0xf]
        %v5438 = vld [vmem:[#allocation11 + $0x20] sm:$0xf]
        %v5439 = vld [vmem:[#allocation11 + $0x24] sm:$0xf]
        %v5440 = vld [vmem:[#allocation11 + $0x28] sm:$0xf]
        %v5441 = vld [vmem:[#allocation11 + $0x2c] sm:$0xf]
        %v5442 = vld [vmem:[#allocation11 + $0x30] sm:$0xf]
        %v5443 = vld [vmem:[#allocation11 + $0x34] sm:$0xf]
        %v5444 = vld [vmem:[#allocation11 + $0x38] sm:$0xf]
        %v5445 = vld [vmem:[#allocation11 + $0x3c] sm:$0xf]
        %v5446 = vld [vmem:[#allocation11 + $0x40] sm:$0xf]
        %v5447 = vld [vmem:[#allocation11 + $0x44] sm:$0xf]
        %v5448 = vld [vmem:[#allocation11 + $0x48] sm:$0xf]
        %v5449 = vld [vmem:[#allocation11 + $0x4c] sm:$0xf]
        %v5450 = vld [vmem:[#allocation11 + $0x50] sm:$0xf]
        %v5451 = vld [vmem:[#allocation11 + $0x54] sm:$0xf]
        %v5452 = vld [vmem:[#allocation11 + $0x58] sm:$0xf]
        %v5453 = vld [vmem:[#allocation11 + $0x5c] sm:$0xf]
        %v5454 = vld [vmem:[#allocation11 + $0x60] sm:$0xf]
        %v5455 = vld [vmem:[#allocation11 + $0x64] sm:$0xf]
        %v5456 = vld [vmem:[#allocation11 + $0x68] sm:$0xf]
        %v5457 = vld [vmem:[#allocation11 + $0x6c] sm:$0xf]
        %v5458 = vld [vmem:[#allocation11 + $0x70] sm:$0xf]
        %v5459 = vld [vmem:[#allocation11 + $0x74] sm:$0xf]
        %v5460 = vld [vmem:[#allocation11 + $0x78] sm:$0xf]
        %v5461 = vld [vmem:[#allocation11 + $0x7c] sm:$0xf]
        %v5462 = vld [vmem:[#allocation11 + $0x80] sm:$0xf]
        %v5463 = vld [vmem:[#allocation11 + $0x84] sm:$0xf]
        %v5464 = vld [vmem:[#allocation11 + $0x88] sm:$0xf]
        %v5465 = vld [vmem:[#allocation11 + $0x8c] sm:$0xf]
        %v5466 = vld [vmem:[#allocation11 + $0x90] sm:$0xf]
        %v5467 = vld [vmem:[#allocation11 + $0x94] sm:$0xf]
        %v5468 = vld [vmem:[#allocation11 + $0x98] sm:$0xf]
        %v5469 = vld [vmem:[#allocation11 + $0x9c] sm:$0xf]
        %v5470 = vld [vmem:[#allocation11 + $0xa0] sm:$0xf]
        %v5471 = vld [vmem:[#allocation11 + $0xa4] sm:$0xf]
        %v5472 = vld [vmem:[#allocation11 + $0xa8] sm:$0xf]
        %v5473 = vld [vmem:[#allocation11 + $0xac] sm:$0xf]
        %v5474 = vld [vmem:[#allocation11 + $0xb0] sm:$0xf]
        %v5475 = vld [vmem:[#allocation11 + $0xb4] sm:$0xf]
        %v5476 = vld [vmem:[#allocation11 + $0xb8] sm:$0xf]
        %v5477 = vld [vmem:[#allocation11 + $0xbc] sm:$0xf]
        %v5478 = vld [vmem:[#allocation11 + $0xc0] sm:$0xf]
        %v5479 = vld [vmem:[#allocation11 + $0xc4] sm:$0xf]
        %v5480 = vld [vmem:[#allocation11 + $0xc8] sm:$0xf]
        %v5481 = vld [vmem:[#allocation11 + $0xcc] sm:$0xf]
        %v5482 = vld [vmem:[#allocation11 + $0xd0] sm:$0xf]
        %v5483 = vld [vmem:[#allocation11 + $0xd4] sm:$0xf]
        %v5484 = vld [vmem:[#allocation11 + $0xd8] sm:$0xf]
        %v5485 = vld [vmem:[#allocation11 + $0xdc] sm:$0xf]
        %v5486 = vld [vmem:[#allocation11 + $0xe0] sm:$0xf]
        %v5487 = vld [vmem:[#allocation11 + $0xe4] sm:$0xf]
        %v5488 = vld [vmem:[#allocation11 + $0xe8] sm:$0xf]
        %v5489 = vld [vmem:[#allocation11 + $0xec] sm:$0xf]
        %v5490 = vld [vmem:[#allocation11 + $0xf0] sm:$0xf]
        %v5491 = vld [vmem:[#allocation11 + $0xf4] sm:$0xf]
        %v5492 = vld [vmem:[#allocation11 + $0xf8] sm:$0xf]
        %v5493 = vld [vmem:[#allocation11 + $0xfc] sm:$0xf]
        %v5494 = vld [vmem:[%s10] sm:$0x1]
        %v5496 = vlaneseq
        %v5497 = vshrl.u32 %v5496, 7
        %v5498 = vsub.s32 0, %v5497
        %v5499 = vrot.slane %v5494, %v5498
        %v5565 = vunpack.c.l.b16 %v5430
        %v5566 = vunpack.c.l.b16 %v5431
        %v5567 = vunpack.c.l.b16 %v5432
        %v5568 = vunpack.c.l.b16 %v5433
        %v5569 = vunpack.c.l.b16 %v5434
        %v5570 = vunpack.c.l.b16 %v5435
        %v5571 = vunpack.c.l.b16 %v5436
        %v5572 = vunpack.c.l.b16 %v5437
        %v5573 = vunpack.c.l.b16 %v5438
        %v5574 = vunpack.c.l.b16 %v5439
        %v5575 = vunpack.c.l.b16 %v5440
        %v5576 = vunpack.c.l.b16 %v5441
        %v5577 = vunpack.c.l.b16 %v5442
        %v5578 = vunpack.c.l.b16 %v5443
        %v5579 = vunpack.c.l.b16 %v5444
        %v5580 = vunpack.c.l.b16 %v5445
        %v5581 = vunpack.c.l.b16 %v5446
        %v5582 = vunpack.c.l.b16 %v5447
        %v5583 = vunpack.c.l.b16 %v5448
        %v5584 = vunpack.c.l.b16 %v5449
        %v5585 = vunpack.c.l.b16 %v5450
        %v5586 = vunpack.c.l.b16 %v5451
        %v5587 = vunpack.c.l.b16 %v5452
        %v5588 = vunpack.c.l.b16 %v5453
        %v5589 = vunpack.c.l.b16 %v5454
        %v5590 = vunpack.c.l.b16 %v5455
        %v5591 = vunpack.c.l.b16 %v5456
        %v5592 = vunpack.c.l.b16 %v5457
        %v5593 = vunpack.c.l.b16 %v5458
        %v5594 = vunpack.c.l.b16 %v5459
        %v5595 = vunpack.c.l.b16 %v5460
        %v5596 = vunpack.c.l.b16 %v5461
        %v5597 = vunpack.c.l.b16 %v5462
        %v5598 = vunpack.c.l.b16 %v5463
        %v5599 = vunpack.c.l.b16 %v5464
        %v5600 = vunpack.c.l.b16 %v5465
        %v5601 = vunpack.c.l.b16 %v5466
        %v5602 = vunpack.c.l.b16 %v5467
        %v5603 = vunpack.c.l.b16 %v5468
        %v5604 = vunpack.c.l.b16 %v5469
        %v5605 = vunpack.c.l.b16 %v5470
        %v5606 = vunpack.c.l.b16 %v5471
        %v5607 = vunpack.c.l.b16 %v5472
        %v5608 = vunpack.c.l.b16 %v5473
        %v5609 = vunpack.c.l.b16 %v5474
        %v5610 = vunpack.c.l.b16 %v5475
        %v5611 = vunpack.c.l.b16 %v5476
        %v5612 = vunpack.c.l.b16 %v5477
        %v5613 = vunpack.c.l.b16 %v5478
        %v5614 = vunpack.c.l.b16 %v5479
        %v5615 = vunpack.c.l.b16 %v5480
        %v5616 = vunpack.c.l.b16 %v5481
        %v5617 = vunpack.c.l.b16 %v5482
        %v5618 = vunpack.c.l.b16 %v5483
        %v5619 = vunpack.c.l.b16 %v5484
        %v5620 = vunpack.c.l.b16 %v5485
        %v5621 = vunpack.c.l.b16 %v5486
        %v5622 = vunpack.c.l.b16 %v5487
        %v5623 = vunpack.c.l.b16 %v5488
        %v5624 = vunpack.c.l.b16 %v5489
        %v5625 = vunpack.c.l.b16 %v5490
        %v5626 = vunpack.c.l.b16 %v5491
        %v5627 = vunpack.c.l.b16 %v5492
        %v5628 = vunpack.c.l.b16 %v5493
        %v5629 = vpack.c.b16 %v5566, %v5565
        %v5630 = vpack.c.b16 %v5568, %v5567
        %v5631 = vpack.c.b16 %v5570, %v5569
        %v5632 = vpack.c.b16 %v5572, %v5571
        %v5633 = vpack.c.b16 %v5574, %v5573
        %v5634 = vpack.c.b16 %v5576, %v5575
        %v5635 = vpack.c.b16 %v5578, %v5577
        %v5636 = vpack.c.b16 %v5580, %v5579
        %v5637 = vpack.c.b16 %v5582, %v5581
        %v5638 = vpack.c.b16 %v5584, %v5583
        %v5639 = vpack.c.b16 %v5586, %v5585
        %v5640 = vpack.c.b16 %v5588, %v5587
        %v5641 = vpack.c.b16 %v5590, %v5589
        %v5642 = vpack.c.b16 %v5592, %v5591
        %v5643 = vpack.c.b16 %v5594, %v5593
        %v5644 = vpack.c.b16 %v5596, %v5595
        %v5645 = vpack.c.b16 %v5598, %v5597
        %v5646 = vpack.c.b16 %v5600, %v5599
        %v5647 = vpack.c.b16 %v5602, %v5601
        %v5648 = vpack.c.b16 %v5604, %v5603
        %v5649 = vpack.c.b16 %v5606, %v5605
        %v5650 = vpack.c.b16 %v5608, %v5607
        %v5651 = vpack.c.b16 %v5610, %v5609
        %v5652 = vpack.c.b16 %v5612, %v5611
        %v5653 = vpack.c.b16 %v5614, %v5613
        %v5654 = vpack.c.b16 %v5616, %v5615
        %v5655 = vpack.c.b16 %v5618, %v5617
        %v5656 = vpack.c.b16 %v5620, %v5619
        %v5657 = vpack.c.b16 %v5622, %v5621
        %v5658 = vpack.c.b16 %v5624, %v5623
        %v5659 = vpack.c.b16 %v5626, %v5625
        %v5660 = vpack.c.b16 %v5628, %v5627
        %5693 = vmatprep.subr.bf16.mxu0 0
        %5694 = vmatpush1.bf16.msra.mxu0 %v5629
        %5695 = vmatprep.subr.bf16.mxu0 0
        %5696 = vmatpush1.bf16.msra.mxu0 %v5630
        %5697 = vmatprep.subr.bf16.mxu0 0
        %5698 = vmatpush1.bf16.msra.mxu0 %v5631
        %5699 = vmatprep.subr.bf16.mxu0 0
        %5700 = vmatpush1.bf16.msra.mxu0 %v5632
        %5701 = vmatprep.subr.bf16.mxu0 0
        %5702 = vmatpush1.bf16.msra.mxu0 %v5633
        %5703 = vmatprep.subr.bf16.mxu0 0
        %5704 = vmatpush1.bf16.msra.mxu0 %v5634
        %5705 = vmatprep.subr.bf16.mxu0 0
        %5706 = vmatpush1.bf16.msra.mxu0 %v5635
        %5707 = vmatprep.subr.bf16.mxu0 0
        %5708 = vmatpush1.bf16.msra.mxu0 %v5636
        %5709 = vmatprep.subr.bf16.mxu0 0
        %5710 = vmatpush1.bf16.msra.mxu0 %v5637
        %5711 = vmatprep.subr.bf16.mxu0 0
        %5712 = vmatpush1.bf16.msra.mxu0 %v5638
        %5713 = vmatprep.subr.bf16.mxu0 0
        %5714 = vmatpush1.bf16.msra.mxu0 %v5639
        %5715 = vmatprep.subr.bf16.mxu0 0
        %5716 = vmatpush1.bf16.msra.mxu0 %v5640
        %5717 = vmatprep.subr.bf16.mxu0 0
        %5718 = vmatpush1.bf16.msra.mxu0 %v5641
        %5719 = vmatprep.subr.bf16.mxu0 0
        %5720 = vmatpush1.bf16.msra.mxu0 %v5642
        %5721 = vmatprep.subr.bf16.mxu0 0
        %5722 = vmatpush1.bf16.msra.mxu0 %v5643
        %5723 = vmatprep.subr.bf16.mxu0 0
        %5724 = vmatpush1.bf16.msra.mxu0 %v5644
        %5725 = vmatprep.mubr.bf16.mxu0 %v5427
        %5726 = vmatmul.mubr.bf16.gmra.mrb[0].mxu0 %v5426
        %v5727 = vpop.f32.mrb[0].mxu0
        %v5728 = vadd.f32 %v5499, %v5727
        %v5729 = vpop.f32.mrb[0].mxu0
        %v5730 = vpop.f32.mrb[0].mxu0
        %v5731 = vadd.f32 %v5499, %v5730
        %v5732 = vpop.f32.mrb[0].mxu0
        %5733 = vdwg.mxu0
        %5734 = vmatprep.subr.bf16.mxu0 0
        %5735 = vmatpush1.bf16.msra.mxu0 %v5645
        %5736 = vmatprep.subr.bf16.mxu0 0
        %5737 = vmatpush1.bf16.msra.mxu0 %v5646
        %5738 = vmatprep.subr.bf16.mxu0 0
        %5739 = vmatpush1.bf16.msra.mxu0 %v5647
        %5740 = vmatprep.subr.bf16.mxu0 0
        %5741 = vmatpush1.bf16.msra.mxu0 %v5648
        %5742 = vmatprep.subr.bf16.mxu0 0
        %5743 = vmatpush1.bf16.msra.mxu0 %v5649
        %5744 = vmatprep.subr.bf16.mxu0 0
        %5745 = vmatpush1.bf16.msra.mxu0 %v5650
        %5746 = vmatprep.subr.bf16.mxu0 0
        %5747 = vmatpush1.bf16.msra.mxu0 %v5651
        %5748 = vmatprep.subr.bf16.mxu0 0
        %5749 = vmatpush1.bf16.msra.mxu0 %v5652
        %5750 = vmatprep.subr.bf16.mxu0 0
        %5751 = vmatpush1.bf16.msra.mxu0 %v5653
        %5752 = vmatprep.subr.bf16.mxu0 0
        %5753 = vmatpush1.bf16.msra.mxu0 %v5654
        %5754 = vmatprep.subr.bf16.mxu0 0
        %5755 = vmatpush1.bf16.msra.mxu0 %v5655
        %5756 = vmatprep.subr.bf16.mxu0 0
        %5757 = vmatpush1.bf16.msra.mxu0 %v5656
        %5758 = vmatprep.subr.bf16.mxu0 0
        %5759 = vmatpush1.bf16.msra.mxu0 %v5657
        %5760 = vmatprep.subr.bf16.mxu0 0
        %5761 = vmatpush1.bf16.msra.mxu0 %v5658
        %5762 = vmatprep.subr.bf16.mxu0 0
        %5763 = vmatpush1.bf16.msra.mxu0 %v5659
        %5764 = vmatprep.subr.bf16.mxu0 0
        %5765 = vmatpush1.bf16.msra.mxu0 %v5660
        %5766 = vmatprep.mubr.bf16.mxu0 %v5429
        %5767 = vmatmul.mubr.bf16.gmra.mrb[0].mxu0 %v5428
        %v5768 = vpop.f32.mrb[0].mxu0
        %v5769 = vadd.f32 %v5728, %v5768
        %v5770 = vpop.f32.mrb[0].mxu0
        %v5771 = vpop.f32.mrb[0].mxu0
        %v5772 = vadd.f32 %v5731, %v5771
        %v5773 = vpop.f32.mrb[0].mxu0
        %5774 = vdwg.mxu0
        %v5775 = vpack.c.bf16 %v5772, %v5769
        %v5777 = vunpack.c.l.b16 %v5775
        %v5778 = vunpack.c.h.b16 %v5775
        %v5779 = vpack.c.b16 %v5777, %v5777
        %v5780 = vpack.c.b16 %v5778, %v5778
        %5783 = vst [vmem:[%s478] sm:$0xf] %v5779
        %5784 = vst [vmem:[%s478 + $0x4] sm:$0xf] %v5780
        %s5785 = sand.u32 %s275, 1
        %s5786 = scalar_lea.sflag [#allocation4], %s5785
        %s5787 = sand.u32 %s275, 1
        %s5788 = smul.addr %s5787, 8
        %s5789 = scalar_lea.vmem [#allocation13], %s5788
        // Predicated region
        $region89: #{tpu_custom_call.1} parent=63 // pred_check
          %p5790 = pneg %p285
        $region90: #{tpu_custom_call.1} parent=63 // pred_check_branch
          %5792 = sbr.rel (%p5790) target = $region92
        $region91: #{tpu_custom_call.1} parent=63 // pred_region
          %s5793 = smul.u32 2, %s31
          %s5795 = ssub.s32 128, 128
          %5796 = vsyncadd %s5786, %s5795
          %s5797 = smul.addr %s5793, 64
          %s5798 = scalar_lea.hbm %s11, %s5797
          %s5799 = sshll.u32 %s5789, 4
          %s5800 = int_to_ptr.vmem [resolvable:$true] %s5799
          %5805 = dma.vmem_to_hbm [thread:$0]  %s5800, 128, %s5798, %s5786, 64, 64, 4
        $region92: #{tpu_custom_call.1} parent=63 // pred_fallthru
          _
      $region64: #{tpu_custom_call.1} parent=5 // pred_fallthru
        _
      %p5806 = scmp.le.s32.totalorder 2, %s26
      // Predicated region
      $region93: #{tpu_custom_call.1} parent=5 // pred_check
        %p5807 = pneg %p5806
      $region94: #{tpu_custom_call.1} parent=5 // pred_check_branch
        %5809 = sbr.rel (%p5807) target = $region96
      $region95: #{tpu_custom_call.1} parent=5 // pred_region
        %s5810 = ssub.s32 %s26, 2
        // Predicated region
        $region97: #{tpu_custom_call.1} parent=95 // pred_check
          %p5811 = pneg %p291
        $region98: #{tpu_custom_call.1} parent=95 // pred_check_branch
          %5813 = sbr.rel (%p5811) target = $region100
        $region99: #{tpu_custom_call.1} parent=95 // pred_region
          %s5814 = sand.u32 %s276, 1
          %s5815 = scalar_lea.sflag [#allocation4], %s5814
          %s5816 = sand.u32 %s276, 1
          %s5817 = smul.addr %s5816, 8
          %s5818 = scalar_lea.vmem [#allocation13], %s5817
          %5819 = dma.done %s5815, 128
        $region100: #{tpu_custom_call.1} parent=95 // pred_fallthru
          _
      $region96: #{tpu_custom_call.1} parent=5 // pred_fallthru
        _
    $region6: #{tpu_custom_call.1} parent=1 // loop_footer
      %s30 = sadd.s32 1, %s26
    $region7: #{tpu_custom_call.1} parent=1 // loop_footer_branch
      %25 = sbr.rel target = $region3
    $region8: #{tpu_custom_call.1} parent=1 // loop_exit
      _
    %5820 = vsyncpa [#allocation3], 1
    %s5821 = scalar_lea.sflag [#allocation3], 1
    %5822 = vsyncpa %s5821, 1
    %5823 = vsyncpa [#allocation6], 1
    %5824 = vsyncpa [#allocation9], 1
    %5825 = vsyncpa [#allocation12], 1
    %5826 = vsyncpa [#allocation4], 1
    %s5827 = scalar_lea.sflag [#allocation4], 1
    %5828 = vsyncpa %s5827, 1

</llo_original>
